<compile_context>
chip_gen: v6e
topology: v6e:2x2x1
jax: 0.10.0
libtpu: 0.0.40
codegen_flags: <defaults>
</compile_context>

<pallas_src>
import jax
import jax.numpy as jnp
from jax import lax
from jax.experimental import pallas as pl
from jax.experimental.pallas import tpu as pltpu

LANE = 128
SUBLANE = 8


def _round_up(x, m):
    return (x + m - 1) // m * m


# ---------------------------------------------------------------------------
# Fused decoder kernel (one grid step == one decode iteration).
# Ref order:
#   inputs : x (T*Bp, Hp), h0 (2L, Bp, Hp), c0 (2L, Bp, Hp),
#            per layer: w_ih_cat (INp, 8Hp), w_hh_f (Hp, 4Hp),
#                       w_hh_r (Hp, 4Hp), b_cat (1, 8Hp),
#            w_fc (2Hp, Op), b_fc (1, Op)
#   output : (T*Bp, Op) block of log-probs for this decode step
#   scratch: h_st, c_st (2L, Bp, Hp)   -- persistent recurrent state
#            zin0, zin (T, Bp, 8Hp)    -- cached / per-layer input projections
#            seq_cat (T, Bp, 2Hp)      -- fwd|rev layer output
# ---------------------------------------------------------------------------
def make_decoder_kernel(num_layers, T, Bp, Hp):
    L = num_layers
    H4 = 4 * Hp
    H8 = 8 * Hp
    unroll = True if T <= 8 else 4       # cap unroll for larger T (vreg pressure)

    def kernel(*refs):
        x_ref, h0_ref, c0_ref = refs[0:3]
        w_refs = refs[3:3 + 4 * L]
        w_fc_ref = refs[3 + 4 * L]
        b_fc_ref = refs[4 + 4 * L]
        out_ref = refs[5 + 4 * L]
        h_st, c_st, zin0, zin, seq_cat = refs[6 + 4 * L:]

        def wref(l, which):              # 0=w_ih_cat, 1=w_hh_f, 2=w_hh_r, 3=b_cat
            return w_refs[l * 4 + which]

        s = pl.program_id(0)

        @pl.when(s == 0)
        def _init():
            # Load initial state once; it persists in VMEM scratch afterwards.
            h_st[...] = h0_ref[...]
            c_st[...] = c0_ref[...]
            # x is identical at every decode step -> fused fwd|rev layer-0
            # input projection (bias folded) computed once and reused.
            z0 = (jnp.dot(x_ref[...], wref(0, 0)[...],
                          preferred_element_type=jnp.float32)
                  + wref(0, 3)[...])                       # (T*Bp, 8Hp)
            zin0[...] = z0.reshape(T, Bp, H8)

        def run_layer(z_ref, whh_f, whh_r, l):
            # Interleaved fwd/rev recurrence: one fori_loop, 4-tuple carry,
            # two independent small matmuls + gate chains per iteration.
            def step(i, carry):
                h_f, c_f, h_r, c_r = carry
                tf = i
                tr = T - 1 - i

                z_f = z_ref[tf, :, :H4] + jnp.dot(
                    h_f, whh_f, preferred_element_type=jnp.float32)
                z_r = z_ref[tr, :, H4:] + jnp.dot(
                    h_r, whh_r, preferred_element_type=jnp.float32)

                i_f = jax.nn.sigmoid(z_f[:, 0 * Hp:1 * Hp])
                f_f = jax.nn.sigmoid(z_f[:, 1 * Hp:2 * Hp])
                g_f = jnp.tanh(z_f[:, 2 * Hp:3 * Hp])
                o_f = jax.nn.sigmoid(z_f[:, 3 * Hp:4 * Hp])
                c_f = f_f * c_f + i_f * g_f
                h_f = o_f * jnp.tanh(c_f)

                i_r = jax.nn.sigmoid(z_r[:, 0 * Hp:1 * Hp])
                f_r = jax.nn.sigmoid(z_r[:, 1 * Hp:2 * Hp])
                g_r = jnp.tanh(z_r[:, 2 * Hp:3 * Hp])
                o_r = jax.nn.sigmoid(z_r[:, 3 * Hp:4 * Hp])
                c_r = f_r * c_r + i_r * g_r
                h_r = o_r * jnp.tanh(c_r)

                # Combined fwd|rev output scratch; 128-lane aligned halves.
                seq_cat[tf, :, :Hp] = h_f
                seq_cat[tr, :, Hp:] = h_r
                return (h_f, c_f, h_r, c_r)

            kf, kr = 2 * l, 2 * l + 1
            init = (h_st[kf], c_st[kf], h_st[kr], c_st[kr])
            h_f, c_f, h_r, c_r = lax.fori_loop(0, T, step, init, unroll=unroll)
            h_st[kf] = h_f
            c_st[kf] = c_f
            h_st[kr] = h_r
            c_st[kr] = c_r

        for l in range(L):
            if l == 0:
                z_ref = zin0
            else:
                # Fused fwd|rev projection for layers >= 1: one matmul.
                prev = seq_cat[...].reshape(T * Bp, 2 * Hp)
                z = (jnp.dot(prev, wref(l, 0)[...],
                             preferred_element_type=jnp.float32)
                     + wref(l, 3)[...])
                zin[...] = z.reshape(T, Bp, H8)
                z_ref = zin
            run_layer(z_ref, wref(l, 1)[...], wref(l, 2)[...], l)

        # FC + log_softmax for this decode step; streamed out via out_specs.
        top = seq_cat[...].reshape(T * Bp, 2 * Hp)
        logits = (jnp.dot(top, w_fc_ref[...],
                          preferred_element_type=jnp.float32)
                  + b_fc_ref[...])                          # pad cols get -1e30
        m = jnp.max(logits, axis=-1, keepdims=True)
        shifted = logits - m
        lse = jnp.log(jnp.sum(jnp.exp(shifted), axis=-1, keepdims=True))
        out_ref[...] = shifted - lse

    return kernel


# ---------------------------------------------------------------------------
# Parameter padding / fusion to lane-dense layouts.
# Zero-padding is inert: padded gate columns give z=0 -> padded h lanes stay 0,
# padded weight rows are zero so pad lanes never contaminate real lanes.
# ---------------------------------------------------------------------------
def _pad_gate_cols(w, H, Hp):
    """(..., 4H) -> (..., 4Hp), padding each gate block independently."""
    lead = w.shape[:-1]
    w4 = w.reshape(lead + (4, H))
    out = jnp.zeros(lead + (4, Hp), w.dtype).at[..., :H].set(w4)
    return out.reshape(lead + (4 * Hp,))


def pad_params(params, hidden_size, output_size, num_layers, Hp, Op):
    H, O = hidden_size, output_size
    layers = []
    for l in range(num_layers):
        dirs = []
        for d in range(2):
            w_ih, w_hh, b = params["lstm"][l][d]
            w_ih_c = _pad_gate_cols(w_ih, H, Hp)
            w_hh_c = _pad_gate_cols(w_hh, H, Hp)
            b_p = _pad_gate_cols(b, H, Hp)                             # (1, 4Hp)
            w_hh_p = jnp.zeros((Hp, 4 * Hp), jnp.float32).at[:H].set(w_hh_c)
            if l == 0:
                w_ih_p = jnp.zeros((Hp, 4 * Hp), jnp.float32).at[:H].set(w_ih_c)
            else:
                # Layer >=1 input is [h_fwd | h_rev] in padded lanes:
                # real fwd rows at [0:H], real rev rows at [Hp:Hp+H].
                w_ih_p = jnp.zeros((2 * Hp, 4 * Hp), jnp.float32)
                w_ih_p = w_ih_p.at[:H].set(w_ih_c[:H])
                w_ih_p = w_ih_p.at[Hp:Hp + H].set(w_ih_c[H:2 * H])
            dirs.append((w_ih_p, w_hh_p, b_p))
        (wi_f, wh_f, b_f), (wi_r, wh_r, b_r) = dirs
        # Fuse fwd|rev input projections into a single matmul weight/bias.
        w_ih_cat = jnp.concatenate([wi_f, wi_r], axis=1)               # (IN, 8Hp)
        b_cat = jnp.concatenate([b_f, b_r], axis=1)                    # (1, 8Hp)
        layers.append((w_ih_cat, wh_f, wh_r, b_cat))

    w_fc, b_fc = params["w_fc"], params["b_fc"]
    w_fc_p = jnp.zeros((2 * Hp, Op), jnp.float32)
    w_fc_p = w_fc_p.at[:H, :O].set(w_fc[:H])
    w_fc_p = w_fc_p.at[Hp:Hp + H, :O].set(w_fc[H:2 * H])
    # Padded output columns get a huge negative bias so exp() -> 0 in softmax
    # (kept in f32; would need ~-1e9 if ever cast to bf16).
    b_fc_p = jnp.full((1, Op), -1e30, jnp.float32).at[:, :O].set(b_fc)
    return layers, w_fc_p, b_fc_p


# ---------------------------------------------------------------------------
# Host wrapper: pad, run the fused kernel over a (max_length,) grid, unpad.
# ---------------------------------------------------------------------------
def decoder_forward(params, cfg, hidden, cell, x):
    B, T, H = x.shape
    L = cfg["num_layers"]
    ML = cfg["max_length"]
    O = params["w_fc"].shape[-1]
    Hp = _round_up(H, LANE)
    Op = _round_up(O, LANE)
    Bp = _round_up(B, SUBLANE)            # pad batch to 8 sublanes (f32 minimum)

    layers, w_fc_p, b_fc_p = pad_params(params, H, O, L, Hp, Op)

    x_tm = jnp.transpose(x, (1, 0, 2))                                 # (T, B, H)
    x_p = jnp.zeros((T, Bp, Hp), jnp.float32).at[:, :B, :H].set(x_tm)
    x_p = x_p.reshape(T * Bp, Hp)
    h_p = jnp.zeros((2 * L, Bp, Hp), jnp.float32).at[:, :B, :H].set(hidden)
    c_p = jnp.zeros((2 * L, Bp, Hp), jnp.float32).at[:, :B, :H].set(cell)

    args = [x_p, h_p, c_p]
    for lp in layers:
        args.extend(lp)
    args.extend([w_fc_p, b_fc_p])

    def resident(a):
        # Full-array block with a constant index map -> stays VMEM-resident
        # across the whole decode grid (no re-fetch per step).
        nd = a.ndim
        return pl.BlockSpec(a.shape, lambda s, _nd=nd: (0,) * _nd)

    kernel = make_decoder_kernel(L, T, Bp, Hp)
    out = pl.pallas_call(
        kernel,
        out_shape=jax.ShapeDtypeStruct((ML * T * Bp, Op), jnp.float32),
        grid_spec=pltpu.PrefetchScalarGridSpec(
            num_scalar_prefetch=0,
            grid=(ML,),
            in_specs=[resident(a) for a in args],
            out_specs=pl.BlockSpec((T * Bp, Op), lambda s: (s, 0)),
            scratch_shapes=[
                pltpu.VMEM((2 * L, Bp, Hp), jnp.float32),   # h state (persists)
                pltpu.VMEM((2 * L, Bp, Hp), jnp.float32),   # c state (persists)
                pltpu.VMEM((T, Bp, 8 * Hp), jnp.float32),   # layer-0 projection
                pltpu.VMEM((T, Bp, 8 * Hp), jnp.float32),   # layer>=1 projection
                pltpu.VMEM((T, Bp, 2 * Hp), jnp.float32),   # fwd|rev layer output
            ]),
        compiler_params=pltpu.CompilerParams(
            dimension_semantics=("arbitrary",),             # state carried across steps
            vmem_limit_bytes=32 * 1024 * 1024),
    )(*args)

    # rows within a step are (t, b); steps are blocks along axis 0.
    out = out.reshape(ML, T, Bp, Op)[:, :, :B, :O]          # (ML, T, B, O)
    return jnp.transpose(out, (2, 0, 1, 3)).reshape(B, ML * T, O)


# ---------------------------------------------------------------------------
# Deterministic parameter init (torch-style uniform(-1/sqrt(H), 1/sqrt(H))).
# Weights stored pre-transposed as (IN, 4H), gate order i, f, g, o.
# ---------------------------------------------------------------------------
def init_params(key, input_size, hidden_size, output_size, num_layers):
    H = hidden_size
    bound = 1.0 / float(H) ** 0.5
    keys = iter(jax.random.split(key, num_layers * 2 * 4 + 4))
    lstm = []
    for l in range(num_layers):
        in_size = H if l == 0 else 2 * H
        dirs = []
        for _ in range(2):
            w_ih = jax.random.uniform(next(keys), (in_size, 4 * H), jnp.float32,
                                      -bound, bound)
            w_hh = jax.random.uniform(next(keys), (H, 4 * H), jnp.float32,
                                      -bound, bound)
            b_ih = jax.random.uniform(next(keys), (1, 4 * H), jnp.float32,
                                      -bound, bound)
            b_hh = jax.random.uniform(next(keys), (1, 4 * H), jnp.float32,
                                      -bound, bound)
            dirs.append((w_ih, w_hh, b_ih + b_hh))
        lstm.append(dirs)
    fc_bound = 1.0 / float(2 * H) ** 0.5
    w_fc = jax.random.uniform(next(keys), (2 * H, output_size), jnp.float32,
                              -fc_bound, fc_bound)
    b_fc = jax.random.uniform(next(keys), (1, output_size), jnp.float32,
                              -fc_bound, fc_bound)
    # nn.Embedding / nn.Dropout exist on the module but are unused in forward().
    embedding = jax.random.normal(next(keys), (input_size, H), jnp.float32)
    return {"lstm": lstm, "w_fc": w_fc, "b_fc": b_fc, "embedding": embedding}


# ---------------------------------------------------------------------------
# Pure-JAX reference (unpadded) for correctness checking.
# ---------------------------------------------------------------------------
def reference_forward(params, cfg, hidden, cell, x):
    B, T, H = x.shape
    L, ML = cfg["num_layers"], cfg["max_length"]

    def lstm_dir(x_seq, h, c, w_ih, w_hh, b):
        outs = []
        for t in range(x_seq.shape[0]):
            z = x_seq[t] @ w_ih + h @ w_hh + b
            i_g = jax.nn.sigmoid(z[:, 0 * H:1 * H])
            f_g = jax.nn.sigmoid(z[:, 1 * H:2 * H])
            g_g = jnp.tanh(z[:, 2 * H:3 * H])
            o_g = jax.nn.sigmoid(z[:, 3 * H:4 * H])
            c = f_g * c + i_g * g_g
            h = o_g * jnp.tanh(c)
            outs.append(h)
        return jnp.stack(outs), h, c

    hs = [hidden[k] for k in range(2 * L)]
    cs = [cell[k] for k in range(2 * L)]
    x_tm = jnp.transpose(x, (1, 0, 2))
    outputs = []
    for _ in range(ML):
        layer_in = x_tm
        for l in range(L):
            w_ih_f, w_hh_f, b_f = params["lstm"][l][0]
            w_ih_r, w_hh_r, b_r = params["lstm"][l][1]
            o_f, hs[2 * l], cs[2 * l] = lstm_dir(
                layer_in, hs[2 * l], cs[2 * l], w_ih_f, w_hh_f, b_f)
            o_r, hs[2 * l + 1], cs[2 * l + 1] = lstm_dir(
                layer_in[::-1], hs[2 * l + 1], cs[2 * l + 1], w_ih_r, w_hh_r, b_r)
            layer_in = jnp.concatenate([o_f, o_r[::-1]], axis=-1)
        step_out = jnp.transpose(layer_in, (1, 0, 2))                   # (B, T, 2H)
        outputs.append(step_out @ params["w_fc"] + params["b_fc"])
    logits = jnp.concatenate(outputs, axis=1)
    return jax.nn.log_softmax(logits, axis=-1)


if __name__ == "__main__":
    B, T = 2, 4                 # batch, input sequence length of x
    hidden_size = 32
    num_layers = 2
    max_length = 3
    output_size = 10
    input_size = 10             # vocab size (embedding unused in forward)

    cfg = {"num_layers": num_layers, "max_length": max_length}

    root = jax.random.PRNGKey(0)
    kp, kx, kh, kc = jax.random.split(root, 4)
    params = init_params(kp, input_size, hidden_size, output_size, num_layers)

    # LSTM-unit input x: (B, T, hidden_size); hidden/cell: (num_layers*2, B, H)
    x = jax.random.normal(kx, (B, T, hidden_size), jnp.float32)
    hidden = jax.random.normal(kh, (num_layers * 2, B, hidden_size), jnp.float32)
    cell = jax.random.normal(kc, (num_layers * 2, B, hidden_size), jnp.float32)

    out = decoder_forward(params, cfg, hidden, cell, x)
    jax.block_until_ready(out)

    assert out.shape == (B, max_length * T, output_size), out.shape
    assert bool(jnp.all(jnp.isfinite(out)))
    # log_softmax rows should sum (in prob space) to ~1
    assert jnp.allclose(jnp.sum(jnp.exp(out), axis=-1), 1.0, atol=1e-4)

    # Cross-check against a high-precision pure-JAX reference.
    with jax.default_matmul_precision("highest"):
        ref = reference_forward(params, cfg, hidden, cell, x)
        jax.block_until_ready(ref)
    max_err = float(jnp.max(jnp.abs(out - ref)))
    assert max_err < 2e-2, max_err

    print("KERNEL_OK")
</pallas_src>

<mosaic_0001>
module attributes {stable_mosaic.version = 11 : i64} {
  func.func @kernel(%arg0: i32, %arg1: memref<32x128xf32, #tpu.memory_space<vmem>>, %arg2: memref<4x8x128xf32, #tpu.memory_space<vmem>>, %arg3: memref<4x8x128xf32, #tpu.memory_space<vmem>>, %arg4: memref<128x1024xf32, #tpu.memory_space<vmem>>, %arg5: memref<128x512xf32, #tpu.memory_space<vmem>>, %arg6: memref<128x512xf32, #tpu.memory_space<vmem>>, %arg7: memref<1x1024xf32, #tpu.memory_space<vmem>>, %arg8: memref<256x1024xf32, #tpu.memory_space<vmem>>, %arg9: memref<128x512xf32, #tpu.memory_space<vmem>>, %arg10: memref<128x512xf32, #tpu.memory_space<vmem>>, %arg11: memref<1x1024xf32, #tpu.memory_space<vmem>>, %arg12: memref<256x128xf32, #tpu.memory_space<vmem>>, %arg13: memref<1x128xf32, #tpu.memory_space<vmem>>, %arg14: memref<32x128xf32, #tpu.memory_space<vmem>>, %arg15: memref<4x8x128xf32, #tpu.memory_space<vmem>>, %arg16: memref<4x8x128xf32, #tpu.memory_space<vmem>>, %arg17: memref<4x8x1024xf32, #tpu.memory_space<vmem>>, %arg18: memref<4x8x1024xf32, #tpu.memory_space<vmem>>, %arg19: memref<4x8x256xf32, #tpu.memory_space<vmem>>) attributes {dimension_semantics = [#tpu.dimension_semantics<arbitrary>], iteration_bounds = array<i64: 3>, scalar_prefetch = 0 : i64, scratch_operands = 5 : i64, tpu.core_type = #tpu.core_type<tc>, window_params = [{pipeline_mode = #tpu.pipeline_mode<synchronous>, transform_indices = @transform_0, window_bounds = array<i64: 32, 128>}, {pipeline_mode = #tpu.pipeline_mode<synchronous>, transform_indices = @transform_1, window_bounds = array<i64: 4, 8, 128>}, {pipeline_mode = #tpu.pipeline_mode<synchronous>, transform_indices = @transform_2, window_bounds = array<i64: 4, 8, 128>}, {pipeline_mode = #tpu.pipeline_mode<synchronous>, transform_indices = @transform_3, window_bounds = array<i64: 128, 1024>}, {pipeline_mode = #tpu.pipeline_mode<synchronous>, transform_indices = @transform_4, window_bounds = array<i64: 128, 512>}, {pipeline_mode = #tpu.pipeline_mode<synchronous>, transform_indices = @transform_5, window_bounds = array<i64: 128, 512>}, {pipeline_mode = #tpu.pipeline_mode<synchronous>, transform_indices = @transform_6, window_bounds = array<i64: 1, 1024>}, {pipeline_mode = #tpu.pipeline_mode<synchronous>, transform_indices = @transform_7, window_bounds = array<i64: 256, 1024>}, {pipeline_mode = #tpu.pipeline_mode<synchronous>, transform_indices = @transform_8, window_bounds = array<i64: 128, 512>}, {pipeline_mode = #tpu.pipeline_mode<synchronous>, transform_indices = @transform_9, window_bounds = array<i64: 128, 512>}, {pipeline_mode = #tpu.pipeline_mode<synchronous>, transform_indices = @transform_10, window_bounds = array<i64: 1, 1024>}, {pipeline_mode = #tpu.pipeline_mode<synchronous>, transform_indices = @transform_11, window_bounds = array<i64: 256, 128>}, {pipeline_mode = #tpu.pipeline_mode<synchronous>, transform_indices = @transform_12, window_bounds = array<i64: 1, 128>}, {transform_indices = @transform_13, window_bounds = array<i64: 32, 128>}]} {
    %c0_i32 = arith.constant 0 : i32
    %0 = arith.cmpi eq, %arg0, %c0_i32 : i32
    %1 = arith.extui %0 : i1 to i32
    %c0_i32_0 = arith.constant 0 : i32
    %2 = arith.cmpi ne, %1, %c0_i32_0 : i32
    scf.if %2 {
      %c0_215 = arith.constant 0 : index
      %c0_216 = arith.constant 0 : index
      %c0_217 = arith.constant 0 : index
      %626 = vector.load %arg2[%c0_215, %c0_216, %c0_217] : memref<4x8x128xf32, #tpu.memory_space<vmem>>, vector<4x8x128xf32>
      %c0_218 = arith.constant 0 : index
      %c0_219 = arith.constant 0 : index
      %c0_220 = arith.constant 0 : index
      %627 = vector.load %arg15[%c0_218, %c0_219, %c0_220] : memref<4x8x128xf32, #tpu.memory_space<vmem>>, vector<4x8x128xf32>
      tpu.vector_store %arg15[%c0_218, %c0_219, %c0_220], %626 {strides = array<i32>} : memref<4x8x128xf32, #tpu.memory_space<vmem>>, vector<4x8x128xf32>,
      %c0_221 = arith.constant 0 : index
      %c0_222 = arith.constant 0 : index
      %c0_223 = arith.constant 0 : index
      %628 = vector.load %arg3[%c0_221, %c0_222, %c0_223] : memref<4x8x128xf32, #tpu.memory_space<vmem>>, vector<4x8x128xf32>
      %c0_224 = arith.constant 0 : index
      %c0_225 = arith.constant 0 : index
      %c0_226 = arith.constant 0 : index
      %629 = vector.load %arg16[%c0_224, %c0_225, %c0_226] : memref<4x8x128xf32, #tpu.memory_space<vmem>>, vector<4x8x128xf32>
      tpu.vector_store %arg16[%c0_224, %c0_225, %c0_226], %628 {strides = array<i32>} : memref<4x8x128xf32, #tpu.memory_space<vmem>>, vector<4x8x128xf32>,
      %c0_227 = arith.constant 0 : index
      %c0_228 = arith.constant 0 : index
      %630 = vector.load %arg1[%c0_227, %c0_228] : memref<32x128xf32, #tpu.memory_space<vmem>>, vector<32x128xf32>
      %c0_229 = arith.constant 0 : index
      %c0_230 = arith.constant 0 : index
      %631 = vector.load %arg4[%c0_229, %c0_230] : memref<128x1024xf32, #tpu.memory_space<vmem>>, vector<128x1024xf32>
      %cst_231 = arith.constant dense<0.000000e+00> : vector<32x1024xf32>
      %632 = tpu.matmul %630, %631, %cst_231 {dimension_numbers = #tpu.dot_dimension_numbers<[1], [0], [0], [1], [0, 0, 1, 1], [], []>} : vector<32x128xf32>, vector<128x1024xf32>, vector<32x1024xf32> -> vector<32x1024xf32>
      %c0_232 = arith.constant 0 : index
      %c0_233 = arith.constant 0 : index
      %633 = vector.load %arg7[%c0_232, %c0_233] : memref<1x1024xf32, #tpu.memory_space<vmem>>, vector<1x1024xf32>
      %634 = vector.broadcast %633 : vector<1x1024xf32> to vector<32x1024xf32>
      %635 = arith.addf %632, %634 : vector<32x1024xf32>
      %636 = vector.shape_cast %635 : vector<32x1024xf32> to vector<4x8x1024xf32>
      %c0_234 = arith.constant 0 : index
      %c0_235 = arith.constant 0 : index
      %c0_236 = arith.constant 0 : index
      %637 = vector.load %arg17[%c0_234, %c0_235, %c0_236] : memref<4x8x1024xf32, #tpu.memory_space<vmem>>, vector<4x8x1024xf32>
      tpu.vector_store %arg17[%c0_234, %c0_235, %c0_236], %636 {strides = array<i32>} : memref<4x8x1024xf32, #tpu.memory_space<vmem>>, vector<4x8x1024xf32>,
    } else {
    }
    %c0 = arith.constant 0 : index
    %c0_1 = arith.constant 0 : index
    %3 = vector.load %arg5[%c0, %c0_1] : memref<128x512xf32, #tpu.memory_space<vmem>>, vector<128x512xf32>
    %c0_2 = arith.constant 0 : index
    %c0_3 = arith.constant 0 : index
    %4 = vector.load %arg6[%c0_2, %c0_3] : memref<128x512xf32, #tpu.memory_space<vmem>>, vector<128x512xf32>
    %c0_4 = arith.constant 0 : index
    %c0_5 = arith.constant 0 : index
    %c0_6 = arith.constant 0 : index
    %5 = vector.load %arg15[%c0_4, %c0_5, %c0_6] : memref<4x8x128xf32, #tpu.memory_space<vmem>>, vector<1x8x128xf32>
    %6 = vector.shape_cast %5 : vector<1x8x128xf32> to vector<8x128xf32>
    %c0_7 = arith.constant 0 : index
    %c0_8 = arith.constant 0 : index
    %c0_9 = arith.constant 0 : index
    %7 = vector.load %arg16[%c0_7, %c0_8, %c0_9] : memref<4x8x128xf32, #tpu.memory_space<vmem>>, vector<1x8x128xf32>
    %8 = vector.shape_cast %7 : vector<1x8x128xf32> to vector<8x128xf32>
    %c1 = arith.constant 1 : index
    %c0_10 = arith.constant 0 : index
    %c0_11 = arith.constant 0 : index
    %9 = vector.load %arg15[%c1, %c0_10, %c0_11] : memref<4x8x128xf32, #tpu.memory_space<vmem>>, vector<1x8x128xf32>
    %10 = vector.shape_cast %9 : vector<1x8x128xf32> to vector<8x128xf32>
    %c1_12 = arith.constant 1 : index
    %c0_13 = arith.constant 0 : index
    %c0_14 = arith.constant 0 : index
    %11 = vector.load %arg16[%c1_12, %c0_13, %c0_14] : memref<4x8x128xf32, #tpu.memory_space<vmem>>, vector<1x8x128xf32>
    %12 = vector.shape_cast %11 : vector<1x8x128xf32> to vector<8x128xf32>
    %c0_i32_15 = arith.constant 0 : i32
    %c3_i32 = arith.constant 3 : i32
    %13 = arith.subi %c3_i32, %c0_i32_15 : i32
    %14 = arith.index_cast %c0_i32_15 : i32 to index
    %c0_16 = arith.constant 0 : index
    %c0_17 = arith.constant 0 : index
    %15 = vector.load %arg17[%14, %c0_16, %c0_17] : memref<4x8x1024xf32, #tpu.memory_space<vmem>>, vector<1x8x512xf32>
    %16 = vector.shape_cast %15 : vector<1x8x512xf32> to vector<8x512xf32>
    %cst = arith.constant dense<0.000000e+00> : vector<8x512xf32>
    %17 = tpu.matmul %6, %3, %cst {dimension_numbers = #tpu.dot_dimension_numbers<[1], [0], [0], [1], [0, 0, 1, 1], [], []>} : vector<8x128xf32>, vector<128x512xf32>, vector<8x512xf32> -> vector<8x512xf32>
    %18 = arith.addf %16, %17 : vector<8x512xf32>
    %19 = arith.index_cast %13 : i32 to index
    %c0_18 = arith.constant 0 : index
    %c512 = arith.constant 512 : index
    %20 = vector.load %arg17[%19, %c0_18, %c512] : memref<4x8x1024xf32, #tpu.memory_space<vmem>>, vector<1x8x512xf32>
    %21 = vector.shape_cast %20 : vector<1x8x512xf32> to vector<8x512xf32>
    %cst_19 = arith.constant dense<0.000000e+00> : vector<8x512xf32>
    %22 = tpu.matmul %10, %4, %cst_19 {dimension_numbers = #tpu.dot_dimension_numbers<[1], [0], [0], [1], [0, 0, 1, 1], [], []>} : vector<8x128xf32>, vector<128x512xf32>, vector<8x512xf32> -> vector<8x512xf32>
    %23 = arith.addf %21, %22 : vector<8x512xf32>
    %24 = vector.extract_strided_slice %18 {offsets = [0, 0], sizes = [8, 128], strides = [1, 1]} : vector<8x512xf32> to vector<8x128xf32>
    %25 = arith.negf %24 : vector<8x128xf32>
    %26 = math.exp %25 : vector<8x128xf32>
    %cst_20 = arith.constant 1.000000e+00 : f32
    %27 = vector.broadcast %cst_20 : f32 to vector<8x128xf32>
    %28 = arith.addf %27, %26 : vector<8x128xf32>
    %29 = arith.divf %27, %28 : vector<8x128xf32>
    %30 = vector.extract_strided_slice %18 {offsets = [0, 128], sizes = [8, 128], strides = [1, 1]} : vector<8x512xf32> to vector<8x128xf32>
    %31 = arith.negf %30 : vector<8x128xf32>
    %32 = math.exp %31 : vector<8x128xf32>
    %cst_21 = arith.constant 1.000000e+00 : f32
    %33 = vector.broadcast %cst_21 : f32 to vector<8x128xf32>
    %34 = arith.addf %33, %32 : vector<8x128xf32>
    %35 = arith.divf %33, %34 : vector<8x128xf32>
    %36 = vector.extract_strided_slice %18 {offsets = [0, 256], sizes = [8, 128], strides = [1, 1]} : vector<8x512xf32> to vector<8x128xf32>
    %37 = math.tanh %36 : vector<8x128xf32>
    %38 = vector.extract_strided_slice %18 {offsets = [0, 384], sizes = [8, 128], strides = [1, 1]} : vector<8x512xf32> to vector<8x128xf32>
    %39 = arith.negf %38 : vector<8x128xf32>
    %40 = math.exp %39 : vector<8x128xf32>
    %cst_22 = arith.constant 1.000000e+00 : f32
    %41 = vector.broadcast %cst_22 : f32 to vector<8x128xf32>
    %42 = arith.addf %41, %40 : vector<8x128xf32>
    %43 = arith.divf %41, %42 : vector<8x128xf32>
    %44 = arith.mulf %35, %8 : vector<8x128xf32>
    %45 = arith.mulf %29, %37 : vector<8x128xf32>
    %46 = arith.addf %44, %45 : vector<8x128xf32>
    %47 = math.tanh %46 : vector<8x128xf32>
    %48 = arith.mulf %43, %47 : vector<8x128xf32>
    %49 = vector.extract_strided_slice %23 {offsets = [0, 0], sizes = [8, 128], strides = [1, 1]} : vector<8x512xf32> to vector<8x128xf32>
    %50 = arith.negf %49 : vector<8x128xf32>
    %51 = math.exp %50 : vector<8x128xf32>
    %cst_23 = arith.constant 1.000000e+00 : f32
    %52 = vector.broadcast %cst_23 : f32 to vector<8x128xf32>
    %53 = arith.addf %52, %51 : vector<8x128xf32>
    %54 = arith.divf %52, %53 : vector<8x128xf32>
    %55 = vector.extract_strided_slice %23 {offsets = [0, 128], sizes = [8, 128], strides = [1, 1]} : vector<8x512xf32> to vector<8x128xf32>
    %56 = arith.negf %55 : vector<8x128xf32>
    %57 = math.exp %56 : vector<8x128xf32>
    %cst_24 = arith.constant 1.000000e+00 : f32
    %58 = vector.broadcast %cst_24 : f32 to vector<8x128xf32>
    %59 = arith.addf %58, %57 : vector<8x128xf32>
    %60 = arith.divf %58, %59 : vector<8x128xf32>
    %61 = vector.extract_strided_slice %23 {offsets = [0, 256], sizes = [8, 128], strides = [1, 1]} : vector<8x512xf32> to vector<8x128xf32>
    %62 = math.tanh %61 : vector<8x128xf32>
    %63 = vector.extract_strided_slice %23 {offsets = [0, 384], sizes = [8, 128], strides = [1, 1]} : vector<8x512xf32> to vector<8x128xf32>
    %64 = arith.negf %63 : vector<8x128xf32>
    %65 = math.exp %64 : vector<8x128xf32>
    %cst_25 = arith.constant 1.000000e+00 : f32
    %66 = vector.broadcast %cst_25 : f32 to vector<8x128xf32>
    %67 = arith.addf %66, %65 : vector<8x128xf32>
    %68 = arith.divf %66, %67 : vector<8x128xf32>
    %69 = arith.mulf %60, %12 : vector<8x128xf32>
    %70 = arith.mulf %54, %62 : vector<8x128xf32>
    %71 = arith.addf %69, %70 : vector<8x128xf32>
    %72 = math.tanh %71 : vector<8x128xf32>
    %73 = arith.mulf %68, %72 : vector<8x128xf32>
    %74 = arith.index_cast %c0_i32_15 : i32 to index
    %c0_26 = arith.constant 0 : index
    %c0_27 = arith.constant 0 : index
    %75 = vector.load %arg19[%74, %c0_26, %c0_27] : memref<4x8x256xf32, #tpu.memory_space<vmem>>, vector<1x8x128xf32>
    %76 = vector.shape_cast %75 : vector<1x8x128xf32> to vector<8x128xf32>
    %77 = vector.shape_cast %48 : vector<8x128xf32> to vector<1x8x128xf32>
    tpu.vector_store %arg19[%74, %c0_26, %c0_27], %77 {strides = array<i32>} : memref<4x8x256xf32, #tpu.memory_space<vmem>>, vector<1x8x128xf32>,
    %78 = arith.index_cast %13 : i32 to index
    %c0_28 = arith.constant 0 : index
    %c128 = arith.constant 128 : index
    %79 = vector.load %arg19[%78, %c0_28, %c128] : memref<4x8x256xf32, #tpu.memory_space<vmem>>, vector<1x8x128xf32>
    %80 = vector.shape_cast %79 : vector<1x8x128xf32> to vector<8x128xf32>
    %81 = vector.shape_cast %73 : vector<8x128xf32> to vector<1x8x128xf32>
    tpu.vector_store %arg19[%78, %c0_28, %c128], %81 {strides = array<i32>} : memref<4x8x256xf32, #tpu.memory_space<vmem>>, vector<1x8x128xf32>,
    %c1_i32 = arith.constant 1 : i32
    %c3_i32_29 = arith.constant 3 : i32
    %82 = arith.subi %c3_i32_29, %c1_i32 : i32
    %83 = arith.index_cast %c1_i32 : i32 to index
    %c0_30 = arith.constant 0 : index
    %c0_31 = arith.constant 0 : index
    %84 = vector.load %arg17[%83, %c0_30, %c0_31] : memref<4x8x1024xf32, #tpu.memory_space<vmem>>, vector<1x8x512xf32>
    %85 = vector.shape_cast %84 : vector<1x8x512xf32> to vector<8x512xf32>
    %cst_32 = arith.constant dense<0.000000e+00> : vector<8x512xf32>
    %86 = tpu.matmul %48, %3, %cst_32 {dimension_numbers = #tpu.dot_dimension_numbers<[1], [0], [0], [1], [0, 0, 1, 1], [], []>} : vector<8x128xf32>, vector<128x512xf32>, vector<8x512xf32> -> vector<8x512xf32>
    %87 = arith.addf %85, %86 : vector<8x512xf32>
    %88 = arith.index_cast %82 : i32 to index
    %c0_33 = arith.constant 0 : index
    %c512_34 = arith.constant 512 : index
    %89 = vector.load %arg17[%88, %c0_33, %c512_34] : memref<4x8x1024xf32, #tpu.memory_space<vmem>>, vector<1x8x512xf32>
    %90 = vector.shape_cast %89 : vector<1x8x512xf32> to vector<8x512xf32>
    %cst_35 = arith.constant dense<0.000000e+00> : vector<8x512xf32>
    %91 = tpu.matmul %73, %4, %cst_35 {dimension_numbers = #tpu.dot_dimension_numbers<[1], [0], [0], [1], [0, 0, 1, 1], [], []>} : vector<8x128xf32>, vector<128x512xf32>, vector<8x512xf32> -> vector<8x512xf32>
    %92 = arith.addf %90, %91 : vector<8x512xf32>
    %93 = vector.extract_strided_slice %87 {offsets = [0, 0], sizes = [8, 128], strides = [1, 1]} : vector<8x512xf32> to vector<8x128xf32>
    %94 = arith.negf %93 : vector<8x128xf32>
    %95 = math.exp %94 : vector<8x128xf32>
    %cst_36 = arith.constant 1.000000e+00 : f32
    %96 = vector.broadcast %cst_36 : f32 to vector<8x128xf32>
    %97 = arith.addf %96, %95 : vector<8x128xf32>
    %98 = arith.divf %96, %97 : vector<8x128xf32>
    %99 = vector.extract_strided_slice %87 {offsets = [0, 128], sizes = [8, 128], strides = [1, 1]} : vector<8x512xf32> to vector<8x128xf32>
    %100 = arith.negf %99 : vector<8x128xf32>
    %101 = math.exp %100 : vector<8x128xf32>
    %cst_37 = arith.constant 1.000000e+00 : f32
    %102 = vector.broadcast %cst_37 : f32 to vector<8x128xf32>
    %103 = arith.addf %102, %101 : vector<8x128xf32>
    %104 = arith.divf %102, %103 : vector<8x128xf32>
    %105 = vector.extract_strided_slice %87 {offsets = [0, 256], sizes = [8, 128], strides = [1, 1]} : vector<8x512xf32> to vector<8x128xf32>
    %106 = math.tanh %105 : vector<8x128xf32>
    %107 = vector.extract_strided_slice %87 {offsets = [0, 384], sizes = [8, 128], strides = [1, 1]} : vector<8x512xf32> to vector<8x128xf32>
    %108 = arith.negf %107 : vector<8x128xf32>
    %109 = math.exp %108 : vector<8x128xf32>
    %cst_38 = arith.constant 1.000000e+00 : f32
    %110 = vector.broadcast %cst_38 : f32 to vector<8x128xf32>
    %111 = arith.addf %110, %109 : vector<8x128xf32>
    %112 = arith.divf %110, %111 : vector<8x128xf32>
    %113 = arith.mulf %104, %46 : vector<8x128xf32>
    %114 = arith.mulf %98, %106 : vector<8x128xf32>
    %115 = arith.addf %113, %114 : vector<8x128xf32>
    %116 = math.tanh %115 : vector<8x128xf32>
    %117 = arith.mulf %112, %116 : vector<8x128xf32>
    %118 = vector.extract_strided_slice %92 {offsets = [0, 0], sizes = [8, 128], strides = [1, 1]} : vector<8x512xf32> to vector<8x128xf32>
    %119 = arith.negf %118 : vector<8x128xf32>
    %120 = math.exp %119 : vector<8x128xf32>
    %cst_39 = arith.constant 1.000000e+00 : f32
    %121 = vector.broadcast %cst_39 : f32 to vector<8x128xf32>
    %122 = arith.addf %121, %120 : vector<8x128xf32>
    %123 = arith.divf %121, %122 : vector<8x128xf32>
    %124 = vector.extract_strided_slice %92 {offsets = [0, 128], sizes = [8, 128], strides = [1, 1]} : vector<8x512xf32> to vector<8x128xf32>
    %125 = arith.negf %124 : vector<8x128xf32>
    %126 = math.exp %125 : vector<8x128xf32>
    %cst_40 = arith.constant 1.000000e+00 : f32
    %127 = vector.broadcast %cst_40 : f32 to vector<8x128xf32>
    %128 = arith.addf %127, %126 : vector<8x128xf32>
    %129 = arith.divf %127, %128 : vector<8x128xf32>
    %130 = vector.extract_strided_slice %92 {offsets = [0, 256], sizes = [8, 128], strides = [1, 1]} : vector<8x512xf32> to vector<8x128xf32>
    %131 = math.tanh %130 : vector<8x128xf32>
    %132 = vector.extract_strided_slice %92 {offsets = [0, 384], sizes = [8, 128], strides = [1, 1]} : vector<8x512xf32> to vector<8x128xf32>
    %133 = arith.negf %132 : vector<8x128xf32>
    %134 = math.exp %133 : vector<8x128xf32>
    %cst_41 = arith.constant 1.000000e+00 : f32
    %135 = vector.broadcast %cst_41 : f32 to vector<8x128xf32>
    %136 = arith.addf %135, %134 : vector<8x128xf32>
    %137 = arith.divf %135, %136 : vector<8x128xf32>
    %138 = arith.mulf %129, %71 : vector<8x128xf32>
    %139 = arith.mulf %123, %131 : vector<8x128xf32>
    %140 = arith.addf %138, %139 : vector<8x128xf32>
    %141 = math.tanh %140 : vector<8x128xf32>
    %142 = arith.mulf %137, %141 : vector<8x128xf32>
    %143 = arith.index_cast %c1_i32 : i32 to index
    %c0_42 = arith.constant 0 : index
    %c0_43 = arith.constant 0 : index
    %144 = vector.load %arg19[%143, %c0_42, %c0_43] : memref<4x8x256xf32, #tpu.memory_space<vmem>>, vector<1x8x128xf32>
    %145 = vector.shape_cast %144 : vector<1x8x128xf32> to vector<8x128xf32>
    %146 = vector.shape_cast %117 : vector<8x128xf32> to vector<1x8x128xf32>
    tpu.vector_store %arg19[%143, %c0_42, %c0_43], %146 {strides = array<i32>} : memref<4x8x256xf32, #tpu.memory_space<vmem>>, vector<1x8x128xf32>,
    %147 = arith.index_cast %82 : i32 to index
    %c0_44 = arith.constant 0 : index
    %c128_45 = arith.constant 128 : index
    %148 = vector.load %arg19[%147, %c0_44, %c128_45] : memref<4x8x256xf32, #tpu.memory_space<vmem>>, vector<1x8x128xf32>
    %149 = vector.shape_cast %148 : vector<1x8x128xf32> to vector<8x128xf32>
    %150 = vector.shape_cast %142 : vector<8x128xf32> to vector<1x8x128xf32>
    tpu.vector_store %arg19[%147, %c0_44, %c128_45], %150 {strides = array<i32>} : memref<4x8x256xf32, #tpu.memory_space<vmem>>, vector<1x8x128xf32>,
    %c2_i32 = arith.constant 2 : i32
    %c3_i32_46 = arith.constant 3 : i32
    %151 = arith.subi %c3_i32_46, %c2_i32 : i32
    %152 = arith.index_cast %c2_i32 : i32 to index
    %c0_47 = arith.constant 0 : index
    %c0_48 = arith.constant 0 : index
    %153 = vector.load %arg17[%152, %c0_47, %c0_48] : memref<4x8x1024xf32, #tpu.memory_space<vmem>>, vector<1x8x512xf32>
    %154 = vector.shape_cast %153 : vector<1x8x512xf32> to vector<8x512xf32>
    %cst_49 = arith.constant dense<0.000000e+00> : vector<8x512xf32>
    %155 = tpu.matmul %117, %3, %cst_49 {dimension_numbers = #tpu.dot_dimension_numbers<[1], [0], [0], [1], [0, 0, 1, 1], [], []>} : vector<8x128xf32>, vector<128x512xf32>, vector<8x512xf32> -> vector<8x512xf32>
    %156 = arith.addf %154, %155 : vector<8x512xf32>
    %157 = arith.index_cast %151 : i32 to index
    %c0_50 = arith.constant 0 : index
    %c512_51 = arith.constant 512 : index
    %158 = vector.load %arg17[%157, %c0_50, %c512_51] : memref<4x8x1024xf32, #tpu.memory_space<vmem>>, vector<1x8x512xf32>
    %159 = vector.shape_cast %158 : vector<1x8x512xf32> to vector<8x512xf32>
    %cst_52 = arith.constant dense<0.000000e+00> : vector<8x512xf32>
    %160 = tpu.matmul %142, %4, %cst_52 {dimension_numbers = #tpu.dot_dimension_numbers<[1], [0], [0], [1], [0, 0, 1, 1], [], []>} : vector<8x128xf32>, vector<128x512xf32>, vector<8x512xf32> -> vector<8x512xf32>
    %161 = arith.addf %159, %160 : vector<8x512xf32>
    %162 = vector.extract_strided_slice %156 {offsets = [0, 0], sizes = [8, 128], strides = [1, 1]} : vector<8x512xf32> to vector<8x128xf32>
    %163 = arith.negf %162 : vector<8x128xf32>
    %164 = math.exp %163 : vector<8x128xf32>
    %cst_53 = arith.constant 1.000000e+00 : f32
    %165 = vector.broadcast %cst_53 : f32 to vector<8x128xf32>
    %166 = arith.addf %165, %164 : vector<8x128xf32>
    %167 = arith.divf %165, %166 : vector<8x128xf32>
    %168 = vector.extract_strided_slice %156 {offsets = [0, 128], sizes = [8, 128], strides = [1, 1]} : vector<8x512xf32> to vector<8x128xf32>
    %169 = arith.negf %168 : vector<8x128xf32>
    %170 = math.exp %169 : vector<8x128xf32>
    %cst_54 = arith.constant 1.000000e+00 : f32
    %171 = vector.broadcast %cst_54 : f32 to vector<8x128xf32>
    %172 = arith.addf %171, %170 : vector<8x128xf32>
    %173 = arith.divf %171, %172 : vector<8x128xf32>
    %174 = vector.extract_strided_slice %156 {offsets = [0, 256], sizes = [8, 128], strides = [1, 1]} : vector<8x512xf32> to vector<8x128xf32>
    %175 = math.tanh %174 : vector<8x128xf32>
    %176 = vector.extract_strided_slice %156 {offsets = [0, 384], sizes = [8, 128], strides = [1, 1]} : vector<8x512xf32> to vector<8x128xf32>
    %177 = arith.negf %176 : vector<8x128xf32>
    %178 = math.exp %177 : vector<8x128xf32>
    %cst_55 = arith.constant 1.000000e+00 : f32
    %179 = vector.broadcast %cst_55 : f32 to vector<8x128xf32>
    %180 = arith.addf %179, %178 : vector<8x128xf32>
    %181 = arith.divf %179, %180 : vector<8x128xf32>
    %182 = arith.mulf %173, %115 : vector<8x128xf32>
    %183 = arith.mulf %167, %175 : vector<8x128xf32>
    %184 = arith.addf %182, %183 : vector<8x128xf32>
    %185 = math.tanh %184 : vector<8x128xf32>
    %186 = arith.mulf %181, %185 : vector<8x128xf32>
    %187 = vector.extract_strided_slice %161 {offsets = [0, 0], sizes = [8, 128], strides = [1, 1]} : vector<8x512xf32> to vector<8x128xf32>
    %188 = arith.negf %187 : vector<8x128xf32>
    %189 = math.exp %188 : vector<8x128xf32>
    %cst_56 = arith.constant 1.000000e+00 : f32
    %190 = vector.broadcast %cst_56 : f32 to vector<8x128xf32>
    %191 = arith.addf %190, %189 : vector<8x128xf32>
    %192 = arith.divf %190, %191 : vector<8x128xf32>
    %193 = vector.extract_strided_slice %161 {offsets = [0, 128], sizes = [8, 128], strides = [1, 1]} : vector<8x512xf32> to vector<8x128xf32>
    %194 = arith.negf %193 : vector<8x128xf32>
    %195 = math.exp %194 : vector<8x128xf32>
    %cst_57 = arith.constant 1.000000e+00 : f32
    %196 = vector.broadcast %cst_57 : f32 to vector<8x128xf32>
    %197 = arith.addf %196, %195 : vector<8x128xf32>
    %198 = arith.divf %196, %197 : vector<8x128xf32>
    %199 = vector.extract_strided_slice %161 {offsets = [0, 256], sizes = [8, 128], strides = [1, 1]} : vector<8x512xf32> to vector<8x128xf32>
    %200 = math.tanh %199 : vector<8x128xf32>
    %201 = vector.extract_strided_slice %161 {offsets = [0, 384], sizes = [8, 128], strides = [1, 1]} : vector<8x512xf32> to vector<8x128xf32>
    %202 = arith.negf %201 : vector<8x128xf32>
    %203 = math.exp %202 : vector<8x128xf32>
    %cst_58 = arith.constant 1.000000e+00 : f32
    %204 = vector.broadcast %cst_58 : f32 to vector<8x128xf32>
    %205 = arith.addf %204, %203 : vector<8x128xf32>
    %206 = arith.divf %204, %205 : vector<8x128xf32>
    %207 = arith.mulf %198, %140 : vector<8x128xf32>
    %208 = arith.mulf %192, %200 : vector<8x128xf32>
    %209 = arith.addf %207, %208 : vector<8x128xf32>
    %210 = math.tanh %209 : vector<8x128xf32>
    %211 = arith.mulf %206, %210 : vector<8x128xf32>
    %212 = arith.index_cast %c2_i32 : i32 to index
    %c0_59 = arith.constant 0 : index
    %c0_60 = arith.constant 0 : index
    %213 = vector.load %arg19[%212, %c0_59, %c0_60] : memref<4x8x256xf32, #tpu.memory_space<vmem>>, vector<1x8x128xf32>
    %214 = vector.shape_cast %213 : vector<1x8x128xf32> to vector<8x128xf32>
    %215 = vector.shape_cast %186 : vector<8x128xf32> to vector<1x8x128xf32>
    tpu.vector_store %arg19[%212, %c0_59, %c0_60], %215 {strides = array<i32>} : memref<4x8x256xf32, #tpu.memory_space<vmem>>, vector<1x8x128xf32>,
    %216 = arith.index_cast %151 : i32 to index
    %c0_61 = arith.constant 0 : index
    %c128_62 = arith.constant 128 : index
    %217 = vector.load %arg19[%216, %c0_61, %c128_62] : memref<4x8x256xf32, #tpu.memory_space<vmem>>, vector<1x8x128xf32>
    %218 = vector.shape_cast %217 : vector<1x8x128xf32> to vector<8x128xf32>
    %219 = vector.shape_cast %211 : vector<8x128xf32> to vector<1x8x128xf32>
    tpu.vector_store %arg19[%216, %c0_61, %c128_62], %219 {strides = array<i32>} : memref<4x8x256xf32, #tpu.memory_space<vmem>>, vector<1x8x128xf32>,
    %c3_i32_63 = arith.constant 3 : i32
    %c3_i32_64 = arith.constant 3 : i32
    %220 = arith.subi %c3_i32_64, %c3_i32_63 : i32
    %221 = arith.index_cast %c3_i32_63 : i32 to index
    %c0_65 = arith.constant 0 : index
    %c0_66 = arith.constant 0 : index
    %222 = vector.load %arg17[%221, %c0_65, %c0_66] : memref<4x8x1024xf32, #tpu.memory_space<vmem>>, vector<1x8x512xf32>
    %223 = vector.shape_cast %222 : vector<1x8x512xf32> to vector<8x512xf32>
    %cst_67 = arith.constant dense<0.000000e+00> : vector<8x512xf32>
    %224 = tpu.matmul %186, %3, %cst_67 {dimension_numbers = #tpu.dot_dimension_numbers<[1], [0], [0], [1], [0, 0, 1, 1], [], []>} : vector<8x128xf32>, vector<128x512xf32>, vector<8x512xf32> -> vector<8x512xf32>
    %225 = arith.addf %223, %224 : vector<8x512xf32>
    %226 = arith.index_cast %220 : i32 to index
    %c0_68 = arith.constant 0 : index
    %c512_69 = arith.constant 512 : index
    %227 = vector.load %arg17[%226, %c0_68, %c512_69] : memref<4x8x1024xf32, #tpu.memory_space<vmem>>, vector<1x8x512xf32>
    %228 = vector.shape_cast %227 : vector<1x8x512xf32> to vector<8x512xf32>
    %cst_70 = arith.constant dense<0.000000e+00> : vector<8x512xf32>
    %229 = tpu.matmul %211, %4, %cst_70 {dimension_numbers = #tpu.dot_dimension_numbers<[1], [0], [0], [1], [0, 0, 1, 1], [], []>} : vector<8x128xf32>, vector<128x512xf32>, vector<8x512xf32> -> vector<8x512xf32>
    %230 = arith.addf %228, %229 : vector<8x512xf32>
    %231 = vector.extract_strided_slice %225 {offsets = [0, 0], sizes = [8, 128], strides = [1, 1]} : vector<8x512xf32> to vector<8x128xf32>
    %232 = arith.negf %231 : vector<8x128xf32>
    %233 = math.exp %232 : vector<8x128xf32>
    %cst_71 = arith.constant 1.000000e+00 : f32
    %234 = vector.broadcast %cst_71 : f32 to vector<8x128xf32>
    %235 = arith.addf %234, %233 : vector<8x128xf32>
    %236 = arith.divf %234, %235 : vector<8x128xf32>
    %237 = vector.extract_strided_slice %225 {offsets = [0, 128], sizes = [8, 128], strides = [1, 1]} : vector<8x512xf32> to vector<8x128xf32>
    %238 = arith.negf %237 : vector<8x128xf32>
    %239 = math.exp %238 : vector<8x128xf32>
    %cst_72 = arith.constant 1.000000e+00 : f32
    %240 = vector.broadcast %cst_72 : f32 to vector<8x128xf32>
    %241 = arith.addf %240, %239 : vector<8x128xf32>
    %242 = arith.divf %240, %241 : vector<8x128xf32>
    %243 = vector.extract_strided_slice %225 {offsets = [0, 256], sizes = [8, 128], strides = [1, 1]} : vector<8x512xf32> to vector<8x128xf32>
    %244 = math.tanh %243 : vector<8x128xf32>
    %245 = vector.extract_strided_slice %225 {offsets = [0, 384], sizes = [8, 128], strides = [1, 1]} : vector<8x512xf32> to vector<8x128xf32>
    %246 = arith.negf %245 : vector<8x128xf32>
    %247 = math.exp %246 : vector<8x128xf32>
    %cst_73 = arith.constant 1.000000e+00 : f32
    %248 = vector.broadcast %cst_73 : f32 to vector<8x128xf32>
    %249 = arith.addf %248, %247 : vector<8x128xf32>
    %250 = arith.divf %248, %249 : vector<8x128xf32>
    %251 = arith.mulf %242, %184 : vector<8x128xf32>
    %252 = arith.mulf %236, %244 : vector<8x128xf32>
    %253 = arith.addf %251, %252 : vector<8x128xf32>
    %254 = math.tanh %253 : vector<8x128xf32>
    %255 = arith.mulf %250, %254 : vector<8x128xf32>
    %256 = vector.extract_strided_slice %230 {offsets = [0, 0], sizes = [8, 128], strides = [1, 1]} : vector<8x512xf32> to vector<8x128xf32>
    %257 = arith.negf %256 : vector<8x128xf32>
    %258 = math.exp %257 : vector<8x128xf32>
    %cst_74 = arith.constant 1.000000e+00 : f32
    %259 = vector.broadcast %cst_74 : f32 to vector<8x128xf32>
    %260 = arith.addf %259, %258 : vector<8x128xf32>
    %261 = arith.divf %259, %260 : vector<8x128xf32>
    %262 = vector.extract_strided_slice %230 {offsets = [0, 128], sizes = [8, 128], strides = [1, 1]} : vector<8x512xf32> to vector<8x128xf32>
    %263 = arith.negf %262 : vector<8x128xf32>
    %264 = math.exp %263 : vector<8x128xf32>
    %cst_75 = arith.constant 1.000000e+00 : f32
    %265 = vector.broadcast %cst_75 : f32 to vector<8x128xf32>
    %266 = arith.addf %265, %264 : vector<8x128xf32>
    %267 = arith.divf %265, %266 : vector<8x128xf32>
    %268 = vector.extract_strided_slice %230 {offsets = [0, 256], sizes = [8, 128], strides = [1, 1]} : vector<8x512xf32> to vector<8x128xf32>
    %269 = math.tanh %268 : vector<8x128xf32>
    %270 = vector.extract_strided_slice %230 {offsets = [0, 384], sizes = [8, 128], strides = [1, 1]} : vector<8x512xf32> to vector<8x128xf32>
    %271 = arith.negf %270 : vector<8x128xf32>
    %272 = math.exp %271 : vector<8x128xf32>
    %cst_76 = arith.constant 1.000000e+00 : f32
    %273 = vector.broadcast %cst_76 : f32 to vector<8x128xf32>
    %274 = arith.addf %273, %272 : vector<8x128xf32>
    %275 = arith.divf %273, %274 : vector<8x128xf32>
    %276 = arith.mulf %267, %209 : vector<8x128xf32>
    %277 = arith.mulf %261, %269 : vector<8x128xf32>
    %278 = arith.addf %276, %277 : vector<8x128xf32>
    %279 = math.tanh %278 : vector<8x128xf32>
    %280 = arith.mulf %275, %279 : vector<8x128xf32>
    %281 = arith.index_cast %c3_i32_63 : i32 to index
    %c0_77 = arith.constant 0 : index
    %c0_78 = arith.constant 0 : index
    %282 = vector.load %arg19[%281, %c0_77, %c0_78] : memref<4x8x256xf32, #tpu.memory_space<vmem>>, vector<1x8x128xf32>
    %283 = vector.shape_cast %282 : vector<1x8x128xf32> to vector<8x128xf32>
    %284 = vector.shape_cast %255 : vector<8x128xf32> to vector<1x8x128xf32>
    tpu.vector_store %arg19[%281, %c0_77, %c0_78], %284 {strides = array<i32>} : memref<4x8x256xf32, #tpu.memory_space<vmem>>, vector<1x8x128xf32>,
    %285 = arith.index_cast %220 : i32 to index
    %c0_79 = arith.constant 0 : index
    %c128_80 = arith.constant 128 : index
    %286 = vector.load %arg19[%285, %c0_79, %c128_80] : memref<4x8x256xf32, #tpu.memory_space<vmem>>, vector<1x8x128xf32>
    %287 = vector.shape_cast %286 : vector<1x8x128xf32> to vector<8x128xf32>
    %288 = vector.shape_cast %280 : vector<8x128xf32> to vector<1x8x128xf32>
    tpu.vector_store %arg19[%285, %c0_79, %c128_80], %288 {strides = array<i32>} : memref<4x8x256xf32, #tpu.memory_space<vmem>>, vector<1x8x128xf32>,
    %c4_i32 = arith.constant 4 : i32
    %c0_81 = arith.constant 0 : index
    %c0_82 = arith.constant 0 : index
    %c0_83 = arith.constant 0 : index
    %289 = vector.load %arg15[%c0_81, %c0_82, %c0_83] : memref<4x8x128xf32, #tpu.memory_space<vmem>>, vector<1x8x128xf32>
    %290 = vector.shape_cast %289 : vector<1x8x128xf32> to vector<8x128xf32>
    %291 = vector.shape_cast %255 : vector<8x128xf32> to vector<1x8x128xf32>
    tpu.vector_store %arg15[%c0_81, %c0_82, %c0_83], %291 {strides = array<i32>} : memref<4x8x128xf32, #tpu.memory_space<vmem>>, vector<1x8x128xf32>,
    %c0_84 = arith.constant 0 : index
    %c0_85 = arith.constant 0 : index
    %c0_86 = arith.constant 0 : index
    %292 = vector.load %arg16[%c0_84, %c0_85, %c0_86] : memref<4x8x128xf32, #tpu.memory_space<vmem>>, vector<1x8x128xf32>
    %293 = vector.shape_cast %292 : vector<1x8x128xf32> to vector<8x128xf32>
    %294 = vector.shape_cast %253 : vector<8x128xf32> to vector<1x8x128xf32>
    tpu.vector_store %arg16[%c0_84, %c0_85, %c0_86], %294 {strides = array<i32>} : memref<4x8x128xf32, #tpu.memory_space<vmem>>, vector<1x8x128xf32>,
    %c1_87 = arith.constant 1 : index
    %c0_88 = arith.constant 0 : index
    %c0_89 = arith.constant 0 : index
    %295 = vector.load %arg15[%c1_87, %c0_88, %c0_89] : memref<4x8x128xf32, #tpu.memory_space<vmem>>, vector<1x8x128xf32>
    %296 = vector.shape_cast %295 : vector<1x8x128xf32> to vector<8x128xf32>
    %297 = vector.shape_cast %280 : vector<8x128xf32> to vector<1x8x128xf32>
    tpu.vector_store %arg15[%c1_87, %c0_88, %c0_89], %297 {strides = array<i32>} : memref<4x8x128xf32, #tpu.memory_space<vmem>>, vector<1x8x128xf32>,
    %c1_90 = arith.constant 1 : index
    %c0_91 = arith.constant 0 : index
    %c0_92 = arith.constant 0 : index
    %298 = vector.load %arg16[%c1_90, %c0_91, %c0_92] : memref<4x8x128xf32, #tpu.memory_space<vmem>>, vector<1x8x128xf32>
    %299 = vector.shape_cast %298 : vector<1x8x128xf32> to vector<8x128xf32>
    %300 = vector.shape_cast %278 : vector<8x128xf32> to vector<1x8x128xf32>
    tpu.vector_store %arg16[%c1_90, %c0_91, %c0_92], %300 {strides = array<i32>} : memref<4x8x128xf32, #tpu.memory_space<vmem>>, vector<1x8x128xf32>,
    %c0_93 = arith.constant 0 : index
    %c0_94 = arith.constant 0 : index
    %c0_95 = arith.constant 0 : index
    %301 = vector.load %arg19[%c0_93, %c0_94, %c0_95] : memref<4x8x256xf32, #tpu.memory_space<vmem>>, vector<4x8x256xf32>
    %302 = vector.shape_cast %301 : vector<4x8x256xf32> to vector<32x256xf32>
    %c0_96 = arith.constant 0 : index
    %c0_97 = arith.constant 0 : index
    %303 = vector.load %arg8[%c0_96, %c0_97] : memref<256x1024xf32, #tpu.memory_space<vmem>>, vector<256x1024xf32>
    %cst_98 = arith.constant dense<0.000000e+00> : vector<32x1024xf32>
    %304 = tpu.matmul %302, %303, %cst_98 {dimension_numbers = #tpu.dot_dimension_numbers<[1], [0], [0], [1], [0, 0, 1, 1], [], []>} : vector<32x256xf32>, vector<256x1024xf32>, vector<32x1024xf32> -> vector<32x1024xf32>
    %c0_99 = arith.constant 0 : index
    %c0_100 = arith.constant 0 : index
    %305 = vector.load %arg11[%c0_99, %c0_100] : memref<1x1024xf32, #tpu.memory_space<vmem>>, vector<1x1024xf32>
    %306 = vector.broadcast %305 : vector<1x1024xf32> to vector<32x1024xf32>
    %307 = arith.addf %304, %306 : vector<32x1024xf32>
    %308 = vector.shape_cast %307 : vector<32x1024xf32> to vector<4x8x1024xf32>
    %c0_101 = arith.constant 0 : index
    %c0_102 = arith.constant 0 : index
    %c0_103 = arith.constant 0 : index
    %309 = vector.load %arg18[%c0_101, %c0_102, %c0_103] : memref<4x8x1024xf32, #tpu.memory_space<vmem>>, vector<4x8x1024xf32>
    tpu.vector_store %arg18[%c0_101, %c0_102, %c0_103], %308 {strides = array<i32>} : memref<4x8x1024xf32, #tpu.memory_space<vmem>>, vector<4x8x1024xf32>,
    %c0_104 = arith.constant 0 : index
    %c0_105 = arith.constant 0 : index
    %310 = vector.load %arg9[%c0_104, %c0_105] : memref<128x512xf32, #tpu.memory_space<vmem>>, vector<128x512xf32>
    %c0_106 = arith.constant 0 : index
    %c0_107 = arith.constant 0 : index
    %311 = vector.load %arg10[%c0_106, %c0_107] : memref<128x512xf32, #tpu.memory_space<vmem>>, vector<128x512xf32>
    %c2 = arith.constant 2 : index
    %c0_108 = arith.constant 0 : index
    %c0_109 = arith.constant 0 : index
    %312 = vector.load %arg15[%c2, %c0_108, %c0_109] : memref<4x8x128xf32, #tpu.memory_space<vmem>>, vector<1x8x128xf32>
    %313 = vector.shape_cast %312 : vector<1x8x128xf32> to vector<8x128xf32>
    %c2_110 = arith.constant 2 : index
    %c0_111 = arith.constant 0 : index
    %c0_112 = arith.constant 0 : index
    %314 = vector.load %arg16[%c2_110, %c0_111, %c0_112] : memref<4x8x128xf32, #tpu.memory_space<vmem>>, vector<1x8x128xf32>
    %315 = vector.shape_cast %314 : vector<1x8x128xf32> to vector<8x128xf32>
    %c3 = arith.constant 3 : index
    %c0_113 = arith.constant 0 : index
    %c0_114 = arith.constant 0 : index
    %316 = vector.load %arg15[%c3, %c0_113, %c0_114] : memref<4x8x128xf32, #tpu.memory_space<vmem>>, vector<1x8x128xf32>
    %317 = vector.shape_cast %316 : vector<1x8x128xf32> to vector<8x128xf32>
    %c3_115 = arith.constant 3 : index
    %c0_116 = arith.constant 0 : index
    %c0_117 = arith.constant 0 : index
    %318 = vector.load %arg16[%c3_115, %c0_116, %c0_117] : memref<4x8x128xf32, #tpu.memory_space<vmem>>, vector<1x8x128xf32>
    %319 = vector.shape_cast %318 : vector<1x8x128xf32> to vector<8x128xf32>
    %c0_i32_118 = arith.constant 0 : i32
    %c3_i32_119 = arith.constant 3 : i32
    %320 = arith.subi %c3_i32_119, %c0_i32_118 : i32
    %321 = arith.index_cast %c0_i32_118 : i32 to index
    %c0_120 = arith.constant 0 : index
    %c0_121 = arith.constant 0 : index
    %322 = vector.load %arg18[%321, %c0_120, %c0_121] : memref<4x8x1024xf32, #tpu.memory_space<vmem>>, vector<1x8x512xf32>
    %323 = vector.shape_cast %322 : vector<1x8x512xf32> to vector<8x512xf32>
    %cst_122 = arith.constant dense<0.000000e+00> : vector<8x512xf32>
    %324 = tpu.matmul %313, %310, %cst_122 {dimension_numbers = #tpu.dot_dimension_numbers<[1], [0], [0], [1], [0, 0, 1, 1], [], []>} : vector<8x128xf32>, vector<128x512xf32>, vector<8x512xf32> -> vector<8x512xf32>
    %325 = arith.addf %323, %324 : vector<8x512xf32>
    %326 = arith.index_cast %320 : i32 to index
    %c0_123 = arith.constant 0 : index
    %c512_124 = arith.constant 512 : index
    %327 = vector.load %arg18[%326, %c0_123, %c512_124] : memref<4x8x1024xf32, #tpu.memory_space<vmem>>, vector<1x8x512xf32>
    %328 = vector.shape_cast %327 : vector<1x8x512xf32> to vector<8x512xf32>
    %cst_125 = arith.constant dense<0.000000e+00> : vector<8x512xf32>
    %329 = tpu.matmul %317, %311, %cst_125 {dimension_numbers = #tpu.dot_dimension_numbers<[1], [0], [0], [1], [0, 0, 1, 1], [], []>} : vector<8x128xf32>, vector<128x512xf32>, vector<8x512xf32> -> vector<8x512xf32>
    %330 = arith.addf %328, %329 : vector<8x512xf32>
    %331 = vector.extract_strided_slice %325 {offsets = [0, 0], sizes = [8, 128], strides = [1, 1]} : vector<8x512xf32> to vector<8x128xf32>
    %332 = arith.negf %331 : vector<8x128xf32>
    %333 = math.exp %332 : vector<8x128xf32>
    %cst_126 = arith.constant 1.000000e+00 : f32
    %334 = vector.broadcast %cst_126 : f32 to vector<8x128xf32>
    %335 = arith.addf %334, %333 : vector<8x128xf32>
    %336 = arith.divf %334, %335 : vector<8x128xf32>
    %337 = vector.extract_strided_slice %325 {offsets = [0, 128], sizes = [8, 128], strides = [1, 1]} : vector<8x512xf32> to vector<8x128xf32>
    %338 = arith.negf %337 : vector<8x128xf32>
    %339 = math.exp %338 : vector<8x128xf32>
    %cst_127 = arith.constant 1.000000e+00 : f32
    %340 = vector.broadcast %cst_127 : f32 to vector<8x128xf32>
    %341 = arith.addf %340, %339 : vector<8x128xf32>
    %342 = arith.divf %340, %341 : vector<8x128xf32>
    %343 = vector.extract_strided_slice %325 {offsets = [0, 256], sizes = [8, 128], strides = [1, 1]} : vector<8x512xf32> to vector<8x128xf32>
    %344 = math.tanh %343 : vector<8x128xf32>
    %345 = vector.extract_strided_slice %325 {offsets = [0, 384], sizes = [8, 128], strides = [1, 1]} : vector<8x512xf32> to vector<8x128xf32>
    %346 = arith.negf %345 : vector<8x128xf32>
    %347 = math.exp %346 : vector<8x128xf32>
    %cst_128 = arith.constant 1.000000e+00 : f32
    %348 = vector.broadcast %cst_128 : f32 to vector<8x128xf32>
    %349 = arith.addf %348, %347 : vector<8x128xf32>
    %350 = arith.divf %348, %349 : vector<8x128xf32>
    %351 = arith.mulf %342, %315 : vector<8x128xf32>
    %352 = arith.mulf %336, %344 : vector<8x128xf32>
    %353 = arith.addf %351, %352 : vector<8x128xf32>
    %354 = math.tanh %353 : vector<8x128xf32>
    %355 = arith.mulf %350, %354 : vector<8x128xf32>
    %356 = vector.extract_strided_slice %330 {offsets = [0, 0], sizes = [8, 128], strides = [1, 1]} : vector<8x512xf32> to vector<8x128xf32>
    %357 = arith.negf %356 : vector<8x128xf32>
    %358 = math.exp %357 : vector<8x128xf32>
    %cst_129 = arith.constant 1.000000e+00 : f32
    %359 = vector.broadcast %cst_129 : f32 to vector<8x128xf32>
    %360 = arith.addf %359, %358 : vector<8x128xf32>
    %361 = arith.divf %359, %360 : vector<8x128xf32>
    %362 = vector.extract_strided_slice %330 {offsets = [0, 128], sizes = [8, 128], strides = [1, 1]} : vector<8x512xf32> to vector<8x128xf32>
    %363 = arith.negf %362 : vector<8x128xf32>
    %364 = math.exp %363 : vector<8x128xf32>
    %cst_130 = arith.constant 1.000000e+00 : f32
    %365 = vector.broadcast %cst_130 : f32 to vector<8x128xf32>
    %366 = arith.addf %365, %364 : vector<8x128xf32>
    %367 = arith.divf %365, %366 : vector<8x128xf32>
    %368 = vector.extract_strided_slice %330 {offsets = [0, 256], sizes = [8, 128], strides = [1, 1]} : vector<8x512xf32> to vector<8x128xf32>
    %369 = math.tanh %368 : vector<8x128xf32>
    %370 = vector.extract_strided_slice %330 {offsets = [0, 384], sizes = [8, 128], strides = [1, 1]} : vector<8x512xf32> to vector<8x128xf32>
    %371 = arith.negf %370 : vector<8x128xf32>
    %372 = math.exp %371 : vector<8x128xf32>
    %cst_131 = arith.constant 1.000000e+00 : f32
    %373 = vector.broadcast %cst_131 : f32 to vector<8x128xf32>
    %374 = arith.addf %373, %372 : vector<8x128xf32>
    %375 = arith.divf %373, %374 : vector<8x128xf32>
    %376 = arith.mulf %367, %319 : vector<8x128xf32>
    %377 = arith.mulf %361, %369 : vector<8x128xf32>
    %378 = arith.addf %376, %377 : vector<8x128xf32>
    %379 = math.tanh %378 : vector<8x128xf32>
    %380 = arith.mulf %375, %379 : vector<8x128xf32>
    %381 = arith.index_cast %c0_i32_118 : i32 to index
    %c0_132 = arith.constant 0 : index
    %c0_133 = arith.constant 0 : index
    %382 = vector.load %arg19[%381, %c0_132, %c0_133] : memref<4x8x256xf32, #tpu.memory_space<vmem>>, vector<1x8x128xf32>
    %383 = vector.shape_cast %382 : vector<1x8x128xf32> to vector<8x128xf32>
    %384 = vector.shape_cast %355 : vector<8x128xf32> to vector<1x8x128xf32>
    tpu.vector_store %arg19[%381, %c0_132, %c0_133], %384 {strides = array<i32>} : memref<4x8x256xf32, #tpu.memory_space<vmem>>, vector<1x8x128xf32>,
    %385 = arith.index_cast %320 : i32 to index
    %c0_134 = arith.constant 0 : index
    %c128_135 = arith.constant 128 : index
    %386 = vector.load %arg19[%385, %c0_134, %c128_135] : memref<4x8x256xf32, #tpu.memory_space<vmem>>, vector<1x8x128xf32>
    %387 = vector.shape_cast %386 : vector<1x8x128xf32> to vector<8x128xf32>
    %388 = vector.shape_cast %380 : vector<8x128xf32> to vector<1x8x128xf32>
    tpu.vector_store %arg19[%385, %c0_134, %c128_135], %388 {strides = array<i32>} : memref<4x8x256xf32, #tpu.memory_space<vmem>>, vector<1x8x128xf32>,
    %c1_i32_136 = arith.constant 1 : i32
    %c3_i32_137 = arith.constant 3 : i32
    %389 = arith.subi %c3_i32_137, %c1_i32_136 : i32
    %390 = arith.index_cast %c1_i32_136 : i32 to index
    %c0_138 = arith.constant 0 : index
    %c0_139 = arith.constant 0 : index
    %391 = vector.load %arg18[%390, %c0_138, %c0_139] : memref<4x8x1024xf32, #tpu.memory_space<vmem>>, vector<1x8x512xf32>
    %392 = vector.shape_cast %391 : vector<1x8x512xf32> to vector<8x512xf32>
    %cst_140 = arith.constant dense<0.000000e+00> : vector<8x512xf32>
    %393 = tpu.matmul %355, %310, %cst_140 {dimension_numbers = #tpu.dot_dimension_numbers<[1], [0], [0], [1], [0, 0, 1, 1], [], []>} : vector<8x128xf32>, vector<128x512xf32>, vector<8x512xf32> -> vector<8x512xf32>
    %394 = arith.addf %392, %393 : vector<8x512xf32>
    %395 = arith.index_cast %389 : i32 to index
    %c0_141 = arith.constant 0 : index
    %c512_142 = arith.constant 512 : index
    %396 = vector.load %arg18[%395, %c0_141, %c512_142] : memref<4x8x1024xf32, #tpu.memory_space<vmem>>, vector<1x8x512xf32>
    %397 = vector.shape_cast %396 : vector<1x8x512xf32> to vector<8x512xf32>
    %cst_143 = arith.constant dense<0.000000e+00> : vector<8x512xf32>
    %398 = tpu.matmul %380, %311, %cst_143 {dimension_numbers = #tpu.dot_dimension_numbers<[1], [0], [0], [1], [0, 0, 1, 1], [], []>} : vector<8x128xf32>, vector<128x512xf32>, vector<8x512xf32> -> vector<8x512xf32>
    %399 = arith.addf %397, %398 : vector<8x512xf32>
    %400 = vector.extract_strided_slice %394 {offsets = [0, 0], sizes = [8, 128], strides = [1, 1]} : vector<8x512xf32> to vector<8x128xf32>
    %401 = arith.negf %400 : vector<8x128xf32>
    %402 = math.exp %401 : vector<8x128xf32>
    %cst_144 = arith.constant 1.000000e+00 : f32
    %403 = vector.broadcast %cst_144 : f32 to vector<8x128xf32>
    %404 = arith.addf %403, %402 : vector<8x128xf32>
    %405 = arith.divf %403, %404 : vector<8x128xf32>
    %406 = vector.extract_strided_slice %394 {offsets = [0, 128], sizes = [8, 128], strides = [1, 1]} : vector<8x512xf32> to vector<8x128xf32>
    %407 = arith.negf %406 : vector<8x128xf32>
    %408 = math.exp %407 : vector<8x128xf32>
    %cst_145 = arith.constant 1.000000e+00 : f32
    %409 = vector.broadcast %cst_145 : f32 to vector<8x128xf32>
    %410 = arith.addf %409, %408 : vector<8x128xf32>
    %411 = arith.divf %409, %410 : vector<8x128xf32>
    %412 = vector.extract_strided_slice %394 {offsets = [0, 256], sizes = [8, 128], strides = [1, 1]} : vector<8x512xf32> to vector<8x128xf32>
    %413 = math.tanh %412 : vector<8x128xf32>
    %414 = vector.extract_strided_slice %394 {offsets = [0, 384], sizes = [8, 128], strides = [1, 1]} : vector<8x512xf32> to vector<8x128xf32>
    %415 = arith.negf %414 : vector<8x128xf32>
    %416 = math.exp %415 : vector<8x128xf32>
    %cst_146 = arith.constant 1.000000e+00 : f32
    %417 = vector.broadcast %cst_146 : f32 to vector<8x128xf32>
    %418 = arith.addf %417, %416 : vector<8x128xf32>
    %419 = arith.divf %417, %418 : vector<8x128xf32>
    %420 = arith.mulf %411, %353 : vector<8x128xf32>
    %421 = arith.mulf %405, %413 : vector<8x128xf32>
    %422 = arith.addf %420, %421 : vector<8x128xf32>
    %423 = math.tanh %422 : vector<8x128xf32>
    %424 = arith.mulf %419, %423 : vector<8x128xf32>
    %425 = vector.extract_strided_slice %399 {offsets = [0, 0], sizes = [8, 128], strides = [1, 1]} : vector<8x512xf32> to vector<8x128xf32>
    %426 = arith.negf %425 : vector<8x128xf32>
    %427 = math.exp %426 : vector<8x128xf32>
    %cst_147 = arith.constant 1.000000e+00 : f32
    %428 = vector.broadcast %cst_147 : f32 to vector<8x128xf32>
    %429 = arith.addf %428, %427 : vector<8x128xf32>
    %430 = arith.divf %428, %429 : vector<8x128xf32>
    %431 = vector.extract_strided_slice %399 {offsets = [0, 128], sizes = [8, 128], strides = [1, 1]} : vector<8x512xf32> to vector<8x128xf32>
    %432 = arith.negf %431 : vector<8x128xf32>
    %433 = math.exp %432 : vector<8x128xf32>
    %cst_148 = arith.constant 1.000000e+00 : f32
    %434 = vector.broadcast %cst_148 : f32 to vector<8x128xf32>
    %435 = arith.addf %434, %433 : vector<8x128xf32>
    %436 = arith.divf %434, %435 : vector<8x128xf32>
    %437 = vector.extract_strided_slice %399 {offsets = [0, 256], sizes = [8, 128], strides = [1, 1]} : vector<8x512xf32> to vector<8x128xf32>
    %438 = math.tanh %437 : vector<8x128xf32>
    %439 = vector.extract_strided_slice %399 {offsets = [0, 384], sizes = [8, 128], strides = [1, 1]} : vector<8x512xf32> to vector<8x128xf32>
    %440 = arith.negf %439 : vector<8x128xf32>
    %441 = math.exp %440 : vector<8x128xf32>
    %cst_149 = arith.constant 1.000000e+00 : f32
    %442 = vector.broadcast %cst_149 : f32 to vector<8x128xf32>
    %443 = arith.addf %442, %441 : vector<8x128xf32>
    %444 = arith.divf %442, %443 : vector<8x128xf32>
    %445 = arith.mulf %436, %378 : vector<8x128xf32>
    %446 = arith.mulf %430, %438 : vector<8x128xf32>
    %447 = arith.addf %445, %446 : vector<8x128xf32>
    %448 = math.tanh %447 : vector<8x128xf32>
    %449 = arith.mulf %444, %448 : vector<8x128xf32>
    %450 = arith.index_cast %c1_i32_136 : i32 to index
    %c0_150 = arith.constant 0 : index
    %c0_151 = arith.constant 0 : index
    %451 = vector.load %arg19[%450, %c0_150, %c0_151] : memref<4x8x256xf32, #tpu.memory_space<vmem>>, vector<1x8x128xf32>
    %452 = vector.shape_cast %451 : vector<1x8x128xf32> to vector<8x128xf32>
    %453 = vector.shape_cast %424 : vector<8x128xf32> to vector<1x8x128xf32>
    tpu.vector_store %arg19[%450, %c0_150, %c0_151], %453 {strides = array<i32>} : memref<4x8x256xf32, #tpu.memory_space<vmem>>, vector<1x8x128xf32>,
    %454 = arith.index_cast %389 : i32 to index
    %c0_152 = arith.constant 0 : index
    %c128_153 = arith.constant 128 : index
    %455 = vector.load %arg19[%454, %c0_152, %c128_153] : memref<4x8x256xf32, #tpu.memory_space<vmem>>, vector<1x8x128xf32>
    %456 = vector.shape_cast %455 : vector<1x8x128xf32> to vector<8x128xf32>
    %457 = vector.shape_cast %449 : vector<8x128xf32> to vector<1x8x128xf32>
    tpu.vector_store %arg19[%454, %c0_152, %c128_153], %457 {strides = array<i32>} : memref<4x8x256xf32, #tpu.memory_space<vmem>>, vector<1x8x128xf32>,
    %c2_i32_154 = arith.constant 2 : i32
    %c3_i32_155 = arith.constant 3 : i32
    %458 = arith.subi %c3_i32_155, %c2_i32_154 : i32
    %459 = arith.index_cast %c2_i32_154 : i32 to index
    %c0_156 = arith.constant 0 : index
    %c0_157 = arith.constant 0 : index
    %460 = vector.load %arg18[%459, %c0_156, %c0_157] : memref<4x8x1024xf32, #tpu.memory_space<vmem>>, vector<1x8x512xf32>
    %461 = vector.shape_cast %460 : vector<1x8x512xf32> to vector<8x512xf32>
    %cst_158 = arith.constant dense<0.000000e+00> : vector<8x512xf32>
    %462 = tpu.matmul %424, %310, %cst_158 {dimension_numbers = #tpu.dot_dimension_numbers<[1], [0], [0], [1], [0, 0, 1, 1], [], []>} : vector<8x128xf32>, vector<128x512xf32>, vector<8x512xf32> -> vector<8x512xf32>
    %463 = arith.addf %461, %462 : vector<8x512xf32>
    %464 = arith.index_cast %458 : i32 to index
    %c0_159 = arith.constant 0 : index
    %c512_160 = arith.constant 512 : index
    %465 = vector.load %arg18[%464, %c0_159, %c512_160] : memref<4x8x1024xf32, #tpu.memory_space<vmem>>, vector<1x8x512xf32>
    %466 = vector.shape_cast %465 : vector<1x8x512xf32> to vector<8x512xf32>
    %cst_161 = arith.constant dense<0.000000e+00> : vector<8x512xf32>
    %467 = tpu.matmul %449, %311, %cst_161 {dimension_numbers = #tpu.dot_dimension_numbers<[1], [0], [0], [1], [0, 0, 1, 1], [], []>} : vector<8x128xf32>, vector<128x512xf32>, vector<8x512xf32> -> vector<8x512xf32>
    %468 = arith.addf %466, %467 : vector<8x512xf32>
    %469 = vector.extract_strided_slice %463 {offsets = [0, 0], sizes = [8, 128], strides = [1, 1]} : vector<8x512xf32> to vector<8x128xf32>
    %470 = arith.negf %469 : vector<8x128xf32>
    %471 = math.exp %470 : vector<8x128xf32>
    %cst_162 = arith.constant 1.000000e+00 : f32
    %472 = vector.broadcast %cst_162 : f32 to vector<8x128xf32>
    %473 = arith.addf %472, %471 : vector<8x128xf32>
    %474 = arith.divf %472, %473 : vector<8x128xf32>
    %475 = vector.extract_strided_slice %463 {offsets = [0, 128], sizes = [8, 128], strides = [1, 1]} : vector<8x512xf32> to vector<8x128xf32>
    %476 = arith.negf %475 : vector<8x128xf32>
    %477 = math.exp %476 : vector<8x128xf32>
    %cst_163 = arith.constant 1.000000e+00 : f32
    %478 = vector.broadcast %cst_163 : f32 to vector<8x128xf32>
    %479 = arith.addf %478, %477 : vector<8x128xf32>
    %480 = arith.divf %478, %479 : vector<8x128xf32>
    %481 = vector.extract_strided_slice %463 {offsets = [0, 256], sizes = [8, 128], strides = [1, 1]} : vector<8x512xf32> to vector<8x128xf32>
    %482 = math.tanh %481 : vector<8x128xf32>
    %483 = vector.extract_strided_slice %463 {offsets = [0, 384], sizes = [8, 128], strides = [1, 1]} : vector<8x512xf32> to vector<8x128xf32>
    %484 = arith.negf %483 : vector<8x128xf32>
    %485 = math.exp %484 : vector<8x128xf32>
    %cst_164 = arith.constant 1.000000e+00 : f32
    %486 = vector.broadcast %cst_164 : f32 to vector<8x128xf32>
    %487 = arith.addf %486, %485 : vector<8x128xf32>
    %488 = arith.divf %486, %487 : vector<8x128xf32>
    %489 = arith.mulf %480, %422 : vector<8x128xf32>
    %490 = arith.mulf %474, %482 : vector<8x128xf32>
    %491 = arith.addf %489, %490 : vector<8x128xf32>
    %492 = math.tanh %491 : vector<8x128xf32>
    %493 = arith.mulf %488, %492 : vector<8x128xf32>
    %494 = vector.extract_strided_slice %468 {offsets = [0, 0], sizes = [8, 128], strides = [1, 1]} : vector<8x512xf32> to vector<8x128xf32>
    %495 = arith.negf %494 : vector<8x128xf32>
    %496 = math.exp %495 : vector<8x128xf32>
    %cst_165 = arith.constant 1.000000e+00 : f32
    %497 = vector.broadcast %cst_165 : f32 to vector<8x128xf32>
    %498 = arith.addf %497, %496 : vector<8x128xf32>
    %499 = arith.divf %497, %498 : vector<8x128xf32>
    %500 = vector.extract_strided_slice %468 {offsets = [0, 128], sizes = [8, 128], strides = [1, 1]} : vector<8x512xf32> to vector<8x128xf32>
    %501 = arith.negf %500 : vector<8x128xf32>
    %502 = math.exp %501 : vector<8x128xf32>
    %cst_166 = arith.constant 1.000000e+00 : f32
    %503 = vector.broadcast %cst_166 : f32 to vector<8x128xf32>
    %504 = arith.addf %503, %502 : vector<8x128xf32>
    %505 = arith.divf %503, %504 : vector<8x128xf32>
    %506 = vector.extract_strided_slice %468 {offsets = [0, 256], sizes = [8, 128], strides = [1, 1]} : vector<8x512xf32> to vector<8x128xf32>
    %507 = math.tanh %506 : vector<8x128xf32>
    %508 = vector.extract_strided_slice %468 {offsets = [0, 384], sizes = [8, 128], strides = [1, 1]} : vector<8x512xf32> to vector<8x128xf32>
    %509 = arith.negf %508 : vector<8x128xf32>
    %510 = math.exp %509 : vector<8x128xf32>
    %cst_167 = arith.constant 1.000000e+00 : f32
    %511 = vector.broadcast %cst_167 : f32 to vector<8x128xf32>
    %512 = arith.addf %511, %510 : vector<8x128xf32>
    %513 = arith.divf %511, %512 : vector<8x128xf32>
    %514 = arith.mulf %505, %447 : vector<8x128xf32>
    %515 = arith.mulf %499, %507 : vector<8x128xf32>
    %516 = arith.addf %514, %515 : vector<8x128xf32>
    %517 = math.tanh %516 : vector<8x128xf32>
    %518 = arith.mulf %513, %517 : vector<8x128xf32>
    %519 = arith.index_cast %c2_i32_154 : i32 to index
    %c0_168 = arith.constant 0 : index
    %c0_169 = arith.constant 0 : index
    %520 = vector.load %arg19[%519, %c0_168, %c0_169] : memref<4x8x256xf32, #tpu.memory_space<vmem>>, vector<1x8x128xf32>
    %521 = vector.shape_cast %520 : vector<1x8x128xf32> to vector<8x128xf32>
    %522 = vector.shape_cast %493 : vector<8x128xf32> to vector<1x8x128xf32>
    tpu.vector_store %arg19[%519, %c0_168, %c0_169], %522 {strides = array<i32>} : memref<4x8x256xf32, #tpu.memory_space<vmem>>, vector<1x8x128xf32>,
    %523 = arith.index_cast %458 : i32 to index
    %c0_170 = arith.constant 0 : index
    %c128_171 = arith.constant 128 : index
    %524 = vector.load %arg19[%523, %c0_170, %c128_171] : memref<4x8x256xf32, #tpu.memory_space<vmem>>, vector<1x8x128xf32>
    %525 = vector.shape_cast %524 : vector<1x8x128xf32> to vector<8x128xf32>
    %526 = vector.shape_cast %518 : vector<8x128xf32> to vector<1x8x128xf32>
    tpu.vector_store %arg19[%523, %c0_170, %c128_171], %526 {strides = array<i32>} : memref<4x8x256xf32, #tpu.memory_space<vmem>>, vector<1x8x128xf32>,
    %c3_i32_172 = arith.constant 3 : i32
    %c3_i32_173 = arith.constant 3 : i32
    %527 = arith.subi %c3_i32_173, %c3_i32_172 : i32
    %528 = arith.index_cast %c3_i32_172 : i32 to index
    %c0_174 = arith.constant 0 : index
    %c0_175 = arith.constant 0 : index
    %529 = vector.load %arg18[%528, %c0_174, %c0_175] : memref<4x8x1024xf32, #tpu.memory_space<vmem>>, vector<1x8x512xf32>
    %530 = vector.shape_cast %529 : vector<1x8x512xf32> to vector<8x512xf32>
    %cst_176 = arith.constant dense<0.000000e+00> : vector<8x512xf32>
    %531 = tpu.matmul %493, %310, %cst_176 {dimension_numbers = #tpu.dot_dimension_numbers<[1], [0], [0], [1], [0, 0, 1, 1], [], []>} : vector<8x128xf32>, vector<128x512xf32>, vector<8x512xf32> -> vector<8x512xf32>
    %532 = arith.addf %530, %531 : vector<8x512xf32>
    %533 = arith.index_cast %527 : i32 to index
    %c0_177 = arith.constant 0 : index
    %c512_178 = arith.constant 512 : index
    %534 = vector.load %arg18[%533, %c0_177, %c512_178] : memref<4x8x1024xf32, #tpu.memory_space<vmem>>, vector<1x8x512xf32>
    %535 = vector.shape_cast %534 : vector<1x8x512xf32> to vector<8x512xf32>
    %cst_179 = arith.constant dense<0.000000e+00> : vector<8x512xf32>
    %536 = tpu.matmul %518, %311, %cst_179 {dimension_numbers = #tpu.dot_dimension_numbers<[1], [0], [0], [1], [0, 0, 1, 1], [], []>} : vector<8x128xf32>, vector<128x512xf32>, vector<8x512xf32> -> vector<8x512xf32>
    %537 = arith.addf %535, %536 : vector<8x512xf32>
    %538 = vector.extract_strided_slice %532 {offsets = [0, 0], sizes = [8, 128], strides = [1, 1]} : vector<8x512xf32> to vector<8x128xf32>
    %539 = arith.negf %538 : vector<8x128xf32>
    %540 = math.exp %539 : vector<8x128xf32>
    %cst_180 = arith.constant 1.000000e+00 : f32
    %541 = vector.broadcast %cst_180 : f32 to vector<8x128xf32>
    %542 = arith.addf %541, %540 : vector<8x128xf32>
    %543 = arith.divf %541, %542 : vector<8x128xf32>
    %544 = vector.extract_strided_slice %532 {offsets = [0, 128], sizes = [8, 128], strides = [1, 1]} : vector<8x512xf32> to vector<8x128xf32>
    %545 = arith.negf %544 : vector<8x128xf32>
    %546 = math.exp %545 : vector<8x128xf32>
    %cst_181 = arith.constant 1.000000e+00 : f32
    %547 = vector.broadcast %cst_181 : f32 to vector<8x128xf32>
    %548 = arith.addf %547, %546 : vector<8x128xf32>
    %549 = arith.divf %547, %548 : vector<8x128xf32>
    %550 = vector.extract_strided_slice %532 {offsets = [0, 256], sizes = [8, 128], strides = [1, 1]} : vector<8x512xf32> to vector<8x128xf32>
    %551 = math.tanh %550 : vector<8x128xf32>
    %552 = vector.extract_strided_slice %532 {offsets = [0, 384], sizes = [8, 128], strides = [1, 1]} : vector<8x512xf32> to vector<8x128xf32>
    %553 = arith.negf %552 : vector<8x128xf32>
    %554 = math.exp %553 : vector<8x128xf32>
    %cst_182 = arith.constant 1.000000e+00 : f32
    %555 = vector.broadcast %cst_182 : f32 to vector<8x128xf32>
    %556 = arith.addf %555, %554 : vector<8x128xf32>
    %557 = arith.divf %555, %556 : vector<8x128xf32>
    %558 = arith.mulf %549, %491 : vector<8x128xf32>
    %559 = arith.mulf %543, %551 : vector<8x128xf32>
    %560 = arith.addf %558, %559 : vector<8x128xf32>
    %561 = math.tanh %560 : vector<8x128xf32>
    %562 = arith.mulf %557, %561 : vector<8x128xf32>
    %563 = vector.extract_strided_slice %537 {offsets = [0, 0], sizes = [8, 128], strides = [1, 1]} : vector<8x512xf32> to vector<8x128xf32>
    %564 = arith.negf %563 : vector<8x128xf32>
    %565 = math.exp %564 : vector<8x128xf32>
    %cst_183 = arith.constant 1.000000e+00 : f32
    %566 = vector.broadcast %cst_183 : f32 to vector<8x128xf32>
    %567 = arith.addf %566, %565 : vector<8x128xf32>
    %568 = arith.divf %566, %567 : vector<8x128xf32>
    %569 = vector.extract_strided_slice %537 {offsets = [0, 128], sizes = [8, 128], strides = [1, 1]} : vector<8x512xf32> to vector<8x128xf32>
    %570 = arith.negf %569 : vector<8x128xf32>
    %571 = math.exp %570 : vector<8x128xf32>
    %cst_184 = arith.constant 1.000000e+00 : f32
    %572 = vector.broadcast %cst_184 : f32 to vector<8x128xf32>
    %573 = arith.addf %572, %571 : vector<8x128xf32>
    %574 = arith.divf %572, %573 : vector<8x128xf32>
    %575 = vector.extract_strided_slice %537 {offsets = [0, 256], sizes = [8, 128], strides = [1, 1]} : vector<8x512xf32> to vector<8x128xf32>
    %576 = math.tanh %575 : vector<8x128xf32>
    %577 = vector.extract_strided_slice %537 {offsets = [0, 384], sizes = [8, 128], strides = [1, 1]} : vector<8x512xf32> to vector<8x128xf32>
    %578 = arith.negf %577 : vector<8x128xf32>
    %579 = math.exp %578 : vector<8x128xf32>
    %cst_185 = arith.constant 1.000000e+00 : f32
    %580 = vector.broadcast %cst_185 : f32 to vector<8x128xf32>
    %581 = arith.addf %580, %579 : vector<8x128xf32>
    %582 = arith.divf %580, %581 : vector<8x128xf32>
    %583 = arith.mulf %574, %516 : vector<8x128xf32>
    %584 = arith.mulf %568, %576 : vector<8x128xf32>
    %585 = arith.addf %583, %584 : vector<8x128xf32>
    %586 = math.tanh %585 : vector<8x128xf32>
    %587 = arith.mulf %582, %586 : vector<8x128xf32>
    %588 = arith.index_cast %c3_i32_172 : i32 to index
    %c0_186 = arith.constant 0 : index
    %c0_187 = arith.constant 0 : index
    %589 = vector.load %arg19[%588, %c0_186, %c0_187] : memref<4x8x256xf32, #tpu.memory_space<vmem>>, vector<1x8x128xf32>
    %590 = vector.shape_cast %589 : vector<1x8x128xf32> to vector<8x128xf32>
    %591 = vector.shape_cast %562 : vector<8x128xf32> to vector<1x8x128xf32>
    tpu.vector_store %arg19[%588, %c0_186, %c0_187], %591 {strides = array<i32>} : memref<4x8x256xf32, #tpu.memory_space<vmem>>, vector<1x8x128xf32>,
    %592 = arith.index_cast %527 : i32 to index
    %c0_188 = arith.constant 0 : index
    %c128_189 = arith.constant 128 : index
    %593 = vector.load %arg19[%592, %c0_188, %c128_189] : memref<4x8x256xf32, #tpu.memory_space<vmem>>, vector<1x8x128xf32>
    %594 = vector.shape_cast %593 : vector<1x8x128xf32> to vector<8x128xf32>
    %595 = vector.shape_cast %587 : vector<8x128xf32> to vector<1x8x128xf32>
    tpu.vector_store %arg19[%592, %c0_188, %c128_189], %595 {strides = array<i32>} : memref<4x8x256xf32, #tpu.memory_space<vmem>>, vector<1x8x128xf32>,
    %c4_i32_190 = arith.constant 4 : i32
    %c2_191 = arith.constant 2 : index
    %c0_192 = arith.constant 0 : index
    %c0_193 = arith.constant 0 : index
    %596 = vector.load %arg15[%c2_191, %c0_192, %c0_193] : memref<4x8x128xf32, #tpu.memory_space<vmem>>, vector<1x8x128xf32>
    %597 = vector.shape_cast %596 : vector<1x8x128xf32> to vector<8x128xf32>
    %598 = vector.shape_cast %562 : vector<8x128xf32> to vector<1x8x128xf32>
    tpu.vector_store %arg15[%c2_191, %c0_192, %c0_193], %598 {strides = array<i32>} : memref<4x8x128xf32, #tpu.memory_space<vmem>>, vector<1x8x128xf32>,
    %c2_194 = arith.constant 2 : index
    %c0_195 = arith.constant 0 : index
    %c0_196 = arith.constant 0 : index
    %599 = vector.load %arg16[%c2_194, %c0_195, %c0_196] : memref<4x8x128xf32, #tpu.memory_space<vmem>>, vector<1x8x128xf32>
    %600 = vector.shape_cast %599 : vector<1x8x128xf32> to vector<8x128xf32>
    %601 = vector.shape_cast %560 : vector<8x128xf32> to vector<1x8x128xf32>
    tpu.vector_store %arg16[%c2_194, %c0_195, %c0_196], %601 {strides = array<i32>} : memref<4x8x128xf32, #tpu.memory_space<vmem>>, vector<1x8x128xf32>,
    %c3_197 = arith.constant 3 : index
    %c0_198 = arith.constant 0 : index
    %c0_199 = arith.constant 0 : index
    %602 = vector.load %arg15[%c3_197, %c0_198, %c0_199] : memref<4x8x128xf32, #tpu.memory_space<vmem>>, vector<1x8x128xf32>
    %603 = vector.shape_cast %602 : vector<1x8x128xf32> to vector<8x128xf32>
    %604 = vector.shape_cast %587 : vector<8x128xf32> to vector<1x8x128xf32>
    tpu.vector_store %arg15[%c3_197, %c0_198, %c0_199], %604 {strides = array<i32>} : memref<4x8x128xf32, #tpu.memory_space<vmem>>, vector<1x8x128xf32>,
    %c3_200 = arith.constant 3 : index
    %c0_201 = arith.constant 0 : index
    %c0_202 = arith.constant 0 : index
    %605 = vector.load %arg16[%c3_200, %c0_201, %c0_202] : memref<4x8x128xf32, #tpu.memory_space<vmem>>, vector<1x8x128xf32>
    %606 = vector.shape_cast %605 : vector<1x8x128xf32> to vector<8x128xf32>
    %607 = vector.shape_cast %585 : vector<8x128xf32> to vector<1x8x128xf32>
    tpu.vector_store %arg16[%c3_200, %c0_201, %c0_202], %607 {strides = array<i32>} : memref<4x8x128xf32, #tpu.memory_space<vmem>>, vector<1x8x128xf32>,
    %c0_203 = arith.constant 0 : index
    %c0_204 = arith.constant 0 : index
    %c0_205 = arith.constant 0 : index
    %608 = vector.load %arg19[%c0_203, %c0_204, %c0_205] : memref<4x8x256xf32, #tpu.memory_space<vmem>>, vector<4x8x256xf32>
    %609 = vector.shape_cast %608 : vector<4x8x256xf32> to vector<32x256xf32>
    %c0_206 = arith.constant 0 : index
    %c0_207 = arith.constant 0 : index
    %610 = vector.load %arg12[%c0_206, %c0_207] : memref<256x128xf32, #tpu.memory_space<vmem>>, vector<256x128xf32>
    %cst_208 = arith.constant dense<0.000000e+00> : vector<32x128xf32>
    %611 = tpu.matmul %609, %610, %cst_208 {dimension_numbers = #tpu.dot_dimension_numbers<[1], [0], [0], [1], [0, 0, 1, 1], [], []>} : vector<32x256xf32>, vector<256x128xf32>, vector<32x128xf32> -> vector<32x128xf32>
    %c0_209 = arith.constant 0 : index
    %c0_210 = arith.constant 0 : index
    %612 = vector.load %arg13[%c0_209, %c0_210] : memref<1x128xf32, #tpu.memory_space<vmem>>, vector<1x128xf32>
    %613 = vector.broadcast %612 : vector<1x128xf32> to vector<32x128xf32>
    %614 = arith.addf %611, %613 : vector<32x128xf32>
    %cst_211 = arith.constant dense<0xFF800000> : vector<32xf32>
    %615 = vector.multi_reduction <maximumf>, %614, %cst_211 [1] : vector<32x128xf32> to vector<32xf32>
    %616 = vector.shape_cast %615 : vector<32xf32> to vector<32x1xf32>
    %617 = vector.broadcast %616 : vector<32x1xf32> to vector<32x128xf32>
    %618 = arith.subf %614, %617 : vector<32x128xf32>
    %619 = math.exp %618 : vector<32x128xf32>
    %cst_212 = arith.constant dense<0.000000e+00> : vector<32xf32>
    %620 = vector.multi_reduction <add>, %619, %cst_212 [1] : vector<32x128xf32> to vector<32xf32>
    %621 = vector.shape_cast %620 : vector<32xf32> to vector<32x1xf32>
    %622 = math.log %621 : vector<32x1xf32>
    %623 = vector.broadcast %622 : vector<32x1xf32> to vector<32x128xf32>
    %624 = arith.subf %618, %623 : vector<32x128xf32>
    %c0_213 = arith.constant 0 : index
    %c0_214 = arith.constant 0 : index
    %625 = vector.load %arg14[%c0_213, %c0_214] : memref<32x128xf32, #tpu.memory_space<vmem>>, vector<32x128xf32>
    tpu.vector_store %arg14[%c0_213, %c0_214], %624 {strides = array<i32>} : memref<32x128xf32, #tpu.memory_space<vmem>>, vector<32x128xf32>,
    return
  }
  func.func @transform_0(%arg0: i32) -> (i32, i32) {
    %c0_i32 = arith.constant 0 : i32
    %c0_i32_0 = arith.constant 0 : i32
    %c0_i32_1 = arith.constant 0 : i32
    return %c0_i32, %c0_i32_0 : i32, i32
  }
  func.func @transform_1(%arg0: i32) -> (i32, i32, i32) {
    %c0_i32 = arith.constant 0 : i32
    %c0_i32_0 = arith.constant 0 : i32
    %c0_i32_1 = arith.constant 0 : i32
    %c0_i32_2 = arith.constant 0 : i32
    return %c0_i32, %c0_i32_0, %c0_i32_1 : i32, i32, i32
  }
  func.func @transform_2(%arg0: i32) -> (i32, i32, i32) {
    %c0_i32 = arith.constant 0 : i32
    %c0_i32_0 = arith.constant 0 : i32
    %c0_i32_1 = arith.constant 0 : i32
    %c0_i32_2 = arith.constant 0 : i32
    return %c0_i32, %c0_i32_0, %c0_i32_1 : i32, i32, i32
  }
  func.func @transform_3(%arg0: i32) -> (i32, i32) {
    %c0_i32 = arith.constant 0 : i32
    %c0_i32_0 = arith.constant 0 : i32
    %c0_i32_1 = arith.constant 0 : i32
    return %c0_i32, %c0_i32_0 : i32, i32
  }
  func.func @transform_4(%arg0: i32) -> (i32, i32) {
    %c0_i32 = arith.constant 0 : i32
    %c0_i32_0 = arith.constant 0 : i32
    %c0_i32_1 = arith.constant 0 : i32
    return %c0_i32, %c0_i32_0 : i32, i32
  }
  func.func @transform_5(%arg0: i32) -> (i32, i32) {
    %c0_i32 = arith.constant 0 : i32
    %c0_i32_0 = arith.constant 0 : i32
    %c0_i32_1 = arith.constant 0 : i32
    return %c0_i32, %c0_i32_0 : i32, i32
  }
  func.func @transform_6(%arg0: i32) -> (i32, i32) {
    %c0_i32 = arith.constant 0 : i32
    %c0_i32_0 = arith.constant 0 : i32
    %c0_i32_1 = arith.constant 0 : i32
    return %c0_i32, %c0_i32_0 : i32, i32
  }
  func.func @transform_7(%arg0: i32) -> (i32, i32) {
    %c0_i32 = arith.constant 0 : i32
    %c0_i32_0 = arith.constant 0 : i32
    %c0_i32_1 = arith.constant 0 : i32
    return %c0_i32, %c0_i32_0 : i32, i32
  }
  func.func @transform_8(%arg0: i32) -> (i32, i32) {
    %c0_i32 = arith.constant 0 : i32
    %c0_i32_0 = arith.constant 0 : i32
    %c0_i32_1 = arith.constant 0 : i32
    return %c0_i32, %c0_i32_0 : i32, i32
  }
  func.func @transform_9(%arg0: i32) -> (i32, i32) {
    %c0_i32 = arith.constant 0 : i32
    %c0_i32_0 = arith.constant 0 : i32
    %c0_i32_1 = arith.constant 0 : i32
    return %c0_i32, %c0_i32_0 : i32, i32
  }
  func.func @transform_10(%arg0: i32) -> (i32, i32) {
    %c0_i32 = arith.constant 0 : i32
    %c0_i32_0 = arith.constant 0 : i32
    %c0_i32_1 = arith.constant 0 : i32
    return %c0_i32, %c0_i32_0 : i32, i32
  }
  func.func @transform_11(%arg0: i32) -> (i32, i32) {
    %c0_i32 = arith.constant 0 : i32
    %c0_i32_0 = arith.constant 0 : i32
    %c0_i32_1 = arith.constant 0 : i32
    return %c0_i32, %c0_i32_0 : i32, i32
  }
  func.func @transform_12(%arg0: i32) -> (i32, i32) {
    %c0_i32 = arith.constant 0 : i32
    %c0_i32_0 = arith.constant 0 : i32
    %c0_i32_1 = arith.constant 0 : i32
    return %c0_i32, %c0_i32_0 : i32, i32
  }
  func.func @transform_13(%arg0: i32) -> (i32, i32) {
    %c0_i32 = arith.constant 0 : i32
    %c0_i32_0 = arith.constant 0 : i32
    return %arg0, %c0_i32 : i32, i32
  }
}

</mosaic_0001>

<llo_original>
// kernel: tpu_custom_call.1
$region0: #{tpu_custom_call.1}
  #allocation0 [shape = 'u32[]', space=smem, size = 0x4, offset = 0x4, fixed_abs, tag = 'smem constant byte address 0x4 - core index']
  #allocation1 [shape = 'u32[144,128]{1,0:T(1,128)}', space=vmem, size = 0x12000, scoped, tag = 'internal scratch']
  #allocation2 [shape = 'f32[4,8,128]{2,1,0:T(8,128)}', space=vmem, size = 0x4000, scoped, tag = 'scratch operand']
  #allocation3 [shape = 'f32[4,8,128]{2,1,0:T(8,128)}', space=vmem, size = 0x4000, scoped, tag = 'scratch operand']
  #allocation4 [shape = 'f32[4,8,1024]{2,1,0:T(8,128)}', space=vmem, size = 0x20000, scoped, tag = 'scratch operand']
  #allocation5 [shape = 'f32[4,8,1024]{2,1,0:T(8,128)}', space=vmem, size = 0x20000, scoped, tag = 'scratch operand']
  #allocation6 [shape = 'f32[4,8,256]{2,1,0:T(8,128)}', space=vmem, size = 0x8000, scoped, tag = 'scratch operand']
  %s0 = inlined_call_operand.hbm [shape: f32[32,128], index: 0, kind: input, shape index: {}]
  %s1 = inlined_call_operand.hbm [shape: f32[4,8,128], index: 1, kind: input, shape index: {}]
  %s2 = inlined_call_operand.hbm [shape: f32[4,8,128], index: 2, kind: input, shape index: {}]
  %s3 = inlined_call_operand.hbm [shape: f32[128,1024], index: 3, kind: input, shape index: {}]
  %s4 = inlined_call_operand.hbm [shape: f32[128,512], index: 4, kind: input, shape index: {}]
  %s5 = inlined_call_operand.hbm [shape: f32[128,512], index: 5, kind: input, shape index: {}]
  %s6 = inlined_call_operand.vmem [shape: f32[1,1024], index: 6, kind: input, shape index: {}]
  %s7 = inlined_call_operand.hbm [shape: f32[256,1024], index: 7, kind: input, shape index: {}]
  %s8 = inlined_call_operand.hbm [shape: f32[128,512], index: 8, kind: input, shape index: {}]
  %s9 = inlined_call_operand.hbm [shape: f32[128,512], index: 9, kind: input, shape index: {}]
  %s10 = inlined_call_operand.vmem [shape: f32[1,1024], index: 10, kind: input, shape index: {}]
  %s11 = inlined_call_operand.hbm [shape: f32[256,128], index: 11, kind: input, shape index: {}]
  %s12 = inlined_call_operand.vmem [shape: f32[1,128], index: 12, kind: input, shape index: {}]
  %s13 = inlined_call_operand.hbm [shape: f32[96,128], index: 13, kind: output, shape index: {}]
  %s14 = sld [smem:[#allocation0]]
  $region129: #{tpu_custom_call.1} parent=0
    _
  %s16 = ssub.s32 1, %s14
  %s17 = scalar_select 0, %s16, %s14
  $region1: #{tpu_custom_call.1} parent=0
    #allocation7 [shape = 'u8[16384]{0}', space=vmem, size = 0x4000, scoped, tag = 'input window, operand 0, single buffered']
    #allocation8 [shape = 's32[2]{0}', space=sflag, size = 0x8, scoped, tag = 'scoped memory for tpu_custom_call.1']
    #allocation9 [shape = 's32[2]{0}', space=sflag, size = 0x8, scoped, tag = 'scoped memory for tpu_custom_call.1']
    #allocation10 [shape = 'u8[16384]{0}', space=vmem, size = 0x4000, scoped, tag = 'input window, operand 1, single buffered']
    #allocation11 [shape = 's32[1]{0}', space=sflag, size = 0x4, scoped, tag = 'scoped memory for tpu_custom_call.1']
    #allocation12 [shape = 'u8[16384]{0}', space=vmem, size = 0x4000, scoped, tag = 'input window, operand 2, single buffered']
    #allocation13 [shape = 'u8[524288]{0}', space=vmem, size = 0x80000, scoped, tag = 'input window, operand 3, single buffered']
    #allocation14 [shape = 's32[1]{0}', space=sflag, size = 0x4, scoped, tag = 'scoped memory for tpu_custom_call.1']
    #allocation15 [shape = 'u8[262144]{0}', space=vmem, size = 0x40000, scoped, tag = 'input window, operand 4, single buffered']
    #allocation16 [shape = 'u8[262144]{0}', space=vmem, size = 0x40000, scoped, tag = 'input window, operand 5, single buffered']
    #allocation17 [shape = 's32[1]{0}', space=sflag, size = 0x4, scoped, tag = 'scoped memory for tpu_custom_call.1']
    #allocation18 [shape = 'u8[1048576]{0}', space=vmem, size = 0x100000, scoped, tag = 'input window, operand 7, single buffered']
    #allocation19 [shape = 'u8[262144]{0}', space=vmem, size = 0x40000, scoped, tag = 'input window, operand 8, single buffered']
    #allocation20 [shape = 's32[1]{0}', space=sflag, size = 0x4, scoped, tag = 'scoped memory for tpu_custom_call.1']
    #allocation21 [shape = 'u8[262144]{0}', space=vmem, size = 0x40000, scoped, tag = 'input window, operand 9, single buffered']
    #allocation22 [shape = 'u8[131072]{0}', space=vmem, size = 0x20000, scoped, tag = 'input window, operand 11, single buffered']
    #allocation23 [shape = 's32[1]{0}', space=sflag, size = 0x4, scoped, tag = 'scoped memory for tpu_custom_call.1']
    #allocation24 [shape = 'u8[32768]{0}', space=vmem, size = 0x8000, scoped, tag = 'output window, operand 0']
    %18 = vsyncpa [#allocation8], 0
    %19 = vsyncpa [#allocation11], 0
    %20 = vsyncpa [#allocation14], 0
    %21 = vsyncpa [#allocation17], 0
    %22 = vsyncpa [#allocation20], 0
    %23 = vsyncpa [#allocation23], 0
    %24 = vsyncpa [#allocation9], 0
    %s25 = scalar_lea.sflag [#allocation9], 1
    %26 = vsyncpa %s25, 0
    loop: start=0, step=1, limit=5
    $region2: #{tpu_custom_call.1} parent=1 // loop_pre_header
      _
    $region3: #{tpu_custom_call.1} parent=1 // loop_header
      %s28 = sphi 0, %s32
      %p29 = scmp.ge.s32.totalorder %s28, 5
      %s36 = sphi 0, %s36
      %s38 = sphi 0, %s36
      %s39 = sphi 0, %s38
      %s53 = sphi 0, %s39
      %s57 = sphi 0, %s57
      %s59 = sphi 0, %s57
      %s60 = sphi 0, %s59
      %s74 = sphi 0, %s60
      %s78 = sphi 0, %s78
      %s80 = sphi 0, %s78
      %s81 = sphi 0, %s80
      %s95 = sphi 0, %s81
      %s99 = sphi 0, %s99
      %s101 = sphi 0, %s99
      %s102 = sphi 0, %s101
      %s116 = sphi 0, %s102
      %s120 = sphi 0, %s120
      %s122 = sphi 0, %s120
      %s123 = sphi 0, %s122
      %s137 = sphi 0, %s123
      %s141 = sphi 0, %s141
      %s143 = sphi 0, %s141
      %s144 = sphi 0, %s143
      %s158 = sphi 0, %s144
      %s162 = sphi 0, %s162
      %s164 = sphi 0, %s162
      %s165 = sphi 0, %s164
      %s179 = sphi 0, %s165
      %s183 = sphi 0, %s183
      %s185 = sphi 0, %s183
      %s186 = sphi 0, %s185
      %s200 = sphi 0, %s186
      %s204 = sphi 0, %s204
      %s206 = sphi 0, %s204
      %s207 = sphi 0, %s206
      %s221 = sphi 0, %s207
      %s225 = sphi 0, %s225
      %s227 = sphi 0, %s225
      %s228 = sphi 0, %s227
      %s242 = sphi 0, %s228
      %s246 = sphi 0, %s246
      %s248 = sphi 0, %s246
      %s249 = sphi 0, %s248
      %s263 = sphi 0, %s249
      %s267 = sphi 0, %s267
      %s269 = sphi 0, %s267
      %s270 = sphi 0, %s269
      %s284 = sphi 0, %s270
      %s288 = sphi 0, %s288
      %s290 = sphi 0, %s288
      %s291 = sphi 0, %s290
      %s305 = sphi 0, %s291
      %s311 = sphi 0, %s313
      %s314 = sphi 0, %s311
      %s315 = sphi 0, %s314
      %s331 = sphi 0, %s315
    $region4: #{tpu_custom_call.1} parent=1 // loop_header_branch
      %31 = sbr.rel (%p29) target = $region8
    $region5: #{tpu_custom_call.1} parent=1 // loop_body
      %s33 = ssub.s32 %s28, 1
      %s34 = ssub.s32 %s28, 2
      %s35 = sadd.s32 %s28, 1
      %s37 = sadd.s32 %s36, 1
      %p40 = scmp.eq.s32.totalorder %s28, 2
      %p41 = scmp.ne.s32.totalorder %s36, %s38
      %p42 = scmp.eq.s32.totalorder %s28, 0
      %p43 = por %p41, %p42
      %p44 = scmp.ne.s32.totalorder %s36, %s38
      %p45 = scmp.eq.s32.totalorder %s33, 2
      %p46 = por %p44, %p45
      %p47 = scmp.ne.s32.totalorder %s38, %s39
      %p48 = scmp.eq.s32.totalorder %s33, 0
      %p49 = por %p47, %p48
      %p50 = scmp.ne.s32.totalorder %s38, %s39
      %p51 = scmp.eq.s32.totalorder %s34, 2
      %p52 = por %p50, %p51
      %p54 = scmp.ne.s32.totalorder %s39, %s53
      %p55 = scmp.eq.s32.totalorder %s34, 0
      %p56 = por %p54, %p55
      %s58 = sadd.s32 %s57, 1
      %p61 = scmp.eq.s32.totalorder %s28, 2
      %p62 = scmp.ne.s32.totalorder %s57, %s59
      %p63 = scmp.eq.s32.totalorder %s28, 0
      %p64 = por %p62, %p63
      %p65 = scmp.ne.s32.totalorder %s57, %s59
      %p66 = scmp.eq.s32.totalorder %s33, 2
      %p67 = por %p65, %p66
      %p68 = scmp.ne.s32.totalorder %s59, %s60
      %p69 = scmp.eq.s32.totalorder %s33, 0
      %p70 = por %p68, %p69
      %p71 = scmp.ne.s32.totalorder %s59, %s60
      %p72 = scmp.eq.s32.totalorder %s34, 2
      %p73 = por %p71, %p72
      %p75 = scmp.ne.s32.totalorder %s60, %s74
      %p76 = scmp.eq.s32.totalorder %s34, 0
      %p77 = por %p75, %p76
      %s79 = sadd.s32 %s78, 1
      %p82 = scmp.eq.s32.totalorder %s28, 2
      %p83 = scmp.ne.s32.totalorder %s78, %s80
      %p84 = scmp.eq.s32.totalorder %s28, 0
      %p85 = por %p83, %p84
      %p86 = scmp.ne.s32.totalorder %s78, %s80
      %p87 = scmp.eq.s32.totalorder %s33, 2
      %p88 = por %p86, %p87
      %p89 = scmp.ne.s32.totalorder %s80, %s81
      %p90 = scmp.eq.s32.totalorder %s33, 0
      %p91 = por %p89, %p90
      %p92 = scmp.ne.s32.totalorder %s80, %s81
      %p93 = scmp.eq.s32.totalorder %s34, 2
      %p94 = por %p92, %p93
      %p96 = scmp.ne.s32.totalorder %s81, %s95
      %p97 = scmp.eq.s32.totalorder %s34, 0
      %p98 = por %p96, %p97
      %s100 = sadd.s32 %s99, 1
      %p103 = scmp.eq.s32.totalorder %s28, 2
      %p104 = scmp.ne.s32.totalorder %s99, %s101
      %p105 = scmp.eq.s32.totalorder %s28, 0
      %p106 = por %p104, %p105
      %p107 = scmp.ne.s32.totalorder %s99, %s101
      %p108 = scmp.eq.s32.totalorder %s33, 2
      %p109 = por %p107, %p108
      %p110 = scmp.ne.s32.totalorder %s101, %s102
      %p111 = scmp.eq.s32.totalorder %s33, 0
      %p112 = por %p110, %p111
      %p113 = scmp.ne.s32.totalorder %s101, %s102
      %p114 = scmp.eq.s32.totalorder %s34, 2
      %p115 = por %p113, %p114
      %p117 = scmp.ne.s32.totalorder %s102, %s116
      %p118 = scmp.eq.s32.totalorder %s34, 0
      %p119 = por %p117, %p118
      %s121 = sadd.s32 %s120, 1
      %p124 = scmp.eq.s32.totalorder %s28, 2
      %p125 = scmp.ne.s32.totalorder %s120, %s122
      %p126 = scmp.eq.s32.totalorder %s28, 0
      %p127 = por %p125, %p126
      %p128 = scmp.ne.s32.totalorder %s120, %s122
      %p129 = scmp.eq.s32.totalorder %s33, 2
      %p130 = por %p128, %p129
      %p131 = scmp.ne.s32.totalorder %s122, %s123
      %p132 = scmp.eq.s32.totalorder %s33, 0
      %p133 = por %p131, %p132
      %p134 = scmp.ne.s32.totalorder %s122, %s123
      %p135 = scmp.eq.s32.totalorder %s34, 2
      %p136 = por %p134, %p135
      %p138 = scmp.ne.s32.totalorder %s123, %s137
      %p139 = scmp.eq.s32.totalorder %s34, 0
      %p140 = por %p138, %p139
      %s142 = sadd.s32 %s141, 1
      %p145 = scmp.eq.s32.totalorder %s28, 2
      %p146 = scmp.ne.s32.totalorder %s141, %s143
      %p147 = scmp.eq.s32.totalorder %s28, 0
      %p148 = por %p146, %p147
      %p149 = scmp.ne.s32.totalorder %s141, %s143
      %p150 = scmp.eq.s32.totalorder %s33, 2
      %p151 = por %p149, %p150
      %p152 = scmp.ne.s32.totalorder %s143, %s144
      %p153 = scmp.eq.s32.totalorder %s33, 0
      %p154 = por %p152, %p153
      %p155 = scmp.ne.s32.totalorder %s143, %s144
      %p156 = scmp.eq.s32.totalorder %s34, 2
      %p157 = por %p155, %p156
      %p159 = scmp.ne.s32.totalorder %s144, %s158
      %p160 = scmp.eq.s32.totalorder %s34, 0
      %p161 = por %p159, %p160
      %s163 = sadd.s32 %s162, 1
      %p166 = scmp.eq.s32.totalorder %s28, 2
      %p167 = scmp.ne.s32.totalorder %s162, %s164
      %p168 = scmp.eq.s32.totalorder %s28, 0
      %p169 = por %p167, %p168
      %p170 = scmp.ne.s32.totalorder %s162, %s164
      %p171 = scmp.eq.s32.totalorder %s33, 2
      %p172 = por %p170, %p171
      %p173 = scmp.ne.s32.totalorder %s164, %s165
      %p174 = scmp.eq.s32.totalorder %s33, 0
      %p175 = por %p173, %p174
      %p176 = scmp.ne.s32.totalorder %s164, %s165
      %p177 = scmp.eq.s32.totalorder %s34, 2
      %p178 = por %p176, %p177
      %p180 = scmp.ne.s32.totalorder %s165, %s179
      %p181 = scmp.eq.s32.totalorder %s34, 0
      %p182 = por %p180, %p181
      %s184 = sadd.s32 %s183, 1
      %p187 = scmp.eq.s32.totalorder %s28, 2
      %p188 = scmp.ne.s32.totalorder %s183, %s185
      %p189 = scmp.eq.s32.totalorder %s28, 0
      %p190 = por %p188, %p189
      %p191 = scmp.ne.s32.totalorder %s183, %s185
      %p192 = scmp.eq.s32.totalorder %s33, 2
      %p193 = por %p191, %p192
      %p194 = scmp.ne.s32.totalorder %s185, %s186
      %p195 = scmp.eq.s32.totalorder %s33, 0
      %p196 = por %p194, %p195
      %p197 = scmp.ne.s32.totalorder %s185, %s186
      %p198 = scmp.eq.s32.totalorder %s34, 2
      %p199 = por %p197, %p198
      %p201 = scmp.ne.s32.totalorder %s186, %s200
      %p202 = scmp.eq.s32.totalorder %s34, 0
      %p203 = por %p201, %p202
      %s205 = sadd.s32 %s204, 1
      %p208 = scmp.eq.s32.totalorder %s28, 2
      %p209 = scmp.ne.s32.totalorder %s204, %s206
      %p210 = scmp.eq.s32.totalorder %s28, 0
      %p211 = por %p209, %p210
      %p212 = scmp.ne.s32.totalorder %s204, %s206
      %p213 = scmp.eq.s32.totalorder %s33, 2
      %p214 = por %p212, %p213
      %p215 = scmp.ne.s32.totalorder %s206, %s207
      %p216 = scmp.eq.s32.totalorder %s33, 0
      %p217 = por %p215, %p216
      %p218 = scmp.ne.s32.totalorder %s206, %s207
      %p219 = scmp.eq.s32.totalorder %s34, 2
      %p220 = por %p218, %p219
      %p222 = scmp.ne.s32.totalorder %s207, %s221
      %p223 = scmp.eq.s32.totalorder %s34, 0
      %p224 = por %p222, %p223
      %s226 = sadd.s32 %s225, 1
      %p229 = scmp.eq.s32.totalorder %s28, 2
      %p230 = scmp.ne.s32.totalorder %s225, %s227
      %p231 = scmp.eq.s32.totalorder %s28, 0
      %p232 = por %p230, %p231
      %p233 = scmp.ne.s32.totalorder %s225, %s227
      %p234 = scmp.eq.s32.totalorder %s33, 2
      %p235 = por %p233, %p234
      %p236 = scmp.ne.s32.totalorder %s227, %s228
      %p237 = scmp.eq.s32.totalorder %s33, 0
      %p238 = por %p236, %p237
      %p239 = scmp.ne.s32.totalorder %s227, %s228
      %p240 = scmp.eq.s32.totalorder %s34, 2
      %p241 = por %p239, %p240
      %p243 = scmp.ne.s32.totalorder %s228, %s242
      %p244 = scmp.eq.s32.totalorder %s34, 0
      %p245 = por %p243, %p244
      %s247 = sadd.s32 %s246, 1
      %p250 = scmp.eq.s32.totalorder %s28, 2
      %p251 = scmp.ne.s32.totalorder %s246, %s248
      %p252 = scmp.eq.s32.totalorder %s28, 0
      %p253 = por %p251, %p252
      %p254 = scmp.ne.s32.totalorder %s246, %s248
      %p255 = scmp.eq.s32.totalorder %s33, 2
      %p256 = por %p254, %p255
      %p257 = scmp.ne.s32.totalorder %s248, %s249
      %p258 = scmp.eq.s32.totalorder %s33, 0
      %p259 = por %p257, %p258
      %p260 = scmp.ne.s32.totalorder %s248, %s249
      %p261 = scmp.eq.s32.totalorder %s34, 2
      %p262 = por %p260, %p261
      %p264 = scmp.ne.s32.totalorder %s249, %s263
      %p265 = scmp.eq.s32.totalorder %s34, 0
      %p266 = por %p264, %p265
      %s268 = sadd.s32 %s267, 1
      %p271 = scmp.eq.s32.totalorder %s28, 2
      %p272 = scmp.ne.s32.totalorder %s267, %s269
      %p273 = scmp.eq.s32.totalorder %s28, 0
      %p274 = por %p272, %p273
      %p275 = scmp.ne.s32.totalorder %s267, %s269
      %p276 = scmp.eq.s32.totalorder %s33, 2
      %p277 = por %p275, %p276
      %p278 = scmp.ne.s32.totalorder %s269, %s270
      %p279 = scmp.eq.s32.totalorder %s33, 0
      %p280 = por %p278, %p279
      %p281 = scmp.ne.s32.totalorder %s269, %s270
      %p282 = scmp.eq.s32.totalorder %s34, 2
      %p283 = por %p281, %p282
      %p285 = scmp.ne.s32.totalorder %s270, %s284
      %p286 = scmp.eq.s32.totalorder %s34, 0
      %p287 = por %p285, %p286
      %s289 = sadd.s32 %s288, 1
      %p292 = scmp.eq.s32.totalorder %s28, 2
      %p293 = scmp.ne.s32.totalorder %s288, %s290
      %p294 = scmp.eq.s32.totalorder %s28, 0
      %p295 = por %p293, %p294
      %p296 = scmp.ne.s32.totalorder %s288, %s290
      %p297 = scmp.eq.s32.totalorder %s33, 2
      %p298 = por %p296, %p297
      %p299 = scmp.ne.s32.totalorder %s290, %s291
      %p300 = scmp.eq.s32.totalorder %s33, 0
      %p301 = por %p299, %p300
      %p302 = scmp.ne.s32.totalorder %s290, %s291
      %p303 = scmp.eq.s32.totalorder %s34, 2
      %p304 = por %p302, %p303
      %p306 = scmp.ne.s32.totalorder %s291, %s305
      %p307 = scmp.eq.s32.totalorder %s34, 0
      %p308 = por %p306, %p307
      %s309 = ssub.s32 %s28, %s35
      %p310 = scmp.eq.s32.totalorder %s309, 0
      %s312 = sadd.s32 %s311, 1
      %s313 = scalar_select %p310, %s311, %s312
      %p316 = pneg %p310
      %p317 = scmp.eq.s32.totalorder %s28, 2
      %p318 = por %p316, %p317
      %p319 = scmp.ne.s32.totalorder %s311, %s314
      %p320 = scmp.eq.s32.totalorder %s28, 0
      %p321 = por %p319, %p320
      %p322 = scmp.ne.s32.totalorder %s311, %s314
      %p323 = scmp.eq.s32.totalorder %s33, 2
      %p324 = por %p322, %p323
      %p325 = scmp.ne.s32.totalorder %s314, %s315
      %p326 = scmp.eq.s32.totalorder %s33, 0
      %p327 = por %p325, %p326
      %p328 = scmp.ne.s32.totalorder %s314, %s315
      %p329 = scmp.eq.s32.totalorder %s34, 2
      %p330 = por %p328, %p329
      %p332 = scmp.ne.s32.totalorder %s315, %s331
      %p333 = scmp.eq.s32.totalorder %s34, 0
      %p334 = por %p332, %p333
      %p335 = scmp.le.s32.totalorder 1, %s28
      %p336 = scmp.lt.s32.totalorder %s28, 4
      %p337 = pnand %p335, %p336
      %p338 = pneg %p337
      // Predicated region
      $region9: #{tpu_custom_call.1} parent=5 // pred_check
        _
      $region10: #{tpu_custom_call.1} parent=5 // pred_check_branch
        %340 = sbr.rel (%p337) target = $region12
      $region11: #{tpu_custom_call.1} parent=5 // pred_region
        %s341 = ssub.s32 %s28, 1
        // Predicated region
        $region13: #{tpu_custom_call.1} parent=11 // pred_check
          %p342 = pneg %p49
        $region14: #{tpu_custom_call.1} parent=11 // pred_check_branch
          %344 = sbr.rel (%p342) target = $region16
        $region15: #{tpu_custom_call.1} parent=11 // pred_region
          %s346 = ssub.s32 512, 512
          %347 = vsyncadd [#allocation8], %s346
          %s348 = sshll.u32 [#allocation7], 4
          %s349 = int_to_ptr.vmem [resolvable:$true] %s348
          %354 = dma.hbm_to_vmem [thread:$0]  %s0, 512, %s349, [#allocation8], 128, 128, 8
        $region16: #{tpu_custom_call.1} parent=11 // pred_fallthru
          _
        // Predicated region
        $region17: #{tpu_custom_call.1} parent=11 // pred_check
          %p355 = pneg %p70
        $region18: #{tpu_custom_call.1} parent=11 // pred_check_branch
          %357 = sbr.rel (%p355) target = $region20
        $region19: #{tpu_custom_call.1} parent=11 // pred_region
          %s359 = ssub.s32 512, 512
          %360 = vsyncadd [#allocation11], %s359
          %s361 = sshll.u32 [#allocation10], 4
          %s362 = int_to_ptr.vmem [resolvable:$true] %s361
          %367 = dma.hbm_to_vmem [thread:$0]  %s1, 512, %s362, [#allocation11], 128, 128, 8
        $region20: #{tpu_custom_call.1} parent=11 // pred_fallthru
          _
        // Predicated region
        $region21: #{tpu_custom_call.1} parent=11 // pred_check
          %p368 = pneg %p91
        $region22: #{tpu_custom_call.1} parent=11 // pred_check_branch
          %370 = sbr.rel (%p368) target = $region24
        $region23: #{tpu_custom_call.1} parent=11 // pred_region
          %s372 = ssub.s32 512, 512
          %373 = vsyncadd [#allocation11], %s372
          %s374 = sshll.u32 [#allocation12], 4
          %s375 = int_to_ptr.vmem [resolvable:$true] %s374
          %380 = dma.hbm_to_vmem [thread:$0]  %s2, 512, %s375, [#allocation11], 128, 128, 8
        $region24: #{tpu_custom_call.1} parent=11 // pred_fallthru
          _
        // Predicated region
        $region25: #{tpu_custom_call.1} parent=11 // pred_check
          %p381 = pneg %p112
        $region26: #{tpu_custom_call.1} parent=11 // pred_check_branch
          %383 = sbr.rel (%p381) target = $region28
        $region27: #{tpu_custom_call.1} parent=11 // pred_region
          %s385 = ssub.s32 16384, 16384
          %386 = vsyncadd [#allocation14], %s385
          %s387 = sshll.u32 [#allocation13], 4
          %s388 = int_to_ptr.vmem [resolvable:$true] %s387
          %393 = dma.hbm_to_vmem [thread:$0]  %s3, 16384, %s388, [#allocation14], 1024, 1024, 64
        $region28: #{tpu_custom_call.1} parent=11 // pred_fallthru
          _
        // Predicated region
        $region29: #{tpu_custom_call.1} parent=11 // pred_check
          %p394 = pneg %p133
        $region30: #{tpu_custom_call.1} parent=11 // pred_check_branch
          %396 = sbr.rel (%p394) target = $region32
        $region31: #{tpu_custom_call.1} parent=11 // pred_region
          %s398 = ssub.s32 8192, 8192
          %399 = vsyncadd [#allocation14], %s398
          %s400 = sshll.u32 [#allocation15], 4
          %s401 = int_to_ptr.vmem [resolvable:$true] %s400
          %406 = dma.hbm_to_vmem [thread:$0]  %s4, 8192, %s401, [#allocation14], 512, 512, 32
        $region32: #{tpu_custom_call.1} parent=11 // pred_fallthru
          _
        // Predicated region
        $region33: #{tpu_custom_call.1} parent=11 // pred_check
          %p407 = pneg %p154
        $region34: #{tpu_custom_call.1} parent=11 // pred_check_branch
          %409 = sbr.rel (%p407) target = $region36
        $region35: #{tpu_custom_call.1} parent=11 // pred_region
          %s411 = ssub.s32 8192, 8192
          %412 = vsyncadd [#allocation17], %s411
          %s413 = sshll.u32 [#allocation16], 4
          %s414 = int_to_ptr.vmem [resolvable:$true] %s413
          %419 = dma.hbm_to_vmem [thread:$0]  %s5, 8192, %s414, [#allocation17], 512, 512, 32
        $region36: #{tpu_custom_call.1} parent=11 // pred_fallthru
          _
        // Predicated region
        $region37: #{tpu_custom_call.1} parent=11 // pred_check
          %p420 = pneg %p175
        $region38: #{tpu_custom_call.1} parent=11 // pred_check_branch
          %422 = sbr.rel (%p420) target = $region40
        $region39: #{tpu_custom_call.1} parent=11 // pred_region
          _
        $region40: #{tpu_custom_call.1} parent=11 // pred_fallthru
          _
        // Predicated region
        $region41: #{tpu_custom_call.1} parent=11 // pred_check
          %p423 = pneg %p196
        $region42: #{tpu_custom_call.1} parent=11 // pred_check_branch
          %425 = sbr.rel (%p423) target = $region44
        $region43: #{tpu_custom_call.1} parent=11 // pred_region
          %s427 = ssub.s32 32768, 32768
          %428 = vsyncadd [#allocation17], %s427
          %s429 = sshll.u32 [#allocation18], 4
          %s430 = int_to_ptr.vmem [resolvable:$true] %s429
          %435 = dma.hbm_to_vmem [thread:$0]  %s7, 32768, %s430, [#allocation17], 1024, 1024, 64
        $region44: #{tpu_custom_call.1} parent=11 // pred_fallthru
          _
        // Predicated region
        $region45: #{tpu_custom_call.1} parent=11 // pred_check
          %p436 = pneg %p217
        $region46: #{tpu_custom_call.1} parent=11 // pred_check_branch
          %438 = sbr.rel (%p436) target = $region48
        $region47: #{tpu_custom_call.1} parent=11 // pred_region
          %s440 = ssub.s32 8192, 8192
          %441 = vsyncadd [#allocation20], %s440
          %s442 = sshll.u32 [#allocation19], 4
          %s443 = int_to_ptr.vmem [resolvable:$true] %s442
          %448 = dma.hbm_to_vmem [thread:$0]  %s8, 8192, %s443, [#allocation20], 512, 512, 32
        $region48: #{tpu_custom_call.1} parent=11 // pred_fallthru
          _
        // Predicated region
        $region49: #{tpu_custom_call.1} parent=11 // pred_check
          %p449 = pneg %p238
        $region50: #{tpu_custom_call.1} parent=11 // pred_check_branch
          %451 = sbr.rel (%p449) target = $region52
        $region51: #{tpu_custom_call.1} parent=11 // pred_region
          %s453 = ssub.s32 8192, 8192
          %454 = vsyncadd [#allocation20], %s453
          %s455 = sshll.u32 [#allocation21], 4
          %s456 = int_to_ptr.vmem [resolvable:$true] %s455
          %461 = dma.hbm_to_vmem [thread:$0]  %s9, 8192, %s456, [#allocation20], 512, 512, 32
        $region52: #{tpu_custom_call.1} parent=11 // pred_fallthru
          _
        // Predicated region
        $region53: #{tpu_custom_call.1} parent=11 // pred_check
          %p462 = pneg %p259
        $region54: #{tpu_custom_call.1} parent=11 // pred_check_branch
          %464 = sbr.rel (%p462) target = $region56
        $region55: #{tpu_custom_call.1} parent=11 // pred_region
          _
        $region56: #{tpu_custom_call.1} parent=11 // pred_fallthru
          _
        // Predicated region
        $region57: #{tpu_custom_call.1} parent=11 // pred_check
          %p465 = pneg %p280
        $region58: #{tpu_custom_call.1} parent=11 // pred_check_branch
          %467 = sbr.rel (%p465) target = $region60
        $region59: #{tpu_custom_call.1} parent=11 // pred_region
          %s469 = ssub.s32 4096, 4096
          %470 = vsyncadd [#allocation23], %s469
          %s471 = sshll.u32 [#allocation22], 4
          %s472 = int_to_ptr.vmem [resolvable:$true] %s471
          %477 = dma.hbm_to_vmem [thread:$0]  %s11, 4096, %s472, [#allocation23], 128, 128, 8
        $region60: #{tpu_custom_call.1} parent=11 // pred_fallthru
          _
        // Predicated region
        $region61: #{tpu_custom_call.1} parent=11 // pred_check
          %p478 = pneg %p301
        $region62: #{tpu_custom_call.1} parent=11 // pred_check_branch
          %480 = sbr.rel (%p478) target = $region64
        $region63: #{tpu_custom_call.1} parent=11 // pred_region
          _
        $region64: #{tpu_custom_call.1} parent=11 // pred_fallthru
          _
      $region12: #{tpu_custom_call.1} parent=5 // pred_fallthru
        _
      %p481 = scmp.lt.s32.totalorder %s28, 3
      // Predicated region
      $region65: #{tpu_custom_call.1} parent=5 // pred_check
        %p482 = pneg %p481
      $region66: #{tpu_custom_call.1} parent=5 // pred_check_branch
        %484 = sbr.rel (%p482) target = $region68
      $region67: #{tpu_custom_call.1} parent=5 // pred_region
        _
      $region68: #{tpu_custom_call.1} parent=5 // pred_fallthru
        _
      %p485 = scmp.le.s32.totalorder 1, %s28
      %p486 = scmp.lt.s32.totalorder %s28, 4
      %p487 = pnand %p485, %p486
      %p488 = pneg %p487
      // Predicated region
      $region69: #{tpu_custom_call.1} parent=5 // pred_check
        _
      $region70: #{tpu_custom_call.1} parent=5 // pred_check_branch
        %490 = sbr.rel (%p487) target = $region72
      $region71: #{tpu_custom_call.1} parent=5 // pred_region
        %s491 = ssub.s32 %s28, 1
        // Predicated region
        $region73: #{tpu_custom_call.1} parent=71 // pred_check
          %p492 = pneg %p49
        $region74: #{tpu_custom_call.1} parent=71 // pred_check_branch
          %494 = sbr.rel (%p492) target = $region76
        $region75: #{tpu_custom_call.1} parent=71 // pred_region
          %495 = dma.done [#allocation8], 512
        $region76: #{tpu_custom_call.1} parent=71 // pred_fallthru
          _
        // Predicated region
        $region77: #{tpu_custom_call.1} parent=71 // pred_check
          %p496 = pneg %p70
        $region78: #{tpu_custom_call.1} parent=71 // pred_check_branch
          %498 = sbr.rel (%p496) target = $region80
        $region79: #{tpu_custom_call.1} parent=71 // pred_region
          %499 = dma.done [#allocation11], 512
        $region80: #{tpu_custom_call.1} parent=71 // pred_fallthru
          _
        // Predicated region
        $region81: #{tpu_custom_call.1} parent=71 // pred_check
          %p500 = pneg %p91
        $region82: #{tpu_custom_call.1} parent=71 // pred_check_branch
          %502 = sbr.rel (%p500) target = $region84
        $region83: #{tpu_custom_call.1} parent=71 // pred_region
          %503 = dma.done [#allocation11], 512
        $region84: #{tpu_custom_call.1} parent=71 // pred_fallthru
          _
        // Predicated region
        $region85: #{tpu_custom_call.1} parent=71 // pred_check
          %p504 = pneg %p112
        $region86: #{tpu_custom_call.1} parent=71 // pred_check_branch
          %506 = sbr.rel (%p504) target = $region88
        $region87: #{tpu_custom_call.1} parent=71 // pred_region
          %507 = dma.done [#allocation14], 16384
        $region88: #{tpu_custom_call.1} parent=71 // pred_fallthru
          _
        // Predicated region
        $region89: #{tpu_custom_call.1} parent=71 // pred_check
          %p508 = pneg %p133
        $region90: #{tpu_custom_call.1} parent=71 // pred_check_branch
          %510 = sbr.rel (%p508) target = $region92
        $region91: #{tpu_custom_call.1} parent=71 // pred_region
          %511 = dma.done [#allocation14], 8192
        $region92: #{tpu_custom_call.1} parent=71 // pred_fallthru
          _
        // Predicated region
        $region93: #{tpu_custom_call.1} parent=71 // pred_check
          %p512 = pneg %p154
        $region94: #{tpu_custom_call.1} parent=71 // pred_check_branch
          %514 = sbr.rel (%p512) target = $region96
        $region95: #{tpu_custom_call.1} parent=71 // pred_region
          %515 = dma.done [#allocation17], 8192
        $region96: #{tpu_custom_call.1} parent=71 // pred_fallthru
          _
        // Predicated region
        $region97: #{tpu_custom_call.1} parent=71 // pred_check
          %p516 = pneg %p196
        $region98: #{tpu_custom_call.1} parent=71 // pred_check_branch
          %518 = sbr.rel (%p516) target = $region100
        $region99: #{tpu_custom_call.1} parent=71 // pred_region
          %519 = dma.done [#allocation17], 32768
        $region100: #{tpu_custom_call.1} parent=71 // pred_fallthru
          _
        // Predicated region
        $region101: #{tpu_custom_call.1} parent=71 // pred_check
          %p520 = pneg %p217
        $region102: #{tpu_custom_call.1} parent=71 // pred_check_branch
          %522 = sbr.rel (%p520) target = $region104
        $region103: #{tpu_custom_call.1} parent=71 // pred_region
          %523 = dma.done [#allocation20], 8192
        $region104: #{tpu_custom_call.1} parent=71 // pred_fallthru
          _
        // Predicated region
        $region105: #{tpu_custom_call.1} parent=71 // pred_check
          %p524 = pneg %p238
        $region106: #{tpu_custom_call.1} parent=71 // pred_check_branch
          %526 = sbr.rel (%p524) target = $region108
        $region107: #{tpu_custom_call.1} parent=71 // pred_region
          %527 = dma.done [#allocation20], 8192
        $region108: #{tpu_custom_call.1} parent=71 // pred_fallthru
          _
        // Predicated region
        $region109: #{tpu_custom_call.1} parent=71 // pred_check
          %p528 = pneg %p280
        $region110: #{tpu_custom_call.1} parent=71 // pred_check_branch
          %530 = sbr.rel (%p528) target = $region112
        $region111: #{tpu_custom_call.1} parent=71 // pred_region
          %531 = dma.done [#allocation23], 4096
        $region112: #{tpu_custom_call.1} parent=71 // pred_fallthru
          _
        %p532 = pneg %p49
        %p533 = pneg %p46
        %p534 = pneg %p70
        %p535 = pneg %p67
        %p536 = pneg %p91
        %p537 = pneg %p88
        %p538 = pneg %p112
        %p539 = pneg %p109
        %p540 = pneg %p133
        %p541 = pneg %p130
        %p542 = pneg %p154
        %p543 = pneg %p151
        %p544 = pneg %p175
        %p545 = pneg %p172
        %p546 = pneg %p196
        %p547 = pneg %p193
        %p548 = pneg %p217
        %p549 = pneg %p214
        %p550 = pneg %p238
        %p551 = pneg %p235
        %p552 = pneg %p259
        %p553 = pneg %p256
        %p554 = pneg %p280
        %p555 = pneg %p277
        %p556 = pneg %p301
        %p557 = pneg %p298
        %p558 = pneg %p327
        %p559 = pneg %p324
        %s560 = sand.u32 %s314, 1
        %s561 = scalar_lea.sflag [#allocation9], %s560
        %s562 = sand.u32 %s314, 1
        %s563 = smul.addr %s562, 32
        %s564 = scalar_lea.vmem [#allocation24], %s563
        %s565 = smul.u32 4, %s33
        %p566 = scmp.eq.s32.totalorder %s33, 0
        // Predicated region
        $region113: #{tpu_custom_call.1} parent=71 // pred_check
          %p567 = pneg %p566
        $region114: #{tpu_custom_call.1} parent=71 // pred_check_branch
          %569 = sbr.rel (%p567) target = $region116
        $region115: #{tpu_custom_call.1} parent=71 // pred_region
          %v570 = vld [vmem:[#allocation10] sm:$0xff]
          %v571 = vld [vmem:[#allocation10 + $0x8] sm:$0xff]
          %v572 = vld [vmem:[#allocation10 + $0x10] sm:$0xff]
          %v573 = vld [vmem:[#allocation10 + $0x18] sm:$0xff]
          %574 = vst [vmem:[#allocation2] sm:$0xff] %v570
          %575 = vst [vmem:[#allocation2 + $0x8] sm:$0xff] %v571
          %576 = vst [vmem:[#allocation2 + $0x10] sm:$0xff] %v572
          %577 = vst [vmem:[#allocation2 + $0x18] sm:$0xff] %v573
          %v578 = vld [vmem:[#allocation12] sm:$0xff]
          %v579 = vld [vmem:[#allocation12 + $0x8] sm:$0xff]
          %v580 = vld [vmem:[#allocation12 + $0x10] sm:$0xff]
          %v581 = vld [vmem:[#allocation12 + $0x18] sm:$0xff]
          %582 = vst [vmem:[#allocation3] sm:$0xff] %v578
          %583 = vst [vmem:[#allocation3 + $0x8] sm:$0xff] %v579
          %584 = vst [vmem:[#allocation3 + $0x10] sm:$0xff] %v580
          %585 = vst [vmem:[#allocation3 + $0x18] sm:$0xff] %v581
          %v586 = vld [vmem:[#allocation7] sm:$0xff]
          %v587 = vld [vmem:[#allocation7 + $0x8] sm:$0xff]
          %v588 = vld [vmem:[#allocation7 + $0x10] sm:$0xff]
          %v589 = vld [vmem:[#allocation7 + $0x18] sm:$0xff]
          %v590 = vld [vmem:[#allocation13] sm:$0xff]
          %v591 = vld [vmem:[#allocation13 + $0x8] sm:$0xff]
          %v592 = vld [vmem:[#allocation13 + $0x10] sm:$0xff]
          %v593 = vld [vmem:[#allocation13 + $0x18] sm:$0xff]
          %v594 = vld [vmem:[#allocation13 + $0x20] sm:$0xff]
          %v595 = vld [vmem:[#allocation13 + $0x28] sm:$0xff]
          %v596 = vld [vmem:[#allocation13 + $0x30] sm:$0xff]
          %v597 = vld [vmem:[#allocation13 + $0x38] sm:$0xff]
          %v598 = vld [vmem:[#allocation13 + $0x40] sm:$0xff]
          %v599 = vld [vmem:[#allocation13 + $0x48] sm:$0xff]
          %v600 = vld [vmem:[#allocation13 + $0x50] sm:$0xff]
          %v601 = vld [vmem:[#allocation13 + $0x58] sm:$0xff]
          %v602 = vld [vmem:[#allocation13 + $0x60] sm:$0xff]
          %v603 = vld [vmem:[#allocation13 + $0x68] sm:$0xff]
          %v604 = vld [vmem:[#allocation13 + $0x70] sm:$0xff]
          %v605 = vld [vmem:[#allocation13 + $0x78] sm:$0xff]
          %v606 = vld [vmem:[#allocation13 + $0x80] sm:$0xff]
          %v607 = vld [vmem:[#allocation13 + $0x88] sm:$0xff]
          %v608 = vld [vmem:[#allocation13 + $0x90] sm:$0xff]
          %v609 = vld [vmem:[#allocation13 + $0x98] sm:$0xff]
          %v610 = vld [vmem:[#allocation13 + $0xa0] sm:$0xff]
          %v611 = vld [vmem:[#allocation13 + $0xa8] sm:$0xff]
          %v612 = vld [vmem:[#allocation13 + $0xb0] sm:$0xff]
          %v613 = vld [vmem:[#allocation13 + $0xb8] sm:$0xff]
          %v614 = vld [vmem:[#allocation13 + $0xc0] sm:$0xff]
          %v615 = vld [vmem:[#allocation13 + $0xc8] sm:$0xff]
          %v616 = vld [vmem:[#allocation13 + $0xd0] sm:$0xff]
          %v617 = vld [vmem:[#allocation13 + $0xd8] sm:$0xff]
          %v618 = vld [vmem:[#allocation13 + $0xe0] sm:$0xff]
          %v619 = vld [vmem:[#allocation13 + $0xe8] sm:$0xff]
          %v620 = vld [vmem:[#allocation13 + $0xf0] sm:$0xff]
          %v621 = vld [vmem:[#allocation13 + $0xf8] sm:$0xff]
          %v622 = vld [vmem:[#allocation13 + $0x100] sm:$0xff]
          %v623 = vld [vmem:[#allocation13 + $0x108] sm:$0xff]
          %v624 = vld [vmem:[#allocation13 + $0x110] sm:$0xff]
          %v625 = vld [vmem:[#allocation13 + $0x118] sm:$0xff]
          %v626 = vld [vmem:[#allocation13 + $0x120] sm:$0xff]
          %v627 = vld [vmem:[#allocation13 + $0x128] sm:$0xff]
          %v628 = vld [vmem:[#allocation13 + $0x130] sm:$0xff]
          %v629 = vld [vmem:[#allocation13 + $0x138] sm:$0xff]
          %v630 = vld [vmem:[#allocation13 + $0x140] sm:$0xff]
          %v631 = vld [vmem:[#allocation13 + $0x148] sm:$0xff]
          %v632 = vld [vmem:[#allocation13 + $0x150] sm:$0xff]
          %v633 = vld [vmem:[#allocation13 + $0x158] sm:$0xff]
          %v634 = vld [vmem:[#allocation13 + $0x160] sm:$0xff]
          %v635 = vld [vmem:[#allocation13 + $0x168] sm:$0xff]
          %v636 = vld [vmem:[#allocation13 + $0x170] sm:$0xff]
          %v637 = vld [vmem:[#allocation13 + $0x178] sm:$0xff]
          %v638 = vld [vmem:[#allocation13 + $0x180] sm:$0xff]
          %v639 = vld [vmem:[#allocation13 + $0x188] sm:$0xff]
          %v640 = vld [vmem:[#allocation13 + $0x190] sm:$0xff]
          %v641 = vld [vmem:[#allocation13 + $0x198] sm:$0xff]
          %v642 = vld [vmem:[#allocation13 + $0x1a0] sm:$0xff]
          %v643 = vld [vmem:[#allocation13 + $0x1a8] sm:$0xff]
          %v644 = vld [vmem:[#allocation13 + $0x1b0] sm:$0xff]
          %v645 = vld [vmem:[#allocation13 + $0x1b8] sm:$0xff]
          %v646 = vld [vmem:[#allocation13 + $0x1c0] sm:$0xff]
          %v647 = vld [vmem:[#allocation13 + $0x1c8] sm:$0xff]
          %v648 = vld [vmem:[#allocation13 + $0x1d0] sm:$0xff]
          %v649 = vld [vmem:[#allocation13 + $0x1d8] sm:$0xff]
          %v650 = vld [vmem:[#allocation13 + $0x1e0] sm:$0xff]
          %v651 = vld [vmem:[#allocation13 + $0x1e8] sm:$0xff]
          %v652 = vld [vmem:[#allocation13 + $0x1f0] sm:$0xff]
          %v653 = vld [vmem:[#allocation13 + $0x1f8] sm:$0xff]
          %v654 = vld [vmem:[#allocation13 + $0x200] sm:$0xff]
          %v655 = vld [vmem:[#allocation13 + $0x208] sm:$0xff]
          %v656 = vld [vmem:[#allocation13 + $0x210] sm:$0xff]
          %v657 = vld [vmem:[#allocation13 + $0x218] sm:$0xff]
          %v658 = vld [vmem:[#allocation13 + $0x220] sm:$0xff]
          %v659 = vld [vmem:[#allocation13 + $0x228] sm:$0xff]
          %v660 = vld [vmem:[#allocation13 + $0x230] sm:$0xff]
          %v661 = vld [vmem:[#allocation13 + $0x238] sm:$0xff]
          %v662 = vld [vmem:[#allocation13 + $0x240] sm:$0xff]
          %v663 = vld [vmem:[#allocation13 + $0x248] sm:$0xff]
          %v664 = vld [vmem:[#allocation13 + $0x250] sm:$0xff]
          %v665 = vld [vmem:[#allocation13 + $0x258] sm:$0xff]
          %v666 = vld [vmem:[#allocation13 + $0x260] sm:$0xff]
          %v667 = vld [vmem:[#allocation13 + $0x268] sm:$0xff]
          %v668 = vld [vmem:[#allocation13 + $0x270] sm:$0xff]
          %v669 = vld [vmem:[#allocation13 + $0x278] sm:$0xff]
          %v670 = vld [vmem:[#allocation13 + $0x280] sm:$0xff]
          %v671 = vld [vmem:[#allocation13 + $0x288] sm:$0xff]
          %v672 = vld [vmem:[#allocation13 + $0x290] sm:$0xff]
          %v673 = vld [vmem:[#allocation13 + $0x298] sm:$0xff]
          %v674 = vld [vmem:[#allocation13 + $0x2a0] sm:$0xff]
          %v675 = vld [vmem:[#allocation13 + $0x2a8] sm:$0xff]
          %v676 = vld [vmem:[#allocation13 + $0x2b0] sm:$0xff]
          %v677 = vld [vmem:[#allocation13 + $0x2b8] sm:$0xff]
          %v678 = vld [vmem:[#allocation13 + $0x2c0] sm:$0xff]
          %v679 = vld [vmem:[#allocation13 + $0x2c8] sm:$0xff]
          %v680 = vld [vmem:[#allocation13 + $0x2d0] sm:$0xff]
          %v681 = vld [vmem:[#allocation13 + $0x2d8] sm:$0xff]
          %v682 = vld [vmem:[#allocation13 + $0x2e0] sm:$0xff]
          %v683 = vld [vmem:[#allocation13 + $0x2e8] sm:$0xff]
          %v684 = vld [vmem:[#allocation13 + $0x2f0] sm:$0xff]
          %v685 = vld [vmem:[#allocation13 + $0x2f8] sm:$0xff]
          %v686 = vld [vmem:[#allocation13 + $0x300] sm:$0xff]
          %v687 = vld [vmem:[#allocation13 + $0x308] sm:$0xff]
          %v688 = vld [vmem:[#allocation13 + $0x310] sm:$0xff]
          %v689 = vld [vmem:[#allocation13 + $0x318] sm:$0xff]
          %v690 = vld [vmem:[#allocation13 + $0x320] sm:$0xff]
          %v691 = vld [vmem:[#allocation13 + $0x328] sm:$0xff]
          %v692 = vld [vmem:[#allocation13 + $0x330] sm:$0xff]
          %v693 = vld [vmem:[#allocation13 + $0x338] sm:$0xff]
          %v694 = vld [vmem:[#allocation13 + $0x340] sm:$0xff]
          %v695 = vld [vmem:[#allocation13 + $0x348] sm:$0xff]
          %v696 = vld [vmem:[#allocation13 + $0x350] sm:$0xff]
          %v697 = vld [vmem:[#allocation13 + $0x358] sm:$0xff]
          %v698 = vld [vmem:[#allocation13 + $0x360] sm:$0xff]
          %v699 = vld [vmem:[#allocation13 + $0x368] sm:$0xff]
          %v700 = vld [vmem:[#allocation13 + $0x370] sm:$0xff]
          %v701 = vld [vmem:[#allocation13 + $0x378] sm:$0xff]
          %v702 = vld [vmem:[#allocation13 + $0x380] sm:$0xff]
          %v703 = vld [vmem:[#allocation13 + $0x388] sm:$0xff]
          %v704 = vld [vmem:[#allocation13 + $0x390] sm:$0xff]
          %v705 = vld [vmem:[#allocation13 + $0x398] sm:$0xff]
          %v706 = vld [vmem:[#allocation13 + $0x3a0] sm:$0xff]
          %v707 = vld [vmem:[#allocation13 + $0x3a8] sm:$0xff]
          %v708 = vld [vmem:[#allocation13 + $0x3b0] sm:$0xff]
          %v709 = vld [vmem:[#allocation13 + $0x3b8] sm:$0xff]
          %v710 = vld [vmem:[#allocation13 + $0x3c0] sm:$0xff]
          %v711 = vld [vmem:[#allocation13 + $0x3c8] sm:$0xff]
          %v712 = vld [vmem:[#allocation13 + $0x3d0] sm:$0xff]
          %v713 = vld [vmem:[#allocation13 + $0x3d8] sm:$0xff]
          %v714 = vld [vmem:[#allocation13 + $0x3e0] sm:$0xff]
          %v715 = vld [vmem:[#allocation13 + $0x3e8] sm:$0xff]
          %v716 = vld [vmem:[#allocation13 + $0x3f0] sm:$0xff]
          %v717 = vld [vmem:[#allocation13 + $0x3f8] sm:$0xff]
          %v718 = vld [vmem:[%s6] sm:$0xff]
          %v720 = vlaneseq
          %v721 = vshrl.u32 %v720, 7
          %v722 = vsub.s32 0, %v721
          %v723 = vrot.slane %v718, %v722
          %v724 = vlaneseq
          %v725 = vshrl.u32 %v724, 7
          %v726 = vsub.s32 1, %v725
          %v727 = vrot.slane %v718, %v726
          %v728 = vlaneseq
          %v729 = vshrl.u32 %v728, 7
          %v730 = vsub.s32 2, %v729
          %v731 = vrot.slane %v718, %v730
          %v732 = vlaneseq
          %v733 = vshrl.u32 %v732, 7
          %v734 = vsub.s32 3, %v733
          %v735 = vrot.slane %v718, %v734
          %v736 = vlaneseq
          %v737 = vshrl.u32 %v736, 7
          %v738 = vsub.s32 4, %v737
          %v739 = vrot.slane %v718, %v738
          %v740 = vlaneseq
          %v741 = vshrl.u32 %v740, 7
          %v742 = vsub.s32 5, %v741
          %v743 = vrot.slane %v718, %v742
          %v744 = vlaneseq
          %v745 = vshrl.u32 %v744, 7
          %v746 = vsub.s32 6, %v745
          %v747 = vrot.slane %v718, %v746
          %v748 = vlaneseq
          %v749 = vshrl.u32 %v748, 7
          %v750 = vsub.s32 7, %v749
          %v751 = vrot.slane %v718, %v750
          %760 = vmatprep.subr.mxu0 %v711
          %761 = vmatpush1.msra.mxu0 %v710
          %762 = vmatprep.subr.mxu0 %v703
          %763 = vmatpush1.msra.mxu0 %v702
          %764 = vmatprep.subr.mxu0 %v695
          %765 = vmatpush1.msra.mxu0 %v694
          %766 = vmatprep.subr.mxu0 %v687
          %767 = vmatpush1.msra.mxu0 %v686
          %768 = vmatprep.subr.mxu0 %v679
          %769 = vmatpush1.msra.mxu0 %v678
          %770 = vmatprep.subr.mxu0 %v671
          %771 = vmatpush1.msra.mxu0 %v670
          %772 = vmatprep.subr.mxu0 %v663
          %773 = vmatpush1.msra.mxu0 %v662
          %774 = vmatprep.subr.mxu0 %v655
          %775 = vmatpush1.msra.mxu0 %v654
          %776 = vmatprep.subr.mxu0 %v647
          %777 = vmatpush1.msra.mxu0 %v646
          %778 = vmatprep.subr.mxu0 %v639
          %779 = vmatpush1.msra.mxu0 %v638
          %780 = vmatprep.subr.mxu0 %v631
          %781 = vmatpush1.msra.mxu0 %v630
          %782 = vmatprep.subr.mxu0 %v623
          %783 = vmatpush1.msra.mxu0 %v622
          %784 = vmatprep.subr.mxu0 %v615
          %785 = vmatpush1.msra.mxu0 %v614
          %786 = vmatprep.subr.mxu0 %v607
          %787 = vmatpush1.msra.mxu0 %v606
          %788 = vmatprep.subr.mxu0 %v599
          %789 = vmatpush1.msra.mxu0 %v598
          %790 = vmatprep.subr.mxu0 %v591
          %791 = vmatpush1.msra.mxu0 %v590
          %792 = vmatprep.subr.mxu0 0.0
          %793 = vmatpush2.msra.mxu0 0.0
          %794 = vmatprep.subr.mxu0 0.0
          %795 = vmatpush2.msra.mxu0 0.0
          %796 = vmatprep.subr.mxu0 0.0
          %797 = vmatpush2.msra.mxu0 0.0
          %798 = vmatprep.subr.mxu0 0.0
          %799 = vmatpush2.msra.mxu0 0.0
          %800 = vmatprep.subr.mxu0 0.0
          %801 = vmatpush2.msra.mxu0 0.0
          %802 = vmatprep.subr.mxu0 0.0
          %803 = vmatpush2.msra.mxu0 0.0
          %804 = vmatprep.subr.mxu0 0.0
          %805 = vmatpush2.msra.mxu0 0.0
          %806 = vmatprep.subr.mxu0 0.0
          %807 = vmatpush2.msra.mxu0 0.0
          %808 = vmatprep.subr.mxu0 0.0
          %809 = vmatpush2.msra.mxu0 0.0
          %810 = vmatprep.subr.mxu0 0.0
          %811 = vmatpush2.msra.mxu0 0.0
          %812 = vmatprep.subr.mxu0 0.0
          %813 = vmatpush2.msra.mxu0 0.0
          %814 = vmatprep.subr.mxu0 0.0
          %815 = vmatpush2.msra.mxu0 0.0
          %816 = vmatprep.subr.mxu0 0.0
          %817 = vmatpush2.msra.mxu0 0.0
          %818 = vmatprep.subr.mxu0 0.0
          %819 = vmatpush2.msra.mxu0 0.0
          %820 = vmatprep.subr.mxu0 0.0
          %821 = vmatpush2.msra.mxu0 0.0
          %822 = vmatprep.subr.mxu0 0.0
          %823 = vmatpush2.msra.mxu0 0.0
          %824 = vmatprep.mubr.f32.mxu0 0.0
          %825 = vmatmul.mubr.f32.gmra.mxu0 %v586
          %v826 = vpop.f32.mrf.mxu0
          %v827 = vadd.f32 %v723, %v826
          %v828 = vpop.f32.mrf.mxu0
          %v829 = vadd.f32 %v727, %v828
          %830 = vmatprep.mubr.f32.mxu0 0.0
          %831 = vmatmul.mubr.f32.gmra.mxu0 %v587
          %v832 = vpop.f32.mrf.mxu0
          %v833 = vadd.f32 %v723, %v832
          %v834 = vpop.f32.mrf.mxu0
          %v835 = vadd.f32 %v727, %v834
          %836 = vmatprep.mubr.f32.mxu0 0.0
          %837 = vmatmul.mubr.f32.gmra.mxu0 %v588
          %v838 = vpop.f32.mrf.mxu0
          %v839 = vadd.f32 %v723, %v838
          %v840 = vpop.f32.mrf.mxu0
          %v841 = vadd.f32 %v727, %v840
          %842 = vmatprep.mubr.f32.mxu0 0.0
          %843 = vmatmul.mubr.f32.gmra.mxu0 %v589
          %v844 = vpop.f32.mrf.mxu0
          %v845 = vadd.f32 %v723, %v844
          %v846 = vpop.f32.mrf.mxu0
          %v847 = vadd.f32 %v727, %v846
          %848 = vdwg.mxu0
          %849 = vmatprep.subr.mxu0 %v713
          %850 = vmatpush1.msra.mxu0 %v712
          %851 = vmatprep.subr.mxu0 %v705
          %852 = vmatpush1.msra.mxu0 %v704
          %853 = vmatprep.subr.mxu0 %v697
          %854 = vmatpush1.msra.mxu0 %v696
          %855 = vmatprep.subr.mxu0 %v689
          %856 = vmatpush1.msra.mxu0 %v688
          %857 = vmatprep.subr.mxu0 %v681
          %858 = vmatpush1.msra.mxu0 %v680
          %859 = vmatprep.subr.mxu0 %v673
          %860 = vmatpush1.msra.mxu0 %v672
          %861 = vmatprep.subr.mxu0 %v665
          %862 = vmatpush1.msra.mxu0 %v664
          %863 = vmatprep.subr.mxu0 %v657
          %864 = vmatpush1.msra.mxu0 %v656
          %865 = vmatprep.subr.mxu0 %v649
          %866 = vmatpush1.msra.mxu0 %v648
          %867 = vmatprep.subr.mxu0 %v641
          %868 = vmatpush1.msra.mxu0 %v640
          %869 = vmatprep.subr.mxu0 %v633
          %870 = vmatpush1.msra.mxu0 %v632
          %871 = vmatprep.subr.mxu0 %v625
          %872 = vmatpush1.msra.mxu0 %v624
          %873 = vmatprep.subr.mxu0 %v617
          %874 = vmatpush1.msra.mxu0 %v616
          %875 = vmatprep.subr.mxu0 %v609
          %876 = vmatpush1.msra.mxu0 %v608
          %877 = vmatprep.subr.mxu0 %v601
          %878 = vmatpush1.msra.mxu0 %v600
          %879 = vmatprep.subr.mxu0 %v593
          %880 = vmatpush1.msra.mxu0 %v592
          %881 = vmatprep.subr.mxu0 0.0
          %882 = vmatpush2.msra.mxu0 0.0
          %883 = vmatprep.subr.mxu0 0.0
          %884 = vmatpush2.msra.mxu0 0.0
          %885 = vmatprep.subr.mxu0 0.0
          %886 = vmatpush2.msra.mxu0 0.0
          %887 = vmatprep.subr.mxu0 0.0
          %888 = vmatpush2.msra.mxu0 0.0
          %889 = vmatprep.subr.mxu0 0.0
          %890 = vmatpush2.msra.mxu0 0.0
          %891 = vmatprep.subr.mxu0 0.0
          %892 = vmatpush2.msra.mxu0 0.0
          %893 = vmatprep.subr.mxu0 0.0
          %894 = vmatpush2.msra.mxu0 0.0
          %895 = vmatprep.subr.mxu0 0.0
          %896 = vmatpush2.msra.mxu0 0.0
          %897 = vmatprep.subr.mxu0 0.0
          %898 = vmatpush2.msra.mxu0 0.0
          %899 = vmatprep.subr.mxu0 0.0
          %900 = vmatpush2.msra.mxu0 0.0
          %901 = vmatprep.subr.mxu0 0.0
          %902 = vmatpush2.msra.mxu0 0.0
          %903 = vmatprep.subr.mxu0 0.0
          %904 = vmatpush2.msra.mxu0 0.0
          %905 = vmatprep.subr.mxu0 0.0
          %906 = vmatpush2.msra.mxu0 0.0
          %907 = vmatprep.subr.mxu0 0.0
          %908 = vmatpush2.msra.mxu0 0.0
          %909 = vmatprep.subr.mxu0 0.0
          %910 = vmatpush2.msra.mxu0 0.0
          %911 = vmatprep.subr.mxu0 0.0
          %912 = vmatpush2.msra.mxu0 0.0
          %913 = vmatprep.mubr.f32.mxu0 0.0
          %914 = vmatmul.mubr.f32.gmra.mxu0 %v586
          %v915 = vpop.f32.mrf.mxu0
          %v916 = vadd.f32 %v731, %v915
          %v917 = vpop.f32.mrf.mxu0
          %v918 = vadd.f32 %v735, %v917
          %919 = vmatprep.mubr.f32.mxu0 0.0
          %920 = vmatmul.mubr.f32.gmra.mxu0 %v587
          %v921 = vpop.f32.mrf.mxu0
          %v922 = vadd.f32 %v731, %v921
          %v923 = vpop.f32.mrf.mxu0
          %v924 = vadd.f32 %v735, %v923
          %925 = vmatprep.mubr.f32.mxu0 0.0
          %926 = vmatmul.mubr.f32.gmra.mxu0 %v588
          %v927 = vpop.f32.mrf.mxu0
          %v928 = vadd.f32 %v731, %v927
          %v929 = vpop.f32.mrf.mxu0
          %v930 = vadd.f32 %v735, %v929
          %931 = vmatprep.mubr.f32.mxu0 0.0
          %932 = vmatmul.mubr.f32.gmra.mxu0 %v589
          %v933 = vpop.f32.mrf.mxu0
          %v934 = vadd.f32 %v731, %v933
          %v935 = vpop.f32.mrf.mxu0
          %v936 = vadd.f32 %v735, %v935
          %937 = vdwg.mxu0
          %938 = vmatprep.subr.mxu0 %v715
          %939 = vmatpush1.msra.mxu0 %v714
          %940 = vmatprep.subr.mxu0 %v707
          %941 = vmatpush1.msra.mxu0 %v706
          %942 = vmatprep.subr.mxu0 %v699
          %943 = vmatpush1.msra.mxu0 %v698
          %944 = vmatprep.subr.mxu0 %v691
          %945 = vmatpush1.msra.mxu0 %v690
          %946 = vmatprep.subr.mxu0 %v683
          %947 = vmatpush1.msra.mxu0 %v682
          %948 = vmatprep.subr.mxu0 %v675
          %949 = vmatpush1.msra.mxu0 %v674
          %950 = vmatprep.subr.mxu0 %v667
          %951 = vmatpush1.msra.mxu0 %v666
          %952 = vmatprep.subr.mxu0 %v659
          %953 = vmatpush1.msra.mxu0 %v658
          %954 = vmatprep.subr.mxu0 %v651
          %955 = vmatpush1.msra.mxu0 %v650
          %956 = vmatprep.subr.mxu0 %v643
          %957 = vmatpush1.msra.mxu0 %v642
          %958 = vmatprep.subr.mxu0 %v635
          %959 = vmatpush1.msra.mxu0 %v634
          %960 = vmatprep.subr.mxu0 %v627
          %961 = vmatpush1.msra.mxu0 %v626
          %962 = vmatprep.subr.mxu0 %v619
          %963 = vmatpush1.msra.mxu0 %v618
          %964 = vmatprep.subr.mxu0 %v611
          %965 = vmatpush1.msra.mxu0 %v610
          %966 = vmatprep.subr.mxu0 %v603
          %967 = vmatpush1.msra.mxu0 %v602
          %968 = vmatprep.subr.mxu0 %v595
          %969 = vmatpush1.msra.mxu0 %v594
          %970 = vmatprep.subr.mxu0 0.0
          %971 = vmatpush2.msra.mxu0 0.0
          %972 = vmatprep.subr.mxu0 0.0
          %973 = vmatpush2.msra.mxu0 0.0
          %974 = vmatprep.subr.mxu0 0.0
          %975 = vmatpush2.msra.mxu0 0.0
          %976 = vmatprep.subr.mxu0 0.0
          %977 = vmatpush2.msra.mxu0 0.0
          %978 = vmatprep.subr.mxu0 0.0
          %979 = vmatpush2.msra.mxu0 0.0
          %980 = vmatprep.subr.mxu0 0.0
          %981 = vmatpush2.msra.mxu0 0.0
          %982 = vmatprep.subr.mxu0 0.0
          %983 = vmatpush2.msra.mxu0 0.0
          %984 = vmatprep.subr.mxu0 0.0
          %985 = vmatpush2.msra.mxu0 0.0
          %986 = vmatprep.subr.mxu0 0.0
          %987 = vmatpush2.msra.mxu0 0.0
          %988 = vmatprep.subr.mxu0 0.0
          %989 = vmatpush2.msra.mxu0 0.0
          %990 = vmatprep.subr.mxu0 0.0
          %991 = vmatpush2.msra.mxu0 0.0
          %992 = vmatprep.subr.mxu0 0.0
          %993 = vmatpush2.msra.mxu0 0.0
          %994 = vmatprep.subr.mxu0 0.0
          %995 = vmatpush2.msra.mxu0 0.0
          %996 = vmatprep.subr.mxu0 0.0
          %997 = vmatpush2.msra.mxu0 0.0
          %998 = vmatprep.subr.mxu0 0.0
          %999 = vmatpush2.msra.mxu0 0.0
          %1000 = vmatprep.subr.mxu0 0.0
          %1001 = vmatpush2.msra.mxu0 0.0
          %1002 = vmatprep.mubr.f32.mxu0 0.0
          %1003 = vmatmul.mubr.f32.gmra.mxu0 %v586
          %v1004 = vpop.f32.mrf.mxu0
          %v1005 = vadd.f32 %v739, %v1004
          %v1006 = vpop.f32.mrf.mxu0
          %v1007 = vadd.f32 %v743, %v1006
          %1008 = vmatprep.mubr.f32.mxu0 0.0
          %1009 = vmatmul.mubr.f32.gmra.mxu0 %v587
          %v1010 = vpop.f32.mrf.mxu0
          %v1011 = vadd.f32 %v739, %v1010
          %v1012 = vpop.f32.mrf.mxu0
          %v1013 = vadd.f32 %v743, %v1012
          %1014 = vmatprep.mubr.f32.mxu0 0.0
          %1015 = vmatmul.mubr.f32.gmra.mxu0 %v588
          %v1016 = vpop.f32.mrf.mxu0
          %v1017 = vadd.f32 %v739, %v1016
          %v1018 = vpop.f32.mrf.mxu0
          %v1019 = vadd.f32 %v743, %v1018
          %1020 = vmatprep.mubr.f32.mxu0 0.0
          %1021 = vmatmul.mubr.f32.gmra.mxu0 %v589
          %v1022 = vpop.f32.mrf.mxu0
          %v1023 = vadd.f32 %v739, %v1022
          %v1024 = vpop.f32.mrf.mxu0
          %v1025 = vadd.f32 %v743, %v1024
          %1026 = vdwg.mxu0
          %1027 = vmatprep.subr.mxu0 %v717
          %1028 = vmatpush1.msra.mxu0 %v716
          %1029 = vmatprep.subr.mxu0 %v709
          %1030 = vmatpush1.msra.mxu0 %v708
          %1031 = vmatprep.subr.mxu0 %v701
          %1032 = vmatpush1.msra.mxu0 %v700
          %1033 = vmatprep.subr.mxu0 %v693
          %1034 = vmatpush1.msra.mxu0 %v692
          %1035 = vmatprep.subr.mxu0 %v685
          %1036 = vmatpush1.msra.mxu0 %v684
          %1037 = vmatprep.subr.mxu0 %v677
          %1038 = vmatpush1.msra.mxu0 %v676
          %1039 = vmatprep.subr.mxu0 %v669
          %1040 = vmatpush1.msra.mxu0 %v668
          %1041 = vmatprep.subr.mxu0 %v661
          %1042 = vmatpush1.msra.mxu0 %v660
          %1043 = vmatprep.subr.mxu0 %v653
          %1044 = vmatpush1.msra.mxu0 %v652
          %1045 = vmatprep.subr.mxu0 %v645
          %1046 = vmatpush1.msra.mxu0 %v644
          %1047 = vmatprep.subr.mxu0 %v637
          %1048 = vmatpush1.msra.mxu0 %v636
          %1049 = vmatprep.subr.mxu0 %v629
          %1050 = vmatpush1.msra.mxu0 %v628
          %1051 = vmatprep.subr.mxu0 %v621
          %1052 = vmatpush1.msra.mxu0 %v620
          %1053 = vmatprep.subr.mxu0 %v613
          %1054 = vmatpush1.msra.mxu0 %v612
          %1055 = vmatprep.subr.mxu0 %v605
          %1056 = vmatpush1.msra.mxu0 %v604
          %1057 = vmatprep.subr.mxu0 %v597
          %1058 = vmatpush1.msra.mxu0 %v596
          %1059 = vmatprep.subr.mxu0 0.0
          %1060 = vmatpush2.msra.mxu0 0.0
          %1061 = vmatprep.subr.mxu0 0.0
          %1062 = vmatpush2.msra.mxu0 0.0
          %1063 = vmatprep.subr.mxu0 0.0
          %1064 = vmatpush2.msra.mxu0 0.0
          %1065 = vmatprep.subr.mxu0 0.0
          %1066 = vmatpush2.msra.mxu0 0.0
          %1067 = vmatprep.subr.mxu0 0.0
          %1068 = vmatpush2.msra.mxu0 0.0
          %1069 = vmatprep.subr.mxu0 0.0
          %1070 = vmatpush2.msra.mxu0 0.0
          %1071 = vmatprep.subr.mxu0 0.0
          %1072 = vmatpush2.msra.mxu0 0.0
          %1073 = vmatprep.subr.mxu0 0.0
          %1074 = vmatpush2.msra.mxu0 0.0
          %1075 = vmatprep.subr.mxu0 0.0
          %1076 = vmatpush2.msra.mxu0 0.0
          %1077 = vmatprep.subr.mxu0 0.0
          %1078 = vmatpush2.msra.mxu0 0.0
          %1079 = vmatprep.subr.mxu0 0.0
          %1080 = vmatpush2.msra.mxu0 0.0
          %1081 = vmatprep.subr.mxu0 0.0
          %1082 = vmatpush2.msra.mxu0 0.0
          %1083 = vmatprep.subr.mxu0 0.0
          %1084 = vmatpush2.msra.mxu0 0.0
          %1085 = vmatprep.subr.mxu0 0.0
          %1086 = vmatpush2.msra.mxu0 0.0
          %1087 = vmatprep.subr.mxu0 0.0
          %1088 = vmatpush2.msra.mxu0 0.0
          %1089 = vmatprep.subr.mxu0 0.0
          %1090 = vmatpush2.msra.mxu0 0.0
          %1091 = vmatprep.mubr.f32.mxu0 0.0
          %1092 = vmatmul.mubr.f32.gmra.mxu0 %v586
          %v1093 = vpop.f32.mrf.mxu0
          %v1094 = vadd.f32 %v747, %v1093
          %v1095 = vpop.f32.mrf.mxu0
          %v1096 = vadd.f32 %v751, %v1095
          %1097 = vmatprep.mubr.f32.mxu0 0.0
          %1098 = vmatmul.mubr.f32.gmra.mxu0 %v587
          %v1099 = vpop.f32.mrf.mxu0
          %v1100 = vadd.f32 %v747, %v1099
          %v1101 = vpop.f32.mrf.mxu0
          %v1102 = vadd.f32 %v751, %v1101
          %1103 = vmatprep.mubr.f32.mxu0 0.0
          %1104 = vmatmul.mubr.f32.gmra.mxu0 %v588
          %v1105 = vpop.f32.mrf.mxu0
          %v1106 = vadd.f32 %v747, %v1105
          %v1107 = vpop.f32.mrf.mxu0
          %v1108 = vadd.f32 %v751, %v1107
          %1109 = vmatprep.mubr.f32.mxu0 0.0
          %1110 = vmatmul.mubr.f32.gmra.mxu0 %v589
          %v1111 = vpop.f32.mrf.mxu0
          %v1112 = vadd.f32 %v747, %v1111
          %v1113 = vpop.f32.mrf.mxu0
          %v1114 = vadd.f32 %v751, %v1113
          %1115 = vdwg.mxu0
          %1116 = vst [vmem:[#allocation4] sm:$0xff] %v827
          %1117 = vst [vmem:[#allocation4 + $0x8] sm:$0xff] %v829
          %1118 = vst [vmem:[#allocation4 + $0x10] sm:$0xff] %v916
          %1119 = vst [vmem:[#allocation4 + $0x18] sm:$0xff] %v918
          %1120 = vst [vmem:[#allocation4 + $0x20] sm:$0xff] %v1005
          %1121 = vst [vmem:[#allocation4 + $0x28] sm:$0xff] %v1007
          %1122 = vst [vmem:[#allocation4 + $0x30] sm:$0xff] %v1094
          %1123 = vst [vmem:[#allocation4 + $0x38] sm:$0xff] %v1096
          %1124 = vst [vmem:[#allocation4 + $0x40] sm:$0xff] %v833
          %1125 = vst [vmem:[#allocation4 + $0x48] sm:$0xff] %v835
          %1126 = vst [vmem:[#allocation4 + $0x50] sm:$0xff] %v922
          %1127 = vst [vmem:[#allocation4 + $0x58] sm:$0xff] %v924
          %1128 = vst [vmem:[#allocation4 + $0x60] sm:$0xff] %v1011
          %1129 = vst [vmem:[#allocation4 + $0x68] sm:$0xff] %v1013
          %1130 = vst [vmem:[#allocation4 + $0x70] sm:$0xff] %v1100
          %1131 = vst [vmem:[#allocation4 + $0x78] sm:$0xff] %v1102
          %1132 = vst [vmem:[#allocation4 + $0x80] sm:$0xff] %v839
          %1133 = vst [vmem:[#allocation4 + $0x88] sm:$0xff] %v841
          %1134 = vst [vmem:[#allocation4 + $0x90] sm:$0xff] %v928
          %1135 = vst [vmem:[#allocation4 + $0x98] sm:$0xff] %v930
          %1136 = vst [vmem:[#allocation4 + $0xa0] sm:$0xff] %v1017
          %1137 = vst [vmem:[#allocation4 + $0xa8] sm:$0xff] %v1019
          %1138 = vst [vmem:[#allocation4 + $0xb0] sm:$0xff] %v1106
          %1139 = vst [vmem:[#allocation4 + $0xb8] sm:$0xff] %v1108
          %1140 = vst [vmem:[#allocation4 + $0xc0] sm:$0xff] %v845
          %1141 = vst [vmem:[#allocation4 + $0xc8] sm:$0xff] %v847
          %1142 = vst [vmem:[#allocation4 + $0xd0] sm:$0xff] %v934
          %1143 = vst [vmem:[#allocation4 + $0xd8] sm:$0xff] %v936
          %1144 = vst [vmem:[#allocation4 + $0xe0] sm:$0xff] %v1023
          %1145 = vst [vmem:[#allocation4 + $0xe8] sm:$0xff] %v1025
          %1146 = vst [vmem:[#allocation4 + $0xf0] sm:$0xff] %v1112
          %1147 = vst [vmem:[#allocation4 + $0xf8] sm:$0xff] %v1114
        $region116: #{tpu_custom_call.1} parent=71 // pred_fallthru
          _
        %v1148 = vld [vmem:[#allocation15] sm:$0xff]
        %v1149 = vld [vmem:[#allocation15 + $0x8] sm:$0xff]
        %v1150 = vld [vmem:[#allocation15 + $0x10] sm:$0xff]
        %v1151 = vld [vmem:[#allocation15 + $0x18] sm:$0xff]
        %v1152 = vld [vmem:[#allocation15 + $0x20] sm:$0xff]
        %v1153 = vld [vmem:[#allocation15 + $0x28] sm:$0xff]
        %v1154 = vld [vmem:[#allocation15 + $0x30] sm:$0xff]
        %v1155 = vld [vmem:[#allocation15 + $0x38] sm:$0xff]
        %v1156 = vld [vmem:[#allocation15 + $0x40] sm:$0xff]
        %v1157 = vld [vmem:[#allocation15 + $0x48] sm:$0xff]
        %v1158 = vld [vmem:[#allocation15 + $0x50] sm:$0xff]
        %v1159 = vld [vmem:[#allocation15 + $0x58] sm:$0xff]
        %v1160 = vld [vmem:[#allocation15 + $0x60] sm:$0xff]
        %v1161 = vld [vmem:[#allocation15 + $0x68] sm:$0xff]
        %v1162 = vld [vmem:[#allocation15 + $0x70] sm:$0xff]
        %v1163 = vld [vmem:[#allocation15 + $0x78] sm:$0xff]
        %v1164 = vld [vmem:[#allocation15 + $0x80] sm:$0xff]
        %v1165 = vld [vmem:[#allocation15 + $0x88] sm:$0xff]
        %v1166 = vld [vmem:[#allocation15 + $0x90] sm:$0xff]
        %v1167 = vld [vmem:[#allocation15 + $0x98] sm:$0xff]
        %v1168 = vld [vmem:[#allocation15 + $0xa0] sm:$0xff]
        %v1169 = vld [vmem:[#allocation15 + $0xa8] sm:$0xff]
        %v1170 = vld [vmem:[#allocation15 + $0xb0] sm:$0xff]
        %v1171 = vld [vmem:[#allocation15 + $0xb8] sm:$0xff]
        %v1172 = vld [vmem:[#allocation15 + $0xc0] sm:$0xff]
        %v1173 = vld [vmem:[#allocation15 + $0xc8] sm:$0xff]
        %v1174 = vld [vmem:[#allocation15 + $0xd0] sm:$0xff]
        %v1175 = vld [vmem:[#allocation15 + $0xd8] sm:$0xff]
        %v1176 = vld [vmem:[#allocation15 + $0xe0] sm:$0xff]
        %v1177 = vld [vmem:[#allocation15 + $0xe8] sm:$0xff]
        %v1178 = vld [vmem:[#allocation15 + $0xf0] sm:$0xff]
        %v1179 = vld [vmem:[#allocation15 + $0xf8] sm:$0xff]
        %v1180 = vld [vmem:[#allocation15 + $0x100] sm:$0xff]
        %v1181 = vld [vmem:[#allocation15 + $0x108] sm:$0xff]
        %v1182 = vld [vmem:[#allocation15 + $0x110] sm:$0xff]
        %v1183 = vld [vmem:[#allocation15 + $0x118] sm:$0xff]
        %v1184 = vld [vmem:[#allocation15 + $0x120] sm:$0xff]
        %v1185 = vld [vmem:[#allocation15 + $0x128] sm:$0xff]
        %v1186 = vld [vmem:[#allocation15 + $0x130] sm:$0xff]
        %v1187 = vld [vmem:[#allocation15 + $0x138] sm:$0xff]
        %v1188 = vld [vmem:[#allocation15 + $0x140] sm:$0xff]
        %v1189 = vld [vmem:[#allocation15 + $0x148] sm:$0xff]
        %v1190 = vld [vmem:[#allocation15 + $0x150] sm:$0xff]
        %v1191 = vld [vmem:[#allocation15 + $0x158] sm:$0xff]
        %v1192 = vld [vmem:[#allocation15 + $0x160] sm:$0xff]
        %v1193 = vld [vmem:[#allocation15 + $0x168] sm:$0xff]
        %v1194 = vld [vmem:[#allocation15 + $0x170] sm:$0xff]
        %v1195 = vld [vmem:[#allocation15 + $0x178] sm:$0xff]
        %v1196 = vld [vmem:[#allocation15 + $0x180] sm:$0xff]
        %v1197 = vld [vmem:[#allocation15 + $0x188] sm:$0xff]
        %v1198 = vld [vmem:[#allocation15 + $0x190] sm:$0xff]
        %v1199 = vld [vmem:[#allocation15 + $0x198] sm:$0xff]
        %v1200 = vld [vmem:[#allocation15 + $0x1a0] sm:$0xff]
        %v1201 = vld [vmem:[#allocation15 + $0x1a8] sm:$0xff]
        %v1202 = vld [vmem:[#allocation15 + $0x1b0] sm:$0xff]
        %v1203 = vld [vmem:[#allocation15 + $0x1b8] sm:$0xff]
        %v1204 = vld [vmem:[#allocation15 + $0x1c0] sm:$0xff]
        %v1205 = vld [vmem:[#allocation15 + $0x1c8] sm:$0xff]
        %v1206 = vld [vmem:[#allocation15 + $0x1d0] sm:$0xff]
        %v1207 = vld [vmem:[#allocation15 + $0x1d8] sm:$0xff]
        %v1208 = vld [vmem:[#allocation15 + $0x1e0] sm:$0xff]
        %v1209 = vld [vmem:[#allocation15 + $0x1e8] sm:$0xff]
        %v1210 = vld [vmem:[#allocation15 + $0x1f0] sm:$0xff]
        %v1211 = vld [vmem:[#allocation15 + $0x1f8] sm:$0xff]
        %v1212 = vld [vmem:[#allocation16] sm:$0xff]
        %v1213 = vld [vmem:[#allocation16 + $0x8] sm:$0xff]
        %v1214 = vld [vmem:[#allocation16 + $0x10] sm:$0xff]
        %v1215 = vld [vmem:[#allocation16 + $0x18] sm:$0xff]
        %v1216 = vld [vmem:[#allocation16 + $0x20] sm:$0xff]
        %v1217 = vld [vmem:[#allocation16 + $0x28] sm:$0xff]
        %v1218 = vld [vmem:[#allocation16 + $0x30] sm:$0xff]
        %v1219 = vld [vmem:[#allocation16 + $0x38] sm:$0xff]
        %v1220 = vld [vmem:[#allocation16 + $0x40] sm:$0xff]
        %v1221 = vld [vmem:[#allocation16 + $0x48] sm:$0xff]
        %v1222 = vld [vmem:[#allocation16 + $0x50] sm:$0xff]
        %v1223 = vld [vmem:[#allocation16 + $0x58] sm:$0xff]
        %v1224 = vld [vmem:[#allocation16 + $0x60] sm:$0xff]
        %v1225 = vld [vmem:[#allocation16 + $0x68] sm:$0xff]
        %v1226 = vld [vmem:[#allocation16 + $0x70] sm:$0xff]
        %v1227 = vld [vmem:[#allocation16 + $0x78] sm:$0xff]
        %v1228 = vld [vmem:[#allocation16 + $0x80] sm:$0xff]
        %v1229 = vld [vmem:[#allocation16 + $0x88] sm:$0xff]
        %v1230 = vld [vmem:[#allocation16 + $0x90] sm:$0xff]
        %v1231 = vld [vmem:[#allocation16 + $0x98] sm:$0xff]
        %v1232 = vld [vmem:[#allocation16 + $0xa0] sm:$0xff]
        %v1233 = vld [vmem:[#allocation16 + $0xa8] sm:$0xff]
        %v1234 = vld [vmem:[#allocation16 + $0xb0] sm:$0xff]
        %v1235 = vld [vmem:[#allocation16 + $0xb8] sm:$0xff]
        %v1236 = vld [vmem:[#allocation16 + $0xc0] sm:$0xff]
        %v1237 = vld [vmem:[#allocation16 + $0xc8] sm:$0xff]
        %v1238 = vld [vmem:[#allocation16 + $0xd0] sm:$0xff]
        %v1239 = vld [vmem:[#allocation16 + $0xd8] sm:$0xff]
        %v1240 = vld [vmem:[#allocation16 + $0xe0] sm:$0xff]
        %v1241 = vld [vmem:[#allocation16 + $0xe8] sm:$0xff]
        %v1242 = vld [vmem:[#allocation16 + $0xf0] sm:$0xff]
        %v1243 = vld [vmem:[#allocation16 + $0xf8] sm:$0xff]
        %v1244 = vld [vmem:[#allocation16 + $0x100] sm:$0xff]
        %v1245 = vld [vmem:[#allocation16 + $0x108] sm:$0xff]
        %v1246 = vld [vmem:[#allocation16 + $0x110] sm:$0xff]
        %v1247 = vld [vmem:[#allocation16 + $0x118] sm:$0xff]
        %v1248 = vld [vmem:[#allocation16 + $0x120] sm:$0xff]
        %v1249 = vld [vmem:[#allocation16 + $0x128] sm:$0xff]
        %v1250 = vld [vmem:[#allocation16 + $0x130] sm:$0xff]
        %v1251 = vld [vmem:[#allocation16 + $0x138] sm:$0xff]
        %v1252 = vld [vmem:[#allocation16 + $0x140] sm:$0xff]
        %v1253 = vld [vmem:[#allocation16 + $0x148] sm:$0xff]
        %v1254 = vld [vmem:[#allocation16 + $0x150] sm:$0xff]
        %v1255 = vld [vmem:[#allocation16 + $0x158] sm:$0xff]
        %v1256 = vld [vmem:[#allocation16 + $0x160] sm:$0xff]
        %v1257 = vld [vmem:[#allocation16 + $0x168] sm:$0xff]
        %v1258 = vld [vmem:[#allocation16 + $0x170] sm:$0xff]
        %v1259 = vld [vmem:[#allocation16 + $0x178] sm:$0xff]
        %v1260 = vld [vmem:[#allocation16 + $0x180] sm:$0xff]
        %v1261 = vld [vmem:[#allocation16 + $0x188] sm:$0xff]
        %v1262 = vld [vmem:[#allocation16 + $0x190] sm:$0xff]
        %v1263 = vld [vmem:[#allocation16 + $0x198] sm:$0xff]
        %v1264 = vld [vmem:[#allocation16 + $0x1a0] sm:$0xff]
        %v1265 = vld [vmem:[#allocation16 + $0x1a8] sm:$0xff]
        %v1266 = vld [vmem:[#allocation16 + $0x1b0] sm:$0xff]
        %v1267 = vld [vmem:[#allocation16 + $0x1b8] sm:$0xff]
        %v1268 = vld [vmem:[#allocation16 + $0x1c0] sm:$0xff]
        %v1269 = vld [vmem:[#allocation16 + $0x1c8] sm:$0xff]
        %v1270 = vld [vmem:[#allocation16 + $0x1d0] sm:$0xff]
        %v1271 = vld [vmem:[#allocation16 + $0x1d8] sm:$0xff]
        %v1272 = vld [vmem:[#allocation16 + $0x1e0] sm:$0xff]
        %v1273 = vld [vmem:[#allocation16 + $0x1e8] sm:$0xff]
        %v1274 = vld [vmem:[#allocation16 + $0x1f0] sm:$0xff]
        %v1275 = vld [vmem:[#allocation16 + $0x1f8] sm:$0xff]
        %v1276 = vld [vmem:[#allocation2] sm:$0xff]
        %v1277 = vld [vmem:[#allocation3] sm:$0xff]
        %s1278 = scalar_lea.vmem [#allocation2], 8
        %v1279 = vld [vmem:[%s1278] sm:$0xff]
        %s1280 = scalar_lea.vmem [#allocation3], 8
        %v1281 = vld [vmem:[%s1280] sm:$0xff]
        %v1282 = vld [vmem:[#allocation4] sm:$0xff]
        %v1283 = vld [vmem:[#allocation4 + $0x8] sm:$0xff]
        %v1284 = vld [vmem:[#allocation4 + $0x10] sm:$0xff]
        %v1285 = vld [vmem:[#allocation4 + $0x18] sm:$0xff]
        %1286 = vmatprep.subr.mxu0 %v1209
        %1287 = vmatpush1.msra.mxu0 %v1208
        %1288 = vmatprep.subr.mxu0 %v1205
        %1289 = vmatpush1.msra.mxu0 %v1204
        %1290 = vmatprep.subr.mxu0 %v1201
        %1291 = vmatpush1.msra.mxu0 %v1200
        %1292 = vmatprep.subr.mxu0 %v1197
        %1293 = vmatpush1.msra.mxu0 %v1196
        %1294 = vmatprep.subr.mxu0 %v1193
        %1295 = vmatpush1.msra.mxu0 %v1192
        %1296 = vmatprep.subr.mxu0 %v1189
        %1297 = vmatpush1.msra.mxu0 %v1188
        %1298 = vmatprep.subr.mxu0 %v1185
        %1299 = vmatpush1.msra.mxu0 %v1184
        %1300 = vmatprep.subr.mxu0 %v1181
        %1301 = vmatpush1.msra.mxu0 %v1180
        %1302 = vmatprep.subr.mxu0 %v1177
        %1303 = vmatpush1.msra.mxu0 %v1176
        %1304 = vmatprep.subr.mxu0 %v1173
        %1305 = vmatpush1.msra.mxu0 %v1172
        %1306 = vmatprep.subr.mxu0 %v1169
        %1307 = vmatpush1.msra.mxu0 %v1168
        %1308 = vmatprep.subr.mxu0 %v1165
        %1309 = vmatpush1.msra.mxu0 %v1164
        %1310 = vmatprep.subr.mxu0 %v1161
        %1311 = vmatpush1.msra.mxu0 %v1160
        %1312 = vmatprep.subr.mxu0 %v1157
        %1313 = vmatpush1.msra.mxu0 %v1156
        %1314 = vmatprep.subr.mxu0 %v1153
        %1315 = vmatpush1.msra.mxu0 %v1152
        %1316 = vmatprep.subr.mxu0 %v1149
        %1317 = vmatpush1.msra.mxu0 %v1148
        %1318 = vmatprep.subr.mxu0 0.0
        %1319 = vmatpush2.msra.mxu0 0.0
        %1320 = vmatprep.subr.mxu0 0.0
        %1321 = vmatpush2.msra.mxu0 0.0
        %1322 = vmatprep.subr.mxu0 0.0
        %1323 = vmatpush2.msra.mxu0 0.0
        %1324 = vmatprep.subr.mxu0 0.0
        %1325 = vmatpush2.msra.mxu0 0.0
        %1326 = vmatprep.subr.mxu0 0.0
        %1327 = vmatpush2.msra.mxu0 0.0
        %1328 = vmatprep.subr.mxu0 0.0
        %1329 = vmatpush2.msra.mxu0 0.0
        %1330 = vmatprep.subr.mxu0 0.0
        %1331 = vmatpush2.msra.mxu0 0.0
        %1332 = vmatprep.subr.mxu0 0.0
        %1333 = vmatpush2.msra.mxu0 0.0
        %1334 = vmatprep.subr.mxu0 0.0
        %1335 = vmatpush2.msra.mxu0 0.0
        %1336 = vmatprep.subr.mxu0 0.0
        %1337 = vmatpush2.msra.mxu0 0.0
        %1338 = vmatprep.subr.mxu0 0.0
        %1339 = vmatpush2.msra.mxu0 0.0
        %1340 = vmatprep.subr.mxu0 0.0
        %1341 = vmatpush2.msra.mxu0 0.0
        %1342 = vmatprep.subr.mxu0 0.0
        %1343 = vmatpush2.msra.mxu0 0.0
        %1344 = vmatprep.subr.mxu0 0.0
        %1345 = vmatpush2.msra.mxu0 0.0
        %1346 = vmatprep.subr.mxu0 0.0
        %1347 = vmatpush2.msra.mxu0 0.0
        %1348 = vmatprep.subr.mxu0 0.0
        %1349 = vmatpush2.msra.mxu0 0.0
        %1350 = vmatprep.mubr.f32.mxu0 0.0
        %1351 = vmatmul.mubr.f32.gmra.mxu0 %v1276
        %v1352 = vpop.f32.mrf.mxu0
        %v1353 = vadd.f32 0.0, %v1352
        %v1354 = vpop.f32.mrf.mxu0
        %v1355 = vadd.f32 0.0, %v1354
        %1356 = vdwg.mxu0
        %1357 = vmatprep.subr.mxu0 %v1211
        %1358 = vmatpush1.msra.mxu0 %v1210
        %1359 = vmatprep.subr.mxu0 %v1207
        %1360 = vmatpush1.msra.mxu0 %v1206
        %1361 = vmatprep.subr.mxu0 %v1203
        %1362 = vmatpush1.msra.mxu0 %v1202
        %1363 = vmatprep.subr.mxu0 %v1199
        %1364 = vmatpush1.msra.mxu0 %v1198
        %1365 = vmatprep.subr.mxu0 %v1195
        %1366 = vmatpush1.msra.mxu0 %v1194
        %1367 = vmatprep.subr.mxu0 %v1191
        %1368 = vmatpush1.msra.mxu0 %v1190
        %1369 = vmatprep.subr.mxu0 %v1187
        %1370 = vmatpush1.msra.mxu0 %v1186
        %1371 = vmatprep.subr.mxu0 %v1183
        %1372 = vmatpush1.msra.mxu0 %v1182
        %1373 = vmatprep.subr.mxu0 %v1179
        %1374 = vmatpush1.msra.mxu0 %v1178
        %1375 = vmatprep.subr.mxu0 %v1175
        %1376 = vmatpush1.msra.mxu0 %v1174
        %1377 = vmatprep.subr.mxu0 %v1171
        %1378 = vmatpush1.msra.mxu0 %v1170
        %1379 = vmatprep.subr.mxu0 %v1167
        %1380 = vmatpush1.msra.mxu0 %v1166
        %1381 = vmatprep.subr.mxu0 %v1163
        %1382 = vmatpush1.msra.mxu0 %v1162
        %1383 = vmatprep.subr.mxu0 %v1159
        %1384 = vmatpush1.msra.mxu0 %v1158
        %1385 = vmatprep.subr.mxu0 %v1155
        %1386 = vmatpush1.msra.mxu0 %v1154
        %1387 = vmatprep.subr.mxu0 %v1151
        %1388 = vmatpush1.msra.mxu0 %v1150
        %1389 = vmatprep.subr.mxu0 0.0
        %1390 = vmatpush2.msra.mxu0 0.0
        %1391 = vmatprep.subr.mxu0 0.0
        %1392 = vmatpush2.msra.mxu0 0.0
        %1393 = vmatprep.subr.mxu0 0.0
        %1394 = vmatpush2.msra.mxu0 0.0
        %1395 = vmatprep.subr.mxu0 0.0
        %1396 = vmatpush2.msra.mxu0 0.0
        %1397 = vmatprep.subr.mxu0 0.0
        %1398 = vmatpush2.msra.mxu0 0.0
        %1399 = vmatprep.subr.mxu0 0.0
        %1400 = vmatpush2.msra.mxu0 0.0
        %1401 = vmatprep.subr.mxu0 0.0
        %1402 = vmatpush2.msra.mxu0 0.0
        %1403 = vmatprep.subr.mxu0 0.0
        %1404 = vmatpush2.msra.mxu0 0.0
        %1405 = vmatprep.subr.mxu0 0.0
        %1406 = vmatpush2.msra.mxu0 0.0
        %1407 = vmatprep.subr.mxu0 0.0
        %1408 = vmatpush2.msra.mxu0 0.0
        %1409 = vmatprep.subr.mxu0 0.0
        %1410 = vmatpush2.msra.mxu0 0.0
        %1411 = vmatprep.subr.mxu0 0.0
        %1412 = vmatpush2.msra.mxu0 0.0
        %1413 = vmatprep.subr.mxu0 0.0
        %1414 = vmatpush2.msra.mxu0 0.0
        %1415 = vmatprep.subr.mxu0 0.0
        %1416 = vmatpush2.msra.mxu0 0.0
        %1417 = vmatprep.subr.mxu0 0.0
        %1418 = vmatpush2.msra.mxu0 0.0
        %1419 = vmatprep.subr.mxu0 0.0
        %1420 = vmatpush2.msra.mxu0 0.0
        %1421 = vmatprep.mubr.f32.mxu0 0.0
        %1422 = vmatmul.mubr.f32.gmra.mxu0 %v1276
        %v1423 = vpop.f32.mrf.mxu0
        %v1424 = vadd.f32 0.0, %v1423
        %v1425 = vpop.f32.mrf.mxu0
        %v1426 = vadd.f32 0.0, %v1425
        %1427 = vdwg.mxu0
        %v1428 = vadd.f32 %v1282, %v1353
        %v1429 = vadd.f32 %v1283, %v1355
        %v1430 = vadd.f32 %v1284, %v1424
        %v1431 = vadd.f32 %v1285, %v1426
        %s1432 = scalar_lea.vmem [#allocation4], 192
        %v1433 = vld [vmem:[%s1432 + $0x20] sm:$0xff]
        %v1434 = vld [vmem:[%s1432 + $0x28] sm:$0xff]
        %v1435 = vld [vmem:[%s1432 + $0x30] sm:$0xff]
        %v1436 = vld [vmem:[%s1432 + $0x38] sm:$0xff]
        %1437 = vmatprep.subr.mxu0 %v1273
        %1438 = vmatpush1.msra.mxu0 %v1272
        %1439 = vmatprep.subr.mxu0 %v1269
        %1440 = vmatpush1.msra.mxu0 %v1268
        %1441 = vmatprep.subr.mxu0 %v1265
        %1442 = vmatpush1.msra.mxu0 %v1264
        %1443 = vmatprep.subr.mxu0 %v1261
        %1444 = vmatpush1.msra.mxu0 %v1260
        %1445 = vmatprep.subr.mxu0 %v1257
        %1446 = vmatpush1.msra.mxu0 %v1256
        %1447 = vmatprep.subr.mxu0 %v1253
        %1448 = vmatpush1.msra.mxu0 %v1252
        %1449 = vmatprep.subr.mxu0 %v1249
        %1450 = vmatpush1.msra.mxu0 %v1248
        %1451 = vmatprep.subr.mxu0 %v1245
        %1452 = vmatpush1.msra.mxu0 %v1244
        %1453 = vmatprep.subr.mxu0 %v1241
        %1454 = vmatpush1.msra.mxu0 %v1240
        %1455 = vmatprep.subr.mxu0 %v1237
        %1456 = vmatpush1.msra.mxu0 %v1236
        %1457 = vmatprep.subr.mxu0 %v1233
        %1458 = vmatpush1.msra.mxu0 %v1232
        %1459 = vmatprep.subr.mxu0 %v1229
        %1460 = vmatpush1.msra.mxu0 %v1228
        %1461 = vmatprep.subr.mxu0 %v1225
        %1462 = vmatpush1.msra.mxu0 %v1224
        %1463 = vmatprep.subr.mxu0 %v1221
        %1464 = vmatpush1.msra.mxu0 %v1220
        %1465 = vmatprep.subr.mxu0 %v1217
        %1466 = vmatpush1.msra.mxu0 %v1216
        %1467 = vmatprep.subr.mxu0 %v1213
        %1468 = vmatpush1.msra.mxu0 %v1212
        %1469 = vmatprep.subr.mxu0 0.0
        %1470 = vmatpush2.msra.mxu0 0.0
        %1471 = vmatprep.subr.mxu0 0.0
        %1472 = vmatpush2.msra.mxu0 0.0
        %1473 = vmatprep.subr.mxu0 0.0
        %1474 = vmatpush2.msra.mxu0 0.0
        %1475 = vmatprep.subr.mxu0 0.0
        %1476 = vmatpush2.msra.mxu0 0.0
        %1477 = vmatprep.subr.mxu0 0.0
        %1478 = vmatpush2.msra.mxu0 0.0
        %1479 = vmatprep.subr.mxu0 0.0
        %1480 = vmatpush2.msra.mxu0 0.0
        %1481 = vmatprep.subr.mxu0 0.0
        %1482 = vmatpush2.msra.mxu0 0.0
        %1483 = vmatprep.subr.mxu0 0.0
        %1484 = vmatpush2.msra.mxu0 0.0
        %1485 = vmatprep.subr.mxu0 0.0
        %1486 = vmatpush2.msra.mxu0 0.0
        %1487 = vmatprep.subr.mxu0 0.0
        %1488 = vmatpush2.msra.mxu0 0.0
        %1489 = vmatprep.subr.mxu0 0.0
        %1490 = vmatpush2.msra.mxu0 0.0
        %1491 = vmatprep.subr.mxu0 0.0
        %1492 = vmatpush2.msra.mxu0 0.0
        %1493 = vmatprep.subr.mxu0 0.0
        %1494 = vmatpush2.msra.mxu0 0.0
        %1495 = vmatprep.subr.mxu0 0.0
        %1496 = vmatpush2.msra.mxu0 0.0
        %1497 = vmatprep.subr.mxu0 0.0
        %1498 = vmatpush2.msra.mxu0 0.0
        %1499 = vmatprep.subr.mxu0 0.0
        %1500 = vmatpush2.msra.mxu0 0.0
        %1501 = vmatprep.mubr.f32.mxu0 0.0
        %1502 = vmatmul.mubr.f32.gmra.mxu0 %v1279
        %v1503 = vpop.f32.mrf.mxu0
        %v1504 = vadd.f32 0.0, %v1503
        %v1505 = vpop.f32.mrf.mxu0
        %v1506 = vadd.f32 0.0, %v1505
        %1507 = vdwg.mxu0
        %1508 = vmatprep.subr.mxu0 %v1275
        %1509 = vmatpush1.msra.mxu0 %v1274
        %1510 = vmatprep.subr.mxu0 %v1271
        %1511 = vmatpush1.msra.mxu0 %v1270
        %1512 = vmatprep.subr.mxu0 %v1267
        %1513 = vmatpush1.msra.mxu0 %v1266
        %1514 = vmatprep.subr.mxu0 %v1263
        %1515 = vmatpush1.msra.mxu0 %v1262
        %1516 = vmatprep.subr.mxu0 %v1259
        %1517 = vmatpush1.msra.mxu0 %v1258
        %1518 = vmatprep.subr.mxu0 %v1255
        %1519 = vmatpush1.msra.mxu0 %v1254
        %1520 = vmatprep.subr.mxu0 %v1251
        %1521 = vmatpush1.msra.mxu0 %v1250
        %1522 = vmatprep.subr.mxu0 %v1247
        %1523 = vmatpush1.msra.mxu0 %v1246
        %1524 = vmatprep.subr.mxu0 %v1243
        %1525 = vmatpush1.msra.mxu0 %v1242
        %1526 = vmatprep.subr.mxu0 %v1239
        %1527 = vmatpush1.msra.mxu0 %v1238
        %1528 = vmatprep.subr.mxu0 %v1235
        %1529 = vmatpush1.msra.mxu0 %v1234
        %1530 = vmatprep.subr.mxu0 %v1231
        %1531 = vmatpush1.msra.mxu0 %v1230
        %1532 = vmatprep.subr.mxu0 %v1227
        %1533 = vmatpush1.msra.mxu0 %v1226
        %1534 = vmatprep.subr.mxu0 %v1223
        %1535 = vmatpush1.msra.mxu0 %v1222
        %1536 = vmatprep.subr.mxu0 %v1219
        %1537 = vmatpush1.msra.mxu0 %v1218
        %1538 = vmatprep.subr.mxu0 %v1215
        %1539 = vmatpush1.msra.mxu0 %v1214
        %1540 = vmatprep.subr.mxu0 0.0
        %1541 = vmatpush2.msra.mxu0 0.0
        %1542 = vmatprep.subr.mxu0 0.0
        %1543 = vmatpush2.msra.mxu0 0.0
        %1544 = vmatprep.subr.mxu0 0.0
        %1545 = vmatpush2.msra.mxu0 0.0
        %1546 = vmatprep.subr.mxu0 0.0
        %1547 = vmatpush2.msra.mxu0 0.0
        %1548 = vmatprep.subr.mxu0 0.0
        %1549 = vmatpush2.msra.mxu0 0.0
        %1550 = vmatprep.subr.mxu0 0.0
        %1551 = vmatpush2.msra.mxu0 0.0
        %1552 = vmatprep.subr.mxu0 0.0
        %1553 = vmatpush2.msra.mxu0 0.0
        %1554 = vmatprep.subr.mxu0 0.0
        %1555 = vmatpush2.msra.mxu0 0.0
        %1556 = vmatprep.subr.mxu0 0.0
        %1557 = vmatpush2.msra.mxu0 0.0
        %1558 = vmatprep.subr.mxu0 0.0
        %1559 = vmatpush2.msra.mxu0 0.0
        %1560 = vmatprep.subr.mxu0 0.0
        %1561 = vmatpush2.msra.mxu0 0.0
        %1562 = vmatprep.subr.mxu0 0.0
        %1563 = vmatpush2.msra.mxu0 0.0
        %1564 = vmatprep.subr.mxu0 0.0
        %1565 = vmatpush2.msra.mxu0 0.0
        %1566 = vmatprep.subr.mxu0 0.0
        %1567 = vmatpush2.msra.mxu0 0.0
        %1568 = vmatprep.subr.mxu0 0.0
        %1569 = vmatpush2.msra.mxu0 0.0
        %1570 = vmatprep.subr.mxu0 0.0
        %1571 = vmatpush2.msra.mxu0 0.0
        %1572 = vmatprep.mubr.f32.mxu0 0.0
        %1573 = vmatmul.mubr.f32.gmra.mxu0 %v1279
        %v1574 = vpop.f32.mrf.mxu0
        %v1575 = vadd.f32 0.0, %v1574
        %v1576 = vpop.f32.mrf.mxu0
        %v1577 = vadd.f32 0.0, %v1576
        %1578 = vdwg.mxu0
        %v1579 = vadd.f32 %v1433, %v1504
        %v1580 = vadd.f32 %v1434, %v1506
        %v1581 = vadd.f32 %v1435, %v1575
        %v1582 = vadd.f32 %v1436, %v1577
        %v1583 = vxor.u32 %v1428, 2147483648
        %v1584 = vmul.f32 %v1583, 1.442695
        %v1585 = vpow.pop %v1584
        %v1586 = vadd.f32 %v1585, 1.0
        %v1587 = vrcp.pop %v1586
        %v1588 = vmul.f32 1.0, %v1587
        %v1589 = vxor.u32 %v1429, 2147483648
        %v1590 = vmul.f32 %v1589, 1.442695
        %v1591 = vpow.pop %v1590
        %v1592 = vadd.f32 %v1591, 1.0
        %v1593 = vrcp.pop %v1592
        %v1594 = vmul.f32 1.0, %v1593
        %v1595 = vtanh.pop %v1430
        %v1596 = vxor.u32 %v1431, 2147483648
        %v1597 = vmul.f32 %v1596, 1.442695
        %v1598 = vpow.pop %v1597
        %v1599 = vadd.f32 %v1598, 1.0
        %v1600 = vrcp.pop %v1599
        %v1601 = vmul.f32 1.0, %v1600
        %v1602 = vmul.f32 %v1594, %v1277
        %v1603 = vmul.f32 %v1588, %v1595
        %v1604 = vadd.f32 %v1602, %v1603
        %v1605 = vtanh.pop %v1604
        %v1606 = vmul.f32 %v1601, %v1605
        %v1607 = vxor.u32 %v1579, 2147483648
        %v1608 = vmul.f32 %v1607, 1.442695
        %v1609 = vpow.pop %v1608
        %v1610 = vadd.f32 %v1609, 1.0
        %v1611 = vrcp.pop %v1610
        %v1612 = vmul.f32 1.0, %v1611
        %v1613 = vxor.u32 %v1580, 2147483648
        %v1614 = vmul.f32 %v1613, 1.442695
        %v1615 = vpow.pop %v1614
        %v1616 = vadd.f32 %v1615, 1.0
        %v1617 = vrcp.pop %v1616
        %v1618 = vmul.f32 1.0, %v1617
        %v1619 = vtanh.pop %v1581
        %v1620 = vxor.u32 %v1582, 2147483648
        %v1621 = vmul.f32 %v1620, 1.442695
        %v1622 = vpow.pop %v1621
        %v1623 = vadd.f32 %v1622, 1.0
        %v1624 = vrcp.pop %v1623
        %v1625 = vmul.f32 1.0, %v1624
        %v1626 = vmul.f32 %v1618, %v1281
        %v1627 = vmul.f32 %v1612, %v1619
        %v1628 = vadd.f32 %v1626, %v1627
        %v1629 = vtanh.pop %v1628
        %v1630 = vmul.f32 %v1625, %v1629
        %1631 = vst [vmem:[#allocation6] sm:$0xff] %v1606
        %s1632 = scalar_lea.vmem [#allocation6], 48
        %1633 = vst [vmem:[%s1632 + $0x8] sm:$0xff] %v1630
        %s1634 = scalar_lea.vmem [#allocation4], 64
        %v1635 = vld [vmem:[%s1634] sm:$0xff]
        %v1636 = vld [vmem:[%s1634 + $0x8] sm:$0xff]
        %v1637 = vld [vmem:[%s1634 + $0x10] sm:$0xff]
        %v1638 = vld [vmem:[%s1634 + $0x18] sm:$0xff]
        %1639 = vmatprep.subr.mxu0 %v1209
        %1640 = vmatpush1.msra.mxu0 %v1208
        %1641 = vmatprep.subr.mxu0 %v1205
        %1642 = vmatpush1.msra.mxu0 %v1204
        %1643 = vmatprep.subr.mxu0 %v1201
        %1644 = vmatpush1.msra.mxu0 %v1200
        %1645 = vmatprep.subr.mxu0 %v1197
        %1646 = vmatpush1.msra.mxu0 %v1196
        %1647 = vmatprep.subr.mxu0 %v1193
        %1648 = vmatpush1.msra.mxu0 %v1192
        %1649 = vmatprep.subr.mxu0 %v1189
        %1650 = vmatpush1.msra.mxu0 %v1188
        %1651 = vmatprep.subr.mxu0 %v1185
        %1652 = vmatpush1.msra.mxu0 %v1184
        %1653 = vmatprep.subr.mxu0 %v1181
        %1654 = vmatpush1.msra.mxu0 %v1180
        %1655 = vmatprep.subr.mxu0 %v1177
        %1656 = vmatpush1.msra.mxu0 %v1176
        %1657 = vmatprep.subr.mxu0 %v1173
        %1658 = vmatpush1.msra.mxu0 %v1172
        %1659 = vmatprep.subr.mxu0 %v1169
        %1660 = vmatpush1.msra.mxu0 %v1168
        %1661 = vmatprep.subr.mxu0 %v1165
        %1662 = vmatpush1.msra.mxu0 %v1164
        %1663 = vmatprep.subr.mxu0 %v1161
        %1664 = vmatpush1.msra.mxu0 %v1160
        %1665 = vmatprep.subr.mxu0 %v1157
        %1666 = vmatpush1.msra.mxu0 %v1156
        %1667 = vmatprep.subr.mxu0 %v1153
        %1668 = vmatpush1.msra.mxu0 %v1152
        %1669 = vmatprep.subr.mxu0 %v1149
        %1670 = vmatpush1.msra.mxu0 %v1148
        %1671 = vmatprep.subr.mxu0 0.0
        %1672 = vmatpush2.msra.mxu0 0.0
        %1673 = vmatprep.subr.mxu0 0.0
        %1674 = vmatpush2.msra.mxu0 0.0
        %1675 = vmatprep.subr.mxu0 0.0
        %1676 = vmatpush2.msra.mxu0 0.0
        %1677 = vmatprep.subr.mxu0 0.0
        %1678 = vmatpush2.msra.mxu0 0.0
        %1679 = vmatprep.subr.mxu0 0.0
        %1680 = vmatpush2.msra.mxu0 0.0
        %1681 = vmatprep.subr.mxu0 0.0
        %1682 = vmatpush2.msra.mxu0 0.0
        %1683 = vmatprep.subr.mxu0 0.0
        %1684 = vmatpush2.msra.mxu0 0.0
        %1685 = vmatprep.subr.mxu0 0.0
        %1686 = vmatpush2.msra.mxu0 0.0
        %1687 = vmatprep.subr.mxu0 0.0
        %1688 = vmatpush2.msra.mxu0 0.0
        %1689 = vmatprep.subr.mxu0 0.0
        %1690 = vmatpush2.msra.mxu0 0.0
        %1691 = vmatprep.subr.mxu0 0.0
        %1692 = vmatpush2.msra.mxu0 0.0
        %1693 = vmatprep.subr.mxu0 0.0
        %1694 = vmatpush2.msra.mxu0 0.0
        %1695 = vmatprep.subr.mxu0 0.0
        %1696 = vmatpush2.msra.mxu0 0.0
        %1697 = vmatprep.subr.mxu0 0.0
        %1698 = vmatpush2.msra.mxu0 0.0
        %1699 = vmatprep.subr.mxu0 0.0
        %1700 = vmatpush2.msra.mxu0 0.0
        %1701 = vmatprep.subr.mxu0 0.0
        %1702 = vmatpush2.msra.mxu0 0.0
        %1703 = vmatprep.mubr.f32.mxu0 0.0
        %1704 = vmatmul.mubr.f32.gmra.mxu0 %v1606
        %v1705 = vpop.f32.mrf.mxu0
        %v1706 = vadd.f32 0.0, %v1705
        %v1707 = vpop.f32.mrf.mxu0
        %v1708 = vadd.f32 0.0, %v1707
        %1709 = vdwg.mxu0
        %1710 = vmatprep.subr.mxu0 %v1211
        %1711 = vmatpush1.msra.mxu0 %v1210
        %1712 = vmatprep.subr.mxu0 %v1207
        %1713 = vmatpush1.msra.mxu0 %v1206
        %1714 = vmatprep.subr.mxu0 %v1203
        %1715 = vmatpush1.msra.mxu0 %v1202
        %1716 = vmatprep.subr.mxu0 %v1199
        %1717 = vmatpush1.msra.mxu0 %v1198
        %1718 = vmatprep.subr.mxu0 %v1195
        %1719 = vmatpush1.msra.mxu0 %v1194
        %1720 = vmatprep.subr.mxu0 %v1191
        %1721 = vmatpush1.msra.mxu0 %v1190
        %1722 = vmatprep.subr.mxu0 %v1187
        %1723 = vmatpush1.msra.mxu0 %v1186
        %1724 = vmatprep.subr.mxu0 %v1183
        %1725 = vmatpush1.msra.mxu0 %v1182
        %1726 = vmatprep.subr.mxu0 %v1179
        %1727 = vmatpush1.msra.mxu0 %v1178
        %1728 = vmatprep.subr.mxu0 %v1175
        %1729 = vmatpush1.msra.mxu0 %v1174
        %1730 = vmatprep.subr.mxu0 %v1171
        %1731 = vmatpush1.msra.mxu0 %v1170
        %1732 = vmatprep.subr.mxu0 %v1167
        %1733 = vmatpush1.msra.mxu0 %v1166
        %1734 = vmatprep.subr.mxu0 %v1163
        %1735 = vmatpush1.msra.mxu0 %v1162
        %1736 = vmatprep.subr.mxu0 %v1159
        %1737 = vmatpush1.msra.mxu0 %v1158
        %1738 = vmatprep.subr.mxu0 %v1155
        %1739 = vmatpush1.msra.mxu0 %v1154
        %1740 = vmatprep.subr.mxu0 %v1151
        %1741 = vmatpush1.msra.mxu0 %v1150
        %1742 = vmatprep.subr.mxu0 0.0
        %1743 = vmatpush2.msra.mxu0 0.0
        %1744 = vmatprep.subr.mxu0 0.0
        %1745 = vmatpush2.msra.mxu0 0.0
        %1746 = vmatprep.subr.mxu0 0.0
        %1747 = vmatpush2.msra.mxu0 0.0
        %1748 = vmatprep.subr.mxu0 0.0
        %1749 = vmatpush2.msra.mxu0 0.0
        %1750 = vmatprep.subr.mxu0 0.0
        %1751 = vmatpush2.msra.mxu0 0.0
        %1752 = vmatprep.subr.mxu0 0.0
        %1753 = vmatpush2.msra.mxu0 0.0
        %1754 = vmatprep.subr.mxu0 0.0
        %1755 = vmatpush2.msra.mxu0 0.0
        %1756 = vmatprep.subr.mxu0 0.0
        %1757 = vmatpush2.msra.mxu0 0.0
        %1758 = vmatprep.subr.mxu0 0.0
        %1759 = vmatpush2.msra.mxu0 0.0
        %1760 = vmatprep.subr.mxu0 0.0
        %1761 = vmatpush2.msra.mxu0 0.0
        %1762 = vmatprep.subr.mxu0 0.0
        %1763 = vmatpush2.msra.mxu0 0.0
        %1764 = vmatprep.subr.mxu0 0.0
        %1765 = vmatpush2.msra.mxu0 0.0
        %1766 = vmatprep.subr.mxu0 0.0
        %1767 = vmatpush2.msra.mxu0 0.0
        %1768 = vmatprep.subr.mxu0 0.0
        %1769 = vmatpush2.msra.mxu0 0.0
        %1770 = vmatprep.subr.mxu0 0.0
        %1771 = vmatpush2.msra.mxu0 0.0
        %1772 = vmatprep.subr.mxu0 0.0
        %1773 = vmatpush2.msra.mxu0 0.0
        %1774 = vmatprep.mubr.f32.mxu0 0.0
        %1775 = vmatmul.mubr.f32.gmra.mxu0 %v1606
        %v1776 = vpop.f32.mrf.mxu0
        %v1777 = vadd.f32 0.0, %v1776
        %v1778 = vpop.f32.mrf.mxu0
        %v1779 = vadd.f32 0.0, %v1778
        %1780 = vdwg.mxu0
        %v1781 = vadd.f32 %v1635, %v1706
        %v1782 = vadd.f32 %v1636, %v1708
        %v1783 = vadd.f32 %v1637, %v1777
        %v1784 = vadd.f32 %v1638, %v1779
        %s1785 = scalar_lea.vmem [#allocation4], 128
        %v1786 = vld [vmem:[%s1785 + $0x20] sm:$0xff]
        %v1787 = vld [vmem:[%s1785 + $0x28] sm:$0xff]
        %v1788 = vld [vmem:[%s1785 + $0x30] sm:$0xff]
        %v1789 = vld [vmem:[%s1785 + $0x38] sm:$0xff]
        %1790 = vmatprep.subr.mxu0 %v1273
        %1791 = vmatpush1.msra.mxu0 %v1272
        %1792 = vmatprep.subr.mxu0 %v1269
        %1793 = vmatpush1.msra.mxu0 %v1268
        %1794 = vmatprep.subr.mxu0 %v1265
        %1795 = vmatpush1.msra.mxu0 %v1264
        %1796 = vmatprep.subr.mxu0 %v1261
        %1797 = vmatpush1.msra.mxu0 %v1260
        %1798 = vmatprep.subr.mxu0 %v1257
        %1799 = vmatpush1.msra.mxu0 %v1256
        %1800 = vmatprep.subr.mxu0 %v1253
        %1801 = vmatpush1.msra.mxu0 %v1252
        %1802 = vmatprep.subr.mxu0 %v1249
        %1803 = vmatpush1.msra.mxu0 %v1248
        %1804 = vmatprep.subr.mxu0 %v1245
        %1805 = vmatpush1.msra.mxu0 %v1244
        %1806 = vmatprep.subr.mxu0 %v1241
        %1807 = vmatpush1.msra.mxu0 %v1240
        %1808 = vmatprep.subr.mxu0 %v1237
        %1809 = vmatpush1.msra.mxu0 %v1236
        %1810 = vmatprep.subr.mxu0 %v1233
        %1811 = vmatpush1.msra.mxu0 %v1232
        %1812 = vmatprep.subr.mxu0 %v1229
        %1813 = vmatpush1.msra.mxu0 %v1228
        %1814 = vmatprep.subr.mxu0 %v1225
        %1815 = vmatpush1.msra.mxu0 %v1224
        %1816 = vmatprep.subr.mxu0 %v1221
        %1817 = vmatpush1.msra.mxu0 %v1220
        %1818 = vmatprep.subr.mxu0 %v1217
        %1819 = vmatpush1.msra.mxu0 %v1216
        %1820 = vmatprep.subr.mxu0 %v1213
        %1821 = vmatpush1.msra.mxu0 %v1212
        %1822 = vmatprep.subr.mxu0 0.0
        %1823 = vmatpush2.msra.mxu0 0.0
        %1824 = vmatprep.subr.mxu0 0.0
        %1825 = vmatpush2.msra.mxu0 0.0
        %1826 = vmatprep.subr.mxu0 0.0
        %1827 = vmatpush2.msra.mxu0 0.0
        %1828 = vmatprep.subr.mxu0 0.0
        %1829 = vmatpush2.msra.mxu0 0.0
        %1830 = vmatprep.subr.mxu0 0.0
        %1831 = vmatpush2.msra.mxu0 0.0
        %1832 = vmatprep.subr.mxu0 0.0
        %1833 = vmatpush2.msra.mxu0 0.0
        %1834 = vmatprep.subr.mxu0 0.0
        %1835 = vmatpush2.msra.mxu0 0.0
        %1836 = vmatprep.subr.mxu0 0.0
        %1837 = vmatpush2.msra.mxu0 0.0
        %1838 = vmatprep.subr.mxu0 0.0
        %1839 = vmatpush2.msra.mxu0 0.0
        %1840 = vmatprep.subr.mxu0 0.0
        %1841 = vmatpush2.msra.mxu0 0.0
        %1842 = vmatprep.subr.mxu0 0.0
        %1843 = vmatpush2.msra.mxu0 0.0
        %1844 = vmatprep.subr.mxu0 0.0
        %1845 = vmatpush2.msra.mxu0 0.0
        %1846 = vmatprep.subr.mxu0 0.0
        %1847 = vmatpush2.msra.mxu0 0.0
        %1848 = vmatprep.subr.mxu0 0.0
        %1849 = vmatpush2.msra.mxu0 0.0
        %1850 = vmatprep.subr.mxu0 0.0
        %1851 = vmatpush2.msra.mxu0 0.0
        %1852 = vmatprep.subr.mxu0 0.0
        %1853 = vmatpush2.msra.mxu0 0.0
        %1854 = vmatprep.mubr.f32.mxu0 0.0
        %1855 = vmatmul.mubr.f32.gmra.mxu0 %v1630
        %v1856 = vpop.f32.mrf.mxu0
        %v1857 = vadd.f32 0.0, %v1856
        %v1858 = vpop.f32.mrf.mxu0
        %v1859 = vadd.f32 0.0, %v1858
        %1860 = vdwg.mxu0
        %1861 = vmatprep.subr.mxu0 %v1275
        %1862 = vmatpush1.msra.mxu0 %v1274
        %1863 = vmatprep.subr.mxu0 %v1271
        %1864 = vmatpush1.msra.mxu0 %v1270
        %1865 = vmatprep.subr.mxu0 %v1267
        %1866 = vmatpush1.msra.mxu0 %v1266
        %1867 = vmatprep.subr.mxu0 %v1263
        %1868 = vmatpush1.msra.mxu0 %v1262
        %1869 = vmatprep.subr.mxu0 %v1259
        %1870 = vmatpush1.msra.mxu0 %v1258
        %1871 = vmatprep.subr.mxu0 %v1255
        %1872 = vmatpush1.msra.mxu0 %v1254
        %1873 = vmatprep.subr.mxu0 %v1251
        %1874 = vmatpush1.msra.mxu0 %v1250
        %1875 = vmatprep.subr.mxu0 %v1247
        %1876 = vmatpush1.msra.mxu0 %v1246
        %1877 = vmatprep.subr.mxu0 %v1243
        %1878 = vmatpush1.msra.mxu0 %v1242
        %1879 = vmatprep.subr.mxu0 %v1239
        %1880 = vmatpush1.msra.mxu0 %v1238
        %1881 = vmatprep.subr.mxu0 %v1235
        %1882 = vmatpush1.msra.mxu0 %v1234
        %1883 = vmatprep.subr.mxu0 %v1231
        %1884 = vmatpush1.msra.mxu0 %v1230
        %1885 = vmatprep.subr.mxu0 %v1227
        %1886 = vmatpush1.msra.mxu0 %v1226
        %1887 = vmatprep.subr.mxu0 %v1223
        %1888 = vmatpush1.msra.mxu0 %v1222
        %1889 = vmatprep.subr.mxu0 %v1219
        %1890 = vmatpush1.msra.mxu0 %v1218
        %1891 = vmatprep.subr.mxu0 %v1215
        %1892 = vmatpush1.msra.mxu0 %v1214
        %1893 = vmatprep.subr.mxu0 0.0
        %1894 = vmatpush2.msra.mxu0 0.0
        %1895 = vmatprep.subr.mxu0 0.0
        %1896 = vmatpush2.msra.mxu0 0.0
        %1897 = vmatprep.subr.mxu0 0.0
        %1898 = vmatpush2.msra.mxu0 0.0
        %1899 = vmatprep.subr.mxu0 0.0
        %1900 = vmatpush2.msra.mxu0 0.0
        %1901 = vmatprep.subr.mxu0 0.0
        %1902 = vmatpush2.msra.mxu0 0.0
        %1903 = vmatprep.subr.mxu0 0.0
        %1904 = vmatpush2.msra.mxu0 0.0
        %1905 = vmatprep.subr.mxu0 0.0
        %1906 = vmatpush2.msra.mxu0 0.0
        %1907 = vmatprep.subr.mxu0 0.0
        %1908 = vmatpush2.msra.mxu0 0.0
        %1909 = vmatprep.subr.mxu0 0.0
        %1910 = vmatpush2.msra.mxu0 0.0
        %1911 = vmatprep.subr.mxu0 0.0
        %1912 = vmatpush2.msra.mxu0 0.0
        %1913 = vmatprep.subr.mxu0 0.0
        %1914 = vmatpush2.msra.mxu0 0.0
        %1915 = vmatprep.subr.mxu0 0.0
        %1916 = vmatpush2.msra.mxu0 0.0
        %1917 = vmatprep.subr.mxu0 0.0
        %1918 = vmatpush2.msra.mxu0 0.0
        %1919 = vmatprep.subr.mxu0 0.0
        %1920 = vmatpush2.msra.mxu0 0.0
        %1921 = vmatprep.subr.mxu0 0.0
        %1922 = vmatpush2.msra.mxu0 0.0
        %1923 = vmatprep.subr.mxu0 0.0
        %1924 = vmatpush2.msra.mxu0 0.0
        %1925 = vmatprep.mubr.f32.mxu0 0.0
        %1926 = vmatmul.mubr.f32.gmra.mxu0 %v1630
        %v1927 = vpop.f32.mrf.mxu0
        %v1928 = vadd.f32 0.0, %v1927
        %v1929 = vpop.f32.mrf.mxu0
        %v1930 = vadd.f32 0.0, %v1929
        %1931 = vdwg.mxu0
        %v1932 = vadd.f32 %v1786, %v1857
        %v1933 = vadd.f32 %v1787, %v1859
        %v1934 = vadd.f32 %v1788, %v1928
        %v1935 = vadd.f32 %v1789, %v1930
        %v1936 = vxor.u32 %v1781, 2147483648
        %v1937 = vmul.f32 %v1936, 1.442695
        %v1938 = vpow.pop %v1937
        %v1939 = vadd.f32 %v1938, 1.0
        %v1940 = vrcp.pop %v1939
        %v1941 = vmul.f32 1.0, %v1940
        %v1942 = vxor.u32 %v1782, 2147483648
        %v1943 = vmul.f32 %v1942, 1.442695
        %v1944 = vpow.pop %v1943
        %v1945 = vadd.f32 %v1944, 1.0
        %v1946 = vrcp.pop %v1945
        %v1947 = vmul.f32 1.0, %v1946
        %v1948 = vtanh.pop %v1783
        %v1949 = vxor.u32 %v1784, 2147483648
        %v1950 = vmul.f32 %v1949, 1.442695
        %v1951 = vpow.pop %v1950
        %v1952 = vadd.f32 %v1951, 1.0
        %v1953 = vrcp.pop %v1952
        %v1954 = vmul.f32 1.0, %v1953
        %v1955 = vmul.f32 %v1947, %v1604
        %v1956 = vmul.f32 %v1941, %v1948
        %v1957 = vadd.f32 %v1955, %v1956
        %v1958 = vtanh.pop %v1957
        %v1959 = vmul.f32 %v1954, %v1958
        %v1960 = vxor.u32 %v1932, 2147483648
        %v1961 = vmul.f32 %v1960, 1.442695
        %v1962 = vpow.pop %v1961
        %v1963 = vadd.f32 %v1962, 1.0
        %v1964 = vrcp.pop %v1963
        %v1965 = vmul.f32 1.0, %v1964
        %v1966 = vxor.u32 %v1933, 2147483648
        %v1967 = vmul.f32 %v1966, 1.442695
        %v1968 = vpow.pop %v1967
        %v1969 = vadd.f32 %v1968, 1.0
        %v1970 = vrcp.pop %v1969
        %v1971 = vmul.f32 1.0, %v1970
        %v1972 = vtanh.pop %v1934
        %v1973 = vxor.u32 %v1935, 2147483648
        %v1974 = vmul.f32 %v1973, 1.442695
        %v1975 = vpow.pop %v1974
        %v1976 = vadd.f32 %v1975, 1.0
        %v1977 = vrcp.pop %v1976
        %v1978 = vmul.f32 1.0, %v1977
        %v1979 = vmul.f32 %v1971, %v1628
        %v1980 = vmul.f32 %v1965, %v1972
        %v1981 = vadd.f32 %v1979, %v1980
        %v1982 = vtanh.pop %v1981
        %v1983 = vmul.f32 %v1978, %v1982
        %s1984 = scalar_lea.vmem [#allocation6], 16
        %1985 = vst [vmem:[%s1984] sm:$0xff] %v1959
        %s1986 = scalar_lea.vmem [#allocation6], 32
        %1987 = vst [vmem:[%s1986 + $0x8] sm:$0xff] %v1983
        %v1988 = vld [vmem:[%s1785] sm:$0xff]
        %v1989 = vld [vmem:[%s1785 + $0x8] sm:$0xff]
        %v1990 = vld [vmem:[%s1785 + $0x10] sm:$0xff]
        %v1991 = vld [vmem:[%s1785 + $0x18] sm:$0xff]
        %1992 = vmatprep.subr.mxu0 %v1209
        %1993 = vmatpush1.msra.mxu0 %v1208
        %1994 = vmatprep.subr.mxu0 %v1205
        %1995 = vmatpush1.msra.mxu0 %v1204
        %1996 = vmatprep.subr.mxu0 %v1201
        %1997 = vmatpush1.msra.mxu0 %v1200
        %1998 = vmatprep.subr.mxu0 %v1197
        %1999 = vmatpush1.msra.mxu0 %v1196
        %2000 = vmatprep.subr.mxu0 %v1193
        %2001 = vmatpush1.msra.mxu0 %v1192
        %2002 = vmatprep.subr.mxu0 %v1189
        %2003 = vmatpush1.msra.mxu0 %v1188
        %2004 = vmatprep.subr.mxu0 %v1185
        %2005 = vmatpush1.msra.mxu0 %v1184
        %2006 = vmatprep.subr.mxu0 %v1181
        %2007 = vmatpush1.msra.mxu0 %v1180
        %2008 = vmatprep.subr.mxu0 %v1177
        %2009 = vmatpush1.msra.mxu0 %v1176
        %2010 = vmatprep.subr.mxu0 %v1173
        %2011 = vmatpush1.msra.mxu0 %v1172
        %2012 = vmatprep.subr.mxu0 %v1169
        %2013 = vmatpush1.msra.mxu0 %v1168
        %2014 = vmatprep.subr.mxu0 %v1165
        %2015 = vmatpush1.msra.mxu0 %v1164
        %2016 = vmatprep.subr.mxu0 %v1161
        %2017 = vmatpush1.msra.mxu0 %v1160
        %2018 = vmatprep.subr.mxu0 %v1157
        %2019 = vmatpush1.msra.mxu0 %v1156
        %2020 = vmatprep.subr.mxu0 %v1153
        %2021 = vmatpush1.msra.mxu0 %v1152
        %2022 = vmatprep.subr.mxu0 %v1149
        %2023 = vmatpush1.msra.mxu0 %v1148
        %2024 = vmatprep.subr.mxu0 0.0
        %2025 = vmatpush2.msra.mxu0 0.0
        %2026 = vmatprep.subr.mxu0 0.0
        %2027 = vmatpush2.msra.mxu0 0.0
        %2028 = vmatprep.subr.mxu0 0.0
        %2029 = vmatpush2.msra.mxu0 0.0
        %2030 = vmatprep.subr.mxu0 0.0
        %2031 = vmatpush2.msra.mxu0 0.0
        %2032 = vmatprep.subr.mxu0 0.0
        %2033 = vmatpush2.msra.mxu0 0.0
        %2034 = vmatprep.subr.mxu0 0.0
        %2035 = vmatpush2.msra.mxu0 0.0
        %2036 = vmatprep.subr.mxu0 0.0
        %2037 = vmatpush2.msra.mxu0 0.0
        %2038 = vmatprep.subr.mxu0 0.0
        %2039 = vmatpush2.msra.mxu0 0.0
        %2040 = vmatprep.subr.mxu0 0.0
        %2041 = vmatpush2.msra.mxu0 0.0
        %2042 = vmatprep.subr.mxu0 0.0
        %2043 = vmatpush2.msra.mxu0 0.0
        %2044 = vmatprep.subr.mxu0 0.0
        %2045 = vmatpush2.msra.mxu0 0.0
        %2046 = vmatprep.subr.mxu0 0.0
        %2047 = vmatpush2.msra.mxu0 0.0
        %2048 = vmatprep.subr.mxu0 0.0
        %2049 = vmatpush2.msra.mxu0 0.0
        %2050 = vmatprep.subr.mxu0 0.0
        %2051 = vmatpush2.msra.mxu0 0.0
        %2052 = vmatprep.subr.mxu0 0.0
        %2053 = vmatpush2.msra.mxu0 0.0
        %2054 = vmatprep.subr.mxu0 0.0
        %2055 = vmatpush2.msra.mxu0 0.0
        %2056 = vmatprep.mubr.f32.mxu0 0.0
        %2057 = vmatmul.mubr.f32.gmra.mxu0 %v1959
        %v2058 = vpop.f32.mrf.mxu0
        %v2059 = vadd.f32 0.0, %v2058
        %v2060 = vpop.f32.mrf.mxu0
        %v2061 = vadd.f32 0.0, %v2060
        %2062 = vdwg.mxu0
        %2063 = vmatprep.subr.mxu0 %v1211
        %2064 = vmatpush1.msra.mxu0 %v1210
        %2065 = vmatprep.subr.mxu0 %v1207
        %2066 = vmatpush1.msra.mxu0 %v1206
        %2067 = vmatprep.subr.mxu0 %v1203
        %2068 = vmatpush1.msra.mxu0 %v1202
        %2069 = vmatprep.subr.mxu0 %v1199
        %2070 = vmatpush1.msra.mxu0 %v1198
        %2071 = vmatprep.subr.mxu0 %v1195
        %2072 = vmatpush1.msra.mxu0 %v1194
        %2073 = vmatprep.subr.mxu0 %v1191
        %2074 = vmatpush1.msra.mxu0 %v1190
        %2075 = vmatprep.subr.mxu0 %v1187
        %2076 = vmatpush1.msra.mxu0 %v1186
        %2077 = vmatprep.subr.mxu0 %v1183
        %2078 = vmatpush1.msra.mxu0 %v1182
        %2079 = vmatprep.subr.mxu0 %v1179
        %2080 = vmatpush1.msra.mxu0 %v1178
        %2081 = vmatprep.subr.mxu0 %v1175
        %2082 = vmatpush1.msra.mxu0 %v1174
        %2083 = vmatprep.subr.mxu0 %v1171
        %2084 = vmatpush1.msra.mxu0 %v1170
        %2085 = vmatprep.subr.mxu0 %v1167
        %2086 = vmatpush1.msra.mxu0 %v1166
        %2087 = vmatprep.subr.mxu0 %v1163
        %2088 = vmatpush1.msra.mxu0 %v1162
        %2089 = vmatprep.subr.mxu0 %v1159
        %2090 = vmatpush1.msra.mxu0 %v1158
        %2091 = vmatprep.subr.mxu0 %v1155
        %2092 = vmatpush1.msra.mxu0 %v1154
        %2093 = vmatprep.subr.mxu0 %v1151
        %2094 = vmatpush1.msra.mxu0 %v1150
        %2095 = vmatprep.subr.mxu0 0.0
        %2096 = vmatpush2.msra.mxu0 0.0
        %2097 = vmatprep.subr.mxu0 0.0
        %2098 = vmatpush2.msra.mxu0 0.0
        %2099 = vmatprep.subr.mxu0 0.0
        %2100 = vmatpush2.msra.mxu0 0.0
        %2101 = vmatprep.subr.mxu0 0.0
        %2102 = vmatpush2.msra.mxu0 0.0
        %2103 = vmatprep.subr.mxu0 0.0
        %2104 = vmatpush2.msra.mxu0 0.0
        %2105 = vmatprep.subr.mxu0 0.0
        %2106 = vmatpush2.msra.mxu0 0.0
        %2107 = vmatprep.subr.mxu0 0.0
        %2108 = vmatpush2.msra.mxu0 0.0
        %2109 = vmatprep.subr.mxu0 0.0
        %2110 = vmatpush2.msra.mxu0 0.0
        %2111 = vmatprep.subr.mxu0 0.0
        %2112 = vmatpush2.msra.mxu0 0.0
        %2113 = vmatprep.subr.mxu0 0.0
        %2114 = vmatpush2.msra.mxu0 0.0
        %2115 = vmatprep.subr.mxu0 0.0
        %2116 = vmatpush2.msra.mxu0 0.0
        %2117 = vmatprep.subr.mxu0 0.0
        %2118 = vmatpush2.msra.mxu0 0.0
        %2119 = vmatprep.subr.mxu0 0.0
        %2120 = vmatpush2.msra.mxu0 0.0
        %2121 = vmatprep.subr.mxu0 0.0
        %2122 = vmatpush2.msra.mxu0 0.0
        %2123 = vmatprep.subr.mxu0 0.0
        %2124 = vmatpush2.msra.mxu0 0.0
        %2125 = vmatprep.subr.mxu0 0.0
        %2126 = vmatpush2.msra.mxu0 0.0
        %2127 = vmatprep.mubr.f32.mxu0 0.0
        %2128 = vmatmul.mubr.f32.gmra.mxu0 %v1959
        %v2129 = vpop.f32.mrf.mxu0
        %v2130 = vadd.f32 0.0, %v2129
        %v2131 = vpop.f32.mrf.mxu0
        %v2132 = vadd.f32 0.0, %v2131
        %2133 = vdwg.mxu0
        %v2134 = vadd.f32 %v1988, %v2059
        %v2135 = vadd.f32 %v1989, %v2061
        %v2136 = vadd.f32 %v1990, %v2130
        %v2137 = vadd.f32 %v1991, %v2132
        %v2138 = vld [vmem:[%s1634 + $0x20] sm:$0xff]
        %v2139 = vld [vmem:[%s1634 + $0x28] sm:$0xff]
        %v2140 = vld [vmem:[%s1634 + $0x30] sm:$0xff]
        %v2141 = vld [vmem:[%s1634 + $0x38] sm:$0xff]
        %2142 = vmatprep.subr.mxu0 %v1273
        %2143 = vmatpush1.msra.mxu0 %v1272
        %2144 = vmatprep.subr.mxu0 %v1269
        %2145 = vmatpush1.msra.mxu0 %v1268
        %2146 = vmatprep.subr.mxu0 %v1265
        %2147 = vmatpush1.msra.mxu0 %v1264
        %2148 = vmatprep.subr.mxu0 %v1261
        %2149 = vmatpush1.msra.mxu0 %v1260
        %2150 = vmatprep.subr.mxu0 %v1257
        %2151 = vmatpush1.msra.mxu0 %v1256
        %2152 = vmatprep.subr.mxu0 %v1253
        %2153 = vmatpush1.msra.mxu0 %v1252
        %2154 = vmatprep.subr.mxu0 %v1249
        %2155 = vmatpush1.msra.mxu0 %v1248
        %2156 = vmatprep.subr.mxu0 %v1245
        %2157 = vmatpush1.msra.mxu0 %v1244
        %2158 = vmatprep.subr.mxu0 %v1241
        %2159 = vmatpush1.msra.mxu0 %v1240
        %2160 = vmatprep.subr.mxu0 %v1237
        %2161 = vmatpush1.msra.mxu0 %v1236
        %2162 = vmatprep.subr.mxu0 %v1233
        %2163 = vmatpush1.msra.mxu0 %v1232
        %2164 = vmatprep.subr.mxu0 %v1229
        %2165 = vmatpush1.msra.mxu0 %v1228
        %2166 = vmatprep.subr.mxu0 %v1225
        %2167 = vmatpush1.msra.mxu0 %v1224
        %2168 = vmatprep.subr.mxu0 %v1221
        %2169 = vmatpush1.msra.mxu0 %v1220
        %2170 = vmatprep.subr.mxu0 %v1217
        %2171 = vmatpush1.msra.mxu0 %v1216
        %2172 = vmatprep.subr.mxu0 %v1213
        %2173 = vmatpush1.msra.mxu0 %v1212
        %2174 = vmatprep.subr.mxu0 0.0
        %2175 = vmatpush2.msra.mxu0 0.0
        %2176 = vmatprep.subr.mxu0 0.0
        %2177 = vmatpush2.msra.mxu0 0.0
        %2178 = vmatprep.subr.mxu0 0.0
        %2179 = vmatpush2.msra.mxu0 0.0
        %2180 = vmatprep.subr.mxu0 0.0
        %2181 = vmatpush2.msra.mxu0 0.0
        %2182 = vmatprep.subr.mxu0 0.0
        %2183 = vmatpush2.msra.mxu0 0.0
        %2184 = vmatprep.subr.mxu0 0.0
        %2185 = vmatpush2.msra.mxu0 0.0
        %2186 = vmatprep.subr.mxu0 0.0
        %2187 = vmatpush2.msra.mxu0 0.0
        %2188 = vmatprep.subr.mxu0 0.0
        %2189 = vmatpush2.msra.mxu0 0.0
        %2190 = vmatprep.subr.mxu0 0.0
        %2191 = vmatpush2.msra.mxu0 0.0
        %2192 = vmatprep.subr.mxu0 0.0
        %2193 = vmatpush2.msra.mxu0 0.0
        %2194 = vmatprep.subr.mxu0 0.0
        %2195 = vmatpush2.msra.mxu0 0.0
        %2196 = vmatprep.subr.mxu0 0.0
        %2197 = vmatpush2.msra.mxu0 0.0
        %2198 = vmatprep.subr.mxu0 0.0
        %2199 = vmatpush2.msra.mxu0 0.0
        %2200 = vmatprep.subr.mxu0 0.0
        %2201 = vmatpush2.msra.mxu0 0.0
        %2202 = vmatprep.subr.mxu0 0.0
        %2203 = vmatpush2.msra.mxu0 0.0
        %2204 = vmatprep.subr.mxu0 0.0
        %2205 = vmatpush2.msra.mxu0 0.0
        %2206 = vmatprep.mubr.f32.mxu0 0.0
        %2207 = vmatmul.mubr.f32.gmra.mxu0 %v1983
        %v2208 = vpop.f32.mrf.mxu0
        %v2209 = vadd.f32 0.0, %v2208
        %v2210 = vpop.f32.mrf.mxu0
        %v2211 = vadd.f32 0.0, %v2210
        %2212 = vdwg.mxu0
        %2213 = vmatprep.subr.mxu0 %v1275
        %2214 = vmatpush1.msra.mxu0 %v1274
        %2215 = vmatprep.subr.mxu0 %v1271
        %2216 = vmatpush1.msra.mxu0 %v1270
        %2217 = vmatprep.subr.mxu0 %v1267
        %2218 = vmatpush1.msra.mxu0 %v1266
        %2219 = vmatprep.subr.mxu0 %v1263
        %2220 = vmatpush1.msra.mxu0 %v1262
        %2221 = vmatprep.subr.mxu0 %v1259
        %2222 = vmatpush1.msra.mxu0 %v1258
        %2223 = vmatprep.subr.mxu0 %v1255
        %2224 = vmatpush1.msra.mxu0 %v1254
        %2225 = vmatprep.subr.mxu0 %v1251
        %2226 = vmatpush1.msra.mxu0 %v1250
        %2227 = vmatprep.subr.mxu0 %v1247
        %2228 = vmatpush1.msra.mxu0 %v1246
        %2229 = vmatprep.subr.mxu0 %v1243
        %2230 = vmatpush1.msra.mxu0 %v1242
        %2231 = vmatprep.subr.mxu0 %v1239
        %2232 = vmatpush1.msra.mxu0 %v1238
        %2233 = vmatprep.subr.mxu0 %v1235
        %2234 = vmatpush1.msra.mxu0 %v1234
        %2235 = vmatprep.subr.mxu0 %v1231
        %2236 = vmatpush1.msra.mxu0 %v1230
        %2237 = vmatprep.subr.mxu0 %v1227
        %2238 = vmatpush1.msra.mxu0 %v1226
        %2239 = vmatprep.subr.mxu0 %v1223
        %2240 = vmatpush1.msra.mxu0 %v1222
        %2241 = vmatprep.subr.mxu0 %v1219
        %2242 = vmatpush1.msra.mxu0 %v1218
        %2243 = vmatprep.subr.mxu0 %v1215
        %2244 = vmatpush1.msra.mxu0 %v1214
        %2245 = vmatprep.subr.mxu0 0.0
        %2246 = vmatpush2.msra.mxu0 0.0
        %2247 = vmatprep.subr.mxu0 0.0
        %2248 = vmatpush2.msra.mxu0 0.0
        %2249 = vmatprep.subr.mxu0 0.0
        %2250 = vmatpush2.msra.mxu0 0.0
        %2251 = vmatprep.subr.mxu0 0.0
        %2252 = vmatpush2.msra.mxu0 0.0
        %2253 = vmatprep.subr.mxu0 0.0
        %2254 = vmatpush2.msra.mxu0 0.0
        %2255 = vmatprep.subr.mxu0 0.0
        %2256 = vmatpush2.msra.mxu0 0.0
        %2257 = vmatprep.subr.mxu0 0.0
        %2258 = vmatpush2.msra.mxu0 0.0
        %2259 = vmatprep.subr.mxu0 0.0
        %2260 = vmatpush2.msra.mxu0 0.0
        %2261 = vmatprep.subr.mxu0 0.0
        %2262 = vmatpush2.msra.mxu0 0.0
        %2263 = vmatprep.subr.mxu0 0.0
        %2264 = vmatpush2.msra.mxu0 0.0
        %2265 = vmatprep.subr.mxu0 0.0
        %2266 = vmatpush2.msra.mxu0 0.0
        %2267 = vmatprep.subr.mxu0 0.0
        %2268 = vmatpush2.msra.mxu0 0.0
        %2269 = vmatprep.subr.mxu0 0.0
        %2270 = vmatpush2.msra.mxu0 0.0
        %2271 = vmatprep.subr.mxu0 0.0
        %2272 = vmatpush2.msra.mxu0 0.0
        %2273 = vmatprep.subr.mxu0 0.0
        %2274 = vmatpush2.msra.mxu0 0.0
        %2275 = vmatprep.subr.mxu0 0.0
        %2276 = vmatpush2.msra.mxu0 0.0
        %2277 = vmatprep.mubr.f32.mxu0 0.0
        %2278 = vmatmul.mubr.f32.gmra.mxu0 %v1983
        %v2279 = vpop.f32.mrf.mxu0
        %v2280 = vadd.f32 0.0, %v2279
        %v2281 = vpop.f32.mrf.mxu0
        %v2282 = vadd.f32 0.0, %v2281
        %2283 = vdwg.mxu0
        %v2284 = vadd.f32 %v2138, %v2209
        %v2285 = vadd.f32 %v2139, %v2211
        %v2286 = vadd.f32 %v2140, %v2280
        %v2287 = vadd.f32 %v2141, %v2282
        %v2288 = vxor.u32 %v2134, 2147483648
        %v2289 = vmul.f32 %v2288, 1.442695
        %v2290 = vpow.pop %v2289
        %v2291 = vadd.f32 %v2290, 1.0
        %v2292 = vrcp.pop %v2291
        %v2293 = vmul.f32 1.0, %v2292
        %v2294 = vxor.u32 %v2135, 2147483648
        %v2295 = vmul.f32 %v2294, 1.442695
        %v2296 = vpow.pop %v2295
        %v2297 = vadd.f32 %v2296, 1.0
        %v2298 = vrcp.pop %v2297
        %v2299 = vmul.f32 1.0, %v2298
        %v2300 = vtanh.pop %v2136
        %v2301 = vxor.u32 %v2137, 2147483648
        %v2302 = vmul.f32 %v2301, 1.442695
        %v2303 = vpow.pop %v2302
        %v2304 = vadd.f32 %v2303, 1.0
        %v2305 = vrcp.pop %v2304
        %v2306 = vmul.f32 1.0, %v2305
        %v2307 = vmul.f32 %v2299, %v1957
        %v2308 = vmul.f32 %v2293, %v2300
        %v2309 = vadd.f32 %v2307, %v2308
        %v2310 = vtanh.pop %v2309
        %v2311 = vmul.f32 %v2306, %v2310
        %v2312 = vxor.u32 %v2284, 2147483648
        %v2313 = vmul.f32 %v2312, 1.442695
        %v2314 = vpow.pop %v2313
        %v2315 = vadd.f32 %v2314, 1.0
        %v2316 = vrcp.pop %v2315
        %v2317 = vmul.f32 1.0, %v2316
        %v2318 = vxor.u32 %v2285, 2147483648
        %v2319 = vmul.f32 %v2318, 1.442695
        %v2320 = vpow.pop %v2319
        %v2321 = vadd.f32 %v2320, 1.0
        %v2322 = vrcp.pop %v2321
        %v2323 = vmul.f32 1.0, %v2322
        %v2324 = vtanh.pop %v2286
        %v2325 = vxor.u32 %v2287, 2147483648
        %v2326 = vmul.f32 %v2325, 1.442695
        %v2327 = vpow.pop %v2326
        %v2328 = vadd.f32 %v2327, 1.0
        %v2329 = vrcp.pop %v2328
        %v2330 = vmul.f32 1.0, %v2329
        %v2331 = vmul.f32 %v2323, %v1981
        %v2332 = vmul.f32 %v2317, %v2324
        %v2333 = vadd.f32 %v2331, %v2332
        %v2334 = vtanh.pop %v2333
        %v2335 = vmul.f32 %v2330, %v2334
        %2336 = vst [vmem:[%s1986] sm:$0xff] %v2311
        %2337 = vst [vmem:[%s1984 + $0x8] sm:$0xff] %v2335
        %v2338 = vld [vmem:[%s1432] sm:$0xff]
        %v2339 = vld [vmem:[%s1432 + $0x8] sm:$0xff]
        %v2340 = vld [vmem:[%s1432 + $0x10] sm:$0xff]
        %v2341 = vld [vmem:[%s1432 + $0x18] sm:$0xff]
        %2342 = vmatprep.subr.mxu0 %v1209
        %2343 = vmatpush1.msra.mxu0 %v1208
        %2344 = vmatprep.subr.mxu0 %v1205
        %2345 = vmatpush1.msra.mxu0 %v1204
        %2346 = vmatprep.subr.mxu0 %v1201
        %2347 = vmatpush1.msra.mxu0 %v1200
        %2348 = vmatprep.subr.mxu0 %v1197
        %2349 = vmatpush1.msra.mxu0 %v1196
        %2350 = vmatprep.subr.mxu0 %v1193
        %2351 = vmatpush1.msra.mxu0 %v1192
        %2352 = vmatprep.subr.mxu0 %v1189
        %2353 = vmatpush1.msra.mxu0 %v1188
        %2354 = vmatprep.subr.mxu0 %v1185
        %2355 = vmatpush1.msra.mxu0 %v1184
        %2356 = vmatprep.subr.mxu0 %v1181
        %2357 = vmatpush1.msra.mxu0 %v1180
        %2358 = vmatprep.subr.mxu0 %v1177
        %2359 = vmatpush1.msra.mxu0 %v1176
        %2360 = vmatprep.subr.mxu0 %v1173
        %2361 = vmatpush1.msra.mxu0 %v1172
        %2362 = vmatprep.subr.mxu0 %v1169
        %2363 = vmatpush1.msra.mxu0 %v1168
        %2364 = vmatprep.subr.mxu0 %v1165
        %2365 = vmatpush1.msra.mxu0 %v1164
        %2366 = vmatprep.subr.mxu0 %v1161
        %2367 = vmatpush1.msra.mxu0 %v1160
        %2368 = vmatprep.subr.mxu0 %v1157
        %2369 = vmatpush1.msra.mxu0 %v1156
        %2370 = vmatprep.subr.mxu0 %v1153
        %2371 = vmatpush1.msra.mxu0 %v1152
        %2372 = vmatprep.subr.mxu0 %v1149
        %2373 = vmatpush1.msra.mxu0 %v1148
        %2374 = vmatprep.subr.mxu0 0.0
        %2375 = vmatpush2.msra.mxu0 0.0
        %2376 = vmatprep.subr.mxu0 0.0
        %2377 = vmatpush2.msra.mxu0 0.0
        %2378 = vmatprep.subr.mxu0 0.0
        %2379 = vmatpush2.msra.mxu0 0.0
        %2380 = vmatprep.subr.mxu0 0.0
        %2381 = vmatpush2.msra.mxu0 0.0
        %2382 = vmatprep.subr.mxu0 0.0
        %2383 = vmatpush2.msra.mxu0 0.0
        %2384 = vmatprep.subr.mxu0 0.0
        %2385 = vmatpush2.msra.mxu0 0.0
        %2386 = vmatprep.subr.mxu0 0.0
        %2387 = vmatpush2.msra.mxu0 0.0
        %2388 = vmatprep.subr.mxu0 0.0
        %2389 = vmatpush2.msra.mxu0 0.0
        %2390 = vmatprep.subr.mxu0 0.0
        %2391 = vmatpush2.msra.mxu0 0.0
        %2392 = vmatprep.subr.mxu0 0.0
        %2393 = vmatpush2.msra.mxu0 0.0
        %2394 = vmatprep.subr.mxu0 0.0
        %2395 = vmatpush2.msra.mxu0 0.0
        %2396 = vmatprep.subr.mxu0 0.0
        %2397 = vmatpush2.msra.mxu0 0.0
        %2398 = vmatprep.subr.mxu0 0.0
        %2399 = vmatpush2.msra.mxu0 0.0
        %2400 = vmatprep.subr.mxu0 0.0
        %2401 = vmatpush2.msra.mxu0 0.0
        %2402 = vmatprep.subr.mxu0 0.0
        %2403 = vmatpush2.msra.mxu0 0.0
        %2404 = vmatprep.subr.mxu0 0.0
        %2405 = vmatpush2.msra.mxu0 0.0
        %2406 = vmatprep.mubr.f32.mxu0 0.0
        %2407 = vmatmul.mubr.f32.gmra.mxu0 %v2311
        %v2408 = vpop.f32.mrf.mxu0
        %v2409 = vadd.f32 0.0, %v2408
        %v2410 = vpop.f32.mrf.mxu0
        %v2411 = vadd.f32 0.0, %v2410
        %2412 = vdwg.mxu0
        %2413 = vmatprep.subr.mxu0 %v1211
        %2414 = vmatpush1.msra.mxu0 %v1210
        %2415 = vmatprep.subr.mxu0 %v1207
        %2416 = vmatpush1.msra.mxu0 %v1206
        %2417 = vmatprep.subr.mxu0 %v1203
        %2418 = vmatpush1.msra.mxu0 %v1202
        %2419 = vmatprep.subr.mxu0 %v1199
        %2420 = vmatpush1.msra.mxu0 %v1198
        %2421 = vmatprep.subr.mxu0 %v1195
        %2422 = vmatpush1.msra.mxu0 %v1194
        %2423 = vmatprep.subr.mxu0 %v1191
        %2424 = vmatpush1.msra.mxu0 %v1190
        %2425 = vmatprep.subr.mxu0 %v1187
        %2426 = vmatpush1.msra.mxu0 %v1186
        %2427 = vmatprep.subr.mxu0 %v1183
        %2428 = vmatpush1.msra.mxu0 %v1182
        %2429 = vmatprep.subr.mxu0 %v1179
        %2430 = vmatpush1.msra.mxu0 %v1178
        %2431 = vmatprep.subr.mxu0 %v1175
        %2432 = vmatpush1.msra.mxu0 %v1174
        %2433 = vmatprep.subr.mxu0 %v1171
        %2434 = vmatpush1.msra.mxu0 %v1170
        %2435 = vmatprep.subr.mxu0 %v1167
        %2436 = vmatpush1.msra.mxu0 %v1166
        %2437 = vmatprep.subr.mxu0 %v1163
        %2438 = vmatpush1.msra.mxu0 %v1162
        %2439 = vmatprep.subr.mxu0 %v1159
        %2440 = vmatpush1.msra.mxu0 %v1158
        %2441 = vmatprep.subr.mxu0 %v1155
        %2442 = vmatpush1.msra.mxu0 %v1154
        %2443 = vmatprep.subr.mxu0 %v1151
        %2444 = vmatpush1.msra.mxu0 %v1150
        %2445 = vmatprep.subr.mxu0 0.0
        %2446 = vmatpush2.msra.mxu0 0.0
        %2447 = vmatprep.subr.mxu0 0.0
        %2448 = vmatpush2.msra.mxu0 0.0
        %2449 = vmatprep.subr.mxu0 0.0
        %2450 = vmatpush2.msra.mxu0 0.0
        %2451 = vmatprep.subr.mxu0 0.0
        %2452 = vmatpush2.msra.mxu0 0.0
        %2453 = vmatprep.subr.mxu0 0.0
        %2454 = vmatpush2.msra.mxu0 0.0
        %2455 = vmatprep.subr.mxu0 0.0
        %2456 = vmatpush2.msra.mxu0 0.0
        %2457 = vmatprep.subr.mxu0 0.0
        %2458 = vmatpush2.msra.mxu0 0.0
        %2459 = vmatprep.subr.mxu0 0.0
        %2460 = vmatpush2.msra.mxu0 0.0
        %2461 = vmatprep.subr.mxu0 0.0
        %2462 = vmatpush2.msra.mxu0 0.0
        %2463 = vmatprep.subr.mxu0 0.0
        %2464 = vmatpush2.msra.mxu0 0.0
        %2465 = vmatprep.subr.mxu0 0.0
        %2466 = vmatpush2.msra.mxu0 0.0
        %2467 = vmatprep.subr.mxu0 0.0
        %2468 = vmatpush2.msra.mxu0 0.0
        %2469 = vmatprep.subr.mxu0 0.0
        %2470 = vmatpush2.msra.mxu0 0.0
        %2471 = vmatprep.subr.mxu0 0.0
        %2472 = vmatpush2.msra.mxu0 0.0
        %2473 = vmatprep.subr.mxu0 0.0
        %2474 = vmatpush2.msra.mxu0 0.0
        %2475 = vmatprep.subr.mxu0 0.0
        %2476 = vmatpush2.msra.mxu0 0.0
        %2477 = vmatprep.mubr.f32.mxu0 0.0
        %2478 = vmatmul.mubr.f32.gmra.mxu0 %v2311
        %v2479 = vpop.f32.mrf.mxu0
        %v2480 = vadd.f32 0.0, %v2479
        %v2481 = vpop.f32.mrf.mxu0
        %v2482 = vadd.f32 0.0, %v2481
        %2483 = vdwg.mxu0
        %v2484 = vadd.f32 %v2338, %v2409
        %v2485 = vadd.f32 %v2339, %v2411
        %v2486 = vadd.f32 %v2340, %v2480
        %v2487 = vadd.f32 %v2341, %v2482
        %v2488 = vld [vmem:[#allocation4 + $0x20] sm:$0xff]
        %v2489 = vld [vmem:[#allocation4 + $0x28] sm:$0xff]
        %v2490 = vld [vmem:[#allocation4 + $0x30] sm:$0xff]
        %v2491 = vld [vmem:[#allocation4 + $0x38] sm:$0xff]
        %2492 = vmatprep.subr.mxu0 %v1273
        %2493 = vmatpush1.msra.mxu0 %v1272
        %2494 = vmatprep.subr.mxu0 %v1269
        %2495 = vmatpush1.msra.mxu0 %v1268
        %2496 = vmatprep.subr.mxu0 %v1265
        %2497 = vmatpush1.msra.mxu0 %v1264
        %2498 = vmatprep.subr.mxu0 %v1261
        %2499 = vmatpush1.msra.mxu0 %v1260
        %2500 = vmatprep.subr.mxu0 %v1257
        %2501 = vmatpush1.msra.mxu0 %v1256
        %2502 = vmatprep.subr.mxu0 %v1253
        %2503 = vmatpush1.msra.mxu0 %v1252
        %2504 = vmatprep.subr.mxu0 %v1249
        %2505 = vmatpush1.msra.mxu0 %v1248
        %2506 = vmatprep.subr.mxu0 %v1245
        %2507 = vmatpush1.msra.mxu0 %v1244
        %2508 = vmatprep.subr.mxu0 %v1241
        %2509 = vmatpush1.msra.mxu0 %v1240
        %2510 = vmatprep.subr.mxu0 %v1237
        %2511 = vmatpush1.msra.mxu0 %v1236
        %2512 = vmatprep.subr.mxu0 %v1233
        %2513 = vmatpush1.msra.mxu0 %v1232
        %2514 = vmatprep.subr.mxu0 %v1229
        %2515 = vmatpush1.msra.mxu0 %v1228
        %2516 = vmatprep.subr.mxu0 %v1225
        %2517 = vmatpush1.msra.mxu0 %v1224
        %2518 = vmatprep.subr.mxu0 %v1221
        %2519 = vmatpush1.msra.mxu0 %v1220
        %2520 = vmatprep.subr.mxu0 %v1217
        %2521 = vmatpush1.msra.mxu0 %v1216
        %2522 = vmatprep.subr.mxu0 %v1213
        %2523 = vmatpush1.msra.mxu0 %v1212
        %2524 = vmatprep.subr.mxu0 0.0
        %2525 = vmatpush2.msra.mxu0 0.0
        %2526 = vmatprep.subr.mxu0 0.0
        %2527 = vmatpush2.msra.mxu0 0.0
        %2528 = vmatprep.subr.mxu0 0.0
        %2529 = vmatpush2.msra.mxu0 0.0
        %2530 = vmatprep.subr.mxu0 0.0
        %2531 = vmatpush2.msra.mxu0 0.0
        %2532 = vmatprep.subr.mxu0 0.0
        %2533 = vmatpush2.msra.mxu0 0.0
        %2534 = vmatprep.subr.mxu0 0.0
        %2535 = vmatpush2.msra.mxu0 0.0
        %2536 = vmatprep.subr.mxu0 0.0
        %2537 = vmatpush2.msra.mxu0 0.0
        %2538 = vmatprep.subr.mxu0 0.0
        %2539 = vmatpush2.msra.mxu0 0.0
        %2540 = vmatprep.subr.mxu0 0.0
        %2541 = vmatpush2.msra.mxu0 0.0
        %2542 = vmatprep.subr.mxu0 0.0
        %2543 = vmatpush2.msra.mxu0 0.0
        %2544 = vmatprep.subr.mxu0 0.0
        %2545 = vmatpush2.msra.mxu0 0.0
        %2546 = vmatprep.subr.mxu0 0.0
        %2547 = vmatpush2.msra.mxu0 0.0
        %2548 = vmatprep.subr.mxu0 0.0
        %2549 = vmatpush2.msra.mxu0 0.0
        %2550 = vmatprep.subr.mxu0 0.0
        %2551 = vmatpush2.msra.mxu0 0.0
        %2552 = vmatprep.subr.mxu0 0.0
        %2553 = vmatpush2.msra.mxu0 0.0
        %2554 = vmatprep.subr.mxu0 0.0
        %2555 = vmatpush2.msra.mxu0 0.0
        %2556 = vmatprep.mubr.f32.mxu0 0.0
        %2557 = vmatmul.mubr.f32.gmra.mxu0 %v2335
        %v2558 = vpop.f32.mrf.mxu0
        %v2559 = vadd.f32 0.0, %v2558
        %v2560 = vpop.f32.mrf.mxu0
        %v2561 = vadd.f32 0.0, %v2560
        %2562 = vdwg.mxu0
        %2563 = vmatprep.subr.mxu0 %v1275
        %2564 = vmatpush1.msra.mxu0 %v1274
        %2565 = vmatprep.subr.mxu0 %v1271
        %2566 = vmatpush1.msra.mxu0 %v1270
        %2567 = vmatprep.subr.mxu0 %v1267
        %2568 = vmatpush1.msra.mxu0 %v1266
        %2569 = vmatprep.subr.mxu0 %v1263
        %2570 = vmatpush1.msra.mxu0 %v1262
        %2571 = vmatprep.subr.mxu0 %v1259
        %2572 = vmatpush1.msra.mxu0 %v1258
        %2573 = vmatprep.subr.mxu0 %v1255
        %2574 = vmatpush1.msra.mxu0 %v1254
        %2575 = vmatprep.subr.mxu0 %v1251
        %2576 = vmatpush1.msra.mxu0 %v1250
        %2577 = vmatprep.subr.mxu0 %v1247
        %2578 = vmatpush1.msra.mxu0 %v1246
        %2579 = vmatprep.subr.mxu0 %v1243
        %2580 = vmatpush1.msra.mxu0 %v1242
        %2581 = vmatprep.subr.mxu0 %v1239
        %2582 = vmatpush1.msra.mxu0 %v1238
        %2583 = vmatprep.subr.mxu0 %v1235
        %2584 = vmatpush1.msra.mxu0 %v1234
        %2585 = vmatprep.subr.mxu0 %v1231
        %2586 = vmatpush1.msra.mxu0 %v1230
        %2587 = vmatprep.subr.mxu0 %v1227
        %2588 = vmatpush1.msra.mxu0 %v1226
        %2589 = vmatprep.subr.mxu0 %v1223
        %2590 = vmatpush1.msra.mxu0 %v1222
        %2591 = vmatprep.subr.mxu0 %v1219
        %2592 = vmatpush1.msra.mxu0 %v1218
        %2593 = vmatprep.subr.mxu0 %v1215
        %2594 = vmatpush1.msra.mxu0 %v1214
        %2595 = vmatprep.subr.mxu0 0.0
        %2596 = vmatpush2.msra.mxu0 0.0
        %2597 = vmatprep.subr.mxu0 0.0
        %2598 = vmatpush2.msra.mxu0 0.0
        %2599 = vmatprep.subr.mxu0 0.0
        %2600 = vmatpush2.msra.mxu0 0.0
        %2601 = vmatprep.subr.mxu0 0.0
        %2602 = vmatpush2.msra.mxu0 0.0
        %2603 = vmatprep.subr.mxu0 0.0
        %2604 = vmatpush2.msra.mxu0 0.0
        %2605 = vmatprep.subr.mxu0 0.0
        %2606 = vmatpush2.msra.mxu0 0.0
        %2607 = vmatprep.subr.mxu0 0.0
        %2608 = vmatpush2.msra.mxu0 0.0
        %2609 = vmatprep.subr.mxu0 0.0
        %2610 = vmatpush2.msra.mxu0 0.0
        %2611 = vmatprep.subr.mxu0 0.0
        %2612 = vmatpush2.msra.mxu0 0.0
        %2613 = vmatprep.subr.mxu0 0.0
        %2614 = vmatpush2.msra.mxu0 0.0
        %2615 = vmatprep.subr.mxu0 0.0
        %2616 = vmatpush2.msra.mxu0 0.0
        %2617 = vmatprep.subr.mxu0 0.0
        %2618 = vmatpush2.msra.mxu0 0.0
        %2619 = vmatprep.subr.mxu0 0.0
        %2620 = vmatpush2.msra.mxu0 0.0
        %2621 = vmatprep.subr.mxu0 0.0
        %2622 = vmatpush2.msra.mxu0 0.0
        %2623 = vmatprep.subr.mxu0 0.0
        %2624 = vmatpush2.msra.mxu0 0.0
        %2625 = vmatprep.subr.mxu0 0.0
        %2626 = vmatpush2.msra.mxu0 0.0
        %2627 = vmatprep.mubr.f32.mxu0 0.0
        %2628 = vmatmul.mubr.f32.gmra.mxu0 %v2335
        %v2629 = vpop.f32.mrf.mxu0
        %v2630 = vadd.f32 0.0, %v2629
        %v2631 = vpop.f32.mrf.mxu0
        %v2632 = vadd.f32 0.0, %v2631
        %2633 = vdwg.mxu0
        %v2634 = vadd.f32 %v2488, %v2559
        %v2635 = vadd.f32 %v2489, %v2561
        %v2636 = vadd.f32 %v2490, %v2630
        %v2637 = vadd.f32 %v2491, %v2632
        %v2638 = vxor.u32 %v2484, 2147483648
        %v2639 = vmul.f32 %v2638, 1.442695
        %v2640 = vpow.pop %v2639
        %v2641 = vadd.f32 %v2640, 1.0
        %v2642 = vrcp.pop %v2641
        %v2643 = vmul.f32 1.0, %v2642
        %v2644 = vxor.u32 %v2485, 2147483648
        %v2645 = vmul.f32 %v2644, 1.442695
        %v2646 = vpow.pop %v2645
        %v2647 = vadd.f32 %v2646, 1.0
        %v2648 = vrcp.pop %v2647
        %v2649 = vmul.f32 1.0, %v2648
        %v2650 = vtanh.pop %v2486
        %v2651 = vxor.u32 %v2487, 2147483648
        %v2652 = vmul.f32 %v2651, 1.442695
        %v2653 = vpow.pop %v2652
        %v2654 = vadd.f32 %v2653, 1.0
        %v2655 = vrcp.pop %v2654
        %v2656 = vmul.f32 1.0, %v2655
        %v2657 = vmul.f32 %v2649, %v2309
        %v2658 = vmul.f32 %v2643, %v2650
        %v2659 = vadd.f32 %v2657, %v2658
        %v2660 = vtanh.pop %v2659
        %v2661 = vmul.f32 %v2656, %v2660
        %v2662 = vxor.u32 %v2634, 2147483648
        %v2663 = vmul.f32 %v2662, 1.442695
        %v2664 = vpow.pop %v2663
        %v2665 = vadd.f32 %v2664, 1.0
        %v2666 = vrcp.pop %v2665
        %v2667 = vmul.f32 1.0, %v2666
        %v2668 = vxor.u32 %v2635, 2147483648
        %v2669 = vmul.f32 %v2668, 1.442695
        %v2670 = vpow.pop %v2669
        %v2671 = vadd.f32 %v2670, 1.0
        %v2672 = vrcp.pop %v2671
        %v2673 = vmul.f32 1.0, %v2672
        %v2674 = vtanh.pop %v2636
        %v2675 = vxor.u32 %v2637, 2147483648
        %v2676 = vmul.f32 %v2675, 1.442695
        %v2677 = vpow.pop %v2676
        %v2678 = vadd.f32 %v2677, 1.0
        %v2679 = vrcp.pop %v2678
        %v2680 = vmul.f32 1.0, %v2679
        %v2681 = vmul.f32 %v2673, %v2333
        %v2682 = vmul.f32 %v2667, %v2674
        %v2683 = vadd.f32 %v2681, %v2682
        %v2684 = vtanh.pop %v2683
        %v2685 = vmul.f32 %v2680, %v2684
        %2686 = vst [vmem:[%s1632] sm:$0xff] %v2661
        %2687 = vst [vmem:[#allocation6 + $0x8] sm:$0xff] %v2685
        %2688 = vst [vmem:[#allocation2] sm:$0xff] %v2661
        %2689 = vst [vmem:[#allocation3] sm:$0xff] %v2659
        %2690 = vst [vmem:[%s1278] sm:$0xff] %v2685
        %2691 = vst [vmem:[%s1280] sm:$0xff] %v2683
        %v2692 = vld [vmem:[#allocation6] sm:$0xff]
        %v2693 = vld [vmem:[#allocation6 + $0x8] sm:$0xff]
        %v2694 = vld [vmem:[#allocation6 + $0x10] sm:$0xff]
        %v2695 = vld [vmem:[#allocation6 + $0x18] sm:$0xff]
        %v2696 = vld [vmem:[#allocation6 + $0x20] sm:$0xff]
        %v2697 = vld [vmem:[#allocation6 + $0x28] sm:$0xff]
        %v2698 = vld [vmem:[#allocation6 + $0x30] sm:$0xff]
        %v2699 = vld [vmem:[#allocation6 + $0x38] sm:$0xff]
        %v2700 = vld [vmem:[#allocation18] sm:$0xff]
        %v2701 = vld [vmem:[#allocation18 + $0x8] sm:$0xff]
        %v2702 = vld [vmem:[#allocation18 + $0x10] sm:$0xff]
        %v2703 = vld [vmem:[#allocation18 + $0x18] sm:$0xff]
        %v2704 = vld [vmem:[#allocation18 + $0x20] sm:$0xff]
        %v2705 = vld [vmem:[#allocation18 + $0x28] sm:$0xff]
        %v2706 = vld [vmem:[#allocation18 + $0x30] sm:$0xff]
        %v2707 = vld [vmem:[#allocation18 + $0x38] sm:$0xff]
        %v2708 = vld [vmem:[#allocation18 + $0x40] sm:$0xff]
        %v2709 = vld [vmem:[#allocation18 + $0x48] sm:$0xff]
        %v2710 = vld [vmem:[#allocation18 + $0x50] sm:$0xff]
        %v2711 = vld [vmem:[#allocation18 + $0x58] sm:$0xff]
        %v2712 = vld [vmem:[#allocation18 + $0x60] sm:$0xff]
        %v2713 = vld [vmem:[#allocation18 + $0x68] sm:$0xff]
        %v2714 = vld [vmem:[#allocation18 + $0x70] sm:$0xff]
        %v2715 = vld [vmem:[#allocation18 + $0x78] sm:$0xff]
        %v2716 = vld [vmem:[#allocation18 + $0x80] sm:$0xff]
        %v2717 = vld [vmem:[#allocation18 + $0x88] sm:$0xff]
        %v2718 = vld [vmem:[#allocation18 + $0x90] sm:$0xff]
        %v2719 = vld [vmem:[#allocation18 + $0x98] sm:$0xff]
        %v2720 = vld [vmem:[#allocation18 + $0xa0] sm:$0xff]
        %v2721 = vld [vmem:[#allocation18 + $0xa8] sm:$0xff]
        %v2722 = vld [vmem:[#allocation18 + $0xb0] sm:$0xff]
        %v2723 = vld [vmem:[#allocation18 + $0xb8] sm:$0xff]
        %v2724 = vld [vmem:[#allocation18 + $0xc0] sm:$0xff]
        %v2725 = vld [vmem:[#allocation18 + $0xc8] sm:$0xff]
        %v2726 = vld [vmem:[#allocation18 + $0xd0] sm:$0xff]
        %v2727 = vld [vmem:[#allocation18 + $0xd8] sm:$0xff]
        %v2728 = vld [vmem:[#allocation18 + $0xe0] sm:$0xff]
        %v2729 = vld [vmem:[#allocation18 + $0xe8] sm:$0xff]
        %v2730 = vld [vmem:[#allocation18 + $0xf0] sm:$0xff]
        %v2731 = vld [vmem:[#allocation18 + $0xf8] sm:$0xff]
        %v2732 = vld [vmem:[#allocation18 + $0x100] sm:$0xff]
        %v2733 = vld [vmem:[#allocation18 + $0x108] sm:$0xff]
        %v2734 = vld [vmem:[#allocation18 + $0x110] sm:$0xff]
        %v2735 = vld [vmem:[#allocation18 + $0x118] sm:$0xff]
        %v2736 = vld [vmem:[#allocation18 + $0x120] sm:$0xff]
        %v2737 = vld [vmem:[#allocation18 + $0x128] sm:$0xff]
        %v2738 = vld [vmem:[#allocation18 + $0x130] sm:$0xff]
        %v2739 = vld [vmem:[#allocation18 + $0x138] sm:$0xff]
        %v2740 = vld [vmem:[#allocation18 + $0x140] sm:$0xff]
        %v2741 = vld [vmem:[#allocation18 + $0x148] sm:$0xff]
        %v2742 = vld [vmem:[#allocation18 + $0x150] sm:$0xff]
        %v2743 = vld [vmem:[#allocation18 + $0x158] sm:$0xff]
        %v2744 = vld [vmem:[#allocation18 + $0x160] sm:$0xff]
        %v2745 = vld [vmem:[#allocation18 + $0x168] sm:$0xff]
        %v2746 = vld [vmem:[#allocation18 + $0x170] sm:$0xff]
        %v2747 = vld [vmem:[#allocation18 + $0x178] sm:$0xff]
        %v2748 = vld [vmem:[#allocation18 + $0x180] sm:$0xff]
        %v2749 = vld [vmem:[#allocation18 + $0x188] sm:$0xff]
        %v2750 = vld [vmem:[#allocation18 + $0x190] sm:$0xff]
        %v2751 = vld [vmem:[#allocation18 + $0x198] sm:$0xff]
        %v2752 = vld [vmem:[#allocation18 + $0x1a0] sm:$0xff]
        %v2753 = vld [vmem:[#allocation18 + $0x1a8] sm:$0xff]
        %v2754 = vld [vmem:[#allocation18 + $0x1b0] sm:$0xff]
        %v2755 = vld [vmem:[#allocation18 + $0x1b8] sm:$0xff]
        %v2756 = vld [vmem:[#allocation18 + $0x1c0] sm:$0xff]
        %v2757 = vld [vmem:[#allocation18 + $0x1c8] sm:$0xff]
        %v2758 = vld [vmem:[#allocation18 + $0x1d0] sm:$0xff]
        %v2759 = vld [vmem:[#allocation18 + $0x1d8] sm:$0xff]
        %v2760 = vld [vmem:[#allocation18 + $0x1e0] sm:$0xff]
        %v2761 = vld [vmem:[#allocation18 + $0x1e8] sm:$0xff]
        %v2762 = vld [vmem:[#allocation18 + $0x1f0] sm:$0xff]
        %v2763 = vld [vmem:[#allocation18 + $0x1f8] sm:$0xff]
        %v2764 = vld [vmem:[#allocation18 + $0x200] sm:$0xff]
        %v2765 = vld [vmem:[#allocation18 + $0x208] sm:$0xff]
        %v2766 = vld [vmem:[#allocation18 + $0x210] sm:$0xff]
        %v2767 = vld [vmem:[#allocation18 + $0x218] sm:$0xff]
        %v2768 = vld [vmem:[#allocation18 + $0x220] sm:$0xff]
        %v2769 = vld [vmem:[#allocation18 + $0x228] sm:$0xff]
        %v2770 = vld [vmem:[#allocation18 + $0x230] sm:$0xff]
        %v2771 = vld [vmem:[#allocation18 + $0x238] sm:$0xff]
        %v2772 = vld [vmem:[#allocation18 + $0x240] sm:$0xff]
        %v2773 = vld [vmem:[#allocation18 + $0x248] sm:$0xff]
        %v2774 = vld [vmem:[#allocation18 + $0x250] sm:$0xff]
        %v2775 = vld [vmem:[#allocation18 + $0x258] sm:$0xff]
        %v2776 = vld [vmem:[#allocation18 + $0x260] sm:$0xff]
        %v2777 = vld [vmem:[#allocation18 + $0x268] sm:$0xff]
        %v2778 = vld [vmem:[#allocation18 + $0x270] sm:$0xff]
        %v2779 = vld [vmem:[#allocation18 + $0x278] sm:$0xff]
        %v2780 = vld [vmem:[#allocation18 + $0x280] sm:$0xff]
        %v2781 = vld [vmem:[#allocation18 + $0x288] sm:$0xff]
        %v2782 = vld [vmem:[#allocation18 + $0x290] sm:$0xff]
        %v2783 = vld [vmem:[#allocation18 + $0x298] sm:$0xff]
        %v2784 = vld [vmem:[#allocation18 + $0x2a0] sm:$0xff]
        %v2785 = vld [vmem:[#allocation18 + $0x2a8] sm:$0xff]
        %v2786 = vld [vmem:[#allocation18 + $0x2b0] sm:$0xff]
        %v2787 = vld [vmem:[#allocation18 + $0x2b8] sm:$0xff]
        %v2788 = vld [vmem:[#allocation18 + $0x2c0] sm:$0xff]
        %v2789 = vld [vmem:[#allocation18 + $0x2c8] sm:$0xff]
        %v2790 = vld [vmem:[#allocation18 + $0x2d0] sm:$0xff]
        %v2791 = vld [vmem:[#allocation18 + $0x2d8] sm:$0xff]
        %v2792 = vld [vmem:[#allocation18 + $0x2e0] sm:$0xff]
        %v2793 = vld [vmem:[#allocation18 + $0x2e8] sm:$0xff]
        %v2794 = vld [vmem:[#allocation18 + $0x2f0] sm:$0xff]
        %v2795 = vld [vmem:[#allocation18 + $0x2f8] sm:$0xff]
        %v2796 = vld [vmem:[#allocation18 + $0x300] sm:$0xff]
        %v2797 = vld [vmem:[#allocation18 + $0x308] sm:$0xff]
        %v2798 = vld [vmem:[#allocation18 + $0x310] sm:$0xff]
        %v2799 = vld [vmem:[#allocation18 + $0x318] sm:$0xff]
        %v2800 = vld [vmem:[#allocation18 + $0x320] sm:$0xff]
        %v2801 = vld [vmem:[#allocation18 + $0x328] sm:$0xff]
        %v2802 = vld [vmem:[#allocation18 + $0x330] sm:$0xff]
        %v2803 = vld [vmem:[#allocation18 + $0x338] sm:$0xff]
        %v2804 = vld [vmem:[#allocation18 + $0x340] sm:$0xff]
        %v2805 = vld [vmem:[#allocation18 + $0x348] sm:$0xff]
        %v2806 = vld [vmem:[#allocation18 + $0x350] sm:$0xff]
        %v2807 = vld [vmem:[#allocation18 + $0x358] sm:$0xff]
        %v2808 = vld [vmem:[#allocation18 + $0x360] sm:$0xff]
        %v2809 = vld [vmem:[#allocation18 + $0x368] sm:$0xff]
        %v2810 = vld [vmem:[#allocation18 + $0x370] sm:$0xff]
        %v2811 = vld [vmem:[#allocation18 + $0x378] sm:$0xff]
        %v2812 = vld [vmem:[#allocation18 + $0x380] sm:$0xff]
        %v2813 = vld [vmem:[#allocation18 + $0x388] sm:$0xff]
        %v2814 = vld [vmem:[#allocation18 + $0x390] sm:$0xff]
        %v2815 = vld [vmem:[#allocation18 + $0x398] sm:$0xff]
        %v2816 = vld [vmem:[#allocation18 + $0x3a0] sm:$0xff]
        %v2817 = vld [vmem:[#allocation18 + $0x3a8] sm:$0xff]
        %v2818 = vld [vmem:[#allocation18 + $0x3b0] sm:$0xff]
        %v2819 = vld [vmem:[#allocation18 + $0x3b8] sm:$0xff]
        %v2820 = vld [vmem:[#allocation18 + $0x3c0] sm:$0xff]
        %v2821 = vld [vmem:[#allocation18 + $0x3c8] sm:$0xff]
        %v2822 = vld [vmem:[#allocation18 + $0x3d0] sm:$0xff]
        %v2823 = vld [vmem:[#allocation18 + $0x3d8] sm:$0xff]
        %v2824 = vld [vmem:[#allocation18 + $0x3e0] sm:$0xff]
        %v2825 = vld [vmem:[#allocation18 + $0x3e8] sm:$0xff]
        %v2826 = vld [vmem:[#allocation18 + $0x3f0] sm:$0xff]
        %v2827 = vld [vmem:[#allocation18 + $0x3f8] sm:$0xff]
        %v2828 = vld [vmem:[#allocation18 + $0x400] sm:$0xff]
        %v2829 = vld [vmem:[#allocation18 + $0x408] sm:$0xff]
        %v2830 = vld [vmem:[#allocation18 + $0x410] sm:$0xff]
        %v2831 = vld [vmem:[#allocation18 + $0x418] sm:$0xff]
        %v2832 = vld [vmem:[#allocation18 + $0x420] sm:$0xff]
        %v2833 = vld [vmem:[#allocation18 + $0x428] sm:$0xff]
        %v2834 = vld [vmem:[#allocation18 + $0x430] sm:$0xff]
        %v2835 = vld [vmem:[#allocation18 + $0x438] sm:$0xff]
        %v2836 = vld [vmem:[#allocation18 + $0x440] sm:$0xff]
        %v2837 = vld [vmem:[#allocation18 + $0x448] sm:$0xff]
        %v2838 = vld [vmem:[#allocation18 + $0x450] sm:$0xff]
        %v2839 = vld [vmem:[#allocation18 + $0x458] sm:$0xff]
        %v2840 = vld [vmem:[#allocation18 + $0x460] sm:$0xff]
        %v2841 = vld [vmem:[#allocation18 + $0x468] sm:$0xff]
        %v2842 = vld [vmem:[#allocation18 + $0x470] sm:$0xff]
        %v2843 = vld [vmem:[#allocation18 + $0x478] sm:$0xff]
        %v2844 = vld [vmem:[#allocation18 + $0x480] sm:$0xff]
        %v2845 = vld [vmem:[#allocation18 + $0x488] sm:$0xff]
        %v2846 = vld [vmem:[#allocation18 + $0x490] sm:$0xff]
        %v2847 = vld [vmem:[#allocation18 + $0x498] sm:$0xff]
        %v2848 = vld [vmem:[#allocation18 + $0x4a0] sm:$0xff]
        %v2849 = vld [vmem:[#allocation18 + $0x4a8] sm:$0xff]
        %v2850 = vld [vmem:[#allocation18 + $0x4b0] sm:$0xff]
        %v2851 = vld [vmem:[#allocation18 + $0x4b8] sm:$0xff]
        %v2852 = vld [vmem:[#allocation18 + $0x4c0] sm:$0xff]
        %v2853 = vld [vmem:[#allocation18 + $0x4c8] sm:$0xff]
        %v2854 = vld [vmem:[#allocation18 + $0x4d0] sm:$0xff]
        %v2855 = vld [vmem:[#allocation18 + $0x4d8] sm:$0xff]
        %v2856 = vld [vmem:[#allocation18 + $0x4e0] sm:$0xff]
        %v2857 = vld [vmem:[#allocation18 + $0x4e8] sm:$0xff]
        %v2858 = vld [vmem:[#allocation18 + $0x4f0] sm:$0xff]
        %v2859 = vld [vmem:[#allocation18 + $0x4f8] sm:$0xff]
        %v2860 = vld [vmem:[#allocation18 + $0x500] sm:$0xff]
        %v2861 = vld [vmem:[#allocation18 + $0x508] sm:$0xff]
        %v2862 = vld [vmem:[#allocation18 + $0x510] sm:$0xff]
        %v2863 = vld [vmem:[#allocation18 + $0x518] sm:$0xff]
        %v2864 = vld [vmem:[#allocation18 + $0x520] sm:$0xff]
        %v2865 = vld [vmem:[#allocation18 + $0x528] sm:$0xff]
        %v2866 = vld [vmem:[#allocation18 + $0x530] sm:$0xff]
        %v2867 = vld [vmem:[#allocation18 + $0x538] sm:$0xff]
        %v2868 = vld [vmem:[#allocation18 + $0x540] sm:$0xff]
        %v2869 = vld [vmem:[#allocation18 + $0x548] sm:$0xff]
        %v2870 = vld [vmem:[#allocation18 + $0x550] sm:$0xff]
        %v2871 = vld [vmem:[#allocation18 + $0x558] sm:$0xff]
        %v2872 = vld [vmem:[#allocation18 + $0x560] sm:$0xff]
        %v2873 = vld [vmem:[#allocation18 + $0x568] sm:$0xff]
        %v2874 = vld [vmem:[#allocation18 + $0x570] sm:$0xff]
        %v2875 = vld [vmem:[#allocation18 + $0x578] sm:$0xff]
        %v2876 = vld [vmem:[#allocation18 + $0x580] sm:$0xff]
        %v2877 = vld [vmem:[#allocation18 + $0x588] sm:$0xff]
        %v2878 = vld [vmem:[#allocation18 + $0x590] sm:$0xff]
        %v2879 = vld [vmem:[#allocation18 + $0x598] sm:$0xff]
        %v2880 = vld [vmem:[#allocation18 + $0x5a0] sm:$0xff]
        %v2881 = vld [vmem:[#allocation18 + $0x5a8] sm:$0xff]
        %v2882 = vld [vmem:[#allocation18 + $0x5b0] sm:$0xff]
        %v2883 = vld [vmem:[#allocation18 + $0x5b8] sm:$0xff]
        %v2884 = vld [vmem:[#allocation18 + $0x5c0] sm:$0xff]
        %v2885 = vld [vmem:[#allocation18 + $0x5c8] sm:$0xff]
        %v2886 = vld [vmem:[#allocation18 + $0x5d0] sm:$0xff]
        %v2887 = vld [vmem:[#allocation18 + $0x5d8] sm:$0xff]
        %v2888 = vld [vmem:[#allocation18 + $0x5e0] sm:$0xff]
        %v2889 = vld [vmem:[#allocation18 + $0x5e8] sm:$0xff]
        %v2890 = vld [vmem:[#allocation18 + $0x5f0] sm:$0xff]
        %v2891 = vld [vmem:[#allocation18 + $0x5f8] sm:$0xff]
        %v2892 = vld [vmem:[#allocation18 + $0x600] sm:$0xff]
        %v2893 = vld [vmem:[#allocation18 + $0x608] sm:$0xff]
        %v2894 = vld [vmem:[#allocation18 + $0x610] sm:$0xff]
        %v2895 = vld [vmem:[#allocation18 + $0x618] sm:$0xff]
        %v2896 = vld [vmem:[#allocation18 + $0x620] sm:$0xff]
        %v2897 = vld [vmem:[#allocation18 + $0x628] sm:$0xff]
        %v2898 = vld [vmem:[#allocation18 + $0x630] sm:$0xff]
        %v2899 = vld [vmem:[#allocation18 + $0x638] sm:$0xff]
        %v2900 = vld [vmem:[#allocation18 + $0x640] sm:$0xff]
        %v2901 = vld [vmem:[#allocation18 + $0x648] sm:$0xff]
        %v2902 = vld [vmem:[#allocation18 + $0x650] sm:$0xff]
        %v2903 = vld [vmem:[#allocation18 + $0x658] sm:$0xff]
        %v2904 = vld [vmem:[#allocation18 + $0x660] sm:$0xff]
        %v2905 = vld [vmem:[#allocation18 + $0x668] sm:$0xff]
        %v2906 = vld [vmem:[#allocation18 + $0x670] sm:$0xff]
        %v2907 = vld [vmem:[#allocation18 + $0x678] sm:$0xff]
        %v2908 = vld [vmem:[#allocation18 + $0x680] sm:$0xff]
        %v2909 = vld [vmem:[#allocation18 + $0x688] sm:$0xff]
        %v2910 = vld [vmem:[#allocation18 + $0x690] sm:$0xff]
        %v2911 = vld [vmem:[#allocation18 + $0x698] sm:$0xff]
        %v2912 = vld [vmem:[#allocation18 + $0x6a0] sm:$0xff]
        %v2913 = vld [vmem:[#allocation18 + $0x6a8] sm:$0xff]
        %v2914 = vld [vmem:[#allocation18 + $0x6b0] sm:$0xff]
        %v2915 = vld [vmem:[#allocation18 + $0x6b8] sm:$0xff]
        %v2916 = vld [vmem:[#allocation18 + $0x6c0] sm:$0xff]
        %v2917 = vld [vmem:[#allocation18 + $0x6c8] sm:$0xff]
        %v2918 = vld [vmem:[#allocation18 + $0x6d0] sm:$0xff]
        %v2919 = vld [vmem:[#allocation18 + $0x6d8] sm:$0xff]
        %v2920 = vld [vmem:[#allocation18 + $0x6e0] sm:$0xff]
        %v2921 = vld [vmem:[#allocation18 + $0x6e8] sm:$0xff]
        %v2922 = vld [vmem:[#allocation18 + $0x6f0] sm:$0xff]
        %v2923 = vld [vmem:[#allocation18 + $0x6f8] sm:$0xff]
        %v2924 = vld [vmem:[#allocation18 + $0x700] sm:$0xff]
        %v2925 = vld [vmem:[#allocation18 + $0x708] sm:$0xff]
        %v2926 = vld [vmem:[#allocation18 + $0x710] sm:$0xff]
        %v2927 = vld [vmem:[#allocation18 + $0x718] sm:$0xff]
        %v2928 = vld [vmem:[#allocation18 + $0x720] sm:$0xff]
        %v2929 = vld [vmem:[#allocation18 + $0x728] sm:$0xff]
        %v2930 = vld [vmem:[#allocation18 + $0x730] sm:$0xff]
        %v2931 = vld [vmem:[#allocation18 + $0x738] sm:$0xff]
        %v2932 = vld [vmem:[#allocation18 + $0x740] sm:$0xff]
        %v2933 = vld [vmem:[#allocation18 + $0x748] sm:$0xff]
        %v2934 = vld [vmem:[#allocation18 + $0x750] sm:$0xff]
        %v2935 = vld [vmem:[#allocation18 + $0x758] sm:$0xff]
        %v2936 = vld [vmem:[#allocation18 + $0x760] sm:$0xff]
        %v2937 = vld [vmem:[#allocation18 + $0x768] sm:$0xff]
        %v2938 = vld [vmem:[#allocation18 + $0x770] sm:$0xff]
        %v2939 = vld [vmem:[#allocation18 + $0x778] sm:$0xff]
        %v2940 = vld [vmem:[#allocation18 + $0x780] sm:$0xff]
        %v2941 = vld [vmem:[#allocation18 + $0x788] sm:$0xff]
        %v2942 = vld [vmem:[#allocation18 + $0x790] sm:$0xff]
        %v2943 = vld [vmem:[#allocation18 + $0x798] sm:$0xff]
        %v2944 = vld [vmem:[#allocation18 + $0x7a0] sm:$0xff]
        %v2945 = vld [vmem:[#allocation18 + $0x7a8] sm:$0xff]
        %v2946 = vld [vmem:[#allocation18 + $0x7b0] sm:$0xff]
        %v2947 = vld [vmem:[#allocation18 + $0x7b8] sm:$0xff]
        %v2948 = vld [vmem:[#allocation18 + $0x7c0] sm:$0xff]
        %v2949 = vld [vmem:[#allocation18 + $0x7c8] sm:$0xff]
        %v2950 = vld [vmem:[#allocation18 + $0x7d0] sm:$0xff]
        %v2951 = vld [vmem:[#allocation18 + $0x7d8] sm:$0xff]
        %v2952 = vld [vmem:[#allocation18 + $0x7e0] sm:$0xff]
        %v2953 = vld [vmem:[#allocation18 + $0x7e8] sm:$0xff]
        %v2954 = vld [vmem:[#allocation18 + $0x7f0] sm:$0xff]
        %v2955 = vld [vmem:[#allocation18 + $0x7f8] sm:$0xff]
        %v2956 = vld [vmem:[%s10] sm:$0xff]
        %v2958 = vlaneseq
        %v2959 = vshrl.u32 %v2958, 7
        %v2960 = vsub.s32 0, %v2959
        %v2961 = vrot.slane %v2956, %v2960
        %v2962 = vlaneseq
        %v2963 = vshrl.u32 %v2962, 7
        %v2964 = vsub.s32 1, %v2963
        %v2965 = vrot.slane %v2956, %v2964
        %v2966 = vlaneseq
        %v2967 = vshrl.u32 %v2966, 7
        %v2968 = vsub.s32 2, %v2967
        %v2969 = vrot.slane %v2956, %v2968
        %v2970 = vlaneseq
        %v2971 = vshrl.u32 %v2970, 7
        %v2972 = vsub.s32 3, %v2971
        %v2973 = vrot.slane %v2956, %v2972
        %v2974 = vlaneseq
        %v2975 = vshrl.u32 %v2974, 7
        %v2976 = vsub.s32 4, %v2975
        %v2977 = vrot.slane %v2956, %v2976
        %v2978 = vlaneseq
        %v2979 = vshrl.u32 %v2978, 7
        %v2980 = vsub.s32 5, %v2979
        %v2981 = vrot.slane %v2956, %v2980
        %v2982 = vlaneseq
        %v2983 = vshrl.u32 %v2982, 7
        %v2984 = vsub.s32 6, %v2983
        %v2985 = vrot.slane %v2956, %v2984
        %v2986 = vlaneseq
        %v2987 = vshrl.u32 %v2986, 7
        %v2988 = vsub.s32 7, %v2987
        %v2989 = vrot.slane %v2956, %v2988
        %2998 = vmatprep.subr.mxu0 %v2821
        %2999 = vmatpush1.msra.mxu0 %v2820
        %3000 = vmatprep.subr.mxu0 %v2813
        %3001 = vmatpush1.msra.mxu0 %v2812
        %3002 = vmatprep.subr.mxu0 %v2805
        %3003 = vmatpush1.msra.mxu0 %v2804
        %3004 = vmatprep.subr.mxu0 %v2797
        %3005 = vmatpush1.msra.mxu0 %v2796
        %3006 = vmatprep.subr.mxu0 %v2789
        %3007 = vmatpush1.msra.mxu0 %v2788
        %3008 = vmatprep.subr.mxu0 %v2781
        %3009 = vmatpush1.msra.mxu0 %v2780
        %3010 = vmatprep.subr.mxu0 %v2773
        %3011 = vmatpush1.msra.mxu0 %v2772
        %3012 = vmatprep.subr.mxu0 %v2765
        %3013 = vmatpush1.msra.mxu0 %v2764
        %3014 = vmatprep.subr.mxu0 %v2757
        %3015 = vmatpush1.msra.mxu0 %v2756
        %3016 = vmatprep.subr.mxu0 %v2749
        %3017 = vmatpush1.msra.mxu0 %v2748
        %3018 = vmatprep.subr.mxu0 %v2741
        %3019 = vmatpush1.msra.mxu0 %v2740
        %3020 = vmatprep.subr.mxu0 %v2733
        %3021 = vmatpush1.msra.mxu0 %v2732
        %3022 = vmatprep.subr.mxu0 %v2725
        %3023 = vmatpush1.msra.mxu0 %v2724
        %3024 = vmatprep.subr.mxu0 %v2717
        %3025 = vmatpush1.msra.mxu0 %v2716
        %3026 = vmatprep.subr.mxu0 %v2709
        %3027 = vmatpush1.msra.mxu0 %v2708
        %3028 = vmatprep.subr.mxu0 %v2701
        %3029 = vmatpush1.msra.mxu0 %v2700
        %3030 = vmatprep.subr.mxu0 %v2949
        %3031 = vmatpush2.msra.mxu0 %v2948
        %3032 = vmatprep.subr.mxu0 %v2941
        %3033 = vmatpush2.msra.mxu0 %v2940
        %3034 = vmatprep.subr.mxu0 %v2933
        %3035 = vmatpush2.msra.mxu0 %v2932
        %3036 = vmatprep.subr.mxu0 %v2925
        %3037 = vmatpush2.msra.mxu0 %v2924
        %3038 = vmatprep.subr.mxu0 %v2917
        %3039 = vmatpush2.msra.mxu0 %v2916
        %3040 = vmatprep.subr.mxu0 %v2909
        %3041 = vmatpush2.msra.mxu0 %v2908
        %3042 = vmatprep.subr.mxu0 %v2901
        %3043 = vmatpush2.msra.mxu0 %v2900
        %3044 = vmatprep.subr.mxu0 %v2893
        %3045 = vmatpush2.msra.mxu0 %v2892
        %3046 = vmatprep.subr.mxu0 %v2885
        %3047 = vmatpush2.msra.mxu0 %v2884
        %3048 = vmatprep.subr.mxu0 %v2877
        %3049 = vmatpush2.msra.mxu0 %v2876
        %3050 = vmatprep.subr.mxu0 %v2869
        %3051 = vmatpush2.msra.mxu0 %v2868
        %3052 = vmatprep.subr.mxu0 %v2861
        %3053 = vmatpush2.msra.mxu0 %v2860
        %3054 = vmatprep.subr.mxu0 %v2853
        %3055 = vmatpush2.msra.mxu0 %v2852
        %3056 = vmatprep.subr.mxu0 %v2845
        %3057 = vmatpush2.msra.mxu0 %v2844
        %3058 = vmatprep.subr.mxu0 %v2837
        %3059 = vmatpush2.msra.mxu0 %v2836
        %3060 = vmatprep.subr.mxu0 %v2829
        %3061 = vmatpush2.msra.mxu0 %v2828
        %3062 = vmatprep.mubr.f32.mxu0 %v2693
        %3063 = vmatmul.mubr.f32.gmra.mxu0 %v2692
        %v3064 = vpop.f32.mrf.mxu0
        %v3065 = vadd.f32 %v2961, %v3064
        %v3066 = vpop.f32.mrf.mxu0
        %v3067 = vadd.f32 %v2965, %v3066
        %3068 = vmatprep.mubr.f32.mxu0 %v2695
        %3069 = vmatmul.mubr.f32.gmra.mxu0 %v2694
        %v3070 = vpop.f32.mrf.mxu0
        %v3071 = vadd.f32 %v2961, %v3070
        %v3072 = vpop.f32.mrf.mxu0
        %v3073 = vadd.f32 %v2965, %v3072
        %3074 = vmatprep.mubr.f32.mxu0 %v2697
        %3075 = vmatmul.mubr.f32.gmra.mxu0 %v2696
        %v3076 = vpop.f32.mrf.mxu0
        %v3077 = vadd.f32 %v2961, %v3076
        %v3078 = vpop.f32.mrf.mxu0
        %v3079 = vadd.f32 %v2965, %v3078
        %3080 = vmatprep.mubr.f32.mxu0 %v2699
        %3081 = vmatmul.mubr.f32.gmra.mxu0 %v2698
        %v3082 = vpop.f32.mrf.mxu0
        %v3083 = vadd.f32 %v2961, %v3082
        %v3084 = vpop.f32.mrf.mxu0
        %v3085 = vadd.f32 %v2965, %v3084
        %3086 = vdwg.mxu0
        %3087 = vmatprep.subr.mxu0 %v2823
        %3088 = vmatpush1.msra.mxu0 %v2822
        %3089 = vmatprep.subr.mxu0 %v2815
        %3090 = vmatpush1.msra.mxu0 %v2814
        %3091 = vmatprep.subr.mxu0 %v2807
        %3092 = vmatpush1.msra.mxu0 %v2806
        %3093 = vmatprep.subr.mxu0 %v2799
        %3094 = vmatpush1.msra.mxu0 %v2798
        %3095 = vmatprep.subr.mxu0 %v2791
        %3096 = vmatpush1.msra.mxu0 %v2790
        %3097 = vmatprep.subr.mxu0 %v2783
        %3098 = vmatpush1.msra.mxu0 %v2782
        %3099 = vmatprep.subr.mxu0 %v2775
        %3100 = vmatpush1.msra.mxu0 %v2774
        %3101 = vmatprep.subr.mxu0 %v2767
        %3102 = vmatpush1.msra.mxu0 %v2766
        %3103 = vmatprep.subr.mxu0 %v2759
        %3104 = vmatpush1.msra.mxu0 %v2758
        %3105 = vmatprep.subr.mxu0 %v2751
        %3106 = vmatpush1.msra.mxu0 %v2750
        %3107 = vmatprep.subr.mxu0 %v2743
        %3108 = vmatpush1.msra.mxu0 %v2742
        %3109 = vmatprep.subr.mxu0 %v2735
        %3110 = vmatpush1.msra.mxu0 %v2734
        %3111 = vmatprep.subr.mxu0 %v2727
        %3112 = vmatpush1.msra.mxu0 %v2726
        %3113 = vmatprep.subr.mxu0 %v2719
        %3114 = vmatpush1.msra.mxu0 %v2718
        %3115 = vmatprep.subr.mxu0 %v2711
        %3116 = vmatpush1.msra.mxu0 %v2710
        %3117 = vmatprep.subr.mxu0 %v2703
        %3118 = vmatpush1.msra.mxu0 %v2702
        %3119 = vmatprep.subr.mxu0 %v2951
        %3120 = vmatpush2.msra.mxu0 %v2950
        %3121 = vmatprep.subr.mxu0 %v2943
        %3122 = vmatpush2.msra.mxu0 %v2942
        %3123 = vmatprep.subr.mxu0 %v2935
        %3124 = vmatpush2.msra.mxu0 %v2934
        %3125 = vmatprep.subr.mxu0 %v2927
        %3126 = vmatpush2.msra.mxu0 %v2926
        %3127 = vmatprep.subr.mxu0 %v2919
        %3128 = vmatpush2.msra.mxu0 %v2918
        %3129 = vmatprep.subr.mxu0 %v2911
        %3130 = vmatpush2.msra.mxu0 %v2910
        %3131 = vmatprep.subr.mxu0 %v2903
        %3132 = vmatpush2.msra.mxu0 %v2902
        %3133 = vmatprep.subr.mxu0 %v2895
        %3134 = vmatpush2.msra.mxu0 %v2894
        %3135 = vmatprep.subr.mxu0 %v2887
        %3136 = vmatpush2.msra.mxu0 %v2886
        %3137 = vmatprep.subr.mxu0 %v2879
        %3138 = vmatpush2.msra.mxu0 %v2878
        %3139 = vmatprep.subr.mxu0 %v2871
        %3140 = vmatpush2.msra.mxu0 %v2870
        %3141 = vmatprep.subr.mxu0 %v2863
        %3142 = vmatpush2.msra.mxu0 %v2862
        %3143 = vmatprep.subr.mxu0 %v2855
        %3144 = vmatpush2.msra.mxu0 %v2854
        %3145 = vmatprep.subr.mxu0 %v2847
        %3146 = vmatpush2.msra.mxu0 %v2846
        %3147 = vmatprep.subr.mxu0 %v2839
        %3148 = vmatpush2.msra.mxu0 %v2838
        %3149 = vmatprep.subr.mxu0 %v2831
        %3150 = vmatpush2.msra.mxu0 %v2830
        %3151 = vmatprep.mubr.f32.mxu0 %v2693
        %3152 = vmatmul.mubr.f32.gmra.mxu0 %v2692
        %v3153 = vpop.f32.mrf.mxu0
        %v3154 = vadd.f32 %v2969, %v3153
        %v3155 = vpop.f32.mrf.mxu0
        %v3156 = vadd.f32 %v2973, %v3155
        %3157 = vmatprep.mubr.f32.mxu0 %v2695
        %3158 = vmatmul.mubr.f32.gmra.mxu0 %v2694
        %v3159 = vpop.f32.mrf.mxu0
        %v3160 = vadd.f32 %v2969, %v3159
        %v3161 = vpop.f32.mrf.mxu0
        %v3162 = vadd.f32 %v2973, %v3161
        %3163 = vmatprep.mubr.f32.mxu0 %v2697
        %3164 = vmatmul.mubr.f32.gmra.mxu0 %v2696
        %v3165 = vpop.f32.mrf.mxu0
        %v3166 = vadd.f32 %v2969, %v3165
        %v3167 = vpop.f32.mrf.mxu0
        %v3168 = vadd.f32 %v2973, %v3167
        %3169 = vmatprep.mubr.f32.mxu0 %v2699
        %3170 = vmatmul.mubr.f32.gmra.mxu0 %v2698
        %v3171 = vpop.f32.mrf.mxu0
        %v3172 = vadd.f32 %v2969, %v3171
        %v3173 = vpop.f32.mrf.mxu0
        %v3174 = vadd.f32 %v2973, %v3173
        %3175 = vdwg.mxu0
        %3176 = vmatprep.subr.mxu0 %v2825
        %3177 = vmatpush1.msra.mxu0 %v2824
        %3178 = vmatprep.subr.mxu0 %v2817
        %3179 = vmatpush1.msra.mxu0 %v2816
        %3180 = vmatprep.subr.mxu0 %v2809
        %3181 = vmatpush1.msra.mxu0 %v2808
        %3182 = vmatprep.subr.mxu0 %v2801
        %3183 = vmatpush1.msra.mxu0 %v2800
        %3184 = vmatprep.subr.mxu0 %v2793
        %3185 = vmatpush1.msra.mxu0 %v2792
        %3186 = vmatprep.subr.mxu0 %v2785
        %3187 = vmatpush1.msra.mxu0 %v2784
        %3188 = vmatprep.subr.mxu0 %v2777
        %3189 = vmatpush1.msra.mxu0 %v2776
        %3190 = vmatprep.subr.mxu0 %v2769
        %3191 = vmatpush1.msra.mxu0 %v2768
        %3192 = vmatprep.subr.mxu0 %v2761
        %3193 = vmatpush1.msra.mxu0 %v2760
        %3194 = vmatprep.subr.mxu0 %v2753
        %3195 = vmatpush1.msra.mxu0 %v2752
        %3196 = vmatprep.subr.mxu0 %v2745
        %3197 = vmatpush1.msra.mxu0 %v2744
        %3198 = vmatprep.subr.mxu0 %v2737
        %3199 = vmatpush1.msra.mxu0 %v2736
        %3200 = vmatprep.subr.mxu0 %v2729
        %3201 = vmatpush1.msra.mxu0 %v2728
        %3202 = vmatprep.subr.mxu0 %v2721
        %3203 = vmatpush1.msra.mxu0 %v2720
        %3204 = vmatprep.subr.mxu0 %v2713
        %3205 = vmatpush1.msra.mxu0 %v2712
        %3206 = vmatprep.subr.mxu0 %v2705
        %3207 = vmatpush1.msra.mxu0 %v2704
        %3208 = vmatprep.subr.mxu0 %v2953
        %3209 = vmatpush2.msra.mxu0 %v2952
        %3210 = vmatprep.subr.mxu0 %v2945
        %3211 = vmatpush2.msra.mxu0 %v2944
        %3212 = vmatprep.subr.mxu0 %v2937
        %3213 = vmatpush2.msra.mxu0 %v2936
        %3214 = vmatprep.subr.mxu0 %v2929
        %3215 = vmatpush2.msra.mxu0 %v2928
        %3216 = vmatprep.subr.mxu0 %v2921
        %3217 = vmatpush2.msra.mxu0 %v2920
        %3218 = vmatprep.subr.mxu0 %v2913
        %3219 = vmatpush2.msra.mxu0 %v2912
        %3220 = vmatprep.subr.mxu0 %v2905
        %3221 = vmatpush2.msra.mxu0 %v2904
        %3222 = vmatprep.subr.mxu0 %v2897
        %3223 = vmatpush2.msra.mxu0 %v2896
        %3224 = vmatprep.subr.mxu0 %v2889
        %3225 = vmatpush2.msra.mxu0 %v2888
        %3226 = vmatprep.subr.mxu0 %v2881
        %3227 = vmatpush2.msra.mxu0 %v2880
        %3228 = vmatprep.subr.mxu0 %v2873
        %3229 = vmatpush2.msra.mxu0 %v2872
        %3230 = vmatprep.subr.mxu0 %v2865
        %3231 = vmatpush2.msra.mxu0 %v2864
        %3232 = vmatprep.subr.mxu0 %v2857
        %3233 = vmatpush2.msra.mxu0 %v2856
        %3234 = vmatprep.subr.mxu0 %v2849
        %3235 = vmatpush2.msra.mxu0 %v2848
        %3236 = vmatprep.subr.mxu0 %v2841
        %3237 = vmatpush2.msra.mxu0 %v2840
        %3238 = vmatprep.subr.mxu0 %v2833
        %3239 = vmatpush2.msra.mxu0 %v2832
        %3240 = vmatprep.mubr.f32.mxu0 %v2693
        %3241 = vmatmul.mubr.f32.gmra.mxu0 %v2692
        %v3242 = vpop.f32.mrf.mxu0
        %v3243 = vadd.f32 %v2977, %v3242
        %v3244 = vpop.f32.mrf.mxu0
        %v3245 = vadd.f32 %v2981, %v3244
        %3246 = vmatprep.mubr.f32.mxu0 %v2695
        %3247 = vmatmul.mubr.f32.gmra.mxu0 %v2694
        %v3248 = vpop.f32.mrf.mxu0
        %v3249 = vadd.f32 %v2977, %v3248
        %v3250 = vpop.f32.mrf.mxu0
        %v3251 = vadd.f32 %v2981, %v3250
        %3252 = vmatprep.mubr.f32.mxu0 %v2697
        %3253 = vmatmul.mubr.f32.gmra.mxu0 %v2696
        %v3254 = vpop.f32.mrf.mxu0
        %v3255 = vadd.f32 %v2977, %v3254
        %v3256 = vpop.f32.mrf.mxu0
        %v3257 = vadd.f32 %v2981, %v3256
        %3258 = vmatprep.mubr.f32.mxu0 %v2699
        %3259 = vmatmul.mubr.f32.gmra.mxu0 %v2698
        %v3260 = vpop.f32.mrf.mxu0
        %v3261 = vadd.f32 %v2977, %v3260
        %v3262 = vpop.f32.mrf.mxu0
        %v3263 = vadd.f32 %v2981, %v3262
        %3264 = vdwg.mxu0
        %3265 = vmatprep.subr.mxu0 %v2827
        %3266 = vmatpush1.msra.mxu0 %v2826
        %3267 = vmatprep.subr.mxu0 %v2819
        %3268 = vmatpush1.msra.mxu0 %v2818
        %3269 = vmatprep.subr.mxu0 %v2811
        %3270 = vmatpush1.msra.mxu0 %v2810
        %3271 = vmatprep.subr.mxu0 %v2803
        %3272 = vmatpush1.msra.mxu0 %v2802
        %3273 = vmatprep.subr.mxu0 %v2795
        %3274 = vmatpush1.msra.mxu0 %v2794
        %3275 = vmatprep.subr.mxu0 %v2787
        %3276 = vmatpush1.msra.mxu0 %v2786
        %3277 = vmatprep.subr.mxu0 %v2779
        %3278 = vmatpush1.msra.mxu0 %v2778
        %3279 = vmatprep.subr.mxu0 %v2771
        %3280 = vmatpush1.msra.mxu0 %v2770
        %3281 = vmatprep.subr.mxu0 %v2763
        %3282 = vmatpush1.msra.mxu0 %v2762
        %3283 = vmatprep.subr.mxu0 %v2755
        %3284 = vmatpush1.msra.mxu0 %v2754
        %3285 = vmatprep.subr.mxu0 %v2747
        %3286 = vmatpush1.msra.mxu0 %v2746
        %3287 = vmatprep.subr.mxu0 %v2739
        %3288 = vmatpush1.msra.mxu0 %v2738
        %3289 = vmatprep.subr.mxu0 %v2731
        %3290 = vmatpush1.msra.mxu0 %v2730
        %3291 = vmatprep.subr.mxu0 %v2723
        %3292 = vmatpush1.msra.mxu0 %v2722
        %3293 = vmatprep.subr.mxu0 %v2715
        %3294 = vmatpush1.msra.mxu0 %v2714
        %3295 = vmatprep.subr.mxu0 %v2707
        %3296 = vmatpush1.msra.mxu0 %v2706
        %3297 = vmatprep.subr.mxu0 %v2955
        %3298 = vmatpush2.msra.mxu0 %v2954
        %3299 = vmatprep.subr.mxu0 %v2947
        %3300 = vmatpush2.msra.mxu0 %v2946
        %3301 = vmatprep.subr.mxu0 %v2939
        %3302 = vmatpush2.msra.mxu0 %v2938
        %3303 = vmatprep.subr.mxu0 %v2931
        %3304 = vmatpush2.msra.mxu0 %v2930
        %3305 = vmatprep.subr.mxu0 %v2923
        %3306 = vmatpush2.msra.mxu0 %v2922
        %3307 = vmatprep.subr.mxu0 %v2915
        %3308 = vmatpush2.msra.mxu0 %v2914
        %3309 = vmatprep.subr.mxu0 %v2907
        %3310 = vmatpush2.msra.mxu0 %v2906
        %3311 = vmatprep.subr.mxu0 %v2899
        %3312 = vmatpush2.msra.mxu0 %v2898
        %3313 = vmatprep.subr.mxu0 %v2891
        %3314 = vmatpush2.msra.mxu0 %v2890
        %3315 = vmatprep.subr.mxu0 %v2883
        %3316 = vmatpush2.msra.mxu0 %v2882
        %3317 = vmatprep.subr.mxu0 %v2875
        %3318 = vmatpush2.msra.mxu0 %v2874
        %3319 = vmatprep.subr.mxu0 %v2867
        %3320 = vmatpush2.msra.mxu0 %v2866
        %3321 = vmatprep.subr.mxu0 %v2859
        %3322 = vmatpush2.msra.mxu0 %v2858
        %3323 = vmatprep.subr.mxu0 %v2851
        %3324 = vmatpush2.msra.mxu0 %v2850
        %3325 = vmatprep.subr.mxu0 %v2843
        %3326 = vmatpush2.msra.mxu0 %v2842
        %3327 = vmatprep.subr.mxu0 %v2835
        %3328 = vmatpush2.msra.mxu0 %v2834
        %3329 = vmatprep.mubr.f32.mxu0 %v2693
        %3330 = vmatmul.mubr.f32.gmra.mxu0 %v2692
        %v3331 = vpop.f32.mrf.mxu0
        %v3332 = vadd.f32 %v2985, %v3331
        %v3333 = vpop.f32.mrf.mxu0
        %v3334 = vadd.f32 %v2989, %v3333
        %3335 = vmatprep.mubr.f32.mxu0 %v2695
        %3336 = vmatmul.mubr.f32.gmra.mxu0 %v2694
        %v3337 = vpop.f32.mrf.mxu0
        %v3338 = vadd.f32 %v2985, %v3337
        %v3339 = vpop.f32.mrf.mxu0
        %v3340 = vadd.f32 %v2989, %v3339
        %3341 = vmatprep.mubr.f32.mxu0 %v2697
        %3342 = vmatmul.mubr.f32.gmra.mxu0 %v2696
        %v3343 = vpop.f32.mrf.mxu0
        %v3344 = vadd.f32 %v2985, %v3343
        %v3345 = vpop.f32.mrf.mxu0
        %v3346 = vadd.f32 %v2989, %v3345
        %3347 = vmatprep.mubr.f32.mxu0 %v2699
        %3348 = vmatmul.mubr.f32.gmra.mxu0 %v2698
        %v3349 = vpop.f32.mrf.mxu0
        %v3350 = vadd.f32 %v2985, %v3349
        %v3351 = vpop.f32.mrf.mxu0
        %v3352 = vadd.f32 %v2989, %v3351
        %3353 = vdwg.mxu0
        %3354 = vst [vmem:[#allocation5] sm:$0xff] %v3065
        %3355 = vst [vmem:[#allocation5 + $0x8] sm:$0xff] %v3067
        %3356 = vst [vmem:[#allocation5 + $0x10] sm:$0xff] %v3154
        %3357 = vst [vmem:[#allocation5 + $0x18] sm:$0xff] %v3156
        %3358 = vst [vmem:[#allocation5 + $0x20] sm:$0xff] %v3243
        %3359 = vst [vmem:[#allocation5 + $0x28] sm:$0xff] %v3245
        %3360 = vst [vmem:[#allocation5 + $0x30] sm:$0xff] %v3332
        %3361 = vst [vmem:[#allocation5 + $0x38] sm:$0xff] %v3334
        %3362 = vst [vmem:[#allocation5 + $0x40] sm:$0xff] %v3071
        %3363 = vst [vmem:[#allocation5 + $0x48] sm:$0xff] %v3073
        %3364 = vst [vmem:[#allocation5 + $0x50] sm:$0xff] %v3160
        %3365 = vst [vmem:[#allocation5 + $0x58] sm:$0xff] %v3162
        %3366 = vst [vmem:[#allocation5 + $0x60] sm:$0xff] %v3249
        %3367 = vst [vmem:[#allocation5 + $0x68] sm:$0xff] %v3251
        %3368 = vst [vmem:[#allocation5 + $0x70] sm:$0xff] %v3338
        %3369 = vst [vmem:[#allocation5 + $0x78] sm:$0xff] %v3340
        %3370 = vst [vmem:[#allocation5 + $0x80] sm:$0xff] %v3077
        %3371 = vst [vmem:[#allocation5 + $0x88] sm:$0xff] %v3079
        %3372 = vst [vmem:[#allocation5 + $0x90] sm:$0xff] %v3166
        %3373 = vst [vmem:[#allocation5 + $0x98] sm:$0xff] %v3168
        %3374 = vst [vmem:[#allocation5 + $0xa0] sm:$0xff] %v3255
        %3375 = vst [vmem:[#allocation5 + $0xa8] sm:$0xff] %v3257
        %3376 = vst [vmem:[#allocation5 + $0xb0] sm:$0xff] %v3344
        %3377 = vst [vmem:[#allocation5 + $0xb8] sm:$0xff] %v3346
        %3378 = vst [vmem:[#allocation5 + $0xc0] sm:$0xff] %v3083
        %3379 = vst [vmem:[#allocation5 + $0xc8] sm:$0xff] %v3085
        %3380 = vst [vmem:[#allocation5 + $0xd0] sm:$0xff] %v3172
        %3381 = vst [vmem:[#allocation5 + $0xd8] sm:$0xff] %v3174
        %3382 = vst [vmem:[#allocation5 + $0xe0] sm:$0xff] %v3261
        %3383 = vst [vmem:[#allocation5 + $0xe8] sm:$0xff] %v3263
        %3384 = vst [vmem:[#allocation5 + $0xf0] sm:$0xff] %v3350
        %3385 = vst [vmem:[#allocation5 + $0xf8] sm:$0xff] %v3352
        %v3386 = vld [vmem:[#allocation19] sm:$0xff]
        %v3387 = vld [vmem:[#allocation19 + $0x8] sm:$0xff]
        %v3388 = vld [vmem:[#allocation19 + $0x10] sm:$0xff]
        %v3389 = vld [vmem:[#allocation19 + $0x18] sm:$0xff]
        %v3390 = vld [vmem:[#allocation19 + $0x20] sm:$0xff]
        %v3391 = vld [vmem:[#allocation19 + $0x28] sm:$0xff]
        %v3392 = vld [vmem:[#allocation19 + $0x30] sm:$0xff]
        %v3393 = vld [vmem:[#allocation19 + $0x38] sm:$0xff]
        %v3394 = vld [vmem:[#allocation19 + $0x40] sm:$0xff]
        %v3395 = vld [vmem:[#allocation19 + $0x48] sm:$0xff]
        %v3396 = vld [vmem:[#allocation19 + $0x50] sm:$0xff]
        %v3397 = vld [vmem:[#allocation19 + $0x58] sm:$0xff]
        %v3398 = vld [vmem:[#allocation19 + $0x60] sm:$0xff]
        %v3399 = vld [vmem:[#allocation19 + $0x68] sm:$0xff]
        %v3400 = vld [vmem:[#allocation19 + $0x70] sm:$0xff]
        %v3401 = vld [vmem:[#allocation19 + $0x78] sm:$0xff]
        %v3402 = vld [vmem:[#allocation19 + $0x80] sm:$0xff]
        %v3403 = vld [vmem:[#allocation19 + $0x88] sm:$0xff]
        %v3404 = vld [vmem:[#allocation19 + $0x90] sm:$0xff]
        %v3405 = vld [vmem:[#allocation19 + $0x98] sm:$0xff]
        %v3406 = vld [vmem:[#allocation19 + $0xa0] sm:$0xff]
        %v3407 = vld [vmem:[#allocation19 + $0xa8] sm:$0xff]
        %v3408 = vld [vmem:[#allocation19 + $0xb0] sm:$0xff]
        %v3409 = vld [vmem:[#allocation19 + $0xb8] sm:$0xff]
        %v3410 = vld [vmem:[#allocation19 + $0xc0] sm:$0xff]
        %v3411 = vld [vmem:[#allocation19 + $0xc8] sm:$0xff]
        %v3412 = vld [vmem:[#allocation19 + $0xd0] sm:$0xff]
        %v3413 = vld [vmem:[#allocation19 + $0xd8] sm:$0xff]
        %v3414 = vld [vmem:[#allocation19 + $0xe0] sm:$0xff]
        %v3415 = vld [vmem:[#allocation19 + $0xe8] sm:$0xff]
        %v3416 = vld [vmem:[#allocation19 + $0xf0] sm:$0xff]
        %v3417 = vld [vmem:[#allocation19 + $0xf8] sm:$0xff]
        %v3418 = vld [vmem:[#allocation19 + $0x100] sm:$0xff]
        %v3419 = vld [vmem:[#allocation19 + $0x108] sm:$0xff]
        %v3420 = vld [vmem:[#allocation19 + $0x110] sm:$0xff]
        %v3421 = vld [vmem:[#allocation19 + $0x118] sm:$0xff]
        %v3422 = vld [vmem:[#allocation19 + $0x120] sm:$0xff]
        %v3423 = vld [vmem:[#allocation19 + $0x128] sm:$0xff]
        %v3424 = vld [vmem:[#allocation19 + $0x130] sm:$0xff]
        %v3425 = vld [vmem:[#allocation19 + $0x138] sm:$0xff]
        %v3426 = vld [vmem:[#allocation19 + $0x140] sm:$0xff]
        %v3427 = vld [vmem:[#allocation19 + $0x148] sm:$0xff]
        %v3428 = vld [vmem:[#allocation19 + $0x150] sm:$0xff]
        %v3429 = vld [vmem:[#allocation19 + $0x158] sm:$0xff]
        %v3430 = vld [vmem:[#allocation19 + $0x160] sm:$0xff]
        %v3431 = vld [vmem:[#allocation19 + $0x168] sm:$0xff]
        %v3432 = vld [vmem:[#allocation19 + $0x170] sm:$0xff]
        %v3433 = vld [vmem:[#allocation19 + $0x178] sm:$0xff]
        %v3434 = vld [vmem:[#allocation19 + $0x180] sm:$0xff]
        %v3435 = vld [vmem:[#allocation19 + $0x188] sm:$0xff]
        %v3436 = vld [vmem:[#allocation19 + $0x190] sm:$0xff]
        %v3437 = vld [vmem:[#allocation19 + $0x198] sm:$0xff]
        %v3438 = vld [vmem:[#allocation19 + $0x1a0] sm:$0xff]
        %v3439 = vld [vmem:[#allocation19 + $0x1a8] sm:$0xff]
        %v3440 = vld [vmem:[#allocation19 + $0x1b0] sm:$0xff]
        %v3441 = vld [vmem:[#allocation19 + $0x1b8] sm:$0xff]
        %v3442 = vld [vmem:[#allocation19 + $0x1c0] sm:$0xff]
        %v3443 = vld [vmem:[#allocation19 + $0x1c8] sm:$0xff]
        %v3444 = vld [vmem:[#allocation19 + $0x1d0] sm:$0xff]
        %v3445 = vld [vmem:[#allocation19 + $0x1d8] sm:$0xff]
        %v3446 = vld [vmem:[#allocation19 + $0x1e0] sm:$0xff]
        %v3447 = vld [vmem:[#allocation19 + $0x1e8] sm:$0xff]
        %v3448 = vld [vmem:[#allocation19 + $0x1f0] sm:$0xff]
        %v3449 = vld [vmem:[#allocation19 + $0x1f8] sm:$0xff]
        %v3450 = vld [vmem:[#allocation21] sm:$0xff]
        %v3451 = vld [vmem:[#allocation21 + $0x8] sm:$0xff]
        %v3452 = vld [vmem:[#allocation21 + $0x10] sm:$0xff]
        %v3453 = vld [vmem:[#allocation21 + $0x18] sm:$0xff]
        %v3454 = vld [vmem:[#allocation21 + $0x20] sm:$0xff]
        %v3455 = vld [vmem:[#allocation21 + $0x28] sm:$0xff]
        %v3456 = vld [vmem:[#allocation21 + $0x30] sm:$0xff]
        %v3457 = vld [vmem:[#allocation21 + $0x38] sm:$0xff]
        %v3458 = vld [vmem:[#allocation21 + $0x40] sm:$0xff]
        %v3459 = vld [vmem:[#allocation21 + $0x48] sm:$0xff]
        %v3460 = vld [vmem:[#allocation21 + $0x50] sm:$0xff]
        %v3461 = vld [vmem:[#allocation21 + $0x58] sm:$0xff]
        %v3462 = vld [vmem:[#allocation21 + $0x60] sm:$0xff]
        %v3463 = vld [vmem:[#allocation21 + $0x68] sm:$0xff]
        %v3464 = vld [vmem:[#allocation21 + $0x70] sm:$0xff]
        %v3465 = vld [vmem:[#allocation21 + $0x78] sm:$0xff]
        %v3466 = vld [vmem:[#allocation21 + $0x80] sm:$0xff]
        %v3467 = vld [vmem:[#allocation21 + $0x88] sm:$0xff]
        %v3468 = vld [vmem:[#allocation21 + $0x90] sm:$0xff]
        %v3469 = vld [vmem:[#allocation21 + $0x98] sm:$0xff]
        %v3470 = vld [vmem:[#allocation21 + $0xa0] sm:$0xff]
        %v3471 = vld [vmem:[#allocation21 + $0xa8] sm:$0xff]
        %v3472 = vld [vmem:[#allocation21 + $0xb0] sm:$0xff]
        %v3473 = vld [vmem:[#allocation21 + $0xb8] sm:$0xff]
        %v3474 = vld [vmem:[#allocation21 + $0xc0] sm:$0xff]
        %v3475 = vld [vmem:[#allocation21 + $0xc8] sm:$0xff]
        %v3476 = vld [vmem:[#allocation21 + $0xd0] sm:$0xff]
        %v3477 = vld [vmem:[#allocation21 + $0xd8] sm:$0xff]
        %v3478 = vld [vmem:[#allocation21 + $0xe0] sm:$0xff]
        %v3479 = vld [vmem:[#allocation21 + $0xe8] sm:$0xff]
        %v3480 = vld [vmem:[#allocation21 + $0xf0] sm:$0xff]
        %v3481 = vld [vmem:[#allocation21 + $0xf8] sm:$0xff]
        %v3482 = vld [vmem:[#allocation21 + $0x100] sm:$0xff]
        %v3483 = vld [vmem:[#allocation21 + $0x108] sm:$0xff]
        %v3484 = vld [vmem:[#allocation21 + $0x110] sm:$0xff]
        %v3485 = vld [vmem:[#allocation21 + $0x118] sm:$0xff]
        %v3486 = vld [vmem:[#allocation21 + $0x120] sm:$0xff]
        %v3487 = vld [vmem:[#allocation21 + $0x128] sm:$0xff]
        %v3488 = vld [vmem:[#allocation21 + $0x130] sm:$0xff]
        %v3489 = vld [vmem:[#allocation21 + $0x138] sm:$0xff]
        %v3490 = vld [vmem:[#allocation21 + $0x140] sm:$0xff]
        %v3491 = vld [vmem:[#allocation21 + $0x148] sm:$0xff]
        %v3492 = vld [vmem:[#allocation21 + $0x150] sm:$0xff]
        %v3493 = vld [vmem:[#allocation21 + $0x158] sm:$0xff]
        %v3494 = vld [vmem:[#allocation21 + $0x160] sm:$0xff]
        %v3495 = vld [vmem:[#allocation21 + $0x168] sm:$0xff]
        %v3496 = vld [vmem:[#allocation21 + $0x170] sm:$0xff]
        %v3497 = vld [vmem:[#allocation21 + $0x178] sm:$0xff]
        %v3498 = vld [vmem:[#allocation21 + $0x180] sm:$0xff]
        %v3499 = vld [vmem:[#allocation21 + $0x188] sm:$0xff]
        %v3500 = vld [vmem:[#allocation21 + $0x190] sm:$0xff]
        %v3501 = vld [vmem:[#allocation21 + $0x198] sm:$0xff]
        %v3502 = vld [vmem:[#allocation21 + $0x1a0] sm:$0xff]
        %v3503 = vld [vmem:[#allocation21 + $0x1a8] sm:$0xff]
        %v3504 = vld [vmem:[#allocation21 + $0x1b0] sm:$0xff]
        %v3505 = vld [vmem:[#allocation21 + $0x1b8] sm:$0xff]
        %v3506 = vld [vmem:[#allocation21 + $0x1c0] sm:$0xff]
        %v3507 = vld [vmem:[#allocation21 + $0x1c8] sm:$0xff]
        %v3508 = vld [vmem:[#allocation21 + $0x1d0] sm:$0xff]
        %v3509 = vld [vmem:[#allocation21 + $0x1d8] sm:$0xff]
        %v3510 = vld [vmem:[#allocation21 + $0x1e0] sm:$0xff]
        %v3511 = vld [vmem:[#allocation21 + $0x1e8] sm:$0xff]
        %v3512 = vld [vmem:[#allocation21 + $0x1f0] sm:$0xff]
        %v3513 = vld [vmem:[#allocation21 + $0x1f8] sm:$0xff]
        %s3514 = scalar_lea.vmem [#allocation2], 16
        %v3515 = vld [vmem:[%s3514] sm:$0xff]
        %s3516 = scalar_lea.vmem [#allocation3], 16
        %v3517 = vld [vmem:[%s3516] sm:$0xff]
        %s3518 = scalar_lea.vmem [#allocation2], 24
        %v3519 = vld [vmem:[%s3518] sm:$0xff]
        %s3520 = scalar_lea.vmem [#allocation3], 24
        %v3521 = vld [vmem:[%s3520] sm:$0xff]
        %v3522 = vld [vmem:[#allocation5] sm:$0xff]
        %v3523 = vld [vmem:[#allocation5 + $0x8] sm:$0xff]
        %v3524 = vld [vmem:[#allocation5 + $0x10] sm:$0xff]
        %v3525 = vld [vmem:[#allocation5 + $0x18] sm:$0xff]
        %3526 = vmatprep.subr.mxu0 %v3447
        %3527 = vmatpush1.msra.mxu0 %v3446
        %3528 = vmatprep.subr.mxu0 %v3443
        %3529 = vmatpush1.msra.mxu0 %v3442
        %3530 = vmatprep.subr.mxu0 %v3439
        %3531 = vmatpush1.msra.mxu0 %v3438
        %3532 = vmatprep.subr.mxu0 %v3435
        %3533 = vmatpush1.msra.mxu0 %v3434
        %3534 = vmatprep.subr.mxu0 %v3431
        %3535 = vmatpush1.msra.mxu0 %v3430
        %3536 = vmatprep.subr.mxu0 %v3427
        %3537 = vmatpush1.msra.mxu0 %v3426
        %3538 = vmatprep.subr.mxu0 %v3423
        %3539 = vmatpush1.msra.mxu0 %v3422
        %3540 = vmatprep.subr.mxu0 %v3419
        %3541 = vmatpush1.msra.mxu0 %v3418
        %3542 = vmatprep.subr.mxu0 %v3415
        %3543 = vmatpush1.msra.mxu0 %v3414
        %3544 = vmatprep.subr.mxu0 %v3411
        %3545 = vmatpush1.msra.mxu0 %v3410
        %3546 = vmatprep.subr.mxu0 %v3407
        %3547 = vmatpush1.msra.mxu0 %v3406
        %3548 = vmatprep.subr.mxu0 %v3403
        %3549 = vmatpush1.msra.mxu0 %v3402
        %3550 = vmatprep.subr.mxu0 %v3399
        %3551 = vmatpush1.msra.mxu0 %v3398
        %3552 = vmatprep.subr.mxu0 %v3395
        %3553 = vmatpush1.msra.mxu0 %v3394
        %3554 = vmatprep.subr.mxu0 %v3391
        %3555 = vmatpush1.msra.mxu0 %v3390
        %3556 = vmatprep.subr.mxu0 %v3387
        %3557 = vmatpush1.msra.mxu0 %v3386
        %3558 = vmatprep.subr.mxu0 0.0
        %3559 = vmatpush2.msra.mxu0 0.0
        %3560 = vmatprep.subr.mxu0 0.0
        %3561 = vmatpush2.msra.mxu0 0.0
        %3562 = vmatprep.subr.mxu0 0.0
        %3563 = vmatpush2.msra.mxu0 0.0
        %3564 = vmatprep.subr.mxu0 0.0
        %3565 = vmatpush2.msra.mxu0 0.0
        %3566 = vmatprep.subr.mxu0 0.0
        %3567 = vmatpush2.msra.mxu0 0.0
        %3568 = vmatprep.subr.mxu0 0.0
        %3569 = vmatpush2.msra.mxu0 0.0
        %3570 = vmatprep.subr.mxu0 0.0
        %3571 = vmatpush2.msra.mxu0 0.0
        %3572 = vmatprep.subr.mxu0 0.0
        %3573 = vmatpush2.msra.mxu0 0.0
        %3574 = vmatprep.subr.mxu0 0.0
        %3575 = vmatpush2.msra.mxu0 0.0
        %3576 = vmatprep.subr.mxu0 0.0
        %3577 = vmatpush2.msra.mxu0 0.0
        %3578 = vmatprep.subr.mxu0 0.0
        %3579 = vmatpush2.msra.mxu0 0.0
        %3580 = vmatprep.subr.mxu0 0.0
        %3581 = vmatpush2.msra.mxu0 0.0
        %3582 = vmatprep.subr.mxu0 0.0
        %3583 = vmatpush2.msra.mxu0 0.0
        %3584 = vmatprep.subr.mxu0 0.0
        %3585 = vmatpush2.msra.mxu0 0.0
        %3586 = vmatprep.subr.mxu0 0.0
        %3587 = vmatpush2.msra.mxu0 0.0
        %3588 = vmatprep.subr.mxu0 0.0
        %3589 = vmatpush2.msra.mxu0 0.0
        %3590 = vmatprep.mubr.f32.mxu0 0.0
        %3591 = vmatmul.mubr.f32.gmra.mxu0 %v3515
        %v3592 = vpop.f32.mrf.mxu0
        %v3593 = vadd.f32 0.0, %v3592
        %v3594 = vpop.f32.mrf.mxu0
        %v3595 = vadd.f32 0.0, %v3594
        %3596 = vdwg.mxu0
        %3597 = vmatprep.subr.mxu0 %v3449
        %3598 = vmatpush1.msra.mxu0 %v3448
        %3599 = vmatprep.subr.mxu0 %v3445
        %3600 = vmatpush1.msra.mxu0 %v3444
        %3601 = vmatprep.subr.mxu0 %v3441
        %3602 = vmatpush1.msra.mxu0 %v3440
        %3603 = vmatprep.subr.mxu0 %v3437
        %3604 = vmatpush1.msra.mxu0 %v3436
        %3605 = vmatprep.subr.mxu0 %v3433
        %3606 = vmatpush1.msra.mxu0 %v3432
        %3607 = vmatprep.subr.mxu0 %v3429
        %3608 = vmatpush1.msra.mxu0 %v3428
        %3609 = vmatprep.subr.mxu0 %v3425
        %3610 = vmatpush1.msra.mxu0 %v3424
        %3611 = vmatprep.subr.mxu0 %v3421
        %3612 = vmatpush1.msra.mxu0 %v3420
        %3613 = vmatprep.subr.mxu0 %v3417
        %3614 = vmatpush1.msra.mxu0 %v3416
        %3615 = vmatprep.subr.mxu0 %v3413
        %3616 = vmatpush1.msra.mxu0 %v3412
        %3617 = vmatprep.subr.mxu0 %v3409
        %3618 = vmatpush1.msra.mxu0 %v3408
        %3619 = vmatprep.subr.mxu0 %v3405
        %3620 = vmatpush1.msra.mxu0 %v3404
        %3621 = vmatprep.subr.mxu0 %v3401
        %3622 = vmatpush1.msra.mxu0 %v3400
        %3623 = vmatprep.subr.mxu0 %v3397
        %3624 = vmatpush1.msra.mxu0 %v3396
        %3625 = vmatprep.subr.mxu0 %v3393
        %3626 = vmatpush1.msra.mxu0 %v3392
        %3627 = vmatprep.subr.mxu0 %v3389
        %3628 = vmatpush1.msra.mxu0 %v3388
        %3629 = vmatprep.subr.mxu0 0.0
        %3630 = vmatpush2.msra.mxu0 0.0
        %3631 = vmatprep.subr.mxu0 0.0
        %3632 = vmatpush2.msra.mxu0 0.0
        %3633 = vmatprep.subr.mxu0 0.0
        %3634 = vmatpush2.msra.mxu0 0.0
        %3635 = vmatprep.subr.mxu0 0.0
        %3636 = vmatpush2.msra.mxu0 0.0
        %3637 = vmatprep.subr.mxu0 0.0
        %3638 = vmatpush2.msra.mxu0 0.0
        %3639 = vmatprep.subr.mxu0 0.0
        %3640 = vmatpush2.msra.mxu0 0.0
        %3641 = vmatprep.subr.mxu0 0.0
        %3642 = vmatpush2.msra.mxu0 0.0
        %3643 = vmatprep.subr.mxu0 0.0
        %3644 = vmatpush2.msra.mxu0 0.0
        %3645 = vmatprep.subr.mxu0 0.0
        %3646 = vmatpush2.msra.mxu0 0.0
        %3647 = vmatprep.subr.mxu0 0.0
        %3648 = vmatpush2.msra.mxu0 0.0
        %3649 = vmatprep.subr.mxu0 0.0
        %3650 = vmatpush2.msra.mxu0 0.0
        %3651 = vmatprep.subr.mxu0 0.0
        %3652 = vmatpush2.msra.mxu0 0.0
        %3653 = vmatprep.subr.mxu0 0.0
        %3654 = vmatpush2.msra.mxu0 0.0
        %3655 = vmatprep.subr.mxu0 0.0
        %3656 = vmatpush2.msra.mxu0 0.0
        %3657 = vmatprep.subr.mxu0 0.0
        %3658 = vmatpush2.msra.mxu0 0.0
        %3659 = vmatprep.subr.mxu0 0.0
        %3660 = vmatpush2.msra.mxu0 0.0
        %3661 = vmatprep.mubr.f32.mxu0 0.0
        %3662 = vmatmul.mubr.f32.gmra.mxu0 %v3515
        %v3663 = vpop.f32.mrf.mxu0
        %v3664 = vadd.f32 0.0, %v3663
        %v3665 = vpop.f32.mrf.mxu0
        %v3666 = vadd.f32 0.0, %v3665
        %3667 = vdwg.mxu0
        %v3668 = vadd.f32 %v3522, %v3593
        %v3669 = vadd.f32 %v3523, %v3595
        %v3670 = vadd.f32 %v3524, %v3664
        %v3671 = vadd.f32 %v3525, %v3666
        %s3672 = scalar_lea.vmem [#allocation5], 192
        %v3673 = vld [vmem:[%s3672 + $0x20] sm:$0xff]
        %v3674 = vld [vmem:[%s3672 + $0x28] sm:$0xff]
        %v3675 = vld [vmem:[%s3672 + $0x30] sm:$0xff]
        %v3676 = vld [vmem:[%s3672 + $0x38] sm:$0xff]
        %3677 = vmatprep.subr.mxu0 %v3511
        %3678 = vmatpush1.msra.mxu0 %v3510
        %3679 = vmatprep.subr.mxu0 %v3507
        %3680 = vmatpush1.msra.mxu0 %v3506
        %3681 = vmatprep.subr.mxu0 %v3503
        %3682 = vmatpush1.msra.mxu0 %v3502
        %3683 = vmatprep.subr.mxu0 %v3499
        %3684 = vmatpush1.msra.mxu0 %v3498
        %3685 = vmatprep.subr.mxu0 %v3495
        %3686 = vmatpush1.msra.mxu0 %v3494
        %3687 = vmatprep.subr.mxu0 %v3491
        %3688 = vmatpush1.msra.mxu0 %v3490
        %3689 = vmatprep.subr.mxu0 %v3487
        %3690 = vmatpush1.msra.mxu0 %v3486
        %3691 = vmatprep.subr.mxu0 %v3483
        %3692 = vmatpush1.msra.mxu0 %v3482
        %3693 = vmatprep.subr.mxu0 %v3479
        %3694 = vmatpush1.msra.mxu0 %v3478
        %3695 = vmatprep.subr.mxu0 %v3475
        %3696 = vmatpush1.msra.mxu0 %v3474
        %3697 = vmatprep.subr.mxu0 %v3471
        %3698 = vmatpush1.msra.mxu0 %v3470
        %3699 = vmatprep.subr.mxu0 %v3467
        %3700 = vmatpush1.msra.mxu0 %v3466
        %3701 = vmatprep.subr.mxu0 %v3463
        %3702 = vmatpush1.msra.mxu0 %v3462
        %3703 = vmatprep.subr.mxu0 %v3459
        %3704 = vmatpush1.msra.mxu0 %v3458
        %3705 = vmatprep.subr.mxu0 %v3455
        %3706 = vmatpush1.msra.mxu0 %v3454
        %3707 = vmatprep.subr.mxu0 %v3451
        %3708 = vmatpush1.msra.mxu0 %v3450
        %3709 = vmatprep.subr.mxu0 0.0
        %3710 = vmatpush2.msra.mxu0 0.0
        %3711 = vmatprep.subr.mxu0 0.0
        %3712 = vmatpush2.msra.mxu0 0.0
        %3713 = vmatprep.subr.mxu0 0.0
        %3714 = vmatpush2.msra.mxu0 0.0
        %3715 = vmatprep.subr.mxu0 0.0
        %3716 = vmatpush2.msra.mxu0 0.0
        %3717 = vmatprep.subr.mxu0 0.0
        %3718 = vmatpush2.msra.mxu0 0.0
        %3719 = vmatprep.subr.mxu0 0.0
        %3720 = vmatpush2.msra.mxu0 0.0
        %3721 = vmatprep.subr.mxu0 0.0
        %3722 = vmatpush2.msra.mxu0 0.0
        %3723 = vmatprep.subr.mxu0 0.0
        %3724 = vmatpush2.msra.mxu0 0.0
        %3725 = vmatprep.subr.mxu0 0.0
        %3726 = vmatpush2.msra.mxu0 0.0
        %3727 = vmatprep.subr.mxu0 0.0
        %3728 = vmatpush2.msra.mxu0 0.0
        %3729 = vmatprep.subr.mxu0 0.0
        %3730 = vmatpush2.msra.mxu0 0.0
        %3731 = vmatprep.subr.mxu0 0.0
        %3732 = vmatpush2.msra.mxu0 0.0
        %3733 = vmatprep.subr.mxu0 0.0
        %3734 = vmatpush2.msra.mxu0 0.0
        %3735 = vmatprep.subr.mxu0 0.0
        %3736 = vmatpush2.msra.mxu0 0.0
        %3737 = vmatprep.subr.mxu0 0.0
        %3738 = vmatpush2.msra.mxu0 0.0
        %3739 = vmatprep.subr.mxu0 0.0
        %3740 = vmatpush2.msra.mxu0 0.0
        %3741 = vmatprep.mubr.f32.mxu0 0.0
        %3742 = vmatmul.mubr.f32.gmra.mxu0 %v3519
        %v3743 = vpop.f32.mrf.mxu0
        %v3744 = vadd.f32 0.0, %v3743
        %v3745 = vpop.f32.mrf.mxu0
        %v3746 = vadd.f32 0.0, %v3745
        %3747 = vdwg.mxu0
        %3748 = vmatprep.subr.mxu0 %v3513
        %3749 = vmatpush1.msra.mxu0 %v3512
        %3750 = vmatprep.subr.mxu0 %v3509
        %3751 = vmatpush1.msra.mxu0 %v3508
        %3752 = vmatprep.subr.mxu0 %v3505
        %3753 = vmatpush1.msra.mxu0 %v3504
        %3754 = vmatprep.subr.mxu0 %v3501
        %3755 = vmatpush1.msra.mxu0 %v3500
        %3756 = vmatprep.subr.mxu0 %v3497
        %3757 = vmatpush1.msra.mxu0 %v3496
        %3758 = vmatprep.subr.mxu0 %v3493
        %3759 = vmatpush1.msra.mxu0 %v3492
        %3760 = vmatprep.subr.mxu0 %v3489
        %3761 = vmatpush1.msra.mxu0 %v3488
        %3762 = vmatprep.subr.mxu0 %v3485
        %3763 = vmatpush1.msra.mxu0 %v3484
        %3764 = vmatprep.subr.mxu0 %v3481
        %3765 = vmatpush1.msra.mxu0 %v3480
        %3766 = vmatprep.subr.mxu0 %v3477
        %3767 = vmatpush1.msra.mxu0 %v3476
        %3768 = vmatprep.subr.mxu0 %v3473
        %3769 = vmatpush1.msra.mxu0 %v3472
        %3770 = vmatprep.subr.mxu0 %v3469
        %3771 = vmatpush1.msra.mxu0 %v3468
        %3772 = vmatprep.subr.mxu0 %v3465
        %3773 = vmatpush1.msra.mxu0 %v3464
        %3774 = vmatprep.subr.mxu0 %v3461
        %3775 = vmatpush1.msra.mxu0 %v3460
        %3776 = vmatprep.subr.mxu0 %v3457
        %3777 = vmatpush1.msra.mxu0 %v3456
        %3778 = vmatprep.subr.mxu0 %v3453
        %3779 = vmatpush1.msra.mxu0 %v3452
        %3780 = vmatprep.subr.mxu0 0.0
        %3781 = vmatpush2.msra.mxu0 0.0
        %3782 = vmatprep.subr.mxu0 0.0
        %3783 = vmatpush2.msra.mxu0 0.0
        %3784 = vmatprep.subr.mxu0 0.0
        %3785 = vmatpush2.msra.mxu0 0.0
        %3786 = vmatprep.subr.mxu0 0.0
        %3787 = vmatpush2.msra.mxu0 0.0
        %3788 = vmatprep.subr.mxu0 0.0
        %3789 = vmatpush2.msra.mxu0 0.0
        %3790 = vmatprep.subr.mxu0 0.0
        %3791 = vmatpush2.msra.mxu0 0.0
        %3792 = vmatprep.subr.mxu0 0.0
        %3793 = vmatpush2.msra.mxu0 0.0
        %3794 = vmatprep.subr.mxu0 0.0
        %3795 = vmatpush2.msra.mxu0 0.0
        %3796 = vmatprep.subr.mxu0 0.0
        %3797 = vmatpush2.msra.mxu0 0.0
        %3798 = vmatprep.subr.mxu0 0.0
        %3799 = vmatpush2.msra.mxu0 0.0
        %3800 = vmatprep.subr.mxu0 0.0
        %3801 = vmatpush2.msra.mxu0 0.0
        %3802 = vmatprep.subr.mxu0 0.0
        %3803 = vmatpush2.msra.mxu0 0.0
        %3804 = vmatprep.subr.mxu0 0.0
        %3805 = vmatpush2.msra.mxu0 0.0
        %3806 = vmatprep.subr.mxu0 0.0
        %3807 = vmatpush2.msra.mxu0 0.0
        %3808 = vmatprep.subr.mxu0 0.0
        %3809 = vmatpush2.msra.mxu0 0.0
        %3810 = vmatprep.subr.mxu0 0.0
        %3811 = vmatpush2.msra.mxu0 0.0
        %3812 = vmatprep.mubr.f32.mxu0 0.0
        %3813 = vmatmul.mubr.f32.gmra.mxu0 %v3519
        %v3814 = vpop.f32.mrf.mxu0
        %v3815 = vadd.f32 0.0, %v3814
        %v3816 = vpop.f32.mrf.mxu0
        %v3817 = vadd.f32 0.0, %v3816
        %3818 = vdwg.mxu0
        %v3819 = vadd.f32 %v3673, %v3744
        %v3820 = vadd.f32 %v3674, %v3746
        %v3821 = vadd.f32 %v3675, %v3815
        %v3822 = vadd.f32 %v3676, %v3817
        %v3823 = vxor.u32 %v3668, 2147483648
        %v3824 = vmul.f32 %v3823, 1.442695
        %v3825 = vpow.pop %v3824
        %v3826 = vadd.f32 %v3825, 1.0
        %v3827 = vrcp.pop %v3826
        %v3828 = vmul.f32 1.0, %v3827
        %v3829 = vxor.u32 %v3669, 2147483648
        %v3830 = vmul.f32 %v3829, 1.442695
        %v3831 = vpow.pop %v3830
        %v3832 = vadd.f32 %v3831, 1.0
        %v3833 = vrcp.pop %v3832
        %v3834 = vmul.f32 1.0, %v3833
        %v3835 = vtanh.pop %v3670
        %v3836 = vxor.u32 %v3671, 2147483648
        %v3837 = vmul.f32 %v3836, 1.442695
        %v3838 = vpow.pop %v3837
        %v3839 = vadd.f32 %v3838, 1.0
        %v3840 = vrcp.pop %v3839
        %v3841 = vmul.f32 1.0, %v3840
        %v3842 = vmul.f32 %v3834, %v3517
        %v3843 = vmul.f32 %v3828, %v3835
        %v3844 = vadd.f32 %v3842, %v3843
        %v3845 = vtanh.pop %v3844
        %v3846 = vmul.f32 %v3841, %v3845
        %v3847 = vxor.u32 %v3819, 2147483648
        %v3848 = vmul.f32 %v3847, 1.442695
        %v3849 = vpow.pop %v3848
        %v3850 = vadd.f32 %v3849, 1.0
        %v3851 = vrcp.pop %v3850
        %v3852 = vmul.f32 1.0, %v3851
        %v3853 = vxor.u32 %v3820, 2147483648
        %v3854 = vmul.f32 %v3853, 1.442695
        %v3855 = vpow.pop %v3854
        %v3856 = vadd.f32 %v3855, 1.0
        %v3857 = vrcp.pop %v3856
        %v3858 = vmul.f32 1.0, %v3857
        %v3859 = vtanh.pop %v3821
        %v3860 = vxor.u32 %v3822, 2147483648
        %v3861 = vmul.f32 %v3860, 1.442695
        %v3862 = vpow.pop %v3861
        %v3863 = vadd.f32 %v3862, 1.0
        %v3864 = vrcp.pop %v3863
        %v3865 = vmul.f32 1.0, %v3864
        %v3866 = vmul.f32 %v3858, %v3521
        %v3867 = vmul.f32 %v3852, %v3859
        %v3868 = vadd.f32 %v3866, %v3867
        %v3869 = vtanh.pop %v3868
        %v3870 = vmul.f32 %v3865, %v3869
        %3871 = vst [vmem:[#allocation6] sm:$0xff] %v3846
        %3872 = vst [vmem:[%s1632 + $0x8] sm:$0xff] %v3870
        %s3873 = scalar_lea.vmem [#allocation5], 64
        %v3874 = vld [vmem:[%s3873] sm:$0xff]
        %v3875 = vld [vmem:[%s3873 + $0x8] sm:$0xff]
        %v3876 = vld [vmem:[%s3873 + $0x10] sm:$0xff]
        %v3877 = vld [vmem:[%s3873 + $0x18] sm:$0xff]
        %3878 = vmatprep.subr.mxu0 %v3447
        %3879 = vmatpush1.msra.mxu0 %v3446
        %3880 = vmatprep.subr.mxu0 %v3443
        %3881 = vmatpush1.msra.mxu0 %v3442
        %3882 = vmatprep.subr.mxu0 %v3439
        %3883 = vmatpush1.msra.mxu0 %v3438
        %3884 = vmatprep.subr.mxu0 %v3435
        %3885 = vmatpush1.msra.mxu0 %v3434
        %3886 = vmatprep.subr.mxu0 %v3431
        %3887 = vmatpush1.msra.mxu0 %v3430
        %3888 = vmatprep.subr.mxu0 %v3427
        %3889 = vmatpush1.msra.mxu0 %v3426
        %3890 = vmatprep.subr.mxu0 %v3423
        %3891 = vmatpush1.msra.mxu0 %v3422
        %3892 = vmatprep.subr.mxu0 %v3419
        %3893 = vmatpush1.msra.mxu0 %v3418
        %3894 = vmatprep.subr.mxu0 %v3415
        %3895 = vmatpush1.msra.mxu0 %v3414
        %3896 = vmatprep.subr.mxu0 %v3411
        %3897 = vmatpush1.msra.mxu0 %v3410
        %3898 = vmatprep.subr.mxu0 %v3407
        %3899 = vmatpush1.msra.mxu0 %v3406
        %3900 = vmatprep.subr.mxu0 %v3403
        %3901 = vmatpush1.msra.mxu0 %v3402
        %3902 = vmatprep.subr.mxu0 %v3399
        %3903 = vmatpush1.msra.mxu0 %v3398
        %3904 = vmatprep.subr.mxu0 %v3395
        %3905 = vmatpush1.msra.mxu0 %v3394
        %3906 = vmatprep.subr.mxu0 %v3391
        %3907 = vmatpush1.msra.mxu0 %v3390
        %3908 = vmatprep.subr.mxu0 %v3387
        %3909 = vmatpush1.msra.mxu0 %v3386
        %3910 = vmatprep.subr.mxu0 0.0
        %3911 = vmatpush2.msra.mxu0 0.0
        %3912 = vmatprep.subr.mxu0 0.0
        %3913 = vmatpush2.msra.mxu0 0.0
        %3914 = vmatprep.subr.mxu0 0.0
        %3915 = vmatpush2.msra.mxu0 0.0
        %3916 = vmatprep.subr.mxu0 0.0
        %3917 = vmatpush2.msra.mxu0 0.0
        %3918 = vmatprep.subr.mxu0 0.0
        %3919 = vmatpush2.msra.mxu0 0.0
        %3920 = vmatprep.subr.mxu0 0.0
        %3921 = vmatpush2.msra.mxu0 0.0
        %3922 = vmatprep.subr.mxu0 0.0
        %3923 = vmatpush2.msra.mxu0 0.0
        %3924 = vmatprep.subr.mxu0 0.0
        %3925 = vmatpush2.msra.mxu0 0.0
        %3926 = vmatprep.subr.mxu0 0.0
        %3927 = vmatpush2.msra.mxu0 0.0
        %3928 = vmatprep.subr.mxu0 0.0
        %3929 = vmatpush2.msra.mxu0 0.0
        %3930 = vmatprep.subr.mxu0 0.0
        %3931 = vmatpush2.msra.mxu0 0.0
        %3932 = vmatprep.subr.mxu0 0.0
        %3933 = vmatpush2.msra.mxu0 0.0
        %3934 = vmatprep.subr.mxu0 0.0
        %3935 = vmatpush2.msra.mxu0 0.0
        %3936 = vmatprep.subr.mxu0 0.0
        %3937 = vmatpush2.msra.mxu0 0.0
        %3938 = vmatprep.subr.mxu0 0.0
        %3939 = vmatpush2.msra.mxu0 0.0
        %3940 = vmatprep.subr.mxu0 0.0
        %3941 = vmatpush2.msra.mxu0 0.0
        %3942 = vmatprep.mubr.f32.mxu0 0.0
        %3943 = vmatmul.mubr.f32.gmra.mxu0 %v3846
        %v3944 = vpop.f32.mrf.mxu0
        %v3945 = vadd.f32 0.0, %v3944
        %v3946 = vpop.f32.mrf.mxu0
        %v3947 = vadd.f32 0.0, %v3946
        %3948 = vdwg.mxu0
        %3949 = vmatprep.subr.mxu0 %v3449
        %3950 = vmatpush1.msra.mxu0 %v3448
        %3951 = vmatprep.subr.mxu0 %v3445
        %3952 = vmatpush1.msra.mxu0 %v3444
        %3953 = vmatprep.subr.mxu0 %v3441
        %3954 = vmatpush1.msra.mxu0 %v3440
        %3955 = vmatprep.subr.mxu0 %v3437
        %3956 = vmatpush1.msra.mxu0 %v3436
        %3957 = vmatprep.subr.mxu0 %v3433
        %3958 = vmatpush1.msra.mxu0 %v3432
        %3959 = vmatprep.subr.mxu0 %v3429
        %3960 = vmatpush1.msra.mxu0 %v3428
        %3961 = vmatprep.subr.mxu0 %v3425
        %3962 = vmatpush1.msra.mxu0 %v3424
        %3963 = vmatprep.subr.mxu0 %v3421
        %3964 = vmatpush1.msra.mxu0 %v3420
        %3965 = vmatprep.subr.mxu0 %v3417
        %3966 = vmatpush1.msra.mxu0 %v3416
        %3967 = vmatprep.subr.mxu0 %v3413
        %3968 = vmatpush1.msra.mxu0 %v3412
        %3969 = vmatprep.subr.mxu0 %v3409
        %3970 = vmatpush1.msra.mxu0 %v3408
        %3971 = vmatprep.subr.mxu0 %v3405
        %3972 = vmatpush1.msra.mxu0 %v3404
        %3973 = vmatprep.subr.mxu0 %v3401
        %3974 = vmatpush1.msra.mxu0 %v3400
        %3975 = vmatprep.subr.mxu0 %v3397
        %3976 = vmatpush1.msra.mxu0 %v3396
        %3977 = vmatprep.subr.mxu0 %v3393
        %3978 = vmatpush1.msra.mxu0 %v3392
        %3979 = vmatprep.subr.mxu0 %v3389
        %3980 = vmatpush1.msra.mxu0 %v3388
        %3981 = vmatprep.subr.mxu0 0.0
        %3982 = vmatpush2.msra.mxu0 0.0
        %3983 = vmatprep.subr.mxu0 0.0
        %3984 = vmatpush2.msra.mxu0 0.0
        %3985 = vmatprep.subr.mxu0 0.0
        %3986 = vmatpush2.msra.mxu0 0.0
        %3987 = vmatprep.subr.mxu0 0.0
        %3988 = vmatpush2.msra.mxu0 0.0
        %3989 = vmatprep.subr.mxu0 0.0
        %3990 = vmatpush2.msra.mxu0 0.0
        %3991 = vmatprep.subr.mxu0 0.0
        %3992 = vmatpush2.msra.mxu0 0.0
        %3993 = vmatprep.subr.mxu0 0.0
        %3994 = vmatpush2.msra.mxu0 0.0
        %3995 = vmatprep.subr.mxu0 0.0
        %3996 = vmatpush2.msra.mxu0 0.0
        %3997 = vmatprep.subr.mxu0 0.0
        %3998 = vmatpush2.msra.mxu0 0.0
        %3999 = vmatprep.subr.mxu0 0.0
        %4000 = vmatpush2.msra.mxu0 0.0
        %4001 = vmatprep.subr.mxu0 0.0
        %4002 = vmatpush2.msra.mxu0 0.0
        %4003 = vmatprep.subr.mxu0 0.0
        %4004 = vmatpush2.msra.mxu0 0.0
        %4005 = vmatprep.subr.mxu0 0.0
        %4006 = vmatpush2.msra.mxu0 0.0
        %4007 = vmatprep.subr.mxu0 0.0
        %4008 = vmatpush2.msra.mxu0 0.0
        %4009 = vmatprep.subr.mxu0 0.0
        %4010 = vmatpush2.msra.mxu0 0.0
        %4011 = vmatprep.subr.mxu0 0.0
        %4012 = vmatpush2.msra.mxu0 0.0
        %4013 = vmatprep.mubr.f32.mxu0 0.0
        %4014 = vmatmul.mubr.f32.gmra.mxu0 %v3846
        %v4015 = vpop.f32.mrf.mxu0
        %v4016 = vadd.f32 0.0, %v4015
        %v4017 = vpop.f32.mrf.mxu0
        %v4018 = vadd.f32 0.0, %v4017
        %4019 = vdwg.mxu0
        %v4020 = vadd.f32 %v3874, %v3945
        %v4021 = vadd.f32 %v3875, %v3947
        %v4022 = vadd.f32 %v3876, %v4016
        %v4023 = vadd.f32 %v3877, %v4018
        %s4024 = scalar_lea.vmem [#allocation5], 128
        %v4025 = vld [vmem:[%s4024 + $0x20] sm:$0xff]
        %v4026 = vld [vmem:[%s4024 + $0x28] sm:$0xff]
        %v4027 = vld [vmem:[%s4024 + $0x30] sm:$0xff]
        %v4028 = vld [vmem:[%s4024 + $0x38] sm:$0xff]
        %4029 = vmatprep.subr.mxu0 %v3511
        %4030 = vmatpush1.msra.mxu0 %v3510
        %4031 = vmatprep.subr.mxu0 %v3507
        %4032 = vmatpush1.msra.mxu0 %v3506
        %4033 = vmatprep.subr.mxu0 %v3503
        %4034 = vmatpush1.msra.mxu0 %v3502
        %4035 = vmatprep.subr.mxu0 %v3499
        %4036 = vmatpush1.msra.mxu0 %v3498
        %4037 = vmatprep.subr.mxu0 %v3495
        %4038 = vmatpush1.msra.mxu0 %v3494
        %4039 = vmatprep.subr.mxu0 %v3491
        %4040 = vmatpush1.msra.mxu0 %v3490
        %4041 = vmatprep.subr.mxu0 %v3487
        %4042 = vmatpush1.msra.mxu0 %v3486
        %4043 = vmatprep.subr.mxu0 %v3483
        %4044 = vmatpush1.msra.mxu0 %v3482
        %4045 = vmatprep.subr.mxu0 %v3479
        %4046 = vmatpush1.msra.mxu0 %v3478
        %4047 = vmatprep.subr.mxu0 %v3475
        %4048 = vmatpush1.msra.mxu0 %v3474
        %4049 = vmatprep.subr.mxu0 %v3471
        %4050 = vmatpush1.msra.mxu0 %v3470
        %4051 = vmatprep.subr.mxu0 %v3467
        %4052 = vmatpush1.msra.mxu0 %v3466
        %4053 = vmatprep.subr.mxu0 %v3463
        %4054 = vmatpush1.msra.mxu0 %v3462
        %4055 = vmatprep.subr.mxu0 %v3459
        %4056 = vmatpush1.msra.mxu0 %v3458
        %4057 = vmatprep.subr.mxu0 %v3455
        %4058 = vmatpush1.msra.mxu0 %v3454
        %4059 = vmatprep.subr.mxu0 %v3451
        %4060 = vmatpush1.msra.mxu0 %v3450
        %4061 = vmatprep.subr.mxu0 0.0
        %4062 = vmatpush2.msra.mxu0 0.0
        %4063 = vmatprep.subr.mxu0 0.0
        %4064 = vmatpush2.msra.mxu0 0.0
        %4065 = vmatprep.subr.mxu0 0.0
        %4066 = vmatpush2.msra.mxu0 0.0
        %4067 = vmatprep.subr.mxu0 0.0
        %4068 = vmatpush2.msra.mxu0 0.0
        %4069 = vmatprep.subr.mxu0 0.0
        %4070 = vmatpush2.msra.mxu0 0.0
        %4071 = vmatprep.subr.mxu0 0.0
        %4072 = vmatpush2.msra.mxu0 0.0
        %4073 = vmatprep.subr.mxu0 0.0
        %4074 = vmatpush2.msra.mxu0 0.0
        %4075 = vmatprep.subr.mxu0 0.0
        %4076 = vmatpush2.msra.mxu0 0.0
        %4077 = vmatprep.subr.mxu0 0.0
        %4078 = vmatpush2.msra.mxu0 0.0
        %4079 = vmatprep.subr.mxu0 0.0
        %4080 = vmatpush2.msra.mxu0 0.0
        %4081 = vmatprep.subr.mxu0 0.0
        %4082 = vmatpush2.msra.mxu0 0.0
        %4083 = vmatprep.subr.mxu0 0.0
        %4084 = vmatpush2.msra.mxu0 0.0
        %4085 = vmatprep.subr.mxu0 0.0
        %4086 = vmatpush2.msra.mxu0 0.0
        %4087 = vmatprep.subr.mxu0 0.0
        %4088 = vmatpush2.msra.mxu0 0.0
        %4089 = vmatprep.subr.mxu0 0.0
        %4090 = vmatpush2.msra.mxu0 0.0
        %4091 = vmatprep.subr.mxu0 0.0
        %4092 = vmatpush2.msra.mxu0 0.0
        %4093 = vmatprep.mubr.f32.mxu0 0.0
        %4094 = vmatmul.mubr.f32.gmra.mxu0 %v3870
        %v4095 = vpop.f32.mrf.mxu0
        %v4096 = vadd.f32 0.0, %v4095
        %v4097 = vpop.f32.mrf.mxu0
        %v4098 = vadd.f32 0.0, %v4097
        %4099 = vdwg.mxu0
        %4100 = vmatprep.subr.mxu0 %v3513
        %4101 = vmatpush1.msra.mxu0 %v3512
        %4102 = vmatprep.subr.mxu0 %v3509
        %4103 = vmatpush1.msra.mxu0 %v3508
        %4104 = vmatprep.subr.mxu0 %v3505
        %4105 = vmatpush1.msra.mxu0 %v3504
        %4106 = vmatprep.subr.mxu0 %v3501
        %4107 = vmatpush1.msra.mxu0 %v3500
        %4108 = vmatprep.subr.mxu0 %v3497
        %4109 = vmatpush1.msra.mxu0 %v3496
        %4110 = vmatprep.subr.mxu0 %v3493
        %4111 = vmatpush1.msra.mxu0 %v3492
        %4112 = vmatprep.subr.mxu0 %v3489
        %4113 = vmatpush1.msra.mxu0 %v3488
        %4114 = vmatprep.subr.mxu0 %v3485
        %4115 = vmatpush1.msra.mxu0 %v3484
        %4116 = vmatprep.subr.mxu0 %v3481
        %4117 = vmatpush1.msra.mxu0 %v3480
        %4118 = vmatprep.subr.mxu0 %v3477
        %4119 = vmatpush1.msra.mxu0 %v3476
        %4120 = vmatprep.subr.mxu0 %v3473
        %4121 = vmatpush1.msra.mxu0 %v3472
        %4122 = vmatprep.subr.mxu0 %v3469
        %4123 = vmatpush1.msra.mxu0 %v3468
        %4124 = vmatprep.subr.mxu0 %v3465
        %4125 = vmatpush1.msra.mxu0 %v3464
        %4126 = vmatprep.subr.mxu0 %v3461
        %4127 = vmatpush1.msra.mxu0 %v3460
        %4128 = vmatprep.subr.mxu0 %v3457
        %4129 = vmatpush1.msra.mxu0 %v3456
        %4130 = vmatprep.subr.mxu0 %v3453
        %4131 = vmatpush1.msra.mxu0 %v3452
        %4132 = vmatprep.subr.mxu0 0.0
        %4133 = vmatpush2.msra.mxu0 0.0
        %4134 = vmatprep.subr.mxu0 0.0
        %4135 = vmatpush2.msra.mxu0 0.0
        %4136 = vmatprep.subr.mxu0 0.0
        %4137 = vmatpush2.msra.mxu0 0.0
        %4138 = vmatprep.subr.mxu0 0.0
        %4139 = vmatpush2.msra.mxu0 0.0
        %4140 = vmatprep.subr.mxu0 0.0
        %4141 = vmatpush2.msra.mxu0 0.0
        %4142 = vmatprep.subr.mxu0 0.0
        %4143 = vmatpush2.msra.mxu0 0.0
        %4144 = vmatprep.subr.mxu0 0.0
        %4145 = vmatpush2.msra.mxu0 0.0
        %4146 = vmatprep.subr.mxu0 0.0
        %4147 = vmatpush2.msra.mxu0 0.0
        %4148 = vmatprep.subr.mxu0 0.0
        %4149 = vmatpush2.msra.mxu0 0.0
        %4150 = vmatprep.subr.mxu0 0.0
        %4151 = vmatpush2.msra.mxu0 0.0
        %4152 = vmatprep.subr.mxu0 0.0
        %4153 = vmatpush2.msra.mxu0 0.0
        %4154 = vmatprep.subr.mxu0 0.0
        %4155 = vmatpush2.msra.mxu0 0.0
        %4156 = vmatprep.subr.mxu0 0.0
        %4157 = vmatpush2.msra.mxu0 0.0
        %4158 = vmatprep.subr.mxu0 0.0
        %4159 = vmatpush2.msra.mxu0 0.0
        %4160 = vmatprep.subr.mxu0 0.0
        %4161 = vmatpush2.msra.mxu0 0.0
        %4162 = vmatprep.subr.mxu0 0.0
        %4163 = vmatpush2.msra.mxu0 0.0
        %4164 = vmatprep.mubr.f32.mxu0 0.0
        %4165 = vmatmul.mubr.f32.gmra.mxu0 %v3870
        %v4166 = vpop.f32.mrf.mxu0
        %v4167 = vadd.f32 0.0, %v4166
        %v4168 = vpop.f32.mrf.mxu0
        %v4169 = vadd.f32 0.0, %v4168
        %4170 = vdwg.mxu0
        %v4171 = vadd.f32 %v4025, %v4096
        %v4172 = vadd.f32 %v4026, %v4098
        %v4173 = vadd.f32 %v4027, %v4167
        %v4174 = vadd.f32 %v4028, %v4169
        %v4175 = vxor.u32 %v4020, 2147483648
        %v4176 = vmul.f32 %v4175, 1.442695
        %v4177 = vpow.pop %v4176
        %v4178 = vadd.f32 %v4177, 1.0
        %v4179 = vrcp.pop %v4178
        %v4180 = vmul.f32 1.0, %v4179
        %v4181 = vxor.u32 %v4021, 2147483648
        %v4182 = vmul.f32 %v4181, 1.442695
        %v4183 = vpow.pop %v4182
        %v4184 = vadd.f32 %v4183, 1.0
        %v4185 = vrcp.pop %v4184
        %v4186 = vmul.f32 1.0, %v4185
        %v4187 = vtanh.pop %v4022
        %v4188 = vxor.u32 %v4023, 2147483648
        %v4189 = vmul.f32 %v4188, 1.442695
        %v4190 = vpow.pop %v4189
        %v4191 = vadd.f32 %v4190, 1.0
        %v4192 = vrcp.pop %v4191
        %v4193 = vmul.f32 1.0, %v4192
        %v4194 = vmul.f32 %v4186, %v3844
        %v4195 = vmul.f32 %v4180, %v4187
        %v4196 = vadd.f32 %v4194, %v4195
        %v4197 = vtanh.pop %v4196
        %v4198 = vmul.f32 %v4193, %v4197
        %v4199 = vxor.u32 %v4171, 2147483648
        %v4200 = vmul.f32 %v4199, 1.442695
        %v4201 = vpow.pop %v4200
        %v4202 = vadd.f32 %v4201, 1.0
        %v4203 = vrcp.pop %v4202
        %v4204 = vmul.f32 1.0, %v4203
        %v4205 = vxor.u32 %v4172, 2147483648
        %v4206 = vmul.f32 %v4205, 1.442695
        %v4207 = vpow.pop %v4206
        %v4208 = vadd.f32 %v4207, 1.0
        %v4209 = vrcp.pop %v4208
        %v4210 = vmul.f32 1.0, %v4209
        %v4211 = vtanh.pop %v4173
        %v4212 = vxor.u32 %v4174, 2147483648
        %v4213 = vmul.f32 %v4212, 1.442695
        %v4214 = vpow.pop %v4213
        %v4215 = vadd.f32 %v4214, 1.0
        %v4216 = vrcp.pop %v4215
        %v4217 = vmul.f32 1.0, %v4216
        %v4218 = vmul.f32 %v4210, %v3868
        %v4219 = vmul.f32 %v4204, %v4211
        %v4220 = vadd.f32 %v4218, %v4219
        %v4221 = vtanh.pop %v4220
        %v4222 = vmul.f32 %v4217, %v4221
        %4223 = vst [vmem:[%s1984] sm:$0xff] %v4198
        %4224 = vst [vmem:[%s1986 + $0x8] sm:$0xff] %v4222
        %v4225 = vld [vmem:[%s4024] sm:$0xff]
        %v4226 = vld [vmem:[%s4024 + $0x8] sm:$0xff]
        %v4227 = vld [vmem:[%s4024 + $0x10] sm:$0xff]
        %v4228 = vld [vmem:[%s4024 + $0x18] sm:$0xff]
        %4229 = vmatprep.subr.mxu0 %v3447
        %4230 = vmatpush1.msra.mxu0 %v3446
        %4231 = vmatprep.subr.mxu0 %v3443
        %4232 = vmatpush1.msra.mxu0 %v3442
        %4233 = vmatprep.subr.mxu0 %v3439
        %4234 = vmatpush1.msra.mxu0 %v3438
        %4235 = vmatprep.subr.mxu0 %v3435
        %4236 = vmatpush1.msra.mxu0 %v3434
        %4237 = vmatprep.subr.mxu0 %v3431
        %4238 = vmatpush1.msra.mxu0 %v3430
        %4239 = vmatprep.subr.mxu0 %v3427
        %4240 = vmatpush1.msra.mxu0 %v3426
        %4241 = vmatprep.subr.mxu0 %v3423
        %4242 = vmatpush1.msra.mxu0 %v3422
        %4243 = vmatprep.subr.mxu0 %v3419
        %4244 = vmatpush1.msra.mxu0 %v3418
        %4245 = vmatprep.subr.mxu0 %v3415
        %4246 = vmatpush1.msra.mxu0 %v3414
        %4247 = vmatprep.subr.mxu0 %v3411
        %4248 = vmatpush1.msra.mxu0 %v3410
        %4249 = vmatprep.subr.mxu0 %v3407
        %4250 = vmatpush1.msra.mxu0 %v3406
        %4251 = vmatprep.subr.mxu0 %v3403
        %4252 = vmatpush1.msra.mxu0 %v3402
        %4253 = vmatprep.subr.mxu0 %v3399
        %4254 = vmatpush1.msra.mxu0 %v3398
        %4255 = vmatprep.subr.mxu0 %v3395
        %4256 = vmatpush1.msra.mxu0 %v3394
        %4257 = vmatprep.subr.mxu0 %v3391
        %4258 = vmatpush1.msra.mxu0 %v3390
        %4259 = vmatprep.subr.mxu0 %v3387
        %4260 = vmatpush1.msra.mxu0 %v3386
        %4261 = vmatprep.subr.mxu0 0.0
        %4262 = vmatpush2.msra.mxu0 0.0
        %4263 = vmatprep.subr.mxu0 0.0
        %4264 = vmatpush2.msra.mxu0 0.0
        %4265 = vmatprep.subr.mxu0 0.0
        %4266 = vmatpush2.msra.mxu0 0.0
        %4267 = vmatprep.subr.mxu0 0.0
        %4268 = vmatpush2.msra.mxu0 0.0
        %4269 = vmatprep.subr.mxu0 0.0
        %4270 = vmatpush2.msra.mxu0 0.0
        %4271 = vmatprep.subr.mxu0 0.0
        %4272 = vmatpush2.msra.mxu0 0.0
        %4273 = vmatprep.subr.mxu0 0.0
        %4274 = vmatpush2.msra.mxu0 0.0
        %4275 = vmatprep.subr.mxu0 0.0
        %4276 = vmatpush2.msra.mxu0 0.0
        %4277 = vmatprep.subr.mxu0 0.0
        %4278 = vmatpush2.msra.mxu0 0.0
        %4279 = vmatprep.subr.mxu0 0.0
        %4280 = vmatpush2.msra.mxu0 0.0
        %4281 = vmatprep.subr.mxu0 0.0
        %4282 = vmatpush2.msra.mxu0 0.0
        %4283 = vmatprep.subr.mxu0 0.0
        %4284 = vmatpush2.msra.mxu0 0.0
        %4285 = vmatprep.subr.mxu0 0.0
        %4286 = vmatpush2.msra.mxu0 0.0
        %4287 = vmatprep.subr.mxu0 0.0
        %4288 = vmatpush2.msra.mxu0 0.0
        %4289 = vmatprep.subr.mxu0 0.0
        %4290 = vmatpush2.msra.mxu0 0.0
        %4291 = vmatprep.subr.mxu0 0.0
        %4292 = vmatpush2.msra.mxu0 0.0
        %4293 = vmatprep.mubr.f32.mxu0 0.0
        %4294 = vmatmul.mubr.f32.gmra.mxu0 %v4198
        %v4295 = vpop.f32.mrf.mxu0
        %v4296 = vadd.f32 0.0, %v4295
        %v4297 = vpop.f32.mrf.mxu0
        %v4298 = vadd.f32 0.0, %v4297
        %4299 = vdwg.mxu0
        %4300 = vmatprep.subr.mxu0 %v3449
        %4301 = vmatpush1.msra.mxu0 %v3448
        %4302 = vmatprep.subr.mxu0 %v3445
        %4303 = vmatpush1.msra.mxu0 %v3444
        %4304 = vmatprep.subr.mxu0 %v3441
        %4305 = vmatpush1.msra.mxu0 %v3440
        %4306 = vmatprep.subr.mxu0 %v3437
        %4307 = vmatpush1.msra.mxu0 %v3436
        %4308 = vmatprep.subr.mxu0 %v3433
        %4309 = vmatpush1.msra.mxu0 %v3432
        %4310 = vmatprep.subr.mxu0 %v3429
        %4311 = vmatpush1.msra.mxu0 %v3428
        %4312 = vmatprep.subr.mxu0 %v3425
        %4313 = vmatpush1.msra.mxu0 %v3424
        %4314 = vmatprep.subr.mxu0 %v3421
        %4315 = vmatpush1.msra.mxu0 %v3420
        %4316 = vmatprep.subr.mxu0 %v3417
        %4317 = vmatpush1.msra.mxu0 %v3416
        %4318 = vmatprep.subr.mxu0 %v3413
        %4319 = vmatpush1.msra.mxu0 %v3412
        %4320 = vmatprep.subr.mxu0 %v3409
        %4321 = vmatpush1.msra.mxu0 %v3408
        %4322 = vmatprep.subr.mxu0 %v3405
        %4323 = vmatpush1.msra.mxu0 %v3404
        %4324 = vmatprep.subr.mxu0 %v3401
        %4325 = vmatpush1.msra.mxu0 %v3400
        %4326 = vmatprep.subr.mxu0 %v3397
        %4327 = vmatpush1.msra.mxu0 %v3396
        %4328 = vmatprep.subr.mxu0 %v3393
        %4329 = vmatpush1.msra.mxu0 %v3392
        %4330 = vmatprep.subr.mxu0 %v3389
        %4331 = vmatpush1.msra.mxu0 %v3388
        %4332 = vmatprep.subr.mxu0 0.0
        %4333 = vmatpush2.msra.mxu0 0.0
        %4334 = vmatprep.subr.mxu0 0.0
        %4335 = vmatpush2.msra.mxu0 0.0
        %4336 = vmatprep.subr.mxu0 0.0
        %4337 = vmatpush2.msra.mxu0 0.0
        %4338 = vmatprep.subr.mxu0 0.0
        %4339 = vmatpush2.msra.mxu0 0.0
        %4340 = vmatprep.subr.mxu0 0.0
        %4341 = vmatpush2.msra.mxu0 0.0
        %4342 = vmatprep.subr.mxu0 0.0
        %4343 = vmatpush2.msra.mxu0 0.0
        %4344 = vmatprep.subr.mxu0 0.0
        %4345 = vmatpush2.msra.mxu0 0.0
        %4346 = vmatprep.subr.mxu0 0.0
        %4347 = vmatpush2.msra.mxu0 0.0
        %4348 = vmatprep.subr.mxu0 0.0
        %4349 = vmatpush2.msra.mxu0 0.0
        %4350 = vmatprep.subr.mxu0 0.0
        %4351 = vmatpush2.msra.mxu0 0.0
        %4352 = vmatprep.subr.mxu0 0.0
        %4353 = vmatpush2.msra.mxu0 0.0
        %4354 = vmatprep.subr.mxu0 0.0
        %4355 = vmatpush2.msra.mxu0 0.0
        %4356 = vmatprep.subr.mxu0 0.0
        %4357 = vmatpush2.msra.mxu0 0.0
        %4358 = vmatprep.subr.mxu0 0.0
        %4359 = vmatpush2.msra.mxu0 0.0
        %4360 = vmatprep.subr.mxu0 0.0
        %4361 = vmatpush2.msra.mxu0 0.0
        %4362 = vmatprep.subr.mxu0 0.0
        %4363 = vmatpush2.msra.mxu0 0.0
        %4364 = vmatprep.mubr.f32.mxu0 0.0
        %4365 = vmatmul.mubr.f32.gmra.mxu0 %v4198
        %v4366 = vpop.f32.mrf.mxu0
        %v4367 = vadd.f32 0.0, %v4366
        %v4368 = vpop.f32.mrf.mxu0
        %v4369 = vadd.f32 0.0, %v4368
        %4370 = vdwg.mxu0
        %v4371 = vadd.f32 %v4225, %v4296
        %v4372 = vadd.f32 %v4226, %v4298
        %v4373 = vadd.f32 %v4227, %v4367
        %v4374 = vadd.f32 %v4228, %v4369
        %v4375 = vld [vmem:[%s3873 + $0x20] sm:$0xff]
        %v4376 = vld [vmem:[%s3873 + $0x28] sm:$0xff]
        %v4377 = vld [vmem:[%s3873 + $0x30] sm:$0xff]
        %v4378 = vld [vmem:[%s3873 + $0x38] sm:$0xff]
        %4379 = vmatprep.subr.mxu0 %v3511
        %4380 = vmatpush1.msra.mxu0 %v3510
        %4381 = vmatprep.subr.mxu0 %v3507
        %4382 = vmatpush1.msra.mxu0 %v3506
        %4383 = vmatprep.subr.mxu0 %v3503
        %4384 = vmatpush1.msra.mxu0 %v3502
        %4385 = vmatprep.subr.mxu0 %v3499
        %4386 = vmatpush1.msra.mxu0 %v3498
        %4387 = vmatprep.subr.mxu0 %v3495
        %4388 = vmatpush1.msra.mxu0 %v3494
        %4389 = vmatprep.subr.mxu0 %v3491
        %4390 = vmatpush1.msra.mxu0 %v3490
        %4391 = vmatprep.subr.mxu0 %v3487
        %4392 = vmatpush1.msra.mxu0 %v3486
        %4393 = vmatprep.subr.mxu0 %v3483
        %4394 = vmatpush1.msra.mxu0 %v3482
        %4395 = vmatprep.subr.mxu0 %v3479
        %4396 = vmatpush1.msra.mxu0 %v3478
        %4397 = vmatprep.subr.mxu0 %v3475
        %4398 = vmatpush1.msra.mxu0 %v3474
        %4399 = vmatprep.subr.mxu0 %v3471
        %4400 = vmatpush1.msra.mxu0 %v3470
        %4401 = vmatprep.subr.mxu0 %v3467
        %4402 = vmatpush1.msra.mxu0 %v3466
        %4403 = vmatprep.subr.mxu0 %v3463
        %4404 = vmatpush1.msra.mxu0 %v3462
        %4405 = vmatprep.subr.mxu0 %v3459
        %4406 = vmatpush1.msra.mxu0 %v3458
        %4407 = vmatprep.subr.mxu0 %v3455
        %4408 = vmatpush1.msra.mxu0 %v3454
        %4409 = vmatprep.subr.mxu0 %v3451
        %4410 = vmatpush1.msra.mxu0 %v3450
        %4411 = vmatprep.subr.mxu0 0.0
        %4412 = vmatpush2.msra.mxu0 0.0
        %4413 = vmatprep.subr.mxu0 0.0
        %4414 = vmatpush2.msra.mxu0 0.0
        %4415 = vmatprep.subr.mxu0 0.0
        %4416 = vmatpush2.msra.mxu0 0.0
        %4417 = vmatprep.subr.mxu0 0.0
        %4418 = vmatpush2.msra.mxu0 0.0
        %4419 = vmatprep.subr.mxu0 0.0
        %4420 = vmatpush2.msra.mxu0 0.0
        %4421 = vmatprep.subr.mxu0 0.0
        %4422 = vmatpush2.msra.mxu0 0.0
        %4423 = vmatprep.subr.mxu0 0.0
        %4424 = vmatpush2.msra.mxu0 0.0
        %4425 = vmatprep.subr.mxu0 0.0
        %4426 = vmatpush2.msra.mxu0 0.0
        %4427 = vmatprep.subr.mxu0 0.0
        %4428 = vmatpush2.msra.mxu0 0.0
        %4429 = vmatprep.subr.mxu0 0.0
        %4430 = vmatpush2.msra.mxu0 0.0
        %4431 = vmatprep.subr.mxu0 0.0
        %4432 = vmatpush2.msra.mxu0 0.0
        %4433 = vmatprep.subr.mxu0 0.0
        %4434 = vmatpush2.msra.mxu0 0.0
        %4435 = vmatprep.subr.mxu0 0.0
        %4436 = vmatpush2.msra.mxu0 0.0
        %4437 = vmatprep.subr.mxu0 0.0
        %4438 = vmatpush2.msra.mxu0 0.0
        %4439 = vmatprep.subr.mxu0 0.0
        %4440 = vmatpush2.msra.mxu0 0.0
        %4441 = vmatprep.subr.mxu0 0.0
        %4442 = vmatpush2.msra.mxu0 0.0
        %4443 = vmatprep.mubr.f32.mxu0 0.0
        %4444 = vmatmul.mubr.f32.gmra.mxu0 %v4222
        %v4445 = vpop.f32.mrf.mxu0
        %v4446 = vadd.f32 0.0, %v4445
        %v4447 = vpop.f32.mrf.mxu0
        %v4448 = vadd.f32 0.0, %v4447
        %4449 = vdwg.mxu0
        %4450 = vmatprep.subr.mxu0 %v3513
        %4451 = vmatpush1.msra.mxu0 %v3512
        %4452 = vmatprep.subr.mxu0 %v3509
        %4453 = vmatpush1.msra.mxu0 %v3508
        %4454 = vmatprep.subr.mxu0 %v3505
        %4455 = vmatpush1.msra.mxu0 %v3504
        %4456 = vmatprep.subr.mxu0 %v3501
        %4457 = vmatpush1.msra.mxu0 %v3500
        %4458 = vmatprep.subr.mxu0 %v3497
        %4459 = vmatpush1.msra.mxu0 %v3496
        %4460 = vmatprep.subr.mxu0 %v3493
        %4461 = vmatpush1.msra.mxu0 %v3492
        %4462 = vmatprep.subr.mxu0 %v3489
        %4463 = vmatpush1.msra.mxu0 %v3488
        %4464 = vmatprep.subr.mxu0 %v3485
        %4465 = vmatpush1.msra.mxu0 %v3484
        %4466 = vmatprep.subr.mxu0 %v3481
        %4467 = vmatpush1.msra.mxu0 %v3480
        %4468 = vmatprep.subr.mxu0 %v3477
        %4469 = vmatpush1.msra.mxu0 %v3476
        %4470 = vmatprep.subr.mxu0 %v3473
        %4471 = vmatpush1.msra.mxu0 %v3472
        %4472 = vmatprep.subr.mxu0 %v3469
        %4473 = vmatpush1.msra.mxu0 %v3468
        %4474 = vmatprep.subr.mxu0 %v3465
        %4475 = vmatpush1.msra.mxu0 %v3464
        %4476 = vmatprep.subr.mxu0 %v3461
        %4477 = vmatpush1.msra.mxu0 %v3460
        %4478 = vmatprep.subr.mxu0 %v3457
        %4479 = vmatpush1.msra.mxu0 %v3456
        %4480 = vmatprep.subr.mxu0 %v3453
        %4481 = vmatpush1.msra.mxu0 %v3452
        %4482 = vmatprep.subr.mxu0 0.0
        %4483 = vmatpush2.msra.mxu0 0.0
        %4484 = vmatprep.subr.mxu0 0.0
        %4485 = vmatpush2.msra.mxu0 0.0
        %4486 = vmatprep.subr.mxu0 0.0
        %4487 = vmatpush2.msra.mxu0 0.0
        %4488 = vmatprep.subr.mxu0 0.0
        %4489 = vmatpush2.msra.mxu0 0.0
        %4490 = vmatprep.subr.mxu0 0.0
        %4491 = vmatpush2.msra.mxu0 0.0
        %4492 = vmatprep.subr.mxu0 0.0
        %4493 = vmatpush2.msra.mxu0 0.0
        %4494 = vmatprep.subr.mxu0 0.0
        %4495 = vmatpush2.msra.mxu0 0.0
        %4496 = vmatprep.subr.mxu0 0.0
        %4497 = vmatpush2.msra.mxu0 0.0
        %4498 = vmatprep.subr.mxu0 0.0
        %4499 = vmatpush2.msra.mxu0 0.0
        %4500 = vmatprep.subr.mxu0 0.0
        %4501 = vmatpush2.msra.mxu0 0.0
        %4502 = vmatprep.subr.mxu0 0.0
        %4503 = vmatpush2.msra.mxu0 0.0
        %4504 = vmatprep.subr.mxu0 0.0
        %4505 = vmatpush2.msra.mxu0 0.0
        %4506 = vmatprep.subr.mxu0 0.0
        %4507 = vmatpush2.msra.mxu0 0.0
        %4508 = vmatprep.subr.mxu0 0.0
        %4509 = vmatpush2.msra.mxu0 0.0
        %4510 = vmatprep.subr.mxu0 0.0
        %4511 = vmatpush2.msra.mxu0 0.0
        %4512 = vmatprep.subr.mxu0 0.0
        %4513 = vmatpush2.msra.mxu0 0.0
        %4514 = vmatprep.mubr.f32.mxu0 0.0
        %4515 = vmatmul.mubr.f32.gmra.mxu0 %v4222
        %v4516 = vpop.f32.mrf.mxu0
        %v4517 = vadd.f32 0.0, %v4516
        %v4518 = vpop.f32.mrf.mxu0
        %v4519 = vadd.f32 0.0, %v4518
        %4520 = vdwg.mxu0
        %v4521 = vadd.f32 %v4375, %v4446
        %v4522 = vadd.f32 %v4376, %v4448
        %v4523 = vadd.f32 %v4377, %v4517
        %v4524 = vadd.f32 %v4378, %v4519
        %v4525 = vxor.u32 %v4371, 2147483648
        %v4526 = vmul.f32 %v4525, 1.442695
        %v4527 = vpow.pop %v4526
        %v4528 = vadd.f32 %v4527, 1.0
        %v4529 = vrcp.pop %v4528
        %v4530 = vmul.f32 1.0, %v4529
        %v4531 = vxor.u32 %v4372, 2147483648
        %v4532 = vmul.f32 %v4531, 1.442695
        %v4533 = vpow.pop %v4532
        %v4534 = vadd.f32 %v4533, 1.0
        %v4535 = vrcp.pop %v4534
        %v4536 = vmul.f32 1.0, %v4535
        %v4537 = vtanh.pop %v4373
        %v4538 = vxor.u32 %v4374, 2147483648
        %v4539 = vmul.f32 %v4538, 1.442695
        %v4540 = vpow.pop %v4539
        %v4541 = vadd.f32 %v4540, 1.0
        %v4542 = vrcp.pop %v4541
        %v4543 = vmul.f32 1.0, %v4542
        %v4544 = vmul.f32 %v4536, %v4196
        %v4545 = vmul.f32 %v4530, %v4537
        %v4546 = vadd.f32 %v4544, %v4545
        %v4547 = vtanh.pop %v4546
        %v4548 = vmul.f32 %v4543, %v4547
        %v4549 = vxor.u32 %v4521, 2147483648
        %v4550 = vmul.f32 %v4549, 1.442695
        %v4551 = vpow.pop %v4550
        %v4552 = vadd.f32 %v4551, 1.0
        %v4553 = vrcp.pop %v4552
        %v4554 = vmul.f32 1.0, %v4553
        %v4555 = vxor.u32 %v4522, 2147483648
        %v4556 = vmul.f32 %v4555, 1.442695
        %v4557 = vpow.pop %v4556
        %v4558 = vadd.f32 %v4557, 1.0
        %v4559 = vrcp.pop %v4558
        %v4560 = vmul.f32 1.0, %v4559
        %v4561 = vtanh.pop %v4523
        %v4562 = vxor.u32 %v4524, 2147483648
        %v4563 = vmul.f32 %v4562, 1.442695
        %v4564 = vpow.pop %v4563
        %v4565 = vadd.f32 %v4564, 1.0
        %v4566 = vrcp.pop %v4565
        %v4567 = vmul.f32 1.0, %v4566
        %v4568 = vmul.f32 %v4560, %v4220
        %v4569 = vmul.f32 %v4554, %v4561
        %v4570 = vadd.f32 %v4568, %v4569
        %v4571 = vtanh.pop %v4570
        %v4572 = vmul.f32 %v4567, %v4571
        %4573 = vst [vmem:[%s1986] sm:$0xff] %v4548
        %4574 = vst [vmem:[%s1984 + $0x8] sm:$0xff] %v4572
        %v4575 = vld [vmem:[%s3672] sm:$0xff]
        %v4576 = vld [vmem:[%s3672 + $0x8] sm:$0xff]
        %v4577 = vld [vmem:[%s3672 + $0x10] sm:$0xff]
        %v4578 = vld [vmem:[%s3672 + $0x18] sm:$0xff]
        %4579 = vmatprep.subr.mxu0 %v3447
        %4580 = vmatpush1.msra.mxu0 %v3446
        %4581 = vmatprep.subr.mxu0 %v3443
        %4582 = vmatpush1.msra.mxu0 %v3442
        %4583 = vmatprep.subr.mxu0 %v3439
        %4584 = vmatpush1.msra.mxu0 %v3438
        %4585 = vmatprep.subr.mxu0 %v3435
        %4586 = vmatpush1.msra.mxu0 %v3434
        %4587 = vmatprep.subr.mxu0 %v3431
        %4588 = vmatpush1.msra.mxu0 %v3430
        %4589 = vmatprep.subr.mxu0 %v3427
        %4590 = vmatpush1.msra.mxu0 %v3426
        %4591 = vmatprep.subr.mxu0 %v3423
        %4592 = vmatpush1.msra.mxu0 %v3422
        %4593 = vmatprep.subr.mxu0 %v3419
        %4594 = vmatpush1.msra.mxu0 %v3418
        %4595 = vmatprep.subr.mxu0 %v3415
        %4596 = vmatpush1.msra.mxu0 %v3414
        %4597 = vmatprep.subr.mxu0 %v3411
        %4598 = vmatpush1.msra.mxu0 %v3410
        %4599 = vmatprep.subr.mxu0 %v3407
        %4600 = vmatpush1.msra.mxu0 %v3406
        %4601 = vmatprep.subr.mxu0 %v3403
        %4602 = vmatpush1.msra.mxu0 %v3402
        %4603 = vmatprep.subr.mxu0 %v3399
        %4604 = vmatpush1.msra.mxu0 %v3398
        %4605 = vmatprep.subr.mxu0 %v3395
        %4606 = vmatpush1.msra.mxu0 %v3394
        %4607 = vmatprep.subr.mxu0 %v3391
        %4608 = vmatpush1.msra.mxu0 %v3390
        %4609 = vmatprep.subr.mxu0 %v3387
        %4610 = vmatpush1.msra.mxu0 %v3386
        %4611 = vmatprep.subr.mxu0 0.0
        %4612 = vmatpush2.msra.mxu0 0.0
        %4613 = vmatprep.subr.mxu0 0.0
        %4614 = vmatpush2.msra.mxu0 0.0
        %4615 = vmatprep.subr.mxu0 0.0
        %4616 = vmatpush2.msra.mxu0 0.0
        %4617 = vmatprep.subr.mxu0 0.0
        %4618 = vmatpush2.msra.mxu0 0.0
        %4619 = vmatprep.subr.mxu0 0.0
        %4620 = vmatpush2.msra.mxu0 0.0
        %4621 = vmatprep.subr.mxu0 0.0
        %4622 = vmatpush2.msra.mxu0 0.0
        %4623 = vmatprep.subr.mxu0 0.0
        %4624 = vmatpush2.msra.mxu0 0.0
        %4625 = vmatprep.subr.mxu0 0.0
        %4626 = vmatpush2.msra.mxu0 0.0
        %4627 = vmatprep.subr.mxu0 0.0
        %4628 = vmatpush2.msra.mxu0 0.0
        %4629 = vmatprep.subr.mxu0 0.0
        %4630 = vmatpush2.msra.mxu0 0.0
        %4631 = vmatprep.subr.mxu0 0.0
        %4632 = vmatpush2.msra.mxu0 0.0
        %4633 = vmatprep.subr.mxu0 0.0
        %4634 = vmatpush2.msra.mxu0 0.0
        %4635 = vmatprep.subr.mxu0 0.0
        %4636 = vmatpush2.msra.mxu0 0.0
        %4637 = vmatprep.subr.mxu0 0.0
        %4638 = vmatpush2.msra.mxu0 0.0
        %4639 = vmatprep.subr.mxu0 0.0
        %4640 = vmatpush2.msra.mxu0 0.0
        %4641 = vmatprep.subr.mxu0 0.0
        %4642 = vmatpush2.msra.mxu0 0.0
        %4643 = vmatprep.mubr.f32.mxu0 0.0
        %4644 = vmatmul.mubr.f32.gmra.mxu0 %v4548
        %v4645 = vpop.f32.mrf.mxu0
        %v4646 = vadd.f32 0.0, %v4645
        %v4647 = vpop.f32.mrf.mxu0
        %v4648 = vadd.f32 0.0, %v4647
        %4649 = vdwg.mxu0
        %4650 = vmatprep.subr.mxu0 %v3449
        %4651 = vmatpush1.msra.mxu0 %v3448
        %4652 = vmatprep.subr.mxu0 %v3445
        %4653 = vmatpush1.msra.mxu0 %v3444
        %4654 = vmatprep.subr.mxu0 %v3441
        %4655 = vmatpush1.msra.mxu0 %v3440
        %4656 = vmatprep.subr.mxu0 %v3437
        %4657 = vmatpush1.msra.mxu0 %v3436
        %4658 = vmatprep.subr.mxu0 %v3433
        %4659 = vmatpush1.msra.mxu0 %v3432
        %4660 = vmatprep.subr.mxu0 %v3429
        %4661 = vmatpush1.msra.mxu0 %v3428
        %4662 = vmatprep.subr.mxu0 %v3425
        %4663 = vmatpush1.msra.mxu0 %v3424
        %4664 = vmatprep.subr.mxu0 %v3421
        %4665 = vmatpush1.msra.mxu0 %v3420
        %4666 = vmatprep.subr.mxu0 %v3417
        %4667 = vmatpush1.msra.mxu0 %v3416
        %4668 = vmatprep.subr.mxu0 %v3413
        %4669 = vmatpush1.msra.mxu0 %v3412
        %4670 = vmatprep.subr.mxu0 %v3409
        %4671 = vmatpush1.msra.mxu0 %v3408
        %4672 = vmatprep.subr.mxu0 %v3405
        %4673 = vmatpush1.msra.mxu0 %v3404
        %4674 = vmatprep.subr.mxu0 %v3401
        %4675 = vmatpush1.msra.mxu0 %v3400
        %4676 = vmatprep.subr.mxu0 %v3397
        %4677 = vmatpush1.msra.mxu0 %v3396
        %4678 = vmatprep.subr.mxu0 %v3393
        %4679 = vmatpush1.msra.mxu0 %v3392
        %4680 = vmatprep.subr.mxu0 %v3389
        %4681 = vmatpush1.msra.mxu0 %v3388
        %4682 = vmatprep.subr.mxu0 0.0
        %4683 = vmatpush2.msra.mxu0 0.0
        %4684 = vmatprep.subr.mxu0 0.0
        %4685 = vmatpush2.msra.mxu0 0.0
        %4686 = vmatprep.subr.mxu0 0.0
        %4687 = vmatpush2.msra.mxu0 0.0
        %4688 = vmatprep.subr.mxu0 0.0
        %4689 = vmatpush2.msra.mxu0 0.0
        %4690 = vmatprep.subr.mxu0 0.0
        %4691 = vmatpush2.msra.mxu0 0.0
        %4692 = vmatprep.subr.mxu0 0.0
        %4693 = vmatpush2.msra.mxu0 0.0
        %4694 = vmatprep.subr.mxu0 0.0
        %4695 = vmatpush2.msra.mxu0 0.0
        %4696 = vmatprep.subr.mxu0 0.0
        %4697 = vmatpush2.msra.mxu0 0.0
        %4698 = vmatprep.subr.mxu0 0.0
        %4699 = vmatpush2.msra.mxu0 0.0
        %4700 = vmatprep.subr.mxu0 0.0
        %4701 = vmatpush2.msra.mxu0 0.0
        %4702 = vmatprep.subr.mxu0 0.0
        %4703 = vmatpush2.msra.mxu0 0.0
        %4704 = vmatprep.subr.mxu0 0.0
        %4705 = vmatpush2.msra.mxu0 0.0
        %4706 = vmatprep.subr.mxu0 0.0
        %4707 = vmatpush2.msra.mxu0 0.0
        %4708 = vmatprep.subr.mxu0 0.0
        %4709 = vmatpush2.msra.mxu0 0.0
        %4710 = vmatprep.subr.mxu0 0.0
        %4711 = vmatpush2.msra.mxu0 0.0
        %4712 = vmatprep.subr.mxu0 0.0
        %4713 = vmatpush2.msra.mxu0 0.0
        %4714 = vmatprep.mubr.f32.mxu0 0.0
        %4715 = vmatmul.mubr.f32.gmra.mxu0 %v4548
        %v4716 = vpop.f32.mrf.mxu0
        %v4717 = vadd.f32 0.0, %v4716
        %v4718 = vpop.f32.mrf.mxu0
        %v4719 = vadd.f32 0.0, %v4718
        %4720 = vdwg.mxu0
        %v4721 = vadd.f32 %v4575, %v4646
        %v4722 = vadd.f32 %v4576, %v4648
        %v4723 = vadd.f32 %v4577, %v4717
        %v4724 = vadd.f32 %v4578, %v4719
        %v4725 = vld [vmem:[#allocation5 + $0x20] sm:$0xff]
        %v4726 = vld [vmem:[#allocation5 + $0x28] sm:$0xff]
        %v4727 = vld [vmem:[#allocation5 + $0x30] sm:$0xff]
        %v4728 = vld [vmem:[#allocation5 + $0x38] sm:$0xff]
        %4729 = vmatprep.subr.mxu0 %v3511
        %4730 = vmatpush1.msra.mxu0 %v3510
        %4731 = vmatprep.subr.mxu0 %v3507
        %4732 = vmatpush1.msra.mxu0 %v3506
        %4733 = vmatprep.subr.mxu0 %v3503
        %4734 = vmatpush1.msra.mxu0 %v3502
        %4735 = vmatprep.subr.mxu0 %v3499
        %4736 = vmatpush1.msra.mxu0 %v3498
        %4737 = vmatprep.subr.mxu0 %v3495
        %4738 = vmatpush1.msra.mxu0 %v3494
        %4739 = vmatprep.subr.mxu0 %v3491
        %4740 = vmatpush1.msra.mxu0 %v3490
        %4741 = vmatprep.subr.mxu0 %v3487
        %4742 = vmatpush1.msra.mxu0 %v3486
        %4743 = vmatprep.subr.mxu0 %v3483
        %4744 = vmatpush1.msra.mxu0 %v3482
        %4745 = vmatprep.subr.mxu0 %v3479
        %4746 = vmatpush1.msra.mxu0 %v3478
        %4747 = vmatprep.subr.mxu0 %v3475
        %4748 = vmatpush1.msra.mxu0 %v3474
        %4749 = vmatprep.subr.mxu0 %v3471
        %4750 = vmatpush1.msra.mxu0 %v3470
        %4751 = vmatprep.subr.mxu0 %v3467
        %4752 = vmatpush1.msra.mxu0 %v3466
        %4753 = vmatprep.subr.mxu0 %v3463
        %4754 = vmatpush1.msra.mxu0 %v3462
        %4755 = vmatprep.subr.mxu0 %v3459
        %4756 = vmatpush1.msra.mxu0 %v3458
        %4757 = vmatprep.subr.mxu0 %v3455
        %4758 = vmatpush1.msra.mxu0 %v3454
        %4759 = vmatprep.subr.mxu0 %v3451
        %4760 = vmatpush1.msra.mxu0 %v3450
        %4761 = vmatprep.subr.mxu0 0.0
        %4762 = vmatpush2.msra.mxu0 0.0
        %4763 = vmatprep.subr.mxu0 0.0
        %4764 = vmatpush2.msra.mxu0 0.0
        %4765 = vmatprep.subr.mxu0 0.0
        %4766 = vmatpush2.msra.mxu0 0.0
        %4767 = vmatprep.subr.mxu0 0.0
        %4768 = vmatpush2.msra.mxu0 0.0
        %4769 = vmatprep.subr.mxu0 0.0
        %4770 = vmatpush2.msra.mxu0 0.0
        %4771 = vmatprep.subr.mxu0 0.0
        %4772 = vmatpush2.msra.mxu0 0.0
        %4773 = vmatprep.subr.mxu0 0.0
        %4774 = vmatpush2.msra.mxu0 0.0
        %4775 = vmatprep.subr.mxu0 0.0
        %4776 = vmatpush2.msra.mxu0 0.0
        %4777 = vmatprep.subr.mxu0 0.0
        %4778 = vmatpush2.msra.mxu0 0.0
        %4779 = vmatprep.subr.mxu0 0.0
        %4780 = vmatpush2.msra.mxu0 0.0
        %4781 = vmatprep.subr.mxu0 0.0
        %4782 = vmatpush2.msra.mxu0 0.0
        %4783 = vmatprep.subr.mxu0 0.0
        %4784 = vmatpush2.msra.mxu0 0.0
        %4785 = vmatprep.subr.mxu0 0.0
        %4786 = vmatpush2.msra.mxu0 0.0
        %4787 = vmatprep.subr.mxu0 0.0
        %4788 = vmatpush2.msra.mxu0 0.0
        %4789 = vmatprep.subr.mxu0 0.0
        %4790 = vmatpush2.msra.mxu0 0.0
        %4791 = vmatprep.subr.mxu0 0.0
        %4792 = vmatpush2.msra.mxu0 0.0
        %4793 = vmatprep.mubr.f32.mxu0 0.0
        %4794 = vmatmul.mubr.f32.gmra.mxu0 %v4572
        %v4795 = vpop.f32.mrf.mxu0
        %v4796 = vadd.f32 0.0, %v4795
        %v4797 = vpop.f32.mrf.mxu0
        %v4798 = vadd.f32 0.0, %v4797
        %4799 = vdwg.mxu0
        %4800 = vmatprep.subr.mxu0 %v3513
        %4801 = vmatpush1.msra.mxu0 %v3512
        %4802 = vmatprep.subr.mxu0 %v3509
        %4803 = vmatpush1.msra.mxu0 %v3508
        %4804 = vmatprep.subr.mxu0 %v3505
        %4805 = vmatpush1.msra.mxu0 %v3504
        %4806 = vmatprep.subr.mxu0 %v3501
        %4807 = vmatpush1.msra.mxu0 %v3500
        %4808 = vmatprep.subr.mxu0 %v3497
        %4809 = vmatpush1.msra.mxu0 %v3496
        %4810 = vmatprep.subr.mxu0 %v3493
        %4811 = vmatpush1.msra.mxu0 %v3492
        %4812 = vmatprep.subr.mxu0 %v3489
        %4813 = vmatpush1.msra.mxu0 %v3488
        %4814 = vmatprep.subr.mxu0 %v3485
        %4815 = vmatpush1.msra.mxu0 %v3484
        %4816 = vmatprep.subr.mxu0 %v3481
        %4817 = vmatpush1.msra.mxu0 %v3480
        %4818 = vmatprep.subr.mxu0 %v3477
        %4819 = vmatpush1.msra.mxu0 %v3476
        %4820 = vmatprep.subr.mxu0 %v3473
        %4821 = vmatpush1.msra.mxu0 %v3472
        %4822 = vmatprep.subr.mxu0 %v3469
        %4823 = vmatpush1.msra.mxu0 %v3468
        %4824 = vmatprep.subr.mxu0 %v3465
        %4825 = vmatpush1.msra.mxu0 %v3464
        %4826 = vmatprep.subr.mxu0 %v3461
        %4827 = vmatpush1.msra.mxu0 %v3460
        %4828 = vmatprep.subr.mxu0 %v3457
        %4829 = vmatpush1.msra.mxu0 %v3456
        %4830 = vmatprep.subr.mxu0 %v3453
        %4831 = vmatpush1.msra.mxu0 %v3452
        %4832 = vmatprep.subr.mxu0 0.0
        %4833 = vmatpush2.msra.mxu0 0.0
        %4834 = vmatprep.subr.mxu0 0.0
        %4835 = vmatpush2.msra.mxu0 0.0
        %4836 = vmatprep.subr.mxu0 0.0
        %4837 = vmatpush2.msra.mxu0 0.0
        %4838 = vmatprep.subr.mxu0 0.0
        %4839 = vmatpush2.msra.mxu0 0.0
        %4840 = vmatprep.subr.mxu0 0.0
        %4841 = vmatpush2.msra.mxu0 0.0
        %4842 = vmatprep.subr.mxu0 0.0
        %4843 = vmatpush2.msra.mxu0 0.0
        %4844 = vmatprep.subr.mxu0 0.0
        %4845 = vmatpush2.msra.mxu0 0.0
        %4846 = vmatprep.subr.mxu0 0.0
        %4847 = vmatpush2.msra.mxu0 0.0
        %4848 = vmatprep.subr.mxu0 0.0
        %4849 = vmatpush2.msra.mxu0 0.0
        %4850 = vmatprep.subr.mxu0 0.0
        %4851 = vmatpush2.msra.mxu0 0.0
        %4852 = vmatprep.subr.mxu0 0.0
        %4853 = vmatpush2.msra.mxu0 0.0
        %4854 = vmatprep.subr.mxu0 0.0
        %4855 = vmatpush2.msra.mxu0 0.0
        %4856 = vmatprep.subr.mxu0 0.0
        %4857 = vmatpush2.msra.mxu0 0.0
        %4858 = vmatprep.subr.mxu0 0.0
        %4859 = vmatpush2.msra.mxu0 0.0
        %4860 = vmatprep.subr.mxu0 0.0
        %4861 = vmatpush2.msra.mxu0 0.0
        %4862 = vmatprep.subr.mxu0 0.0
        %4863 = vmatpush2.msra.mxu0 0.0
        %4864 = vmatprep.mubr.f32.mxu0 0.0
        %4865 = vmatmul.mubr.f32.gmra.mxu0 %v4572
        %v4866 = vpop.f32.mrf.mxu0
        %v4867 = vadd.f32 0.0, %v4866
        %v4868 = vpop.f32.mrf.mxu0
        %v4869 = vadd.f32 0.0, %v4868
        %4870 = vdwg.mxu0
        %v4871 = vadd.f32 %v4725, %v4796
        %v4872 = vadd.f32 %v4726, %v4798
        %v4873 = vadd.f32 %v4727, %v4867
        %v4874 = vadd.f32 %v4728, %v4869
        %v4875 = vxor.u32 %v4721, 2147483648
        %v4876 = vmul.f32 %v4875, 1.442695
        %v4877 = vpow.pop %v4876
        %v4878 = vadd.f32 %v4877, 1.0
        %v4879 = vrcp.pop %v4878
        %v4880 = vmul.f32 1.0, %v4879
        %v4881 = vxor.u32 %v4722, 2147483648
        %v4882 = vmul.f32 %v4881, 1.442695
        %v4883 = vpow.pop %v4882
        %v4884 = vadd.f32 %v4883, 1.0
        %v4885 = vrcp.pop %v4884
        %v4886 = vmul.f32 1.0, %v4885
        %v4887 = vtanh.pop %v4723
        %v4888 = vxor.u32 %v4724, 2147483648
        %v4889 = vmul.f32 %v4888, 1.442695
        %v4890 = vpow.pop %v4889
        %v4891 = vadd.f32 %v4890, 1.0
        %v4892 = vrcp.pop %v4891
        %v4893 = vmul.f32 1.0, %v4892
        %v4894 = vmul.f32 %v4886, %v4546
        %v4895 = vmul.f32 %v4880, %v4887
        %v4896 = vadd.f32 %v4894, %v4895
        %v4897 = vtanh.pop %v4896
        %v4898 = vmul.f32 %v4893, %v4897
        %v4899 = vxor.u32 %v4871, 2147483648
        %v4900 = vmul.f32 %v4899, 1.442695
        %v4901 = vpow.pop %v4900
        %v4902 = vadd.f32 %v4901, 1.0
        %v4903 = vrcp.pop %v4902
        %v4904 = vmul.f32 1.0, %v4903
        %v4905 = vxor.u32 %v4872, 2147483648
        %v4906 = vmul.f32 %v4905, 1.442695
        %v4907 = vpow.pop %v4906
        %v4908 = vadd.f32 %v4907, 1.0
        %v4909 = vrcp.pop %v4908
        %v4910 = vmul.f32 1.0, %v4909
        %v4911 = vtanh.pop %v4873
        %v4912 = vxor.u32 %v4874, 2147483648
        %v4913 = vmul.f32 %v4912, 1.442695
        %v4914 = vpow.pop %v4913
        %v4915 = vadd.f32 %v4914, 1.0
        %v4916 = vrcp.pop %v4915
        %v4917 = vmul.f32 1.0, %v4916
        %v4918 = vmul.f32 %v4910, %v4570
        %v4919 = vmul.f32 %v4904, %v4911
        %v4920 = vadd.f32 %v4918, %v4919
        %v4921 = vtanh.pop %v4920
        %v4922 = vmul.f32 %v4917, %v4921
        %4923 = vst [vmem:[%s1632] sm:$0xff] %v4898
        %4924 = vst [vmem:[#allocation6 + $0x8] sm:$0xff] %v4922
        %4925 = vst [vmem:[%s3514] sm:$0xff] %v4898
        %4926 = vst [vmem:[%s3516] sm:$0xff] %v4896
        %4927 = vst [vmem:[%s3518] sm:$0xff] %v4922
        %4928 = vst [vmem:[%s3520] sm:$0xff] %v4920
        %v4929 = vld [vmem:[#allocation6] sm:$0xff]
        %v4930 = vld [vmem:[#allocation6 + $0x8] sm:$0xff]
        %v4931 = vld [vmem:[#allocation6 + $0x10] sm:$0xff]
        %v4932 = vld [vmem:[#allocation6 + $0x18] sm:$0xff]
        %v4933 = vld [vmem:[#allocation6 + $0x20] sm:$0xff]
        %v4934 = vld [vmem:[#allocation6 + $0x28] sm:$0xff]
        %v4935 = vld [vmem:[#allocation6 + $0x30] sm:$0xff]
        %v4936 = vld [vmem:[#allocation6 + $0x38] sm:$0xff]
        %v4937 = vld [vmem:[#allocation22] sm:$0xff]
        %v4938 = vld [vmem:[#allocation22 + $0x8] sm:$0xff]
        %v4939 = vld [vmem:[#allocation22 + $0x10] sm:$0xff]
        %v4940 = vld [vmem:[#allocation22 + $0x18] sm:$0xff]
        %v4941 = vld [vmem:[#allocation22 + $0x20] sm:$0xff]
        %v4942 = vld [vmem:[#allocation22 + $0x28] sm:$0xff]
        %v4943 = vld [vmem:[#allocation22 + $0x30] sm:$0xff]
        %v4944 = vld [vmem:[#allocation22 + $0x38] sm:$0xff]
        %v4945 = vld [vmem:[#allocation22 + $0x40] sm:$0xff]
        %v4946 = vld [vmem:[#allocation22 + $0x48] sm:$0xff]
        %v4947 = vld [vmem:[#allocation22 + $0x50] sm:$0xff]
        %v4948 = vld [vmem:[#allocation22 + $0x58] sm:$0xff]
        %v4949 = vld [vmem:[#allocation22 + $0x60] sm:$0xff]
        %v4950 = vld [vmem:[#allocation22 + $0x68] sm:$0xff]
        %v4951 = vld [vmem:[#allocation22 + $0x70] sm:$0xff]
        %v4952 = vld [vmem:[#allocation22 + $0x78] sm:$0xff]
        %v4953 = vld [vmem:[#allocation22 + $0x80] sm:$0xff]
        %v4954 = vld [vmem:[#allocation22 + $0x88] sm:$0xff]
        %v4955 = vld [vmem:[#allocation22 + $0x90] sm:$0xff]
        %v4956 = vld [vmem:[#allocation22 + $0x98] sm:$0xff]
        %v4957 = vld [vmem:[#allocation22 + $0xa0] sm:$0xff]
        %v4958 = vld [vmem:[#allocation22 + $0xa8] sm:$0xff]
        %v4959 = vld [vmem:[#allocation22 + $0xb0] sm:$0xff]
        %v4960 = vld [vmem:[#allocation22 + $0xb8] sm:$0xff]
        %v4961 = vld [vmem:[#allocation22 + $0xc0] sm:$0xff]
        %v4962 = vld [vmem:[#allocation22 + $0xc8] sm:$0xff]
        %v4963 = vld [vmem:[#allocation22 + $0xd0] sm:$0xff]
        %v4964 = vld [vmem:[#allocation22 + $0xd8] sm:$0xff]
        %v4965 = vld [vmem:[#allocation22 + $0xe0] sm:$0xff]
        %v4966 = vld [vmem:[#allocation22 + $0xe8] sm:$0xff]
        %v4967 = vld [vmem:[#allocation22 + $0xf0] sm:$0xff]
        %v4968 = vld [vmem:[#allocation22 + $0xf8] sm:$0xff]
        %v4969 = vld [vmem:[%s12] sm:$0x1]
        %v4971 = vlaneseq
        %v4972 = vshrl.u32 %v4971, 7
        %v4973 = vsub.s32 0, %v4972
        %v4974 = vrot.slane %v4969, %v4973
        %4976 = vmatprep.subr.mxu0 0.0
        %4977 = vmatpush1.msra.mxu0 %v4952
        %4978 = vmatprep.subr.mxu0 0.0
        %4979 = vmatpush1.msra.mxu0 %v4951
        %4980 = vmatprep.subr.mxu0 0.0
        %4981 = vmatpush1.msra.mxu0 %v4950
        %4982 = vmatprep.subr.mxu0 0.0
        %4983 = vmatpush1.msra.mxu0 %v4949
        %4984 = vmatprep.subr.mxu0 0.0
        %4985 = vmatpush1.msra.mxu0 %v4948
        %4986 = vmatprep.subr.mxu0 0.0
        %4987 = vmatpush1.msra.mxu0 %v4947
        %4988 = vmatprep.subr.mxu0 0.0
        %4989 = vmatpush1.msra.mxu0 %v4946
        %4990 = vmatprep.subr.mxu0 0.0
        %4991 = vmatpush1.msra.mxu0 %v4945
        %4992 = vmatprep.subr.mxu0 0.0
        %4993 = vmatpush1.msra.mxu0 %v4944
        %4994 = vmatprep.subr.mxu0 0.0
        %4995 = vmatpush1.msra.mxu0 %v4943
        %4996 = vmatprep.subr.mxu0 0.0
        %4997 = vmatpush1.msra.mxu0 %v4942
        %4998 = vmatprep.subr.mxu0 0.0
        %4999 = vmatpush1.msra.mxu0 %v4941
        %5000 = vmatprep.subr.mxu0 0.0
        %5001 = vmatpush1.msra.mxu0 %v4940
        %5002 = vmatprep.subr.mxu0 0.0
        %5003 = vmatpush1.msra.mxu0 %v4939
        %5004 = vmatprep.subr.mxu0 0.0
        %5005 = vmatpush1.msra.mxu0 %v4938
        %5006 = vmatprep.subr.mxu0 0.0
        %5007 = vmatpush1.msra.mxu0 %v4937
        %5008 = vmatprep.subr.mxu0 0.0
        %5009 = vmatpush2.msra.mxu0 %v4968
        %5010 = vmatprep.subr.mxu0 0.0
        %5011 = vmatpush2.msra.mxu0 %v4967
        %5012 = vmatprep.subr.mxu0 0.0
        %5013 = vmatpush2.msra.mxu0 %v4966
        %5014 = vmatprep.subr.mxu0 0.0
        %5015 = vmatpush2.msra.mxu0 %v4965
        %5016 = vmatprep.subr.mxu0 0.0
        %5017 = vmatpush2.msra.mxu0 %v4964
        %5018 = vmatprep.subr.mxu0 0.0
        %5019 = vmatpush2.msra.mxu0 %v4963
        %5020 = vmatprep.subr.mxu0 0.0
        %5021 = vmatpush2.msra.mxu0 %v4962
        %5022 = vmatprep.subr.mxu0 0.0
        %5023 = vmatpush2.msra.mxu0 %v4961
        %5024 = vmatprep.subr.mxu0 0.0
        %5025 = vmatpush2.msra.mxu0 %v4960
        %5026 = vmatprep.subr.mxu0 0.0
        %5027 = vmatpush2.msra.mxu0 %v4959
        %5028 = vmatprep.subr.mxu0 0.0
        %5029 = vmatpush2.msra.mxu0 %v4958
        %5030 = vmatprep.subr.mxu0 0.0
        %5031 = vmatpush2.msra.mxu0 %v4957
        %5032 = vmatprep.subr.mxu0 0.0
        %5033 = vmatpush2.msra.mxu0 %v4956
        %5034 = vmatprep.subr.mxu0 0.0
        %5035 = vmatpush2.msra.mxu0 %v4955
        %5036 = vmatprep.subr.mxu0 0.0
        %5037 = vmatpush2.msra.mxu0 %v4954
        %5038 = vmatprep.subr.mxu0 0.0
        %5039 = vmatpush2.msra.mxu0 %v4953
        %5040 = vmatprep.mubr.f32.mxu0 %v4930
        %5041 = vmatmul.mubr.f32.gmra.mxu0 %v4929
        %v5042 = vpop.f32.mrf.mxu0
        %v5043 = vadd.f32 %v4974, %v5042
        %v5044 = vpop.f32.mrf.mxu0
        %5045 = vmatprep.mubr.f32.mxu0 %v4932
        %5046 = vmatmul.mubr.f32.gmra.mxu0 %v4931
        %v5047 = vpop.f32.mrf.mxu0
        %v5048 = vadd.f32 %v4974, %v5047
        %v5049 = vpop.f32.mrf.mxu0
        %5050 = vmatprep.mubr.f32.mxu0 %v4934
        %5051 = vmatmul.mubr.f32.gmra.mxu0 %v4933
        %v5052 = vpop.f32.mrf.mxu0
        %v5053 = vadd.f32 %v4974, %v5052
        %v5054 = vpop.f32.mrf.mxu0
        %5055 = vmatprep.mubr.f32.mxu0 %v4936
        %5056 = vmatmul.mubr.f32.gmra.mxu0 %v4935
        %v5057 = vpop.f32.mrf.mxu0
        %v5058 = vadd.f32 %v4974, %v5057
        %v5059 = vpop.f32.mrf.mxu0
        %5060 = vdwg.mxu0
        %5061 = vmax.xlane.f32.xlu0 %v5043
        %v5062 = vpop.xlane.xlu0 %5061
        %5063 = vmax.xlane.f32.xlu0 %v5048
        %v5064 = vpop.xlane.xlu0 %5063
        %5065 = vmax.xlane.f32.xlu0 %v5053
        %v5066 = vpop.xlane.xlu0 %5065
        %5067 = vmax.xlane.f32.xlu0 %v5058
        %v5068 = vpop.xlane.xlu0 %5067
        %v5069 = vsub.f32 %v5043, %v5062
        %v5070 = vsub.f32 %v5048, %v5064
        %v5071 = vsub.f32 %v5053, %v5066
        %v5072 = vsub.f32 %v5058, %v5068
        %v5073 = vmul.f32 %v5069, 1.442695
        %v5074 = vpow.pop %v5073
        %v5075 = vmul.f32 %v5070, 1.442695
        %v5076 = vpow.pop %v5075
        %v5077 = vmul.f32 %v5071, 1.442695
        %v5078 = vpow.pop %v5077
        %v5079 = vmul.f32 %v5072, 1.442695
        %v5080 = vpow.pop %v5079
        %5081 = vadd.xlane.f32.xlu0 %v5074
        %v5082 = vpop.xlane.xlu0 %5081
        %5083 = vadd.xlane.f32.xlu0 %v5076
        %v5084 = vpop.xlane.xlu0 %5083
        %5085 = vadd.xlane.f32.xlu0 %v5078
        %v5086 = vpop.xlane.xlu0 %5085
        %5087 = vadd.xlane.f32.xlu0 %v5080
        %v5088 = vpop.xlane.xlu0 %5087
        %v5089 = vlog2.pop %v5082
        %v5090 = vmul.f32 %v5089, 0.6931472
        %v5091 = vlog2.pop %v5084
        %v5092 = vmul.f32 %v5091, 0.6931472
        %v5093 = vlog2.pop %v5086
        %v5094 = vmul.f32 %v5093, 0.6931472
        %v5095 = vlog2.pop %v5088
        %v5096 = vmul.f32 %v5095, 0.6931472
        %v5097 = vsub.f32 %v5069, %v5090
        %v5098 = vsub.f32 %v5070, %v5092
        %v5099 = vsub.f32 %v5071, %v5094
        %v5100 = vsub.f32 %v5072, %v5096
        %5101 = vst [vmem:[%s564] sm:$0xff] %v5097
        %5102 = vst [vmem:[%s564 + $0x8] sm:$0xff] %v5098
        %5103 = vst [vmem:[%s564 + $0x10] sm:$0xff] %v5099
        %5104 = vst [vmem:[%s564 + $0x18] sm:$0xff] %v5100
        %s5105 = sand.u32 %s314, 1
        %s5106 = scalar_lea.sflag [#allocation9], %s5105
        %s5107 = sand.u32 %s314, 1
        %s5108 = smul.addr %s5107, 32
        %s5109 = scalar_lea.vmem [#allocation24], %s5108
        // Predicated region
        $region117: #{tpu_custom_call.1} parent=71 // pred_check
          %p5110 = pneg %p324
        $region118: #{tpu_custom_call.1} parent=71 // pred_check_branch
          %5112 = sbr.rel (%p5110) target = $region120
        $region119: #{tpu_custom_call.1} parent=71 // pred_region
          %s5113 = smul.u32 4, %s33
          %s5115 = ssub.s32 512, 512
          %5116 = vsyncadd %s5106, %s5115
          %s5117 = smul.addr %s5113, 128
          %s5118 = scalar_lea.hbm %s13, %s5117
          %s5119 = sshll.u32 %s5109, 4
          %s5120 = int_to_ptr.vmem [resolvable:$true] %s5119
          %5125 = dma.vmem_to_hbm [thread:$0]  %s5120, 512, %s5118, %s5106, 128, 128, 8
        $region120: #{tpu_custom_call.1} parent=71 // pred_fallthru
          _
      $region72: #{tpu_custom_call.1} parent=5 // pred_fallthru
        _
      %p5126 = scmp.le.s32.totalorder 2, %s28
      // Predicated region
      $region121: #{tpu_custom_call.1} parent=5 // pred_check
        %p5127 = pneg %p5126
      $region122: #{tpu_custom_call.1} parent=5 // pred_check_branch
        %5129 = sbr.rel (%p5127) target = $region124
      $region123: #{tpu_custom_call.1} parent=5 // pred_region
        %s5130 = ssub.s32 %s28, 2
        // Predicated region
        $region125: #{tpu_custom_call.1} parent=123 // pred_check
          %p5131 = pneg %p330
        $region126: #{tpu_custom_call.1} parent=123 // pred_check_branch
          %5133 = sbr.rel (%p5131) target = $region128
        $region127: #{tpu_custom_call.1} parent=123 // pred_region
          %s5134 = sand.u32 %s315, 1
          %s5135 = scalar_lea.sflag [#allocation9], %s5134
          %s5136 = sand.u32 %s315, 1
          %s5137 = smul.addr %s5136, 32
          %s5138 = scalar_lea.vmem [#allocation24], %s5137
          %5139 = dma.done %s5135, 512
        $region128: #{tpu_custom_call.1} parent=123 // pred_fallthru
          _
      $region124: #{tpu_custom_call.1} parent=5 // pred_fallthru
        _
    $region6: #{tpu_custom_call.1} parent=1 // loop_footer
      %s32 = sadd.s32 1, %s28
    $region7: #{tpu_custom_call.1} parent=1 // loop_footer_branch
      %27 = sbr.rel target = $region3
    $region8: #{tpu_custom_call.1} parent=1 // loop_exit
      _
    %5140 = vsyncpa [#allocation8], 1
    %s5141 = scalar_lea.sflag [#allocation8], 1
    %5142 = vsyncpa %s5141, 1
    %5143 = vsyncpa [#allocation11], 1
    %5144 = vsyncpa [#allocation14], 1
    %5145 = vsyncpa [#allocation17], 1
    %5146 = vsyncpa [#allocation20], 1
    %5147 = vsyncpa [#allocation23], 1
    %5148 = vsyncpa [#allocation9], 1
    %s5149 = scalar_lea.sflag [#allocation9], 1
    %5150 = vsyncpa %s5149, 1

</llo_original>
